<compile_context>
chip_gen: v7x
topology: tpu7x:2x2x1
jax: 0.10.0
libtpu: 0.0.40
codegen_flags: <defaults>
</compile_context>

<pallas_src>
import functools
import math

import jax
import jax.numpy as jnp
from jax.experimental import pallas as pl
from jax.experimental.pallas import tpu as pltpu

EPS = 1e-12

_CompilerParams = getattr(pltpu, "CompilerParams", None) or getattr(
    pltpu, "TPUCompilerParams", None)


# ----------------------------- in-kernel helpers -----------------------------

def _recip(x, approx):
    # exact path: plain divide; perf path: EUP approx reciprocal (free slot)
    return pl.reciprocal(x, approx=True) if approx else 1.0 / x


def _layernorm(x, gamma, beta, approx):
    """Custom PyTorch LayerNorm clone: mean / unbiased std, (x-mean)/(std+eps)."""
    n = x.shape[-1]
    mean = jnp.mean(x, axis=-1, keepdims=True)
    diff = x - mean
    var = jnp.sum(diff * diff, axis=-1, keepdims=True) * (1.0 / (n - 1))
    inv = _recip(jnp.sqrt(var) + EPS, approx)
    return gamma * (diff * inv) + beta


def _split_heads(x2d, n_heads, dh, cd):
    """(t, H) -> (heads, t, dh) head-major via dh-wide lane slices + leading-axis
    concat (avoids an in-kernel major<->sublane transpose relayout)."""
    t = x2d.shape[0]
    parts = [x2d[:, h * dh:(h + 1) * dh].reshape(1, t, dh) for h in range(n_heads)]
    out = parts[0] if n_heads == 1 else jnp.concatenate(parts, axis=0)
    return out.astype(cd)


def _mha(q2d, k2d, v2d, wo_h, bo, *, bb, tq, tk, n_heads, cd, approx):
    """Multi-head attention on flattened projections.

    q2d: (bb*tq, H) f32, already scaled by 1/sqrt(dh) via the weights.
    k2d/v2d: (bb*tk, H) f32.  wo_h: (heads, dh, H) compute dtype.  bo: (1, H) f32.
    Returns (bb*tq, H) f32.
    """
    H = q2d.shape[-1]
    dh = H // n_heads
    outs = []
    for b in range(bb):                                   # static unroll; bb is small
        qh = _split_heads(q2d[b * tq:(b + 1) * tq], n_heads, dh, cd)   # (h, tq, dh)
        kh = _split_heads(k2d[b * tk:(b + 1) * tk], n_heads, dh, cd)   # (h, tk, dh)
        vh = _split_heads(v2d[b * tk:(b + 1) * tk], n_heads, dh, cd)
        s = jnp.einsum("htd,hsd->hts", qh, kh,
                       preferred_element_type=jnp.float32)             # (h, tq, tk)
        # TODO(synk): trg_mask / cross_attn_mask not plumbed; forward is exercised
        # with mask=None (decoder is run unmasked, matching the call signature).
        m = jnp.max(s, axis=-1, keepdims=True)
        p = jnp.exp(s - m)
        attn = p * _recip(jnp.sum(p, axis=-1, keepdims=True), approx)  # softmax; dropout==id
        ctx = jnp.einsum("hts,hsd->htd", attn.astype(cd), vh,
                         preferred_element_type=jnp.float32)           # (h, tq, dh)
        # head-major out-projection: per-head (tq,dh)@(dh,H) + sum over heads;
        # no transpose-back relayout between the two MXU ops.
        o_h = jnp.einsum("htd,hdk->htk", ctx.astype(cd), wo_h,
                         preferred_element_type=jnp.float32)           # (h, tq, H)
        outs.append(jnp.sum(o_h, axis=0))                              # (tq, H)
    out = outs[0] if bb == 1 else jnp.concatenate(outs, axis=0)
    return out + bo


# ----------------------------- fused kernel -----------------------------------

def _decoder_layer_kernel(
        trg_ref, src_ref,
        sa_wqkv_ref, sa_bqkv_ref, sa_wo_ref, sa_bo_ref, ln1_g_ref, ln1_b_ref,
        ea_wq_ref, ea_bq_ref, ea_wkv_ref, ea_bkv_ref, ea_wo_ref, ea_bo_ref,
        ln2_g_ref, ln2_b_ref,
        pf_w1_ref, pf_b1_ref, pf_w2_ref, pf_b2_ref, ln3_g_ref, ln3_b_ref,
        out_ref, *, n_heads, approx):
    bb, T, H = trg_ref.shape
    S = src_ref.shape[1]
    cd = sa_wqkv_ref.dtype                      # MXU compute dtype (f32 or bf16)

    # residual stream flattened to (bb*T, H): larger MXU M for every projection;
    # it never leaves VMEM between the three sub-blocks.
    x = trg_ref[...].reshape(bb * T, H)
    src = src_ref[...].reshape(bb * S, H)

    # ---------------- self-attention + residual + LN1 ----------------
    qkv = jnp.dot(x.astype(cd), sa_wqkv_ref[...],
                  preferred_element_type=jnp.float32) + sa_bqkv_ref[...]
    o = _mha(qkv[:, :H], qkv[:, H:2 * H], qkv[:, 2 * H:],
             sa_wo_ref[...], sa_bo_ref[...],
             bb=bb, tq=T, tk=T, n_heads=n_heads, cd=cd, approx=approx)
    x = _layernorm(x + o, ln1_g_ref[...], ln1_b_ref[...], approx)

    # ---------------- cross-attention + residual + LN2 ----------------
    q = jnp.dot(x.astype(cd), ea_wq_ref[...],
                preferred_element_type=jnp.float32) + ea_bq_ref[...]
    kv = jnp.dot(src.astype(cd), ea_wkv_ref[...],
                 preferred_element_type=jnp.float32) + ea_bkv_ref[...]
    o = _mha(q, kv[:, :H], kv[:, H:], ea_wo_ref[...], ea_bo_ref[...],
             bb=bb, tq=T, tk=S, n_heads=n_heads, cd=cd, approx=approx)
    x = _layernorm(x + o, ln2_g_ref[...], ln2_b_ref[...], approx)

    # ---------------- positionwise FFN + residual + LN3 ----------------
    h1 = jnp.dot(x.astype(cd), pf_w1_ref[...],
                 preferred_element_type=jnp.float32) + pf_b1_ref[...]
    h1 = jnp.maximum(h1, 0.0)
    y = jnp.dot(h1.astype(cd), pf_w2_ref[...],
                preferred_element_type=jnp.float32) + pf_b2_ref[...]
    x = _layernorm(x + y, ln3_g_ref[...], ln3_b_ref[...], approx)

    out_ref[...] = x.reshape(bb, T, H).astype(out_ref.dtype)


# ----------------------------- parameter prep (once) ---------------------------

def prepare_decoder_params(p, n_heads, *, compute_dtype=jnp.float32):
    """Fuse / cast / fold the weights ONCE (not on every forward call)."""
    H = p["sa_wq"].shape[0]
    dh = H // n_heads
    inv_scale = 1.0 / math.sqrt(dh)
    cd = compute_dtype
    return {
        # 1/sqrt(dh) folded into the Q columns + Q bias -> no per-token scale in-kernel
        "sa_wqkv": jnp.concatenate([p["sa_wq"] * inv_scale, p["sa_wk"], p["sa_wv"]],
                                   axis=1).astype(cd),
        "sa_bqkv": jnp.concatenate([p["sa_bq"] * inv_scale, p["sa_bk"], p["sa_bv"]],
                                   axis=1),
        "sa_wo": p["sa_wo"].reshape(n_heads, dh, H).astype(cd),  # head-major out proj
        "sa_bo": p["sa_bo"],
        "ln1_g": p["ln1_g"], "ln1_b": p["ln1_b"],
        "ea_wq": (p["ea_wq"] * inv_scale).astype(cd),
        "ea_bq": p["ea_bq"] * inv_scale,
        "ea_wkv": jnp.concatenate([p["ea_wk"], p["ea_wv"]], axis=1).astype(cd),
        "ea_bkv": jnp.concatenate([p["ea_bk"], p["ea_bv"]], axis=1),
        "ea_wo": p["ea_wo"].reshape(n_heads, dh, H).astype(cd),
        "ea_bo": p["ea_bo"],
        "ln2_g": p["ln2_g"], "ln2_b": p["ln2_b"],
        "pf_w1": p["pf_w1"].astype(cd), "pf_b1": p["pf_b1"],
        "pf_w2": p["pf_w2"].astype(cd), "pf_b2": p["pf_b2"],
        "ln3_g": p["ln3_g"], "ln3_b": p["ln3_b"],
    }


_WEIGHT_NAMES = ("sa_wqkv", "sa_bqkv", "sa_wo", "sa_bo", "ln1_g", "ln1_b",
                 "ea_wq", "ea_bq", "ea_wkv", "ea_bkv", "ea_wo", "ea_bo",
                 "ln2_g", "ln2_b",
                 "pf_w1", "pf_b1", "pf_w2", "pf_b2", "ln3_g", "ln3_b")


# ----------------------------- wrapper -----------------------------------------

def _weight_spec(arr, single_buffer):
    """Index-invariant block: never re-DMA'd, so single-buffer it when possible."""
    shape = tuple(arr.shape)
    idx = lambda b, _n=len(shape): (0,) * _n
    if single_buffer and hasattr(pl, "Buffered"):
        try:
            return pl.BlockSpec(shape, idx, pipeline_mode=pl.Buffered(1))
        except TypeError:
            pass
    return pl.BlockSpec(shape, idx)


def _pick_block_b(B, T, *, target_m=256, max_bb=8):
    """Batch elements per grid step: raise the matmul M dim toward target_m."""
    bb = max(1, min(B, max_bb, max(1, target_m // max(T, 1))))
    while B % bb:
        bb -= 1
    # keep >= 2 grid steps (v7x megacore / pipeline depth) unless that would
    # drop M below one MXU row tile
    while bb > 1 and B // bb < 2 and (bb // 2) * T >= 128 and B % (bb // 2) == 0:
        bb //= 2
    return bb


def decoder_layer(trg, src, fused, n_heads, *, block_b=None, approx_recip=False,
                  single_buffer_weights=True, vmem_limit_bytes=None):
    """Fused Pallas DecoderLayer.forward (masks=None, eval-mode dropout).

    `fused` must come from prepare_decoder_params (weights fused/cast once)."""
    B, T, H = trg.shape
    S = src.shape[1]
    bb = block_b if block_b is not None else _pick_block_b(B, T)
    assert B % bb == 0, "block_b must divide the batch"

    weights = tuple(fused[name] for name in _WEIGHT_NAMES)

    kernel = functools.partial(_decoder_layer_kernel, n_heads=n_heads,
                               approx=approx_recip)

    in_specs = [pl.BlockSpec((bb, T, H), lambda b: (b, 0, 0)),
                pl.BlockSpec((bb, S, H), lambda b: (b, 0, 0))]
    in_specs += [_weight_spec(w, single_buffer_weights) for w in weights]

    cp_kwargs = dict(dimension_semantics=("parallel",))
    if vmem_limit_bytes is not None:
        cp_kwargs["vmem_limit_bytes"] = vmem_limit_bytes
    compiler_params = _CompilerParams(**cp_kwargs) if _CompilerParams else None

    return pl.pallas_call(
        kernel,
        out_shape=jax.ShapeDtypeStruct((B, T, H), jnp.float32),
        grid=(B // bb,),
        in_specs=in_specs,
        out_specs=pl.BlockSpec((bb, T, H), lambda b: (b, 0, 0)),
        compiler_params=compiler_params,
    )(trg, src, *weights)


# ----------------------------- pure-JAX reference ----------------------------

def _ref_layernorm(x, gamma, beta):
    n = x.shape[-1]
    mean = jnp.mean(x, axis=-1, keepdims=True)
    diff = x - mean
    std = jnp.sqrt(jnp.sum(diff * diff, axis=-1, keepdims=True) / (n - 1))
    return gamma * (diff / (std + EPS)) + beta


def _ref_attention(xq, xkv, wq, bq, wk, bk, wv, bv, wo, bo, n_heads):
    B, T, H = xq.shape
    S = xkv.shape[1]
    dh = H // n_heads
    scale = math.sqrt(dh)
    q = (xq @ wq + bq).reshape(B, T, n_heads, dh).transpose(0, 2, 1, 3)
    k = (xkv @ wk + bk).reshape(B, S, n_heads, dh).transpose(0, 2, 1, 3)
    v = (xkv @ wv + bv).reshape(B, S, n_heads, dh).transpose(0, 2, 1, 3)
    energy = jnp.einsum("bhtd,bhsd->bhts", q, k) / scale
    attn = jax.nn.softmax(energy, axis=-1)
    ctx = jnp.einsum("bhts,bhsd->bhtd", attn, v).transpose(0, 2, 1, 3).reshape(B, T, H)
    return ctx @ wo + bo


def _ref_decoder_layer(trg, src, p, n_heads):
    trg = _ref_layernorm(
        trg + _ref_attention(trg, trg, p["sa_wq"], p["sa_bq"], p["sa_wk"], p["sa_bk"],
                             p["sa_wv"], p["sa_bv"], p["sa_wo"], p["sa_bo"], n_heads),
        p["ln1_g"], p["ln1_b"])
    trg = _ref_layernorm(
        trg + _ref_attention(trg, src, p["ea_wq"], p["ea_bq"], p["ea_wk"], p["ea_bk"],
                             p["ea_wv"], p["ea_bv"], p["ea_wo"], p["ea_bo"], n_heads),
        p["ln2_g"], p["ln2_b"])
    ff = jnp.maximum(trg @ p["pf_w1"] + p["pf_b1"], 0.0) @ p["pf_w2"] + p["pf_b2"]
    trg = _ref_layernorm(trg + ff, p["ln3_g"], p["ln3_b"])
    return trg


# ----------------------------- main -------------------------------------------

def _make_params(key, hid_dim, pf_dim):
    ks = jax.random.split(key, 12)
    def w(k, shape, scale=0.1):
        return (scale * jax.random.normal(k, shape)).astype(jnp.float32)
    params = {
        # attention weights stored as (in, out) so kernels do x @ W directly
        "sa_wq": w(ks[0], (hid_dim, hid_dim)), "sa_bq": w(ks[1], (1, hid_dim)),
        "sa_wk": w(ks[2], (hid_dim, hid_dim)), "sa_bk": w(ks[3], (1, hid_dim)),
        "sa_wv": w(ks[4], (hid_dim, hid_dim)), "sa_bv": w(ks[5], (1, hid_dim)),
        "sa_wo": w(ks[6], (hid_dim, hid_dim)), "sa_bo": w(ks[7], (1, hid_dim)),
        "ea_wq": w(ks[8], (hid_dim, hid_dim)), "ea_bq": w(ks[9], (1, hid_dim)),
        "ea_wk": w(ks[10], (hid_dim, hid_dim)), "ea_bk": w(ks[11], (1, hid_dim)),
    }
    ks2 = jax.random.split(jax.random.fold_in(key, 123), 10)
    params.update({
        "ea_wv": w(ks2[0], (hid_dim, hid_dim)), "ea_bv": w(ks2[1], (1, hid_dim)),
        "ea_wo": w(ks2[2], (hid_dim, hid_dim)), "ea_bo": w(ks2[3], (1, hid_dim)),
        # Conv1d(kernel=1) == per-token linear; store as (in, out)
        "pf_w1": w(ks2[4], (hid_dim, pf_dim)), "pf_b1": w(ks2[5], (1, pf_dim)),
        "pf_w2": w(ks2[6], (pf_dim, hid_dim)), "pf_b2": w(ks2[7], (1, hid_dim)),
        # LayerNorm params per module __init__: gamma = ones, beta = zeros
        "ln1_g": jnp.ones((1, hid_dim), jnp.float32), "ln1_b": jnp.zeros((1, hid_dim), jnp.float32),
        "ln2_g": jnp.ones((1, hid_dim), jnp.float32), "ln2_b": jnp.zeros((1, hid_dim), jnp.float32),
        "ln3_g": jnp.ones((1, hid_dim), jnp.float32), "ln3_b": jnp.zeros((1, hid_dim), jnp.float32),
    })
    return params


if __name__ == "__main__":
    B, T, S = 2, 8, 8
    hid_dim, n_heads, pf_dim = 32, 4, 64

    key = jax.random.PRNGKey(0)
    k_trg, k_src, k_par = jax.random.split(key, 3)
    trg = jax.random.normal(k_trg, (B, T, hid_dim), dtype=jnp.float32)
    src = jax.random.normal(k_src, (B, S, hid_dim), dtype=jnp.float32)
    params = _make_params(k_par, hid_dim, pf_dim)

    ref = _ref_decoder_layer(trg, src, params, n_heads)

    # Weight fusion / casts / 1/scale folding happen ONCE here (not per forward).
    fused_f32 = prepare_decoder_params(params, n_heads, compute_dtype=jnp.float32)
    fused_bf16 = prepare_decoder_params(params, n_heads, compute_dtype=jnp.bfloat16)

    def run(fused, **kw):
        return jax.block_until_ready(decoder_layer(trg, src, fused, n_heads, **kw))

    # exact-precision (f32) mode; fall back to default double-buffered weight
    # specs if pl.Buffered(1) is not supported by this jax/libtpu build.
    try:
        out = run(fused_f32, single_buffer_weights=True)
        single_buf = True
    except Exception:
        single_buf = False
        out = run(fused_f32, single_buffer_weights=False)

    assert out.shape == (B, T, hid_dim)
    assert jnp.allclose(out, ref, atol=1e-3, rtol=1e-3), "f32 kernel mismatch vs JAX reference"

    # perf mode (all chips: v5e/v6e/v7x MXUs take bf16 natively): bf16 MXU inputs,
    # f32 accumulation, f32 softmax/LN/residual epilogue, EUP approx reciprocals.
    out_bf16 = run(fused_bf16, approx_recip=True, single_buffer_weights=single_buf)
    assert jnp.allclose(out_bf16, ref, atol=1e-1, rtol=1e-1), "bf16 kernel mismatch vs JAX reference"

    print("KERNEL_OK")
</pallas_src>

<mosaic_0001>
module attributes {stable_mosaic.version = 11 : i64} {
  func.func @_decoder_layer_kernel(%arg0: i32, %arg1: memref<2x8x32xf32, #tpu.memory_space<vmem>>, %arg2: memref<2x8x32xf32, #tpu.memory_space<vmem>>, %arg3: memref<32x96xf32, #tpu.memory_space<vmem>>, %arg4: memref<1x96xf32, #tpu.memory_space<vmem>>, %arg5: memref<4x8x32xf32, #tpu.memory_space<vmem>>, %arg6: memref<1x32xf32, #tpu.memory_space<vmem>>, %arg7: memref<1x32xf32, #tpu.memory_space<vmem>>, %arg8: memref<1x32xf32, #tpu.memory_space<vmem>>, %arg9: memref<32x32xf32, #tpu.memory_space<vmem>>, %arg10: memref<1x32xf32, #tpu.memory_space<vmem>>, %arg11: memref<32x64xf32, #tpu.memory_space<vmem>>, %arg12: memref<1x64xf32, #tpu.memory_space<vmem>>, %arg13: memref<4x8x32xf32, #tpu.memory_space<vmem>>, %arg14: memref<1x32xf32, #tpu.memory_space<vmem>>, %arg15: memref<1x32xf32, #tpu.memory_space<vmem>>, %arg16: memref<1x32xf32, #tpu.memory_space<vmem>>, %arg17: memref<32x64xf32, #tpu.memory_space<vmem>>, %arg18: memref<1x64xf32, #tpu.memory_space<vmem>>, %arg19: memref<64x32xf32, #tpu.memory_space<vmem>>, %arg20: memref<1x32xf32, #tpu.memory_space<vmem>>, %arg21: memref<1x32xf32, #tpu.memory_space<vmem>>, %arg22: memref<1x32xf32, #tpu.memory_space<vmem>>, %arg23: memref<2x8x32xf32, #tpu.memory_space<vmem>>) attributes {dimension_semantics = [#tpu.dimension_semantics<parallel>], iteration_bounds = array<i64: 1>, scalar_prefetch = 0 : i64, scratch_operands = 0 : i64, tpu.core_type = #tpu.core_type<tc>, window_params = [{transform_indices = @transform_0, window_bounds = array<i64: 2, 8, 32>}, {transform_indices = @transform_1, window_bounds = array<i64: 2, 8, 32>}, {pipeline_mode = #tpu.pipeline_mode<synchronous>, transform_indices = @transform_2, window_bounds = array<i64: 32, 96>}, {pipeline_mode = #tpu.pipeline_mode<synchronous>, transform_indices = @transform_3, window_bounds = array<i64: 1, 96>}, {pipeline_mode = #tpu.pipeline_mode<synchronous>, transform_indices = @transform_4, window_bounds = array<i64: 4, 8, 32>}, {pipeline_mode = #tpu.pipeline_mode<synchronous>, transform_indices = @transform_5, window_bounds = array<i64: 1, 32>}, {pipeline_mode = #tpu.pipeline_mode<synchronous>, transform_indices = @transform_6, window_bounds = array<i64: 1, 32>}, {pipeline_mode = #tpu.pipeline_mode<synchronous>, transform_indices = @transform_7, window_bounds = array<i64: 1, 32>}, {pipeline_mode = #tpu.pipeline_mode<synchronous>, transform_indices = @transform_8, window_bounds = array<i64: 32, 32>}, {pipeline_mode = #tpu.pipeline_mode<synchronous>, transform_indices = @transform_9, window_bounds = array<i64: 1, 32>}, {pipeline_mode = #tpu.pipeline_mode<synchronous>, transform_indices = @transform_10, window_bounds = array<i64: 32, 64>}, {pipeline_mode = #tpu.pipeline_mode<synchronous>, transform_indices = @transform_11, window_bounds = array<i64: 1, 64>}, {pipeline_mode = #tpu.pipeline_mode<synchronous>, transform_indices = @transform_12, window_bounds = array<i64: 4, 8, 32>}, {pipeline_mode = #tpu.pipeline_mode<synchronous>, transform_indices = @transform_13, window_bounds = array<i64: 1, 32>}, {pipeline_mode = #tpu.pipeline_mode<synchronous>, transform_indices = @transform_14, window_bounds = array<i64: 1, 32>}, {pipeline_mode = #tpu.pipeline_mode<synchronous>, transform_indices = @transform_15, window_bounds = array<i64: 1, 32>}, {pipeline_mode = #tpu.pipeline_mode<synchronous>, transform_indices = @transform_16, window_bounds = array<i64: 32, 64>}, {pipeline_mode = #tpu.pipeline_mode<synchronous>, transform_indices = @transform_17, window_bounds = array<i64: 1, 64>}, {pipeline_mode = #tpu.pipeline_mode<synchronous>, transform_indices = @transform_18, window_bounds = array<i64: 64, 32>}, {pipeline_mode = #tpu.pipeline_mode<synchronous>, transform_indices = @transform_19, window_bounds = array<i64: 1, 32>}, {pipeline_mode = #tpu.pipeline_mode<synchronous>, transform_indices = @transform_20, window_bounds = array<i64: 1, 32>}, {pipeline_mode = #tpu.pipeline_mode<synchronous>, transform_indices = @transform_21, window_bounds = array<i64: 1, 32>}, {transform_indices = @transform_22, window_bounds = array<i64: 2, 8, 32>}]} {
    %c0 = arith.constant 0 : index
    %c0_0 = arith.constant 0 : index
    %c0_1 = arith.constant 0 : index
    %0 = vector.load %arg1[%c0, %c0_0, %c0_1] : memref<2x8x32xf32, #tpu.memory_space<vmem>>, vector<2x8x32xf32>
    %1 = vector.shape_cast %0 : vector<2x8x32xf32> to vector<16x32xf32>
    %c0_2 = arith.constant 0 : index
    %c0_3 = arith.constant 0 : index
    %c0_4 = arith.constant 0 : index
    %2 = vector.load %arg2[%c0_2, %c0_3, %c0_4] : memref<2x8x32xf32, #tpu.memory_space<vmem>>, vector<2x8x32xf32>
    %3 = vector.shape_cast %2 : vector<2x8x32xf32> to vector<16x32xf32>
    %c0_5 = arith.constant 0 : index
    %c0_6 = arith.constant 0 : index
    %4 = vector.load %arg3[%c0_5, %c0_6] : memref<32x96xf32, #tpu.memory_space<vmem>>, vector<32x96xf32>
    %cst = arith.constant dense<0.000000e+00> : vector<16x96xf32>
    %5 = tpu.matmul %1, %4, %cst {dimension_numbers = #tpu.dot_dimension_numbers<[1], [0], [0], [1], [0, 0, 1, 1], [], []>} : vector<16x32xf32>, vector<32x96xf32>, vector<16x96xf32> -> vector<16x96xf32>
    %c0_7 = arith.constant 0 : index
    %c0_8 = arith.constant 0 : index
    %6 = vector.load %arg4[%c0_7, %c0_8] : memref<1x96xf32, #tpu.memory_space<vmem>>, vector<1x96xf32>
    %7 = vector.broadcast %6 : vector<1x96xf32> to vector<16x96xf32>
    %8 = arith.addf %5, %7 : vector<16x96xf32>
    %9 = vector.extract_strided_slice %8 {offsets = [0, 0], sizes = [16, 32], strides = [1, 1]} : vector<16x96xf32> to vector<16x32xf32>
    %10 = vector.extract_strided_slice %8 {offsets = [0, 32], sizes = [16, 32], strides = [1, 1]} : vector<16x96xf32> to vector<16x32xf32>
    %11 = vector.extract_strided_slice %8 {offsets = [0, 64], sizes = [16, 32], strides = [1, 1]} : vector<16x96xf32> to vector<16x32xf32>
    %c0_9 = arith.constant 0 : index
    %c0_10 = arith.constant 0 : index
    %c0_11 = arith.constant 0 : index
    %12 = vector.load %arg5[%c0_9, %c0_10, %c0_11] : memref<4x8x32xf32, #tpu.memory_space<vmem>>, vector<4x8x32xf32>
    %c0_12 = arith.constant 0 : index
    %c0_13 = arith.constant 0 : index
    %13 = vector.load %arg6[%c0_12, %c0_13] : memref<1x32xf32, #tpu.memory_space<vmem>>, vector<1x32xf32>
    %14 = vector.extract_strided_slice %9 {offsets = [0, 0], sizes = [8, 32], strides = [1, 1]} : vector<16x32xf32> to vector<8x32xf32>
    %15 = vector.extract_strided_slice %14 {offsets = [0, 0], sizes = [8, 8], strides = [1, 1]} : vector<8x32xf32> to vector<8x8xf32>
    %16 = vector.shape_cast %15 : vector<8x8xf32> to vector<1x8x8xf32>
    %17 = vector.extract_strided_slice %14 {offsets = [0, 8], sizes = [8, 8], strides = [1, 1]} : vector<8x32xf32> to vector<8x8xf32>
    %18 = vector.shape_cast %17 : vector<8x8xf32> to vector<1x8x8xf32>
    %19 = vector.extract_strided_slice %14 {offsets = [0, 16], sizes = [8, 8], strides = [1, 1]} : vector<8x32xf32> to vector<8x8xf32>
    %20 = vector.shape_cast %19 : vector<8x8xf32> to vector<1x8x8xf32>
    %21 = vector.extract_strided_slice %14 {offsets = [0, 24], sizes = [8, 8], strides = [1, 1]} : vector<8x32xf32> to vector<8x8xf32>
    %22 = vector.shape_cast %21 : vector<8x8xf32> to vector<1x8x8xf32>
    %23 = tpu.concatenate %16, %18, %20, %22 in 0 : vector<1x8x8xf32>, vector<1x8x8xf32>, vector<1x8x8xf32>, vector<1x8x8xf32> -> vector<4x8x8xf32>
    %24 = vector.extract_strided_slice %10 {offsets = [0, 0], sizes = [8, 32], strides = [1, 1]} : vector<16x32xf32> to vector<8x32xf32>
    %25 = vector.extract_strided_slice %24 {offsets = [0, 0], sizes = [8, 8], strides = [1, 1]} : vector<8x32xf32> to vector<8x8xf32>
    %26 = vector.shape_cast %25 : vector<8x8xf32> to vector<1x8x8xf32>
    %27 = vector.extract_strided_slice %24 {offsets = [0, 8], sizes = [8, 8], strides = [1, 1]} : vector<8x32xf32> to vector<8x8xf32>
    %28 = vector.shape_cast %27 : vector<8x8xf32> to vector<1x8x8xf32>
    %29 = vector.extract_strided_slice %24 {offsets = [0, 16], sizes = [8, 8], strides = [1, 1]} : vector<8x32xf32> to vector<8x8xf32>
    %30 = vector.shape_cast %29 : vector<8x8xf32> to vector<1x8x8xf32>
    %31 = vector.extract_strided_slice %24 {offsets = [0, 24], sizes = [8, 8], strides = [1, 1]} : vector<8x32xf32> to vector<8x8xf32>
    %32 = vector.shape_cast %31 : vector<8x8xf32> to vector<1x8x8xf32>
    %33 = tpu.concatenate %26, %28, %30, %32 in 0 : vector<1x8x8xf32>, vector<1x8x8xf32>, vector<1x8x8xf32>, vector<1x8x8xf32> -> vector<4x8x8xf32>
    %34 = vector.extract_strided_slice %11 {offsets = [0, 0], sizes = [8, 32], strides = [1, 1]} : vector<16x32xf32> to vector<8x32xf32>
    %35 = vector.extract_strided_slice %34 {offsets = [0, 0], sizes = [8, 8], strides = [1, 1]} : vector<8x32xf32> to vector<8x8xf32>
    %36 = vector.shape_cast %35 : vector<8x8xf32> to vector<1x8x8xf32>
    %37 = vector.extract_strided_slice %34 {offsets = [0, 8], sizes = [8, 8], strides = [1, 1]} : vector<8x32xf32> to vector<8x8xf32>
    %38 = vector.shape_cast %37 : vector<8x8xf32> to vector<1x8x8xf32>
    %39 = vector.extract_strided_slice %34 {offsets = [0, 16], sizes = [8, 8], strides = [1, 1]} : vector<8x32xf32> to vector<8x8xf32>
    %40 = vector.shape_cast %39 : vector<8x8xf32> to vector<1x8x8xf32>
    %41 = vector.extract_strided_slice %34 {offsets = [0, 24], sizes = [8, 8], strides = [1, 1]} : vector<8x32xf32> to vector<8x8xf32>
    %42 = vector.shape_cast %41 : vector<8x8xf32> to vector<1x8x8xf32>
    %43 = tpu.concatenate %36, %38, %40, %42 in 0 : vector<1x8x8xf32>, vector<1x8x8xf32>, vector<1x8x8xf32>, vector<1x8x8xf32> -> vector<4x8x8xf32>
    "tpu.trace_start"() <{level = 10 : i32, message = "htd,hsd->hts"}> : () -> ()
    %cst_14 = arith.constant dense<0.000000e+00> : vector<4x8x8xf32>
    %44 = tpu.matmul %23, %33, %cst_14 {dimension_numbers = #tpu.dot_dimension_numbers<[2], [2], [1], [1], [0, 0, 0, 1, 1, 1], [0], [0]>} : vector<4x8x8xf32>, vector<4x8x8xf32>, vector<4x8x8xf32> -> vector<4x8x8xf32>
    "tpu.trace_stop"() : () -> ()
    %cst_15 = arith.constant dense<0xFF800000> : vector<4x8xf32>
    %45 = vector.multi_reduction <maximumf>, %44, %cst_15 [2] : vector<4x8x8xf32> to vector<4x8xf32>
    %46 = vector.shape_cast %45 : vector<4x8xf32> to vector<4x8x1xf32>
    %47 = vector.broadcast %46 : vector<4x8x1xf32> to vector<4x8x8xf32>
    %48 = arith.subf %44, %47 : vector<4x8x8xf32>
    %49 = math.exp %48 : vector<4x8x8xf32>
    %cst_16 = arith.constant dense<0.000000e+00> : vector<4x8xf32>
    %50 = vector.multi_reduction <add>, %49, %cst_16 [2] : vector<4x8x8xf32> to vector<4x8xf32>
    %51 = vector.shape_cast %50 : vector<4x8xf32> to vector<4x8x1xf32>
    %cst_17 = arith.constant 1.000000e+00 : f32
    %52 = vector.broadcast %cst_17 : f32 to vector<4x8x1xf32>
    %53 = arith.divf %52, %51 : vector<4x8x1xf32>
    %54 = vector.broadcast %53 : vector<4x8x1xf32> to vector<4x8x8xf32>
    %55 = arith.mulf %49, %54 : vector<4x8x8xf32>
    "tpu.trace_start"() <{level = 10 : i32, message = "hts,hsd->htd"}> : () -> ()
    %cst_18 = arith.constant dense<0.000000e+00> : vector<4x8x8xf32>
    %56 = tpu.matmul %55, %43, %cst_18 {dimension_numbers = #tpu.dot_dimension_numbers<[2], [1], [1], [2], [0, 0, 0, 1, 1, 2], [0], [0]>} : vector<4x8x8xf32>, vector<4x8x8xf32>, vector<4x8x8xf32> -> vector<4x8x8xf32>
    "tpu.trace_stop"() : () -> ()
    "tpu.trace_start"() <{level = 10 : i32, message = "htd,hdk->htk"}> : () -> ()
    %cst_19 = arith.constant dense<0.000000e+00> : vector<4x8x32xf32>
    %57 = tpu.matmul %56, %12, %cst_19 {dimension_numbers = #tpu.dot_dimension_numbers<[2], [1], [1], [2], [0, 0, 0, 1, 1, 2], [0], [0]>} : vector<4x8x8xf32>, vector<4x8x32xf32>, vector<4x8x32xf32> -> vector<4x8x32xf32>
    "tpu.trace_stop"() : () -> ()
    %cst_20 = arith.constant dense<0.000000e+00> : vector<8x32xf32>
    %58 = vector.multi_reduction <add>, %57, %cst_20 [0] : vector<4x8x32xf32> to vector<8x32xf32>
    %59 = vector.extract_strided_slice %9 {offsets = [8, 0], sizes = [8, 32], strides = [1, 1]} : vector<16x32xf32> to vector<8x32xf32>
    %60 = vector.extract_strided_slice %59 {offsets = [0, 0], sizes = [8, 8], strides = [1, 1]} : vector<8x32xf32> to vector<8x8xf32>
    %61 = vector.shape_cast %60 : vector<8x8xf32> to vector<1x8x8xf32>
    %62 = vector.extract_strided_slice %59 {offsets = [0, 8], sizes = [8, 8], strides = [1, 1]} : vector<8x32xf32> to vector<8x8xf32>
    %63 = vector.shape_cast %62 : vector<8x8xf32> to vector<1x8x8xf32>
    %64 = vector.extract_strided_slice %59 {offsets = [0, 16], sizes = [8, 8], strides = [1, 1]} : vector<8x32xf32> to vector<8x8xf32>
    %65 = vector.shape_cast %64 : vector<8x8xf32> to vector<1x8x8xf32>
    %66 = vector.extract_strided_slice %59 {offsets = [0, 24], sizes = [8, 8], strides = [1, 1]} : vector<8x32xf32> to vector<8x8xf32>
    %67 = vector.shape_cast %66 : vector<8x8xf32> to vector<1x8x8xf32>
    %68 = tpu.concatenate %61, %63, %65, %67 in 0 : vector<1x8x8xf32>, vector<1x8x8xf32>, vector<1x8x8xf32>, vector<1x8x8xf32> -> vector<4x8x8xf32>
    %69 = vector.extract_strided_slice %10 {offsets = [8, 0], sizes = [8, 32], strides = [1, 1]} : vector<16x32xf32> to vector<8x32xf32>
    %70 = vector.extract_strided_slice %69 {offsets = [0, 0], sizes = [8, 8], strides = [1, 1]} : vector<8x32xf32> to vector<8x8xf32>
    %71 = vector.shape_cast %70 : vector<8x8xf32> to vector<1x8x8xf32>
    %72 = vector.extract_strided_slice %69 {offsets = [0, 8], sizes = [8, 8], strides = [1, 1]} : vector<8x32xf32> to vector<8x8xf32>
    %73 = vector.shape_cast %72 : vector<8x8xf32> to vector<1x8x8xf32>
    %74 = vector.extract_strided_slice %69 {offsets = [0, 16], sizes = [8, 8], strides = [1, 1]} : vector<8x32xf32> to vector<8x8xf32>
    %75 = vector.shape_cast %74 : vector<8x8xf32> to vector<1x8x8xf32>
    %76 = vector.extract_strided_slice %69 {offsets = [0, 24], sizes = [8, 8], strides = [1, 1]} : vector<8x32xf32> to vector<8x8xf32>
    %77 = vector.shape_cast %76 : vector<8x8xf32> to vector<1x8x8xf32>
    %78 = tpu.concatenate %71, %73, %75, %77 in 0 : vector<1x8x8xf32>, vector<1x8x8xf32>, vector<1x8x8xf32>, vector<1x8x8xf32> -> vector<4x8x8xf32>
    %79 = vector.extract_strided_slice %11 {offsets = [8, 0], sizes = [8, 32], strides = [1, 1]} : vector<16x32xf32> to vector<8x32xf32>
    %80 = vector.extract_strided_slice %79 {offsets = [0, 0], sizes = [8, 8], strides = [1, 1]} : vector<8x32xf32> to vector<8x8xf32>
    %81 = vector.shape_cast %80 : vector<8x8xf32> to vector<1x8x8xf32>
    %82 = vector.extract_strided_slice %79 {offsets = [0, 8], sizes = [8, 8], strides = [1, 1]} : vector<8x32xf32> to vector<8x8xf32>
    %83 = vector.shape_cast %82 : vector<8x8xf32> to vector<1x8x8xf32>
    %84 = vector.extract_strided_slice %79 {offsets = [0, 16], sizes = [8, 8], strides = [1, 1]} : vector<8x32xf32> to vector<8x8xf32>
    %85 = vector.shape_cast %84 : vector<8x8xf32> to vector<1x8x8xf32>
    %86 = vector.extract_strided_slice %79 {offsets = [0, 24], sizes = [8, 8], strides = [1, 1]} : vector<8x32xf32> to vector<8x8xf32>
    %87 = vector.shape_cast %86 : vector<8x8xf32> to vector<1x8x8xf32>
    %88 = tpu.concatenate %81, %83, %85, %87 in 0 : vector<1x8x8xf32>, vector<1x8x8xf32>, vector<1x8x8xf32>, vector<1x8x8xf32> -> vector<4x8x8xf32>
    "tpu.trace_start"() <{level = 10 : i32, message = "htd,hsd->hts"}> : () -> ()
    %cst_21 = arith.constant dense<0.000000e+00> : vector<4x8x8xf32>
    %89 = tpu.matmul %68, %78, %cst_21 {dimension_numbers = #tpu.dot_dimension_numbers<[2], [2], [1], [1], [0, 0, 0, 1, 1, 1], [0], [0]>} : vector<4x8x8xf32>, vector<4x8x8xf32>, vector<4x8x8xf32> -> vector<4x8x8xf32>
    "tpu.trace_stop"() : () -> ()
    %cst_22 = arith.constant dense<0xFF800000> : vector<4x8xf32>
    %90 = vector.multi_reduction <maximumf>, %89, %cst_22 [2] : vector<4x8x8xf32> to vector<4x8xf32>
    %91 = vector.shape_cast %90 : vector<4x8xf32> to vector<4x8x1xf32>
    %92 = vector.broadcast %91 : vector<4x8x1xf32> to vector<4x8x8xf32>
    %93 = arith.subf %89, %92 : vector<4x8x8xf32>
    %94 = math.exp %93 : vector<4x8x8xf32>
    %cst_23 = arith.constant dense<0.000000e+00> : vector<4x8xf32>
    %95 = vector.multi_reduction <add>, %94, %cst_23 [2] : vector<4x8x8xf32> to vector<4x8xf32>
    %96 = vector.shape_cast %95 : vector<4x8xf32> to vector<4x8x1xf32>
    %cst_24 = arith.constant 1.000000e+00 : f32
    %97 = vector.broadcast %cst_24 : f32 to vector<4x8x1xf32>
    %98 = arith.divf %97, %96 : vector<4x8x1xf32>
    %99 = vector.broadcast %98 : vector<4x8x1xf32> to vector<4x8x8xf32>
    %100 = arith.mulf %94, %99 : vector<4x8x8xf32>
    "tpu.trace_start"() <{level = 10 : i32, message = "hts,hsd->htd"}> : () -> ()
    %cst_25 = arith.constant dense<0.000000e+00> : vector<4x8x8xf32>
    %101 = tpu.matmul %100, %88, %cst_25 {dimension_numbers = #tpu.dot_dimension_numbers<[2], [1], [1], [2], [0, 0, 0, 1, 1, 2], [0], [0]>} : vector<4x8x8xf32>, vector<4x8x8xf32>, vector<4x8x8xf32> -> vector<4x8x8xf32>
    "tpu.trace_stop"() : () -> ()
    "tpu.trace_start"() <{level = 10 : i32, message = "htd,hdk->htk"}> : () -> ()
    %cst_26 = arith.constant dense<0.000000e+00> : vector<4x8x32xf32>
    %102 = tpu.matmul %101, %12, %cst_26 {dimension_numbers = #tpu.dot_dimension_numbers<[2], [1], [1], [2], [0, 0, 0, 1, 1, 2], [0], [0]>} : vector<4x8x8xf32>, vector<4x8x32xf32>, vector<4x8x32xf32> -> vector<4x8x32xf32>
    "tpu.trace_stop"() : () -> ()
    %cst_27 = arith.constant dense<0.000000e+00> : vector<8x32xf32>
    %103 = vector.multi_reduction <add>, %102, %cst_27 [0] : vector<4x8x32xf32> to vector<8x32xf32>
    %104 = tpu.concatenate %58, %103 in 0 : vector<8x32xf32>, vector<8x32xf32> -> vector<16x32xf32>
    %105 = vector.broadcast %13 : vector<1x32xf32> to vector<16x32xf32>
    %106 = arith.addf %104, %105 : vector<16x32xf32>
    %107 = arith.addf %1, %106 : vector<16x32xf32>
    %c0_28 = arith.constant 0 : index
    %c0_29 = arith.constant 0 : index
    %108 = vector.load %arg7[%c0_28, %c0_29] : memref<1x32xf32, #tpu.memory_space<vmem>>, vector<1x32xf32>
    %c0_30 = arith.constant 0 : index
    %c0_31 = arith.constant 0 : index
    %109 = vector.load %arg8[%c0_30, %c0_31] : memref<1x32xf32, #tpu.memory_space<vmem>>, vector<1x32xf32>
    %cst_32 = arith.constant dense<0.000000e+00> : vector<16xf32>
    %110 = vector.multi_reduction <add>, %107, %cst_32 [1] : vector<16x32xf32> to vector<16xf32>
    %111 = vector.shape_cast %110 : vector<16xf32> to vector<16x1xf32>
    %cst_33 = arith.constant 3.200000e+01 : f32
    %112 = vector.broadcast %cst_33 : f32 to vector<16x1xf32>
    %113 = arith.divf %111, %112 : vector<16x1xf32>
    %114 = vector.broadcast %113 : vector<16x1xf32> to vector<16x32xf32>
    %115 = arith.subf %107, %114 : vector<16x32xf32>
    %116 = arith.mulf %115, %115 : vector<16x32xf32>
    %cst_34 = arith.constant dense<0.000000e+00> : vector<16xf32>
    %117 = vector.multi_reduction <add>, %116, %cst_34 [1] : vector<16x32xf32> to vector<16xf32>
    %118 = vector.shape_cast %117 : vector<16xf32> to vector<16x1xf32>
    %cst_35 = arith.constant 0.0322580636 : f32
    %119 = vector.broadcast %cst_35 : f32 to vector<16x1xf32>
    %120 = arith.mulf %118, %119 : vector<16x1xf32>
    %121 = math.sqrt %120 : vector<16x1xf32>
    %cst_36 = arith.constant 9.99999996E-13 : f32
    %122 = vector.broadcast %cst_36 : f32 to vector<16x1xf32>
    %123 = arith.addf %121, %122 : vector<16x1xf32>
    %cst_37 = arith.constant 1.000000e+00 : f32
    %124 = vector.broadcast %cst_37 : f32 to vector<16x1xf32>
    %125 = arith.divf %124, %123 : vector<16x1xf32>
    %126 = vector.broadcast %125 : vector<16x1xf32> to vector<16x32xf32>
    %127 = arith.mulf %115, %126 : vector<16x32xf32>
    %128 = vector.broadcast %108 : vector<1x32xf32> to vector<16x32xf32>
    %129 = arith.mulf %128, %127 : vector<16x32xf32>
    %130 = vector.broadcast %109 : vector<1x32xf32> to vector<16x32xf32>
    %131 = arith.addf %129, %130 : vector<16x32xf32>
    %c0_38 = arith.constant 0 : index
    %c0_39 = arith.constant 0 : index
    %132 = vector.load %arg9[%c0_38, %c0_39] : memref<32x32xf32, #tpu.memory_space<vmem>>, vector<32x32xf32>
    %cst_40 = arith.constant dense<0.000000e+00> : vector<16x32xf32>
    %133 = tpu.matmul %131, %132, %cst_40 {dimension_numbers = #tpu.dot_dimension_numbers<[1], [0], [0], [1], [0, 0, 1, 1], [], []>} : vector<16x32xf32>, vector<32x32xf32>, vector<16x32xf32> -> vector<16x32xf32>
    %c0_41 = arith.constant 0 : index
    %c0_42 = arith.constant 0 : index
    %134 = vector.load %arg10[%c0_41, %c0_42] : memref<1x32xf32, #tpu.memory_space<vmem>>, vector<1x32xf32>
    %135 = vector.broadcast %134 : vector<1x32xf32> to vector<16x32xf32>
    %136 = arith.addf %133, %135 : vector<16x32xf32>
    %c0_43 = arith.constant 0 : index
    %c0_44 = arith.constant 0 : index
    %137 = vector.load %arg11[%c0_43, %c0_44] : memref<32x64xf32, #tpu.memory_space<vmem>>, vector<32x64xf32>
    %cst_45 = arith.constant dense<0.000000e+00> : vector<16x64xf32>
    %138 = tpu.matmul %3, %137, %cst_45 {dimension_numbers = #tpu.dot_dimension_numbers<[1], [0], [0], [1], [0, 0, 1, 1], [], []>} : vector<16x32xf32>, vector<32x64xf32>, vector<16x64xf32> -> vector<16x64xf32>
    %c0_46 = arith.constant 0 : index
    %c0_47 = arith.constant 0 : index
    %139 = vector.load %arg12[%c0_46, %c0_47] : memref<1x64xf32, #tpu.memory_space<vmem>>, vector<1x64xf32>
    %140 = vector.broadcast %139 : vector<1x64xf32> to vector<16x64xf32>
    %141 = arith.addf %138, %140 : vector<16x64xf32>
    %142 = vector.extract_strided_slice %141 {offsets = [0, 0], sizes = [16, 32], strides = [1, 1]} : vector<16x64xf32> to vector<16x32xf32>
    %143 = vector.extract_strided_slice %141 {offsets = [0, 32], sizes = [16, 32], strides = [1, 1]} : vector<16x64xf32> to vector<16x32xf32>
    %c0_48 = arith.constant 0 : index
    %c0_49 = arith.constant 0 : index
    %c0_50 = arith.constant 0 : index
    %144 = vector.load %arg13[%c0_48, %c0_49, %c0_50] : memref<4x8x32xf32, #tpu.memory_space<vmem>>, vector<4x8x32xf32>
    %c0_51 = arith.constant 0 : index
    %c0_52 = arith.constant 0 : index
    %145 = vector.load %arg14[%c0_51, %c0_52] : memref<1x32xf32, #tpu.memory_space<vmem>>, vector<1x32xf32>
    %146 = vector.extract_strided_slice %136 {offsets = [0, 0], sizes = [8, 32], strides = [1, 1]} : vector<16x32xf32> to vector<8x32xf32>
    %147 = vector.extract_strided_slice %146 {offsets = [0, 0], sizes = [8, 8], strides = [1, 1]} : vector<8x32xf32> to vector<8x8xf32>
    %148 = vector.shape_cast %147 : vector<8x8xf32> to vector<1x8x8xf32>
    %149 = vector.extract_strided_slice %146 {offsets = [0, 8], sizes = [8, 8], strides = [1, 1]} : vector<8x32xf32> to vector<8x8xf32>
    %150 = vector.shape_cast %149 : vector<8x8xf32> to vector<1x8x8xf32>
    %151 = vector.extract_strided_slice %146 {offsets = [0, 16], sizes = [8, 8], strides = [1, 1]} : vector<8x32xf32> to vector<8x8xf32>
    %152 = vector.shape_cast %151 : vector<8x8xf32> to vector<1x8x8xf32>
    %153 = vector.extract_strided_slice %146 {offsets = [0, 24], sizes = [8, 8], strides = [1, 1]} : vector<8x32xf32> to vector<8x8xf32>
    %154 = vector.shape_cast %153 : vector<8x8xf32> to vector<1x8x8xf32>
    %155 = tpu.concatenate %148, %150, %152, %154 in 0 : vector<1x8x8xf32>, vector<1x8x8xf32>, vector<1x8x8xf32>, vector<1x8x8xf32> -> vector<4x8x8xf32>
    %156 = vector.extract_strided_slice %142 {offsets = [0, 0], sizes = [8, 32], strides = [1, 1]} : vector<16x32xf32> to vector<8x32xf32>
    %157 = vector.extract_strided_slice %156 {offsets = [0, 0], sizes = [8, 8], strides = [1, 1]} : vector<8x32xf32> to vector<8x8xf32>
    %158 = vector.shape_cast %157 : vector<8x8xf32> to vector<1x8x8xf32>
    %159 = vector.extract_strided_slice %156 {offsets = [0, 8], sizes = [8, 8], strides = [1, 1]} : vector<8x32xf32> to vector<8x8xf32>
    %160 = vector.shape_cast %159 : vector<8x8xf32> to vector<1x8x8xf32>
    %161 = vector.extract_strided_slice %156 {offsets = [0, 16], sizes = [8, 8], strides = [1, 1]} : vector<8x32xf32> to vector<8x8xf32>
    %162 = vector.shape_cast %161 : vector<8x8xf32> to vector<1x8x8xf32>
    %163 = vector.extract_strided_slice %156 {offsets = [0, 24], sizes = [8, 8], strides = [1, 1]} : vector<8x32xf32> to vector<8x8xf32>
    %164 = vector.shape_cast %163 : vector<8x8xf32> to vector<1x8x8xf32>
    %165 = tpu.concatenate %158, %160, %162, %164 in 0 : vector<1x8x8xf32>, vector<1x8x8xf32>, vector<1x8x8xf32>, vector<1x8x8xf32> -> vector<4x8x8xf32>
    %166 = vector.extract_strided_slice %143 {offsets = [0, 0], sizes = [8, 32], strides = [1, 1]} : vector<16x32xf32> to vector<8x32xf32>
    %167 = vector.extract_strided_slice %166 {offsets = [0, 0], sizes = [8, 8], strides = [1, 1]} : vector<8x32xf32> to vector<8x8xf32>
    %168 = vector.shape_cast %167 : vector<8x8xf32> to vector<1x8x8xf32>
    %169 = vector.extract_strided_slice %166 {offsets = [0, 8], sizes = [8, 8], strides = [1, 1]} : vector<8x32xf32> to vector<8x8xf32>
    %170 = vector.shape_cast %169 : vector<8x8xf32> to vector<1x8x8xf32>
    %171 = vector.extract_strided_slice %166 {offsets = [0, 16], sizes = [8, 8], strides = [1, 1]} : vector<8x32xf32> to vector<8x8xf32>
    %172 = vector.shape_cast %171 : vector<8x8xf32> to vector<1x8x8xf32>
    %173 = vector.extract_strided_slice %166 {offsets = [0, 24], sizes = [8, 8], strides = [1, 1]} : vector<8x32xf32> to vector<8x8xf32>
    %174 = vector.shape_cast %173 : vector<8x8xf32> to vector<1x8x8xf32>
    %175 = tpu.concatenate %168, %170, %172, %174 in 0 : vector<1x8x8xf32>, vector<1x8x8xf32>, vector<1x8x8xf32>, vector<1x8x8xf32> -> vector<4x8x8xf32>
    "tpu.trace_start"() <{level = 10 : i32, message = "htd,hsd->hts"}> : () -> ()
    %cst_53 = arith.constant dense<0.000000e+00> : vector<4x8x8xf32>
    %176 = tpu.matmul %155, %165, %cst_53 {dimension_numbers = #tpu.dot_dimension_numbers<[2], [2], [1], [1], [0, 0, 0, 1, 1, 1], [0], [0]>} : vector<4x8x8xf32>, vector<4x8x8xf32>, vector<4x8x8xf32> -> vector<4x8x8xf32>
    "tpu.trace_stop"() : () -> ()
    %cst_54 = arith.constant dense<0xFF800000> : vector<4x8xf32>
    %177 = vector.multi_reduction <maximumf>, %176, %cst_54 [2] : vector<4x8x8xf32> to vector<4x8xf32>
    %178 = vector.shape_cast %177 : vector<4x8xf32> to vector<4x8x1xf32>
    %179 = vector.broadcast %178 : vector<4x8x1xf32> to vector<4x8x8xf32>
    %180 = arith.subf %176, %179 : vector<4x8x8xf32>
    %181 = math.exp %180 : vector<4x8x8xf32>
    %cst_55 = arith.constant dense<0.000000e+00> : vector<4x8xf32>
    %182 = vector.multi_reduction <add>, %181, %cst_55 [2] : vector<4x8x8xf32> to vector<4x8xf32>
    %183 = vector.shape_cast %182 : vector<4x8xf32> to vector<4x8x1xf32>
    %cst_56 = arith.constant 1.000000e+00 : f32
    %184 = vector.broadcast %cst_56 : f32 to vector<4x8x1xf32>
    %185 = arith.divf %184, %183 : vector<4x8x1xf32>
    %186 = vector.broadcast %185 : vector<4x8x1xf32> to vector<4x8x8xf32>
    %187 = arith.mulf %181, %186 : vector<4x8x8xf32>
    "tpu.trace_start"() <{level = 10 : i32, message = "hts,hsd->htd"}> : () -> ()
    %cst_57 = arith.constant dense<0.000000e+00> : vector<4x8x8xf32>
    %188 = tpu.matmul %187, %175, %cst_57 {dimension_numbers = #tpu.dot_dimension_numbers<[2], [1], [1], [2], [0, 0, 0, 1, 1, 2], [0], [0]>} : vector<4x8x8xf32>, vector<4x8x8xf32>, vector<4x8x8xf32> -> vector<4x8x8xf32>
    "tpu.trace_stop"() : () -> ()
    "tpu.trace_start"() <{level = 10 : i32, message = "htd,hdk->htk"}> : () -> ()
    %cst_58 = arith.constant dense<0.000000e+00> : vector<4x8x32xf32>
    %189 = tpu.matmul %188, %144, %cst_58 {dimension_numbers = #tpu.dot_dimension_numbers<[2], [1], [1], [2], [0, 0, 0, 1, 1, 2], [0], [0]>} : vector<4x8x8xf32>, vector<4x8x32xf32>, vector<4x8x32xf32> -> vector<4x8x32xf32>
    "tpu.trace_stop"() : () -> ()
    %cst_59 = arith.constant dense<0.000000e+00> : vector<8x32xf32>
    %190 = vector.multi_reduction <add>, %189, %cst_59 [0] : vector<4x8x32xf32> to vector<8x32xf32>
    %191 = vector.extract_strided_slice %136 {offsets = [8, 0], sizes = [8, 32], strides = [1, 1]} : vector<16x32xf32> to vector<8x32xf32>
    %192 = vector.extract_strided_slice %191 {offsets = [0, 0], sizes = [8, 8], strides = [1, 1]} : vector<8x32xf32> to vector<8x8xf32>
    %193 = vector.shape_cast %192 : vector<8x8xf32> to vector<1x8x8xf32>
    %194 = vector.extract_strided_slice %191 {offsets = [0, 8], sizes = [8, 8], strides = [1, 1]} : vector<8x32xf32> to vector<8x8xf32>
    %195 = vector.shape_cast %194 : vector<8x8xf32> to vector<1x8x8xf32>
    %196 = vector.extract_strided_slice %191 {offsets = [0, 16], sizes = [8, 8], strides = [1, 1]} : vector<8x32xf32> to vector<8x8xf32>
    %197 = vector.shape_cast %196 : vector<8x8xf32> to vector<1x8x8xf32>
    %198 = vector.extract_strided_slice %191 {offsets = [0, 24], sizes = [8, 8], strides = [1, 1]} : vector<8x32xf32> to vector<8x8xf32>
    %199 = vector.shape_cast %198 : vector<8x8xf32> to vector<1x8x8xf32>
    %200 = tpu.concatenate %193, %195, %197, %199 in 0 : vector<1x8x8xf32>, vector<1x8x8xf32>, vector<1x8x8xf32>, vector<1x8x8xf32> -> vector<4x8x8xf32>
    %201 = vector.extract_strided_slice %142 {offsets = [8, 0], sizes = [8, 32], strides = [1, 1]} : vector<16x32xf32> to vector<8x32xf32>
    %202 = vector.extract_strided_slice %201 {offsets = [0, 0], sizes = [8, 8], strides = [1, 1]} : vector<8x32xf32> to vector<8x8xf32>
    %203 = vector.shape_cast %202 : vector<8x8xf32> to vector<1x8x8xf32>
    %204 = vector.extract_strided_slice %201 {offsets = [0, 8], sizes = [8, 8], strides = [1, 1]} : vector<8x32xf32> to vector<8x8xf32>
    %205 = vector.shape_cast %204 : vector<8x8xf32> to vector<1x8x8xf32>
    %206 = vector.extract_strided_slice %201 {offsets = [0, 16], sizes = [8, 8], strides = [1, 1]} : vector<8x32xf32> to vector<8x8xf32>
    %207 = vector.shape_cast %206 : vector<8x8xf32> to vector<1x8x8xf32>
    %208 = vector.extract_strided_slice %201 {offsets = [0, 24], sizes = [8, 8], strides = [1, 1]} : vector<8x32xf32> to vector<8x8xf32>
    %209 = vector.shape_cast %208 : vector<8x8xf32> to vector<1x8x8xf32>
    %210 = tpu.concatenate %203, %205, %207, %209 in 0 : vector<1x8x8xf32>, vector<1x8x8xf32>, vector<1x8x8xf32>, vector<1x8x8xf32> -> vector<4x8x8xf32>
    %211 = vector.extract_strided_slice %143 {offsets = [8, 0], sizes = [8, 32], strides = [1, 1]} : vector<16x32xf32> to vector<8x32xf32>
    %212 = vector.extract_strided_slice %211 {offsets = [0, 0], sizes = [8, 8], strides = [1, 1]} : vector<8x32xf32> to vector<8x8xf32>
    %213 = vector.shape_cast %212 : vector<8x8xf32> to vector<1x8x8xf32>
    %214 = vector.extract_strided_slice %211 {offsets = [0, 8], sizes = [8, 8], strides = [1, 1]} : vector<8x32xf32> to vector<8x8xf32>
    %215 = vector.shape_cast %214 : vector<8x8xf32> to vector<1x8x8xf32>
    %216 = vector.extract_strided_slice %211 {offsets = [0, 16], sizes = [8, 8], strides = [1, 1]} : vector<8x32xf32> to vector<8x8xf32>
    %217 = vector.shape_cast %216 : vector<8x8xf32> to vector<1x8x8xf32>
    %218 = vector.extract_strided_slice %211 {offsets = [0, 24], sizes = [8, 8], strides = [1, 1]} : vector<8x32xf32> to vector<8x8xf32>
    %219 = vector.shape_cast %218 : vector<8x8xf32> to vector<1x8x8xf32>
    %220 = tpu.concatenate %213, %215, %217, %219 in 0 : vector<1x8x8xf32>, vector<1x8x8xf32>, vector<1x8x8xf32>, vector<1x8x8xf32> -> vector<4x8x8xf32>
    "tpu.trace_start"() <{level = 10 : i32, message = "htd,hsd->hts"}> : () -> ()
    %cst_60 = arith.constant dense<0.000000e+00> : vector<4x8x8xf32>
    %221 = tpu.matmul %200, %210, %cst_60 {dimension_numbers = #tpu.dot_dimension_numbers<[2], [2], [1], [1], [0, 0, 0, 1, 1, 1], [0], [0]>} : vector<4x8x8xf32>, vector<4x8x8xf32>, vector<4x8x8xf32> -> vector<4x8x8xf32>
    "tpu.trace_stop"() : () -> ()
    %cst_61 = arith.constant dense<0xFF800000> : vector<4x8xf32>
    %222 = vector.multi_reduction <maximumf>, %221, %cst_61 [2] : vector<4x8x8xf32> to vector<4x8xf32>
    %223 = vector.shape_cast %222 : vector<4x8xf32> to vector<4x8x1xf32>
    %224 = vector.broadcast %223 : vector<4x8x1xf32> to vector<4x8x8xf32>
    %225 = arith.subf %221, %224 : vector<4x8x8xf32>
    %226 = math.exp %225 : vector<4x8x8xf32>
    %cst_62 = arith.constant dense<0.000000e+00> : vector<4x8xf32>
    %227 = vector.multi_reduction <add>, %226, %cst_62 [2] : vector<4x8x8xf32> to vector<4x8xf32>
    %228 = vector.shape_cast %227 : vector<4x8xf32> to vector<4x8x1xf32>
    %cst_63 = arith.constant 1.000000e+00 : f32
    %229 = vector.broadcast %cst_63 : f32 to vector<4x8x1xf32>
    %230 = arith.divf %229, %228 : vector<4x8x1xf32>
    %231 = vector.broadcast %230 : vector<4x8x1xf32> to vector<4x8x8xf32>
    %232 = arith.mulf %226, %231 : vector<4x8x8xf32>
    "tpu.trace_start"() <{level = 10 : i32, message = "hts,hsd->htd"}> : () -> ()
    %cst_64 = arith.constant dense<0.000000e+00> : vector<4x8x8xf32>
    %233 = tpu.matmul %232, %220, %cst_64 {dimension_numbers = #tpu.dot_dimension_numbers<[2], [1], [1], [2], [0, 0, 0, 1, 1, 2], [0], [0]>} : vector<4x8x8xf32>, vector<4x8x8xf32>, vector<4x8x8xf32> -> vector<4x8x8xf32>
    "tpu.trace_stop"() : () -> ()
    "tpu.trace_start"() <{level = 10 : i32, message = "htd,hdk->htk"}> : () -> ()
    %cst_65 = arith.constant dense<0.000000e+00> : vector<4x8x32xf32>
    %234 = tpu.matmul %233, %144, %cst_65 {dimension_numbers = #tpu.dot_dimension_numbers<[2], [1], [1], [2], [0, 0, 0, 1, 1, 2], [0], [0]>} : vector<4x8x8xf32>, vector<4x8x32xf32>, vector<4x8x32xf32> -> vector<4x8x32xf32>
    "tpu.trace_stop"() : () -> ()
    %cst_66 = arith.constant dense<0.000000e+00> : vector<8x32xf32>
    %235 = vector.multi_reduction <add>, %234, %cst_66 [0] : vector<4x8x32xf32> to vector<8x32xf32>
    %236 = tpu.concatenate %190, %235 in 0 : vector<8x32xf32>, vector<8x32xf32> -> vector<16x32xf32>
    %237 = vector.broadcast %145 : vector<1x32xf32> to vector<16x32xf32>
    %238 = arith.addf %236, %237 : vector<16x32xf32>
    %239 = arith.addf %131, %238 : vector<16x32xf32>
    %c0_67 = arith.constant 0 : index
    %c0_68 = arith.constant 0 : index
    %240 = vector.load %arg15[%c0_67, %c0_68] : memref<1x32xf32, #tpu.memory_space<vmem>>, vector<1x32xf32>
    %c0_69 = arith.constant 0 : index
    %c0_70 = arith.constant 0 : index
    %241 = vector.load %arg16[%c0_69, %c0_70] : memref<1x32xf32, #tpu.memory_space<vmem>>, vector<1x32xf32>
    %cst_71 = arith.constant dense<0.000000e+00> : vector<16xf32>
    %242 = vector.multi_reduction <add>, %239, %cst_71 [1] : vector<16x32xf32> to vector<16xf32>
    %243 = vector.shape_cast %242 : vector<16xf32> to vector<16x1xf32>
    %cst_72 = arith.constant 3.200000e+01 : f32
    %244 = vector.broadcast %cst_72 : f32 to vector<16x1xf32>
    %245 = arith.divf %243, %244 : vector<16x1xf32>
    %246 = vector.broadcast %245 : vector<16x1xf32> to vector<16x32xf32>
    %247 = arith.subf %239, %246 : vector<16x32xf32>
    %248 = arith.mulf %247, %247 : vector<16x32xf32>
    %cst_73 = arith.constant dense<0.000000e+00> : vector<16xf32>
    %249 = vector.multi_reduction <add>, %248, %cst_73 [1] : vector<16x32xf32> to vector<16xf32>
    %250 = vector.shape_cast %249 : vector<16xf32> to vector<16x1xf32>
    %cst_74 = arith.constant 0.0322580636 : f32
    %251 = vector.broadcast %cst_74 : f32 to vector<16x1xf32>
    %252 = arith.mulf %250, %251 : vector<16x1xf32>
    %253 = math.sqrt %252 : vector<16x1xf32>
    %cst_75 = arith.constant 9.99999996E-13 : f32
    %254 = vector.broadcast %cst_75 : f32 to vector<16x1xf32>
    %255 = arith.addf %253, %254 : vector<16x1xf32>
    %cst_76 = arith.constant 1.000000e+00 : f32
    %256 = vector.broadcast %cst_76 : f32 to vector<16x1xf32>
    %257 = arith.divf %256, %255 : vector<16x1xf32>
    %258 = vector.broadcast %257 : vector<16x1xf32> to vector<16x32xf32>
    %259 = arith.mulf %247, %258 : vector<16x32xf32>
    %260 = vector.broadcast %240 : vector<1x32xf32> to vector<16x32xf32>
    %261 = arith.mulf %260, %259 : vector<16x32xf32>
    %262 = vector.broadcast %241 : vector<1x32xf32> to vector<16x32xf32>
    %263 = arith.addf %261, %262 : vector<16x32xf32>
    %c0_77 = arith.constant 0 : index
    %c0_78 = arith.constant 0 : index
    %264 = vector.load %arg17[%c0_77, %c0_78] : memref<32x64xf32, #tpu.memory_space<vmem>>, vector<32x64xf32>
    %cst_79 = arith.constant dense<0.000000e+00> : vector<16x64xf32>
    %265 = tpu.matmul %263, %264, %cst_79 {dimension_numbers = #tpu.dot_dimension_numbers<[1], [0], [0], [1], [0, 0, 1, 1], [], []>} : vector<16x32xf32>, vector<32x64xf32>, vector<16x64xf32> -> vector<16x64xf32>
    %c0_80 = arith.constant 0 : index
    %c0_81 = arith.constant 0 : index
    %266 = vector.load %arg18[%c0_80, %c0_81] : memref<1x64xf32, #tpu.memory_space<vmem>>, vector<1x64xf32>
    %267 = vector.broadcast %266 : vector<1x64xf32> to vector<16x64xf32>
    %268 = arith.addf %265, %267 : vector<16x64xf32>
    %cst_82 = arith.constant 0.000000e+00 : f32
    %269 = vector.broadcast %cst_82 : f32 to vector<16x64xf32>
    %270 = arith.maximumf %268, %269 : vector<16x64xf32>
    %c0_83 = arith.constant 0 : index
    %c0_84 = arith.constant 0 : index
    %271 = vector.load %arg19[%c0_83, %c0_84] : memref<64x32xf32, #tpu.memory_space<vmem>>, vector<64x32xf32>
    %cst_85 = arith.constant dense<0.000000e+00> : vector<16x32xf32>
    %272 = tpu.matmul %270, %271, %cst_85 {dimension_numbers = #tpu.dot_dimension_numbers<[1], [0], [0], [1], [0, 0, 1, 1], [], []>} : vector<16x64xf32>, vector<64x32xf32>, vector<16x32xf32> -> vector<16x32xf32>
    %c0_86 = arith.constant 0 : index
    %c0_87 = arith.constant 0 : index
    %273 = vector.load %arg20[%c0_86, %c0_87] : memref<1x32xf32, #tpu.memory_space<vmem>>, vector<1x32xf32>
    %274 = vector.broadcast %273 : vector<1x32xf32> to vector<16x32xf32>
    %275 = arith.addf %272, %274 : vector<16x32xf32>
    %276 = arith.addf %263, %275 : vector<16x32xf32>
    %c0_88 = arith.constant 0 : index
    %c0_89 = arith.constant 0 : index
    %277 = vector.load %arg21[%c0_88, %c0_89] : memref<1x32xf32, #tpu.memory_space<vmem>>, vector<1x32xf32>
    %c0_90 = arith.constant 0 : index
    %c0_91 = arith.constant 0 : index
    %278 = vector.load %arg22[%c0_90, %c0_91] : memref<1x32xf32, #tpu.memory_space<vmem>>, vector<1x32xf32>
    %cst_92 = arith.constant dense<0.000000e+00> : vector<16xf32>
    %279 = vector.multi_reduction <add>, %276, %cst_92 [1] : vector<16x32xf32> to vector<16xf32>
    %280 = vector.shape_cast %279 : vector<16xf32> to vector<16x1xf32>
    %cst_93 = arith.constant 3.200000e+01 : f32
    %281 = vector.broadcast %cst_93 : f32 to vector<16x1xf32>
    %282 = arith.divf %280, %281 : vector<16x1xf32>
    %283 = vector.broadcast %282 : vector<16x1xf32> to vector<16x32xf32>
    %284 = arith.subf %276, %283 : vector<16x32xf32>
    %285 = arith.mulf %284, %284 : vector<16x32xf32>
    %cst_94 = arith.constant dense<0.000000e+00> : vector<16xf32>
    %286 = vector.multi_reduction <add>, %285, %cst_94 [1] : vector<16x32xf32> to vector<16xf32>
    %287 = vector.shape_cast %286 : vector<16xf32> to vector<16x1xf32>
    %cst_95 = arith.constant 0.0322580636 : f32
    %288 = vector.broadcast %cst_95 : f32 to vector<16x1xf32>
    %289 = arith.mulf %287, %288 : vector<16x1xf32>
    %290 = math.sqrt %289 : vector<16x1xf32>
    %cst_96 = arith.constant 9.99999996E-13 : f32
    %291 = vector.broadcast %cst_96 : f32 to vector<16x1xf32>
    %292 = arith.addf %290, %291 : vector<16x1xf32>
    %cst_97 = arith.constant 1.000000e+00 : f32
    %293 = vector.broadcast %cst_97 : f32 to vector<16x1xf32>
    %294 = arith.divf %293, %292 : vector<16x1xf32>
    %295 = vector.broadcast %294 : vector<16x1xf32> to vector<16x32xf32>
    %296 = arith.mulf %284, %295 : vector<16x32xf32>
    %297 = vector.broadcast %277 : vector<1x32xf32> to vector<16x32xf32>
    %298 = arith.mulf %297, %296 : vector<16x32xf32>
    %299 = vector.broadcast %278 : vector<1x32xf32> to vector<16x32xf32>
    %300 = arith.addf %298, %299 : vector<16x32xf32>
    %301 = vector.shape_cast %300 : vector<16x32xf32> to vector<2x8x32xf32>
    %c0_98 = arith.constant 0 : index
    %c0_99 = arith.constant 0 : index
    %c0_100 = arith.constant 0 : index
    %302 = vector.load %arg23[%c0_98, %c0_99, %c0_100] : memref<2x8x32xf32, #tpu.memory_space<vmem>>, vector<2x8x32xf32>
    tpu.vector_store %arg23[%c0_98, %c0_99, %c0_100], %301 {strides = array<i32>} : memref<2x8x32xf32, #tpu.memory_space<vmem>>, vector<2x8x32xf32>,
    return
  }
  func.func @transform_0(%arg0: i32) -> (i32, i32, i32) {
    %c0_i32 = arith.constant 0 : i32
    %c0_i32_0 = arith.constant 0 : i32
    %c0_i32_1 = arith.constant 0 : i32
    return %arg0, %c0_i32, %c0_i32_0 : i32, i32, i32
  }
  func.func @transform_1(%arg0: i32) -> (i32, i32, i32) {
    %c0_i32 = arith.constant 0 : i32
    %c0_i32_0 = arith.constant 0 : i32
    %c0_i32_1 = arith.constant 0 : i32
    return %arg0, %c0_i32, %c0_i32_0 : i32, i32, i32
  }
  func.func @transform_2(%arg0: i32) -> (i32, i32) {
    %c0_i32 = arith.constant 0 : i32
    %c0_i32_0 = arith.constant 0 : i32
    %c0_i32_1 = arith.constant 0 : i32
    return %c0_i32, %c0_i32_0 : i32, i32
  }
  func.func @transform_3(%arg0: i32) -> (i32, i32) {
    %c0_i32 = arith.constant 0 : i32
    %c0_i32_0 = arith.constant 0 : i32
    %c0_i32_1 = arith.constant 0 : i32
    return %c0_i32, %c0_i32_0 : i32, i32
  }
  func.func @transform_4(%arg0: i32) -> (i32, i32, i32) {
    %c0_i32 = arith.constant 0 : i32
    %c0_i32_0 = arith.constant 0 : i32
    %c0_i32_1 = arith.constant 0 : i32
    %c0_i32_2 = arith.constant 0 : i32
    return %c0_i32, %c0_i32_0, %c0_i32_1 : i32, i32, i32
  }
  func.func @transform_5(%arg0: i32) -> (i32, i32) {
    %c0_i32 = arith.constant 0 : i32
    %c0_i32_0 = arith.constant 0 : i32
    %c0_i32_1 = arith.constant 0 : i32
    return %c0_i32, %c0_i32_0 : i32, i32
  }
  func.func @transform_6(%arg0: i32) -> (i32, i32) {
    %c0_i32 = arith.constant 0 : i32
    %c0_i32_0 = arith.constant 0 : i32
    %c0_i32_1 = arith.constant 0 : i32
    return %c0_i32, %c0_i32_0 : i32, i32
  }
  func.func @transform_7(%arg0: i32) -> (i32, i32) {
    %c0_i32 = arith.constant 0 : i32
    %c0_i32_0 = arith.constant 0 : i32
    %c0_i32_1 = arith.constant 0 : i32
    return %c0_i32, %c0_i32_0 : i32, i32
  }
  func.func @transform_8(%arg0: i32) -> (i32, i32) {
    %c0_i32 = arith.constant 0 : i32
    %c0_i32_0 = arith.constant 0 : i32
    %c0_i32_1 = arith.constant 0 : i32
    return %c0_i32, %c0_i32_0 : i32, i32
  }
  func.func @transform_9(%arg0: i32) -> (i32, i32) {
    %c0_i32 = arith.constant 0 : i32
    %c0_i32_0 = arith.constant 0 : i32
    %c0_i32_1 = arith.constant 0 : i32
    return %c0_i32, %c0_i32_0 : i32, i32
  }
  func.func @transform_10(%arg0: i32) -> (i32, i32) {
    %c0_i32 = arith.constant 0 : i32
    %c0_i32_0 = arith.constant 0 : i32
    %c0_i32_1 = arith.constant 0 : i32
    return %c0_i32, %c0_i32_0 : i32, i32
  }
  func.func @transform_11(%arg0: i32) -> (i32, i32) {
    %c0_i32 = arith.constant 0 : i32
    %c0_i32_0 = arith.constant 0 : i32
    %c0_i32_1 = arith.constant 0 : i32
    return %c0_i32, %c0_i32_0 : i32, i32
  }
  func.func @transform_12(%arg0: i32) -> (i32, i32, i32) {
    %c0_i32 = arith.constant 0 : i32
    %c0_i32_0 = arith.constant 0 : i32
    %c0_i32_1 = arith.constant 0 : i32
    %c0_i32_2 = arith.constant 0 : i32
    return %c0_i32, %c0_i32_0, %c0_i32_1 : i32, i32, i32
  }
  func.func @transform_13(%arg0: i32) -> (i32, i32) {
    %c0_i32 = arith.constant 0 : i32
    %c0_i32_0 = arith.constant 0 : i32
    %c0_i32_1 = arith.constant 0 : i32
    return %c0_i32, %c0_i32_0 : i32, i32
  }
  func.func @transform_14(%arg0: i32) -> (i32, i32) {
    %c0_i32 = arith.constant 0 : i32
    %c0_i32_0 = arith.constant 0 : i32
    %c0_i32_1 = arith.constant 0 : i32
    return %c0_i32, %c0_i32_0 : i32, i32
  }
  func.func @transform_15(%arg0: i32) -> (i32, i32) {
    %c0_i32 = arith.constant 0 : i32
    %c0_i32_0 = arith.constant 0 : i32
    %c0_i32_1 = arith.constant 0 : i32
    return %c0_i32, %c0_i32_0 : i32, i32
  }
  func.func @transform_16(%arg0: i32) -> (i32, i32) {
    %c0_i32 = arith.constant 0 : i32
    %c0_i32_0 = arith.constant 0 : i32
    %c0_i32_1 = arith.constant 0 : i32
    return %c0_i32, %c0_i32_0 : i32, i32
  }
  func.func @transform_17(%arg0: i32) -> (i32, i32) {
    %c0_i32 = arith.constant 0 : i32
    %c0_i32_0 = arith.constant 0 : i32
    %c0_i32_1 = arith.constant 0 : i32
    return %c0_i32, %c0_i32_0 : i32, i32
  }
  func.func @transform_18(%arg0: i32) -> (i32, i32) {
    %c0_i32 = arith.constant 0 : i32
    %c0_i32_0 = arith.constant 0 : i32
    %c0_i32_1 = arith.constant 0 : i32
    return %c0_i32, %c0_i32_0 : i32, i32
  }
  func.func @transform_19(%arg0: i32) -> (i32, i32) {
    %c0_i32 = arith.constant 0 : i32
    %c0_i32_0 = arith.constant 0 : i32
    %c0_i32_1 = arith.constant 0 : i32
    return %c0_i32, %c0_i32_0 : i32, i32
  }
  func.func @transform_20(%arg0: i32) -> (i32, i32) {
    %c0_i32 = arith.constant 0 : i32
    %c0_i32_0 = arith.constant 0 : i32
    %c0_i32_1 = arith.constant 0 : i32
    return %c0_i32, %c0_i32_0 : i32, i32
  }
  func.func @transform_21(%arg0: i32) -> (i32, i32) {
    %c0_i32 = arith.constant 0 : i32
    %c0_i32_0 = arith.constant 0 : i32
    %c0_i32_1 = arith.constant 0 : i32
    return %c0_i32, %c0_i32_0 : i32, i32
  }
  func.func @transform_22(%arg0: i32) -> (i32, i32, i32) {
    %c0_i32 = arith.constant 0 : i32
    %c0_i32_0 = arith.constant 0 : i32
    %c0_i32_1 = arith.constant 0 : i32
    return %arg0, %c0_i32, %c0_i32_0 : i32, i32, i32
  }
}

module attributes {stable_mosaic.version = 11 : i64} {
  func.func @_decoder_layer_kernel(%arg0: i32, %arg1: memref<2x8x32xf32, #tpu.memory_space<vmem>>, %arg2: memref<2x8x32xf32, #tpu.memory_space<vmem>>, %arg3: memref<32x96xf32, #tpu.memory_space<vmem>>, %arg4: memref<1x96xf32, #tpu.memory_space<vmem>>, %arg5: memref<4x8x32xf32, #tpu.memory_space<vmem>>, %arg6: memref<1x32xf32, #tpu.memory_space<vmem>>, %arg7: memref<1x32xf32, #tpu.memory_space<vmem>>, %arg8: memref<1x32xf32, #tpu.memory_space<vmem>>, %arg9: memref<32x32xf32, #tpu.memory_space<vmem>>, %arg10: memref<1x32xf32, #tpu.memory_space<vmem>>, %arg11: memref<32x64xf32, #tpu.memory_space<vmem>>, %arg12: memref<1x64xf32, #tpu.memory_space<vmem>>, %arg13: memref<4x8x32xf32, #tpu.memory_space<vmem>>, %arg14: memref<1x32xf32, #tpu.memory_space<vmem>>, %arg15: memref<1x32xf32, #tpu.memory_space<vmem>>, %arg16: memref<1x32xf32, #tpu.memory_space<vmem>>, %arg17: memref<32x64xf32, #tpu.memory_space<vmem>>, %arg18: memref<1x64xf32, #tpu.memory_space<vmem>>, %arg19: memref<64x32xf32, #tpu.memory_space<vmem>>, %arg20: memref<1x32xf32, #tpu.memory_space<vmem>>, %arg21: memref<1x32xf32, #tpu.memory_space<vmem>>, %arg22: memref<1x32xf32, #tpu.memory_space<vmem>>, %arg23: memref<2x8x32xf32, #tpu.memory_space<vmem>>) attributes {dimension_semantics = [#tpu.dimension_semantics<parallel>], iteration_bounds = array<i64: 1>, scalar_prefetch = 0 : i64, scratch_operands = 0 : i64, tpu.core_type = #tpu.core_type<tc>, window_params = [{transform_indices = @transform_0, window_bounds = array<i64: 2, 8, 32>}, {transform_indices = @transform_1, window_bounds = array<i64: 2, 8, 32>}, {pipeline_mode = #tpu.pipeline_mode<synchronous>, transform_indices = @transform_2, window_bounds = array<i64: 32, 96>}, {pipeline_mode = #tpu.pipeline_mode<synchronous>, transform_indices = @transform_3, window_bounds = array<i64: 1, 96>}, {pipeline_mode = #tpu.pipeline_mode<synchronous>, transform_indices = @transform_4, window_bounds = array<i64: 4, 8, 32>}, {pipeline_mode = #tpu.pipeline_mode<synchronous>, transform_indices = @transform_5, window_bounds = array<i64: 1, 32>}, {pipeline_mode = #tpu.pipeline_mode<synchronous>, transform_indices = @transform_6, window_bounds = array<i64: 1, 32>}, {pipeline_mode = #tpu.pipeline_mode<synchronous>, transform_indices = @transform_7, window_bounds = array<i64: 1, 32>}, {pipeline_mode = #tpu.pipeline_mode<synchronous>, transform_indices = @transform_8, window_bounds = array<i64: 32, 32>}, {pipeline_mode = #tpu.pipeline_mode<synchronous>, transform_indices = @transform_9, window_bounds = array<i64: 1, 32>}, {pipeline_mode = #tpu.pipeline_mode<synchronous>, transform_indices = @transform_10, window_bounds = array<i64: 32, 64>}, {pipeline_mode = #tpu.pipeline_mode<synchronous>, transform_indices = @transform_11, window_bounds = array<i64: 1, 64>}, {pipeline_mode = #tpu.pipeline_mode<synchronous>, transform_indices = @transform_12, window_bounds = array<i64: 4, 8, 32>}, {pipeline_mode = #tpu.pipeline_mode<synchronous>, transform_indices = @transform_13, window_bounds = array<i64: 1, 32>}, {pipeline_mode = #tpu.pipeline_mode<synchronous>, transform_indices = @transform_14, window_bounds = array<i64: 1, 32>}, {pipeline_mode = #tpu.pipeline_mode<synchronous>, transform_indices = @transform_15, window_bounds = array<i64: 1, 32>}, {pipeline_mode = #tpu.pipeline_mode<synchronous>, transform_indices = @transform_16, window_bounds = array<i64: 32, 64>}, {pipeline_mode = #tpu.pipeline_mode<synchronous>, transform_indices = @transform_17, window_bounds = array<i64: 1, 64>}, {pipeline_mode = #tpu.pipeline_mode<synchronous>, transform_indices = @transform_18, window_bounds = array<i64: 64, 32>}, {pipeline_mode = #tpu.pipeline_mode<synchronous>, transform_indices = @transform_19, window_bounds = array<i64: 1, 32>}, {pipeline_mode = #tpu.pipeline_mode<synchronous>, transform_indices = @transform_20, window_bounds = array<i64: 1, 32>}, {pipeline_mode = #tpu.pipeline_mode<synchronous>, transform_indices = @transform_21, window_bounds = array<i64: 1, 32>}, {transform_indices = @transform_22, window_bounds = array<i64: 2, 8, 32>}]} {
    %c0 = arith.constant 0 : index
    %c0_0 = arith.constant 0 : index
    %c0_1 = arith.constant 0 : index
    %0 = vector.load %arg1[%c0, %c0_0, %c0_1] : memref<2x8x32xf32, #tpu.memory_space<vmem>>, vector<2x8x32xf32>
    %1 = vector.shape_cast %0 : vector<2x8x32xf32> to vector<16x32xf32>
    %c0_2 = arith.constant 0 : index
    %c0_3 = arith.constant 0 : index
    %c0_4 = arith.constant 0 : index
    %2 = vector.load %arg2[%c0_2, %c0_3, %c0_4] : memref<2x8x32xf32, #tpu.memory_space<vmem>>, vector<2x8x32xf32>
    %3 = vector.shape_cast %2 : vector<2x8x32xf32> to vector<16x32xf32>
    %c0_5 = arith.constant 0 : index
    %c0_6 = arith.constant 0 : index
    %4 = vector.load %arg3[%c0_5, %c0_6] : memref<32x96xf32, #tpu.memory_space<vmem>>, vector<32x96xf32>
    %cst = arith.constant dense<0.000000e+00> : vector<16x96xf32>
    %5 = tpu.matmul %1, %4, %cst {dimension_numbers = #tpu.dot_dimension_numbers<[1], [0], [0], [1], [0, 0, 1, 1], [], []>} : vector<16x32xf32>, vector<32x96xf32>, vector<16x96xf32> -> vector<16x96xf32>
    %c0_7 = arith.constant 0 : index
    %c0_8 = arith.constant 0 : index
    %6 = vector.load %arg4[%c0_7, %c0_8] : memref<1x96xf32, #tpu.memory_space<vmem>>, vector<1x96xf32>
    %7 = vector.broadcast %6 : vector<1x96xf32> to vector<16x96xf32>
    %8 = arith.addf %5, %7 : vector<16x96xf32>
    %9 = vector.extract_strided_slice %8 {offsets = [0, 0], sizes = [16, 32], strides = [1, 1]} : vector<16x96xf32> to vector<16x32xf32>
    %10 = vector.extract_strided_slice %8 {offsets = [0, 32], sizes = [16, 32], strides = [1, 1]} : vector<16x96xf32> to vector<16x32xf32>
    %11 = vector.extract_strided_slice %8 {offsets = [0, 64], sizes = [16, 32], strides = [1, 1]} : vector<16x96xf32> to vector<16x32xf32>
    %c0_9 = arith.constant 0 : index
    %c0_10 = arith.constant 0 : index
    %c0_11 = arith.constant 0 : index
    %12 = vector.load %arg5[%c0_9, %c0_10, %c0_11] : memref<4x8x32xf32, #tpu.memory_space<vmem>>, vector<4x8x32xf32>
    %c0_12 = arith.constant 0 : index
    %c0_13 = arith.constant 0 : index
    %13 = vector.load %arg6[%c0_12, %c0_13] : memref<1x32xf32, #tpu.memory_space<vmem>>, vector<1x32xf32>
    %14 = vector.extract_strided_slice %9 {offsets = [0, 0], sizes = [8, 32], strides = [1, 1]} : vector<16x32xf32> to vector<8x32xf32>
    %15 = vector.extract_strided_slice %14 {offsets = [0, 0], sizes = [8, 8], strides = [1, 1]} : vector<8x32xf32> to vector<8x8xf32>
    %16 = vector.shape_cast %15 : vector<8x8xf32> to vector<1x8x8xf32>
    %17 = vector.extract_strided_slice %14 {offsets = [0, 8], sizes = [8, 8], strides = [1, 1]} : vector<8x32xf32> to vector<8x8xf32>
    %18 = vector.shape_cast %17 : vector<8x8xf32> to vector<1x8x8xf32>
    %19 = vector.extract_strided_slice %14 {offsets = [0, 16], sizes = [8, 8], strides = [1, 1]} : vector<8x32xf32> to vector<8x8xf32>
    %20 = vector.shape_cast %19 : vector<8x8xf32> to vector<1x8x8xf32>
    %21 = vector.extract_strided_slice %14 {offsets = [0, 24], sizes = [8, 8], strides = [1, 1]} : vector<8x32xf32> to vector<8x8xf32>
    %22 = vector.shape_cast %21 : vector<8x8xf32> to vector<1x8x8xf32>
    %23 = tpu.concatenate %16, %18, %20, %22 in 0 : vector<1x8x8xf32>, vector<1x8x8xf32>, vector<1x8x8xf32>, vector<1x8x8xf32> -> vector<4x8x8xf32>
    %24 = vector.extract_strided_slice %10 {offsets = [0, 0], sizes = [8, 32], strides = [1, 1]} : vector<16x32xf32> to vector<8x32xf32>
    %25 = vector.extract_strided_slice %24 {offsets = [0, 0], sizes = [8, 8], strides = [1, 1]} : vector<8x32xf32> to vector<8x8xf32>
    %26 = vector.shape_cast %25 : vector<8x8xf32> to vector<1x8x8xf32>
    %27 = vector.extract_strided_slice %24 {offsets = [0, 8], sizes = [8, 8], strides = [1, 1]} : vector<8x32xf32> to vector<8x8xf32>
    %28 = vector.shape_cast %27 : vector<8x8xf32> to vector<1x8x8xf32>
    %29 = vector.extract_strided_slice %24 {offsets = [0, 16], sizes = [8, 8], strides = [1, 1]} : vector<8x32xf32> to vector<8x8xf32>
    %30 = vector.shape_cast %29 : vector<8x8xf32> to vector<1x8x8xf32>
    %31 = vector.extract_strided_slice %24 {offsets = [0, 24], sizes = [8, 8], strides = [1, 1]} : vector<8x32xf32> to vector<8x8xf32>
    %32 = vector.shape_cast %31 : vector<8x8xf32> to vector<1x8x8xf32>
    %33 = tpu.concatenate %26, %28, %30, %32 in 0 : vector<1x8x8xf32>, vector<1x8x8xf32>, vector<1x8x8xf32>, vector<1x8x8xf32> -> vector<4x8x8xf32>
    %34 = vector.extract_strided_slice %11 {offsets = [0, 0], sizes = [8, 32], strides = [1, 1]} : vector<16x32xf32> to vector<8x32xf32>
    %35 = vector.extract_strided_slice %34 {offsets = [0, 0], sizes = [8, 8], strides = [1, 1]} : vector<8x32xf32> to vector<8x8xf32>
    %36 = vector.shape_cast %35 : vector<8x8xf32> to vector<1x8x8xf32>
    %37 = vector.extract_strided_slice %34 {offsets = [0, 8], sizes = [8, 8], strides = [1, 1]} : vector<8x32xf32> to vector<8x8xf32>
    %38 = vector.shape_cast %37 : vector<8x8xf32> to vector<1x8x8xf32>
    %39 = vector.extract_strided_slice %34 {offsets = [0, 16], sizes = [8, 8], strides = [1, 1]} : vector<8x32xf32> to vector<8x8xf32>
    %40 = vector.shape_cast %39 : vector<8x8xf32> to vector<1x8x8xf32>
    %41 = vector.extract_strided_slice %34 {offsets = [0, 24], sizes = [8, 8], strides = [1, 1]} : vector<8x32xf32> to vector<8x8xf32>
    %42 = vector.shape_cast %41 : vector<8x8xf32> to vector<1x8x8xf32>
    %43 = tpu.concatenate %36, %38, %40, %42 in 0 : vector<1x8x8xf32>, vector<1x8x8xf32>, vector<1x8x8xf32>, vector<1x8x8xf32> -> vector<4x8x8xf32>
    "tpu.trace_start"() <{level = 10 : i32, message = "htd,hsd->hts"}> : () -> ()
    %cst_14 = arith.constant dense<0.000000e+00> : vector<4x8x8xf32>
    %44 = tpu.matmul %23, %33, %cst_14 {dimension_numbers = #tpu.dot_dimension_numbers<[2], [2], [1], [1], [0, 0, 0, 1, 1, 1], [0], [0]>} : vector<4x8x8xf32>, vector<4x8x8xf32>, vector<4x8x8xf32> -> vector<4x8x8xf32>
    "tpu.trace_stop"() : () -> ()
    %cst_15 = arith.constant dense<0xFF800000> : vector<4x8xf32>
    %45 = vector.multi_reduction <maximumf>, %44, %cst_15 [2] : vector<4x8x8xf32> to vector<4x8xf32>
    %46 = vector.shape_cast %45 : vector<4x8xf32> to vector<4x8x1xf32>
    %47 = vector.broadcast %46 : vector<4x8x1xf32> to vector<4x8x8xf32>
    %48 = arith.subf %44, %47 : vector<4x8x8xf32>
    %49 = math.exp %48 : vector<4x8x8xf32>
    %cst_16 = arith.constant dense<0.000000e+00> : vector<4x8xf32>
    %50 = vector.multi_reduction <add>, %49, %cst_16 [2] : vector<4x8x8xf32> to vector<4x8xf32>
    %51 = vector.shape_cast %50 : vector<4x8xf32> to vector<4x8x1xf32>
    %cst_17 = arith.constant 1.000000e+00 : f32
    %52 = vector.broadcast %cst_17 : f32 to vector<4x8x1xf32>
    %53 = arith.divf %52, %51 : vector<4x8x1xf32>
    %54 = vector.broadcast %53 : vector<4x8x1xf32> to vector<4x8x8xf32>
    %55 = arith.mulf %49, %54 : vector<4x8x8xf32>
    "tpu.trace_start"() <{level = 10 : i32, message = "hts,hsd->htd"}> : () -> ()
    %cst_18 = arith.constant dense<0.000000e+00> : vector<4x8x8xf32>
    %56 = tpu.matmul %55, %43, %cst_18 {dimension_numbers = #tpu.dot_dimension_numbers<[2], [1], [1], [2], [0, 0, 0, 1, 1, 2], [0], [0]>} : vector<4x8x8xf32>, vector<4x8x8xf32>, vector<4x8x8xf32> -> vector<4x8x8xf32>
    "tpu.trace_stop"() : () -> ()
    "tpu.trace_start"() <{level = 10 : i32, message = "htd,hdk->htk"}> : () -> ()
    %cst_19 = arith.constant dense<0.000000e+00> : vector<4x8x32xf32>
    %57 = tpu.matmul %56, %12, %cst_19 {dimension_numbers = #tpu.dot_dimension_numbers<[2], [1], [1], [2], [0, 0, 0, 1, 1, 2], [0], [0]>} : vector<4x8x8xf32>, vector<4x8x32xf32>, vector<4x8x32xf32> -> vector<4x8x32xf32>
    "tpu.trace_stop"() : () -> ()
    %cst_20 = arith.constant dense<0.000000e+00> : vector<8x32xf32>
    %58 = vector.multi_reduction <add>, %57, %cst_20 [0] : vector<4x8x32xf32> to vector<8x32xf32>
    %59 = vector.extract_strided_slice %9 {offsets = [8, 0], sizes = [8, 32], strides = [1, 1]} : vector<16x32xf32> to vector<8x32xf32>
    %60 = vector.extract_strided_slice %59 {offsets = [0, 0], sizes = [8, 8], strides = [1, 1]} : vector<8x32xf32> to vector<8x8xf32>
    %61 = vector.shape_cast %60 : vector<8x8xf32> to vector<1x8x8xf32>
    %62 = vector.extract_strided_slice %59 {offsets = [0, 8], sizes = [8, 8], strides = [1, 1]} : vector<8x32xf32> to vector<8x8xf32>
    %63 = vector.shape_cast %62 : vector<8x8xf32> to vector<1x8x8xf32>
    %64 = vector.extract_strided_slice %59 {offsets = [0, 16], sizes = [8, 8], strides = [1, 1]} : vector<8x32xf32> to vector<8x8xf32>
    %65 = vector.shape_cast %64 : vector<8x8xf32> to vector<1x8x8xf32>
    %66 = vector.extract_strided_slice %59 {offsets = [0, 24], sizes = [8, 8], strides = [1, 1]} : vector<8x32xf32> to vector<8x8xf32>
    %67 = vector.shape_cast %66 : vector<8x8xf32> to vector<1x8x8xf32>
    %68 = tpu.concatenate %61, %63, %65, %67 in 0 : vector<1x8x8xf32>, vector<1x8x8xf32>, vector<1x8x8xf32>, vector<1x8x8xf32> -> vector<4x8x8xf32>
    %69 = vector.extract_strided_slice %10 {offsets = [8, 0], sizes = [8, 32], strides = [1, 1]} : vector<16x32xf32> to vector<8x32xf32>
    %70 = vector.extract_strided_slice %69 {offsets = [0, 0], sizes = [8, 8], strides = [1, 1]} : vector<8x32xf32> to vector<8x8xf32>
    %71 = vector.shape_cast %70 : vector<8x8xf32> to vector<1x8x8xf32>
    %72 = vector.extract_strided_slice %69 {offsets = [0, 8], sizes = [8, 8], strides = [1, 1]} : vector<8x32xf32> to vector<8x8xf32>
    %73 = vector.shape_cast %72 : vector<8x8xf32> to vector<1x8x8xf32>
    %74 = vector.extract_strided_slice %69 {offsets = [0, 16], sizes = [8, 8], strides = [1, 1]} : vector<8x32xf32> to vector<8x8xf32>
    %75 = vector.shape_cast %74 : vector<8x8xf32> to vector<1x8x8xf32>
    %76 = vector.extract_strided_slice %69 {offsets = [0, 24], sizes = [8, 8], strides = [1, 1]} : vector<8x32xf32> to vector<8x8xf32>
    %77 = vector.shape_cast %76 : vector<8x8xf32> to vector<1x8x8xf32>
    %78 = tpu.concatenate %71, %73, %75, %77 in 0 : vector<1x8x8xf32>, vector<1x8x8xf32>, vector<1x8x8xf32>, vector<1x8x8xf32> -> vector<4x8x8xf32>
    %79 = vector.extract_strided_slice %11 {offsets = [8, 0], sizes = [8, 32], strides = [1, 1]} : vector<16x32xf32> to vector<8x32xf32>
    %80 = vector.extract_strided_slice %79 {offsets = [0, 0], sizes = [8, 8], strides = [1, 1]} : vector<8x32xf32> to vector<8x8xf32>
    %81 = vector.shape_cast %80 : vector<8x8xf32> to vector<1x8x8xf32>
    %82 = vector.extract_strided_slice %79 {offsets = [0, 8], sizes = [8, 8], strides = [1, 1]} : vector<8x32xf32> to vector<8x8xf32>
    %83 = vector.shape_cast %82 : vector<8x8xf32> to vector<1x8x8xf32>
    %84 = vector.extract_strided_slice %79 {offsets = [0, 16], sizes = [8, 8], strides = [1, 1]} : vector<8x32xf32> to vector<8x8xf32>
    %85 = vector.shape_cast %84 : vector<8x8xf32> to vector<1x8x8xf32>
    %86 = vector.extract_strided_slice %79 {offsets = [0, 24], sizes = [8, 8], strides = [1, 1]} : vector<8x32xf32> to vector<8x8xf32>
    %87 = vector.shape_cast %86 : vector<8x8xf32> to vector<1x8x8xf32>
    %88 = tpu.concatenate %81, %83, %85, %87 in 0 : vector<1x8x8xf32>, vector<1x8x8xf32>, vector<1x8x8xf32>, vector<1x8x8xf32> -> vector<4x8x8xf32>
    "tpu.trace_start"() <{level = 10 : i32, message = "htd,hsd->hts"}> : () -> ()
    %cst_21 = arith.constant dense<0.000000e+00> : vector<4x8x8xf32>
    %89 = tpu.matmul %68, %78, %cst_21 {dimension_numbers = #tpu.dot_dimension_numbers<[2], [2], [1], [1], [0, 0, 0, 1, 1, 1], [0], [0]>} : vector<4x8x8xf32>, vector<4x8x8xf32>, vector<4x8x8xf32> -> vector<4x8x8xf32>
    "tpu.trace_stop"() : () -> ()
    %cst_22 = arith.constant dense<0xFF800000> : vector<4x8xf32>
    %90 = vector.multi_reduction <maximumf>, %89, %cst_22 [2] : vector<4x8x8xf32> to vector<4x8xf32>
    %91 = vector.shape_cast %90 : vector<4x8xf32> to vector<4x8x1xf32>
    %92 = vector.broadcast %91 : vector<4x8x1xf32> to vector<4x8x8xf32>
    %93 = arith.subf %89, %92 : vector<4x8x8xf32>
    %94 = math.exp %93 : vector<4x8x8xf32>
    %cst_23 = arith.constant dense<0.000000e+00> : vector<4x8xf32>
    %95 = vector.multi_reduction <add>, %94, %cst_23 [2] : vector<4x8x8xf32> to vector<4x8xf32>
    %96 = vector.shape_cast %95 : vector<4x8xf32> to vector<4x8x1xf32>
    %cst_24 = arith.constant 1.000000e+00 : f32
    %97 = vector.broadcast %cst_24 : f32 to vector<4x8x1xf32>
    %98 = arith.divf %97, %96 : vector<4x8x1xf32>
    %99 = vector.broadcast %98 : vector<4x8x1xf32> to vector<4x8x8xf32>
    %100 = arith.mulf %94, %99 : vector<4x8x8xf32>
    "tpu.trace_start"() <{level = 10 : i32, message = "hts,hsd->htd"}> : () -> ()
    %cst_25 = arith.constant dense<0.000000e+00> : vector<4x8x8xf32>
    %101 = tpu.matmul %100, %88, %cst_25 {dimension_numbers = #tpu.dot_dimension_numbers<[2], [1], [1], [2], [0, 0, 0, 1, 1, 2], [0], [0]>} : vector<4x8x8xf32>, vector<4x8x8xf32>, vector<4x8x8xf32> -> vector<4x8x8xf32>
    "tpu.trace_stop"() : () -> ()
    "tpu.trace_start"() <{level = 10 : i32, message = "htd,hdk->htk"}> : () -> ()
    %cst_26 = arith.constant dense<0.000000e+00> : vector<4x8x32xf32>
    %102 = tpu.matmul %101, %12, %cst_26 {dimension_numbers = #tpu.dot_dimension_numbers<[2], [1], [1], [2], [0, 0, 0, 1, 1, 2], [0], [0]>} : vector<4x8x8xf32>, vector<4x8x32xf32>, vector<4x8x32xf32> -> vector<4x8x32xf32>
    "tpu.trace_stop"() : () -> ()
    %cst_27 = arith.constant dense<0.000000e+00> : vector<8x32xf32>
    %103 = vector.multi_reduction <add>, %102, %cst_27 [0] : vector<4x8x32xf32> to vector<8x32xf32>
    %104 = tpu.concatenate %58, %103 in 0 : vector<8x32xf32>, vector<8x32xf32> -> vector<16x32xf32>
    %105 = vector.broadcast %13 : vector<1x32xf32> to vector<16x32xf32>
    %106 = arith.addf %104, %105 : vector<16x32xf32>
    %107 = arith.addf %1, %106 : vector<16x32xf32>
    %c0_28 = arith.constant 0 : index
    %c0_29 = arith.constant 0 : index
    %108 = vector.load %arg7[%c0_28, %c0_29] : memref<1x32xf32, #tpu.memory_space<vmem>>, vector<1x32xf32>
    %c0_30 = arith.constant 0 : index
    %c0_31 = arith.constant 0 : index
    %109 = vector.load %arg8[%c0_30, %c0_31] : memref<1x32xf32, #tpu.memory_space<vmem>>, vector<1x32xf32>
    %cst_32 = arith.constant dense<0.000000e+00> : vector<16xf32>
    %110 = vector.multi_reduction <add>, %107, %cst_32 [1] : vector<16x32xf32> to vector<16xf32>
    %111 = vector.shape_cast %110 : vector<16xf32> to vector<16x1xf32>
    %cst_33 = arith.constant 3.200000e+01 : f32
    %112 = vector.broadcast %cst_33 : f32 to vector<16x1xf32>
    %113 = arith.divf %111, %112 : vector<16x1xf32>
    %114 = vector.broadcast %113 : vector<16x1xf32> to vector<16x32xf32>
    %115 = arith.subf %107, %114 : vector<16x32xf32>
    %116 = arith.mulf %115, %115 : vector<16x32xf32>
    %cst_34 = arith.constant dense<0.000000e+00> : vector<16xf32>
    %117 = vector.multi_reduction <add>, %116, %cst_34 [1] : vector<16x32xf32> to vector<16xf32>
    %118 = vector.shape_cast %117 : vector<16xf32> to vector<16x1xf32>
    %cst_35 = arith.constant 0.0322580636 : f32
    %119 = vector.broadcast %cst_35 : f32 to vector<16x1xf32>
    %120 = arith.mulf %118, %119 : vector<16x1xf32>
    %121 = math.sqrt %120 : vector<16x1xf32>
    %cst_36 = arith.constant 9.99999996E-13 : f32
    %122 = vector.broadcast %cst_36 : f32 to vector<16x1xf32>
    %123 = arith.addf %121, %122 : vector<16x1xf32>
    %cst_37 = arith.constant 1.000000e+00 : f32
    %124 = vector.broadcast %cst_37 : f32 to vector<16x1xf32>
    %125 = arith.divf %124, %123 : vector<16x1xf32>
    %126 = vector.broadcast %125 : vector<16x1xf32> to vector<16x32xf32>
    %127 = arith.mulf %115, %126 : vector<16x32xf32>
    %128 = vector.broadcast %108 : vector<1x32xf32> to vector<16x32xf32>
    %129 = arith.mulf %128, %127 : vector<16x32xf32>
    %130 = vector.broadcast %109 : vector<1x32xf32> to vector<16x32xf32>
    %131 = arith.addf %129, %130 : vector<16x32xf32>
    %c0_38 = arith.constant 0 : index
    %c0_39 = arith.constant 0 : index
    %132 = vector.load %arg9[%c0_38, %c0_39] : memref<32x32xf32, #tpu.memory_space<vmem>>, vector<32x32xf32>
    %cst_40 = arith.constant dense<0.000000e+00> : vector<16x32xf32>
    %133 = tpu.matmul %131, %132, %cst_40 {dimension_numbers = #tpu.dot_dimension_numbers<[1], [0], [0], [1], [0, 0, 1, 1], [], []>} : vector<16x32xf32>, vector<32x32xf32>, vector<16x32xf32> -> vector<16x32xf32>
    %c0_41 = arith.constant 0 : index
    %c0_42 = arith.constant 0 : index
    %134 = vector.load %arg10[%c0_41, %c0_42] : memref<1x32xf32, #tpu.memory_space<vmem>>, vector<1x32xf32>
    %135 = vector.broadcast %134 : vector<1x32xf32> to vector<16x32xf32>
    %136 = arith.addf %133, %135 : vector<16x32xf32>
    %c0_43 = arith.constant 0 : index
    %c0_44 = arith.constant 0 : index
    %137 = vector.load %arg11[%c0_43, %c0_44] : memref<32x64xf32, #tpu.memory_space<vmem>>, vector<32x64xf32>
    %cst_45 = arith.constant dense<0.000000e+00> : vector<16x64xf32>
    %138 = tpu.matmul %3, %137, %cst_45 {dimension_numbers = #tpu.dot_dimension_numbers<[1], [0], [0], [1], [0, 0, 1, 1], [], []>} : vector<16x32xf32>, vector<32x64xf32>, vector<16x64xf32> -> vector<16x64xf32>
    %c0_46 = arith.constant 0 : index
    %c0_47 = arith.constant 0 : index
    %139 = vector.load %arg12[%c0_46, %c0_47] : memref<1x64xf32, #tpu.memory_space<vmem>>, vector<1x64xf32>
    %140 = vector.broadcast %139 : vector<1x64xf32> to vector<16x64xf32>
    %141 = arith.addf %138, %140 : vector<16x64xf32>
    %142 = vector.extract_strided_slice %141 {offsets = [0, 0], sizes = [16, 32], strides = [1, 1]} : vector<16x64xf32> to vector<16x32xf32>
    %143 = vector.extract_strided_slice %141 {offsets = [0, 32], sizes = [16, 32], strides = [1, 1]} : vector<16x64xf32> to vector<16x32xf32>
    %c0_48 = arith.constant 0 : index
    %c0_49 = arith.constant 0 : index
    %c0_50 = arith.constant 0 : index
    %144 = vector.load %arg13[%c0_48, %c0_49, %c0_50] : memref<4x8x32xf32, #tpu.memory_space<vmem>>, vector<4x8x32xf32>
    %c0_51 = arith.constant 0 : index
    %c0_52 = arith.constant 0 : index
    %145 = vector.load %arg14[%c0_51, %c0_52] : memref<1x32xf32, #tpu.memory_space<vmem>>, vector<1x32xf32>
    %146 = vector.extract_strided_slice %136 {offsets = [0, 0], sizes = [8, 32], strides = [1, 1]} : vector<16x32xf32> to vector<8x32xf32>
    %147 = vector.extract_strided_slice %146 {offsets = [0, 0], sizes = [8, 8], strides = [1, 1]} : vector<8x32xf32> to vector<8x8xf32>
    %148 = vector.shape_cast %147 : vector<8x8xf32> to vector<1x8x8xf32>
    %149 = vector.extract_strided_slice %146 {offsets = [0, 8], sizes = [8, 8], strides = [1, 1]} : vector<8x32xf32> to vector<8x8xf32>
    %150 = vector.shape_cast %149 : vector<8x8xf32> to vector<1x8x8xf32>
    %151 = vector.extract_strided_slice %146 {offsets = [0, 16], sizes = [8, 8], strides = [1, 1]} : vector<8x32xf32> to vector<8x8xf32>
    %152 = vector.shape_cast %151 : vector<8x8xf32> to vector<1x8x8xf32>
    %153 = vector.extract_strided_slice %146 {offsets = [0, 24], sizes = [8, 8], strides = [1, 1]} : vector<8x32xf32> to vector<8x8xf32>
    %154 = vector.shape_cast %153 : vector<8x8xf32> to vector<1x8x8xf32>
    %155 = tpu.concatenate %148, %150, %152, %154 in 0 : vector<1x8x8xf32>, vector<1x8x8xf32>, vector<1x8x8xf32>, vector<1x8x8xf32> -> vector<4x8x8xf32>
    %156 = vector.extract_strided_slice %142 {offsets = [0, 0], sizes = [8, 32], strides = [1, 1]} : vector<16x32xf32> to vector<8x32xf32>
    %157 = vector.extract_strided_slice %156 {offsets = [0, 0], sizes = [8, 8], strides = [1, 1]} : vector<8x32xf32> to vector<8x8xf32>
    %158 = vector.shape_cast %157 : vector<8x8xf32> to vector<1x8x8xf32>
    %159 = vector.extract_strided_slice %156 {offsets = [0, 8], sizes = [8, 8], strides = [1, 1]} : vector<8x32xf32> to vector<8x8xf32>
    %160 = vector.shape_cast %159 : vector<8x8xf32> to vector<1x8x8xf32>
    %161 = vector.extract_strided_slice %156 {offsets = [0, 16], sizes = [8, 8], strides = [1, 1]} : vector<8x32xf32> to vector<8x8xf32>
    %162 = vector.shape_cast %161 : vector<8x8xf32> to vector<1x8x8xf32>
    %163 = vector.extract_strided_slice %156 {offsets = [0, 24], sizes = [8, 8], strides = [1, 1]} : vector<8x32xf32> to vector<8x8xf32>
    %164 = vector.shape_cast %163 : vector<8x8xf32> to vector<1x8x8xf32>
    %165 = tpu.concatenate %158, %160, %162, %164 in 0 : vector<1x8x8xf32>, vector<1x8x8xf32>, vector<1x8x8xf32>, vector<1x8x8xf32> -> vector<4x8x8xf32>
    %166 = vector.extract_strided_slice %143 {offsets = [0, 0], sizes = [8, 32], strides = [1, 1]} : vector<16x32xf32> to vector<8x32xf32>
    %167 = vector.extract_strided_slice %166 {offsets = [0, 0], sizes = [8, 8], strides = [1, 1]} : vector<8x32xf32> to vector<8x8xf32>
    %168 = vector.shape_cast %167 : vector<8x8xf32> to vector<1x8x8xf32>
    %169 = vector.extract_strided_slice %166 {offsets = [0, 8], sizes = [8, 8], strides = [1, 1]} : vector<8x32xf32> to vector<8x8xf32>
    %170 = vector.shape_cast %169 : vector<8x8xf32> to vector<1x8x8xf32>
    %171 = vector.extract_strided_slice %166 {offsets = [0, 16], sizes = [8, 8], strides = [1, 1]} : vector<8x32xf32> to vector<8x8xf32>
    %172 = vector.shape_cast %171 : vector<8x8xf32> to vector<1x8x8xf32>
    %173 = vector.extract_strided_slice %166 {offsets = [0, 24], sizes = [8, 8], strides = [1, 1]} : vector<8x32xf32> to vector<8x8xf32>
    %174 = vector.shape_cast %173 : vector<8x8xf32> to vector<1x8x8xf32>
    %175 = tpu.concatenate %168, %170, %172, %174 in 0 : vector<1x8x8xf32>, vector<1x8x8xf32>, vector<1x8x8xf32>, vector<1x8x8xf32> -> vector<4x8x8xf32>
    "tpu.trace_start"() <{level = 10 : i32, message = "htd,hsd->hts"}> : () -> ()
    %cst_53 = arith.constant dense<0.000000e+00> : vector<4x8x8xf32>
    %176 = tpu.matmul %155, %165, %cst_53 {dimension_numbers = #tpu.dot_dimension_numbers<[2], [2], [1], [1], [0, 0, 0, 1, 1, 1], [0], [0]>} : vector<4x8x8xf32>, vector<4x8x8xf32>, vector<4x8x8xf32> -> vector<4x8x8xf32>
    "tpu.trace_stop"() : () -> ()
    %cst_54 = arith.constant dense<0xFF800000> : vector<4x8xf32>
    %177 = vector.multi_reduction <maximumf>, %176, %cst_54 [2] : vector<4x8x8xf32> to vector<4x8xf32>
    %178 = vector.shape_cast %177 : vector<4x8xf32> to vector<4x8x1xf32>
    %179 = vector.broadcast %178 : vector<4x8x1xf32> to vector<4x8x8xf32>
    %180 = arith.subf %176, %179 : vector<4x8x8xf32>
    %181 = math.exp %180 : vector<4x8x8xf32>
    %cst_55 = arith.constant dense<0.000000e+00> : vector<4x8xf32>
    %182 = vector.multi_reduction <add>, %181, %cst_55 [2] : vector<4x8x8xf32> to vector<4x8xf32>
    %183 = vector.shape_cast %182 : vector<4x8xf32> to vector<4x8x1xf32>
    %cst_56 = arith.constant 1.000000e+00 : f32
    %184 = vector.broadcast %cst_56 : f32 to vector<4x8x1xf32>
    %185 = arith.divf %184, %183 : vector<4x8x1xf32>
    %186 = vector.broadcast %185 : vector<4x8x1xf32> to vector<4x8x8xf32>
    %187 = arith.mulf %181, %186 : vector<4x8x8xf32>
    "tpu.trace_start"() <{level = 10 : i32, message = "hts,hsd->htd"}> : () -> ()
    %cst_57 = arith.constant dense<0.000000e+00> : vector<4x8x8xf32>
    %188 = tpu.matmul %187, %175, %cst_57 {dimension_numbers = #tpu.dot_dimension_numbers<[2], [1], [1], [2], [0, 0, 0, 1, 1, 2], [0], [0]>} : vector<4x8x8xf32>, vector<4x8x8xf32>, vector<4x8x8xf32> -> vector<4x8x8xf32>
    "tpu.trace_stop"() : () -> ()
    "tpu.trace_start"() <{level = 10 : i32, message = "htd,hdk->htk"}> : () -> ()
    %cst_58 = arith.constant dense<0.000000e+00> : vector<4x8x32xf32>
    %189 = tpu.matmul %188, %144, %cst_58 {dimension_numbers = #tpu.dot_dimension_numbers<[2], [1], [1], [2], [0, 0, 0, 1, 1, 2], [0], [0]>} : vector<4x8x8xf32>, vector<4x8x32xf32>, vector<4x8x32xf32> -> vector<4x8x32xf32>
    "tpu.trace_stop"() : () -> ()
    %cst_59 = arith.constant dense<0.000000e+00> : vector<8x32xf32>
    %190 = vector.multi_reduction <add>, %189, %cst_59 [0] : vector<4x8x32xf32> to vector<8x32xf32>
    %191 = vector.extract_strided_slice %136 {offsets = [8, 0], sizes = [8, 32], strides = [1, 1]} : vector<16x32xf32> to vector<8x32xf32>
    %192 = vector.extract_strided_slice %191 {offsets = [0, 0], sizes = [8, 8], strides = [1, 1]} : vector<8x32xf32> to vector<8x8xf32>
    %193 = vector.shape_cast %192 : vector<8x8xf32> to vector<1x8x8xf32>
    %194 = vector.extract_strided_slice %191 {offsets = [0, 8], sizes = [8, 8], strides = [1, 1]} : vector<8x32xf32> to vector<8x8xf32>
    %195 = vector.shape_cast %194 : vector<8x8xf32> to vector<1x8x8xf32>
    %196 = vector.extract_strided_slice %191 {offsets = [0, 16], sizes = [8, 8], strides = [1, 1]} : vector<8x32xf32> to vector<8x8xf32>
    %197 = vector.shape_cast %196 : vector<8x8xf32> to vector<1x8x8xf32>
    %198 = vector.extract_strided_slice %191 {offsets = [0, 24], sizes = [8, 8], strides = [1, 1]} : vector<8x32xf32> to vector<8x8xf32>
    %199 = vector.shape_cast %198 : vector<8x8xf32> to vector<1x8x8xf32>
    %200 = tpu.concatenate %193, %195, %197, %199 in 0 : vector<1x8x8xf32>, vector<1x8x8xf32>, vector<1x8x8xf32>, vector<1x8x8xf32> -> vector<4x8x8xf32>
    %201 = vector.extract_strided_slice %142 {offsets = [8, 0], sizes = [8, 32], strides = [1, 1]} : vector<16x32xf32> to vector<8x32xf32>
    %202 = vector.extract_strided_slice %201 {offsets = [0, 0], sizes = [8, 8], strides = [1, 1]} : vector<8x32xf32> to vector<8x8xf32>
    %203 = vector.shape_cast %202 : vector<8x8xf32> to vector<1x8x8xf32>
    %204 = vector.extract_strided_slice %201 {offsets = [0, 8], sizes = [8, 8], strides = [1, 1]} : vector<8x32xf32> to vector<8x8xf32>
    %205 = vector.shape_cast %204 : vector<8x8xf32> to vector<1x8x8xf32>
    %206 = vector.extract_strided_slice %201 {offsets = [0, 16], sizes = [8, 8], strides = [1, 1]} : vector<8x32xf32> to vector<8x8xf32>
    %207 = vector.shape_cast %206 : vector<8x8xf32> to vector<1x8x8xf32>
    %208 = vector.extract_strided_slice %201 {offsets = [0, 24], sizes = [8, 8], strides = [1, 1]} : vector<8x32xf32> to vector<8x8xf32>
    %209 = vector.shape_cast %208 : vector<8x8xf32> to vector<1x8x8xf32>
    %210 = tpu.concatenate %203, %205, %207, %209 in 0 : vector<1x8x8xf32>, vector<1x8x8xf32>, vector<1x8x8xf32>, vector<1x8x8xf32> -> vector<4x8x8xf32>
    %211 = vector.extract_strided_slice %143 {offsets = [8, 0], sizes = [8, 32], strides = [1, 1]} : vector<16x32xf32> to vector<8x32xf32>
    %212 = vector.extract_strided_slice %211 {offsets = [0, 0], sizes = [8, 8], strides = [1, 1]} : vector<8x32xf32> to vector<8x8xf32>
    %213 = vector.shape_cast %212 : vector<8x8xf32> to vector<1x8x8xf32>
    %214 = vector.extract_strided_slice %211 {offsets = [0, 8], sizes = [8, 8], strides = [1, 1]} : vector<8x32xf32> to vector<8x8xf32>
    %215 = vector.shape_cast %214 : vector<8x8xf32> to vector<1x8x8xf32>
    %216 = vector.extract_strided_slice %211 {offsets = [0, 16], sizes = [8, 8], strides = [1, 1]} : vector<8x32xf32> to vector<8x8xf32>
    %217 = vector.shape_cast %216 : vector<8x8xf32> to vector<1x8x8xf32>
    %218 = vector.extract_strided_slice %211 {offsets = [0, 24], sizes = [8, 8], strides = [1, 1]} : vector<8x32xf32> to vector<8x8xf32>
    %219 = vector.shape_cast %218 : vector<8x8xf32> to vector<1x8x8xf32>
    %220 = tpu.concatenate %213, %215, %217, %219 in 0 : vector<1x8x8xf32>, vector<1x8x8xf32>, vector<1x8x8xf32>, vector<1x8x8xf32> -> vector<4x8x8xf32>
    "tpu.trace_start"() <{level = 10 : i32, message = "htd,hsd->hts"}> : () -> ()
    %cst_60 = arith.constant dense<0.000000e+00> : vector<4x8x8xf32>
    %221 = tpu.matmul %200, %210, %cst_60 {dimension_numbers = #tpu.dot_dimension_numbers<[2], [2], [1], [1], [0, 0, 0, 1, 1, 1], [0], [0]>} : vector<4x8x8xf32>, vector<4x8x8xf32>, vector<4x8x8xf32> -> vector<4x8x8xf32>
    "tpu.trace_stop"() : () -> ()
    %cst_61 = arith.constant dense<0xFF800000> : vector<4x8xf32>
    %222 = vector.multi_reduction <maximumf>, %221, %cst_61 [2] : vector<4x8x8xf32> to vector<4x8xf32>
    %223 = vector.shape_cast %222 : vector<4x8xf32> to vector<4x8x1xf32>
    %224 = vector.broadcast %223 : vector<4x8x1xf32> to vector<4x8x8xf32>
    %225 = arith.subf %221, %224 : vector<4x8x8xf32>
    %226 = math.exp %225 : vector<4x8x8xf32>
    %cst_62 = arith.constant dense<0.000000e+00> : vector<4x8xf32>
    %227 = vector.multi_reduction <add>, %226, %cst_62 [2] : vector<4x8x8xf32> to vector<4x8xf32>
    %228 = vector.shape_cast %227 : vector<4x8xf32> to vector<4x8x1xf32>
    %cst_63 = arith.constant 1.000000e+00 : f32
    %229 = vector.broadcast %cst_63 : f32 to vector<4x8x1xf32>
    %230 = arith.divf %229, %228 : vector<4x8x1xf32>
    %231 = vector.broadcast %230 : vector<4x8x1xf32> to vector<4x8x8xf32>
    %232 = arith.mulf %226, %231 : vector<4x8x8xf32>
    "tpu.trace_start"() <{level = 10 : i32, message = "hts,hsd->htd"}> : () -> ()
    %cst_64 = arith.constant dense<0.000000e+00> : vector<4x8x8xf32>
    %233 = tpu.matmul %232, %220, %cst_64 {dimension_numbers = #tpu.dot_dimension_numbers<[2], [1], [1], [2], [0, 0, 0, 1, 1, 2], [0], [0]>} : vector<4x8x8xf32>, vector<4x8x8xf32>, vector<4x8x8xf32> -> vector<4x8x8xf32>
    "tpu.trace_stop"() : () -> ()
    "tpu.trace_start"() <{level = 10 : i32, message = "htd,hdk->htk"}> : () -> ()
    %cst_65 = arith.constant dense<0.000000e+00> : vector<4x8x32xf32>
    %234 = tpu.matmul %233, %144, %cst_65 {dimension_numbers = #tpu.dot_dimension_numbers<[2], [1], [1], [2], [0, 0, 0, 1, 1, 2], [0], [0]>} : vector<4x8x8xf32>, vector<4x8x32xf32>, vector<4x8x32xf32> -> vector<4x8x32xf32>
    "tpu.trace_stop"() : () -> ()
    %cst_66 = arith.constant dense<0.000000e+00> : vector<8x32xf32>
    %235 = vector.multi_reduction <add>, %234, %cst_66 [0] : vector<4x8x32xf32> to vector<8x32xf32>
    %236 = tpu.concatenate %190, %235 in 0 : vector<8x32xf32>, vector<8x32xf32> -> vector<16x32xf32>
    %237 = vector.broadcast %145 : vector<1x32xf32> to vector<16x32xf32>
    %238 = arith.addf %236, %237 : vector<16x32xf32>
    %239 = arith.addf %131, %238 : vector<16x32xf32>
    %c0_67 = arith.constant 0 : index
    %c0_68 = arith.constant 0 : index
    %240 = vector.load %arg15[%c0_67, %c0_68] : memref<1x32xf32, #tpu.memory_space<vmem>>, vector<1x32xf32>
    %c0_69 = arith.constant 0 : index
    %c0_70 = arith.constant 0 : index
    %241 = vector.load %arg16[%c0_69, %c0_70] : memref<1x32xf32, #tpu.memory_space<vmem>>, vector<1x32xf32>
    %cst_71 = arith.constant dense<0.000000e+00> : vector<16xf32>
    %242 = vector.multi_reduction <add>, %239, %cst_71 [1] : vector<16x32xf32> to vector<16xf32>
    %243 = vector.shape_cast %242 : vector<16xf32> to vector<16x1xf32>
    %cst_72 = arith.constant 3.200000e+01 : f32
    %244 = vector.broadcast %cst_72 : f32 to vector<16x1xf32>
    %245 = arith.divf %243, %244 : vector<16x1xf32>
    %246 = vector.broadcast %245 : vector<16x1xf32> to vector<16x32xf32>
    %247 = arith.subf %239, %246 : vector<16x32xf32>
    %248 = arith.mulf %247, %247 : vector<16x32xf32>
    %cst_73 = arith.constant dense<0.000000e+00> : vector<16xf32>
    %249 = vector.multi_reduction <add>, %248, %cst_73 [1] : vector<16x32xf32> to vector<16xf32>
    %250 = vector.shape_cast %249 : vector<16xf32> to vector<16x1xf32>
    %cst_74 = arith.constant 0.0322580636 : f32
    %251 = vector.broadcast %cst_74 : f32 to vector<16x1xf32>
    %252 = arith.mulf %250, %251 : vector<16x1xf32>
    %253 = math.sqrt %252 : vector<16x1xf32>
    %cst_75 = arith.constant 9.99999996E-13 : f32
    %254 = vector.broadcast %cst_75 : f32 to vector<16x1xf32>
    %255 = arith.addf %253, %254 : vector<16x1xf32>
    %cst_76 = arith.constant 1.000000e+00 : f32
    %256 = vector.broadcast %cst_76 : f32 to vector<16x1xf32>
    %257 = arith.divf %256, %255 : vector<16x1xf32>
    %258 = vector.broadcast %257 : vector<16x1xf32> to vector<16x32xf32>
    %259 = arith.mulf %247, %258 : vector<16x32xf32>
    %260 = vector.broadcast %240 : vector<1x32xf32> to vector<16x32xf32>
    %261 = arith.mulf %260, %259 : vector<16x32xf32>
    %262 = vector.broadcast %241 : vector<1x32xf32> to vector<16x32xf32>
    %263 = arith.addf %261, %262 : vector<16x32xf32>
    %c0_77 = arith.constant 0 : index
    %c0_78 = arith.constant 0 : index
    %264 = vector.load %arg17[%c0_77, %c0_78] : memref<32x64xf32, #tpu.memory_space<vmem>>, vector<32x64xf32>
    %cst_79 = arith.constant dense<0.000000e+00> : vector<16x64xf32>
    %265 = tpu.matmul %263, %264, %cst_79 {dimension_numbers = #tpu.dot_dimension_numbers<[1], [0], [0], [1], [0, 0, 1, 1], [], []>} : vector<16x32xf32>, vector<32x64xf32>, vector<16x64xf32> -> vector<16x64xf32>
    %c0_80 = arith.constant 0 : index
    %c0_81 = arith.constant 0 : index
    %266 = vector.load %arg18[%c0_80, %c0_81] : memref<1x64xf32, #tpu.memory_space<vmem>>, vector<1x64xf32>
    %267 = vector.broadcast %266 : vector<1x64xf32> to vector<16x64xf32>
    %268 = arith.addf %265, %267 : vector<16x64xf32>
    %cst_82 = arith.constant 0.000000e+00 : f32
    %269 = vector.broadcast %cst_82 : f32 to vector<16x64xf32>
    %270 = arith.maximumf %268, %269 : vector<16x64xf32>
    %c0_83 = arith.constant 0 : index
    %c0_84 = arith.constant 0 : index
    %271 = vector.load %arg19[%c0_83, %c0_84] : memref<64x32xf32, #tpu.memory_space<vmem>>, vector<64x32xf32>
    %cst_85 = arith.constant dense<0.000000e+00> : vector<16x32xf32>
    %272 = tpu.matmul %270, %271, %cst_85 {dimension_numbers = #tpu.dot_dimension_numbers<[1], [0], [0], [1], [0, 0, 1, 1], [], []>} : vector<16x64xf32>, vector<64x32xf32>, vector<16x32xf32> -> vector<16x32xf32>
    %c0_86 = arith.constant 0 : index
    %c0_87 = arith.constant 0 : index
    %273 = vector.load %arg20[%c0_86, %c0_87] : memref<1x32xf32, #tpu.memory_space<vmem>>, vector<1x32xf32>
    %274 = vector.broadcast %273 : vector<1x32xf32> to vector<16x32xf32>
    %275 = arith.addf %272, %274 : vector<16x32xf32>
    %276 = arith.addf %263, %275 : vector<16x32xf32>
    %c0_88 = arith.constant 0 : index
    %c0_89 = arith.constant 0 : index
    %277 = vector.load %arg21[%c0_88, %c0_89] : memref<1x32xf32, #tpu.memory_space<vmem>>, vector<1x32xf32>
    %c0_90 = arith.constant 0 : index
    %c0_91 = arith.constant 0 : index
    %278 = vector.load %arg22[%c0_90, %c0_91] : memref<1x32xf32, #tpu.memory_space<vmem>>, vector<1x32xf32>
    %cst_92 = arith.constant dense<0.000000e+00> : vector<16xf32>
    %279 = vector.multi_reduction <add>, %276, %cst_92 [1] : vector<16x32xf32> to vector<16xf32>
    %280 = vector.shape_cast %279 : vector<16xf32> to vector<16x1xf32>
    %cst_93 = arith.constant 3.200000e+01 : f32
    %281 = vector.broadcast %cst_93 : f32 to vector<16x1xf32>
    %282 = arith.divf %280, %281 : vector<16x1xf32>
    %283 = vector.broadcast %282 : vector<16x1xf32> to vector<16x32xf32>
    %284 = arith.subf %276, %283 : vector<16x32xf32>
    %285 = arith.mulf %284, %284 : vector<16x32xf32>
    %cst_94 = arith.constant dense<0.000000e+00> : vector<16xf32>
    %286 = vector.multi_reduction <add>, %285, %cst_94 [1] : vector<16x32xf32> to vector<16xf32>
    %287 = vector.shape_cast %286 : vector<16xf32> to vector<16x1xf32>
    %cst_95 = arith.constant 0.0322580636 : f32
    %288 = vector.broadcast %cst_95 : f32 to vector<16x1xf32>
    %289 = arith.mulf %287, %288 : vector<16x1xf32>
    %290 = math.sqrt %289 : vector<16x1xf32>
    %cst_96 = arith.constant 9.99999996E-13 : f32
    %291 = vector.broadcast %cst_96 : f32 to vector<16x1xf32>
    %292 = arith.addf %290, %291 : vector<16x1xf32>
    %cst_97 = arith.constant 1.000000e+00 : f32
    %293 = vector.broadcast %cst_97 : f32 to vector<16x1xf32>
    %294 = arith.divf %293, %292 : vector<16x1xf32>
    %295 = vector.broadcast %294 : vector<16x1xf32> to vector<16x32xf32>
    %296 = arith.mulf %284, %295 : vector<16x32xf32>
    %297 = vector.broadcast %277 : vector<1x32xf32> to vector<16x32xf32>
    %298 = arith.mulf %297, %296 : vector<16x32xf32>
    %299 = vector.broadcast %278 : vector<1x32xf32> to vector<16x32xf32>
    %300 = arith.addf %298, %299 : vector<16x32xf32>
    %301 = vector.shape_cast %300 : vector<16x32xf32> to vector<2x8x32xf32>
    %c0_98 = arith.constant 0 : index
    %c0_99 = arith.constant 0 : index
    %c0_100 = arith.constant 0 : index
    %302 = vector.load %arg23[%c0_98, %c0_99, %c0_100] : memref<2x8x32xf32, #tpu.memory_space<vmem>>, vector<2x8x32xf32>
    tpu.vector_store %arg23[%c0_98, %c0_99, %c0_100], %301 {strides = array<i32>} : memref<2x8x32xf32, #tpu.memory_space<vmem>>, vector<2x8x32xf32>,
    return
  }
  func.func @transform_0(%arg0: i32) -> (i32, i32, i32) {
    %c0_i32 = arith.constant 0 : i32
    %c0_i32_0 = arith.constant 0 : i32
    %c0_i32_1 = arith.constant 0 : i32
    return %arg0, %c0_i32, %c0_i32_0 : i32, i32, i32
  }
  func.func @transform_1(%arg0: i32) -> (i32, i32, i32) {
    %c0_i32 = arith.constant 0 : i32
    %c0_i32_0 = arith.constant 0 : i32
    %c0_i32_1 = arith.constant 0 : i32
    return %arg0, %c0_i32, %c0_i32_0 : i32, i32, i32
  }
  func.func @transform_2(%arg0: i32) -> (i32, i32) {
    %c0_i32 = arith.constant 0 : i32
    %c0_i32_0 = arith.constant 0 : i32
    %c0_i32_1 = arith.constant 0 : i32
    return %c0_i32, %c0_i32_0 : i32, i32
  }
  func.func @transform_3(%arg0: i32) -> (i32, i32) {
    %c0_i32 = arith.constant 0 : i32
    %c0_i32_0 = arith.constant 0 : i32
    %c0_i32_1 = arith.constant 0 : i32
    return %c0_i32, %c0_i32_0 : i32, i32
  }
  func.func @transform_4(%arg0: i32) -> (i32, i32, i32) {
    %c0_i32 = arith.constant 0 : i32
    %c0_i32_0 = arith.constant 0 : i32
    %c0_i32_1 = arith.constant 0 : i32
    %c0_i32_2 = arith.constant 0 : i32
    return %c0_i32, %c0_i32_0, %c0_i32_1 : i32, i32, i32
  }
  func.func @transform_5(%arg0: i32) -> (i32, i32) {
    %c0_i32 = arith.constant 0 : i32
    %c0_i32_0 = arith.constant 0 : i32
    %c0_i32_1 = arith.constant 0 : i32
    return %c0_i32, %c0_i32_0 : i32, i32
  }
  func.func @transform_6(%arg0: i32) -> (i32, i32) {
    %c0_i32 = arith.constant 0 : i32
    %c0_i32_0 = arith.constant 0 : i32
    %c0_i32_1 = arith.constant 0 : i32
    return %c0_i32, %c0_i32_0 : i32, i32
  }
  func.func @transform_7(%arg0: i32) -> (i32, i32) {
    %c0_i32 = arith.constant 0 : i32
    %c0_i32_0 = arith.constant 0 : i32
    %c0_i32_1 = arith.constant 0 : i32
    return %c0_i32, %c0_i32_0 : i32, i32
  }
  func.func @transform_8(%arg0: i32) -> (i32, i32) {
    %c0_i32 = arith.constant 0 : i32
    %c0_i32_0 = arith.constant 0 : i32
    %c0_i32_1 = arith.constant 0 : i32
    return %c0_i32, %c0_i32_0 : i32, i32
  }
  func.func @transform_9(%arg0: i32) -> (i32, i32) {
    %c0_i32 = arith.constant 0 : i32
    %c0_i32_0 = arith.constant 0 : i32
    %c0_i32_1 = arith.constant 0 : i32
    return %c0_i32, %c0_i32_0 : i32, i32
  }
  func.func @transform_10(%arg0: i32) -> (i32, i32) {
    %c0_i32 = arith.constant 0 : i32
    %c0_i32_0 = arith.constant 0 : i32
    %c0_i32_1 = arith.constant 0 : i32
    return %c0_i32, %c0_i32_0 : i32, i32
  }
  func.func @transform_11(%arg0: i32) -> (i32, i32) {
    %c0_i32 = arith.constant 0 : i32
    %c0_i32_0 = arith.constant 0 : i32
    %c0_i32_1 = arith.constant 0 : i32
    return %c0_i32, %c0_i32_0 : i32, i32
  }
  func.func @transform_12(%arg0: i32) -> (i32, i32, i32) {
    %c0_i32 = arith.constant 0 : i32
    %c0_i32_0 = arith.constant 0 : i32
    %c0_i32_1 = arith.constant 0 : i32
    %c0_i32_2 = arith.constant 0 : i32
    return %c0_i32, %c0_i32_0, %c0_i32_1 : i32, i32, i32
  }
  func.func @transform_13(%arg0: i32) -> (i32, i32) {
    %c0_i32 = arith.constant 0 : i32
    %c0_i32_0 = arith.constant 0 : i32
    %c0_i32_1 = arith.constant 0 : i32
    return %c0_i32, %c0_i32_0 : i32, i32
  }
  func.func @transform_14(%arg0: i32) -> (i32, i32) {
    %c0_i32 = arith.constant 0 : i32
    %c0_i32_0 = arith.constant 0 : i32
    %c0_i32_1 = arith.constant 0 : i32
    return %c0_i32, %c0_i32_0 : i32, i32
  }
  func.func @transform_15(%arg0: i32) -> (i32, i32) {
    %c0_i32 = arith.constant 0 : i32
    %c0_i32_0 = arith.constant 0 : i32
    %c0_i32_1 = arith.constant 0 : i32
    return %c0_i32, %c0_i32_0 : i32, i32
  }
  func.func @transform_16(%arg0: i32) -> (i32, i32) {
    %c0_i32 = arith.constant 0 : i32
    %c0_i32_0 = arith.constant 0 : i32
    %c0_i32_1 = arith.constant 0 : i32
    return %c0_i32, %c0_i32_0 : i32, i32
  }
  func.func @transform_17(%arg0: i32) -> (i32, i32) {
    %c0_i32 = arith.constant 0 : i32
    %c0_i32_0 = arith.constant 0 : i32
    %c0_i32_1 = arith.constant 0 : i32
    return %c0_i32, %c0_i32_0 : i32, i32
  }
  func.func @transform_18(%arg0: i32) -> (i32, i32) {
    %c0_i32 = arith.constant 0 : i32
    %c0_i32_0 = arith.constant 0 : i32
    %c0_i32_1 = arith.constant 0 : i32
    return %c0_i32, %c0_i32_0 : i32, i32
  }
  func.func @transform_19(%arg0: i32) -> (i32, i32) {
    %c0_i32 = arith.constant 0 : i32
    %c0_i32_0 = arith.constant 0 : i32
    %c0_i32_1 = arith.constant 0 : i32
    return %c0_i32, %c0_i32_0 : i32, i32
  }
  func.func @transform_20(%arg0: i32) -> (i32, i32) {
    %c0_i32 = arith.constant 0 : i32
    %c0_i32_0 = arith.constant 0 : i32
    %c0_i32_1 = arith.constant 0 : i32
    return %c0_i32, %c0_i32_0 : i32, i32
  }
  func.func @transform_21(%arg0: i32) -> (i32, i32) {
    %c0_i32 = arith.constant 0 : i32
    %c0_i32_0 = arith.constant 0 : i32
    %c0_i32_1 = arith.constant 0 : i32
    return %c0_i32, %c0_i32_0 : i32, i32
  }
  func.func @transform_22(%arg0: i32) -> (i32, i32, i32) {
    %c0_i32 = arith.constant 0 : i32
    %c0_i32_0 = arith.constant 0 : i32
    %c0_i32_1 = arith.constant 0 : i32
    return %arg0, %c0_i32, %c0_i32_0 : i32, i32, i32
  }
}

</mosaic_0001>

<llo_original>
// kernel: tpu_custom_call.1
$region0: #{tpu_custom_call.1}
  #allocation0 [shape = 'u32[]', space=smem, size = 0x4, offset = 0x4, fixed_abs, tag = 'smem constant byte address 0x4 - core index']
  #allocation1 [shape = 'u32[144,128]{1,0:T(1,128)}', space=vmem, size = 0x12000, scoped, tag = 'internal scratch']
  %s0 = inlined_call_operand.hbm [shape: f32[2,8,32], index: 0, kind: input, shape index: {}]
  %s1 = inlined_call_operand.hbm [shape: f32[2,8,32], index: 1, kind: input, shape index: {}]
  %s2 = inlined_call_operand.vmem [shape: f32[32,96], index: 2, kind: input, shape index: {}]
  %s3 = inlined_call_operand.hbm [shape: f32[1,96], index: 3, kind: input, shape index: {}]
  %s4 = inlined_call_operand.vmem [shape: f32[4,8,32], index: 4, kind: input, shape index: {}]
  %s5 = inlined_call_operand.hbm [shape: f32[1,32], index: 5, kind: input, shape index: {}]
  %s6 = inlined_call_operand.hbm [shape: f32[1,32], index: 6, kind: input, shape index: {}]
  %s7 = inlined_call_operand.hbm [shape: f32[1,32], index: 7, kind: input, shape index: {}]
  %s8 = inlined_call_operand.vmem [shape: f32[32,32], index: 8, kind: input, shape index: {}]
  %s9 = inlined_call_operand.hbm [shape: f32[1,32], index: 9, kind: input, shape index: {}]
  %s10 = inlined_call_operand.vmem [shape: f32[32,64], index: 10, kind: input, shape index: {}]
  %s11 = inlined_call_operand.hbm [shape: f32[1,64], index: 11, kind: input, shape index: {}]
  %s12 = inlined_call_operand.hbm [shape: f32[4,8,32], index: 12, kind: input, shape index: {}]
  %s13 = inlined_call_operand.hbm [shape: f32[1,32], index: 13, kind: input, shape index: {}]
  %s14 = inlined_call_operand.hbm [shape: f32[1,32], index: 14, kind: input, shape index: {}]
  %s15 = inlined_call_operand.hbm [shape: f32[1,32], index: 15, kind: input, shape index: {}]
  %s16 = inlined_call_operand.hbm [shape: f32[32,64], index: 16, kind: input, shape index: {}]
  %s17 = inlined_call_operand.hbm [shape: f32[1,64], index: 17, kind: input, shape index: {}]
  %s18 = inlined_call_operand.vmem [shape: f32[64,32], index: 18, kind: input, shape index: {}]
  %s19 = inlined_call_operand.vmem [shape: f32[1,32], index: 19, kind: input, shape index: {}]
  %s20 = inlined_call_operand.vmem [shape: f32[1,32], index: 20, kind: input, shape index: {}]
  %s21 = inlined_call_operand.vmem [shape: f32[1,32], index: 21, kind: input, shape index: {}]
  %s22 = inlined_call_operand.hbm [shape: f32[2,8,32], index: 22, kind: output, shape index: {}]
  %s23 = sld [smem:[#allocation0]]
  $region154: #{tpu_custom_call.1} parent=0
    _
  %s25 = ssub.s32 1, %s23
  %s26 = scalar_select 0, %s25, %s23
  $region1: #{tpu_custom_call.1} parent=0
    #allocation2 [shape = 'u8[8192]{0}', space=vmem, size = 0x2000, scoped, tag = 'input window, operand 0, single buffered']
    #allocation3 [shape = 's32[1]{0}', space=sflag, size = 0x4, scoped, tag = 'scoped memory for tpu_custom_call.1']
    #allocation4 [shape = 's32[1]{0}', space=sflag, size = 0x4, scoped, tag = 'scoped memory for tpu_custom_call.1']
    #allocation5 [shape = 'u8[8192]{0}', space=vmem, size = 0x2000, scoped, tag = 'input window, operand 1, single buffered']
    #allocation6 [shape = 's32[1]{0}', space=sflag, size = 0x4, scoped, tag = 'scoped memory for tpu_custom_call.1']
    #allocation7 [shape = 'u8[512]{0}', space=vmem, size = 0x400, scoped, tag = 'input window, operand 3, single buffered']
    #allocation8 [shape = 'u8[512]{0}', space=vmem, size = 0x400, scoped, tag = 'input window, operand 5, single buffered']
    #allocation9 [shape = 's32[1]{0}', space=sflag, size = 0x4, scoped, tag = 'scoped memory for tpu_custom_call.1']
    #allocation10 [shape = 'u8[512]{0}', space=vmem, size = 0x400, scoped, tag = 'input window, operand 6, single buffered']
    #allocation11 [shape = 'u8[512]{0}', space=vmem, size = 0x400, scoped, tag = 'input window, operand 7, single buffered']
    #allocation12 [shape = 's32[1]{0}', space=sflag, size = 0x4, scoped, tag = 'scoped memory for tpu_custom_call.1']
    #allocation13 [shape = 'u8[512]{0}', space=vmem, size = 0x400, scoped, tag = 'input window, operand 9, single buffered']
    #allocation14 [shape = 'u8[512]{0}', space=vmem, size = 0x400, scoped, tag = 'input window, operand 11, single buffered']
    #allocation15 [shape = 's32[1]{0}', space=sflag, size = 0x4, scoped, tag = 'scoped memory for tpu_custom_call.1']
    #allocation16 [shape = 'u8[16384]{0}', space=vmem, size = 0x4000, scoped, tag = 'input window, operand 12, single buffered']
    #allocation17 [shape = 'u8[512]{0}', space=vmem, size = 0x400, scoped, tag = 'input window, operand 13, single buffered']
    #allocation18 [shape = 's32[1]{0}', space=sflag, size = 0x4, scoped, tag = 'scoped memory for tpu_custom_call.1']
    #allocation19 [shape = 'u8[512]{0}', space=vmem, size = 0x400, scoped, tag = 'input window, operand 14, single buffered']
    #allocation20 [shape = 'u8[512]{0}', space=vmem, size = 0x400, scoped, tag = 'input window, operand 15, single buffered']
    #allocation21 [shape = 's32[1]{0}', space=sflag, size = 0x4, scoped, tag = 'scoped memory for tpu_custom_call.1']
    #allocation22 [shape = 'u8[16384]{0}', space=vmem, size = 0x4000, scoped, tag = 'input window, operand 16, single buffered']
    #allocation23 [shape = 'u8[512]{0}', space=vmem, size = 0x400, scoped, tag = 'input window, operand 17, single buffered']
    #allocation24 [shape = 's32[1]{0}', space=sflag, size = 0x4, scoped, tag = 'scoped memory for tpu_custom_call.1']
    #allocation25 [shape = 'u8[8192]{0}', space=vmem, size = 0x2000, scoped, tag = 'output window, operand 0, single buffered']
    %27 = vsyncpa [#allocation3], 0
    %28 = vsyncpa [#allocation6], 0
    %29 = vsyncpa [#allocation9], 0
    %30 = vsyncpa [#allocation12], 0
    %31 = vsyncpa [#allocation15], 0
    %32 = vsyncpa [#allocation18], 0
    %33 = vsyncpa [#allocation21], 0
    %34 = vsyncpa [#allocation24], 0
    %35 = vsyncpa [#allocation4], 0
    // Predicated region
    $region2: #{tpu_custom_call.1} parent=1 // pred_check
      _
    $region3: #{tpu_custom_call.1} parent=1 // pred_check_branch
      %37 = sbr.rel (0) target = $region5
    $region4: #{tpu_custom_call.1} parent=1 // pred_region
      %s39 = ssub.s32 256, 256
      %40 = vsyncadd [#allocation3], %s39
      %s41 = sshll.u32 [#allocation2], 4
      %s42 = int_to_ptr.vmem [resolvable:$true] %s41
      %47 = dma.hbm_to_vmem [thread:$0]  %s0, 256, %s42, [#allocation3], 128, 128, 8
    $region5: #{tpu_custom_call.1} parent=1 // pred_fallthru
      _
    // Predicated region
    $region6: #{tpu_custom_call.1} parent=1 // pred_check
      _
    $region7: #{tpu_custom_call.1} parent=1 // pred_check_branch
      %49 = sbr.rel (0) target = $region9
    $region8: #{tpu_custom_call.1} parent=1 // pred_region
      %s51 = ssub.s32 256, 256
      %52 = vsyncadd [#allocation6], %s51
      %s53 = sshll.u32 [#allocation5], 4
      %s54 = int_to_ptr.vmem [resolvable:$true] %s53
      %59 = dma.hbm_to_vmem [thread:$0]  %s1, 256, %s54, [#allocation6], 128, 128, 8
    $region9: #{tpu_custom_call.1} parent=1 // pred_fallthru
      _
    // Predicated region
    $region10: #{tpu_custom_call.1} parent=1 // pred_check
      _
    $region11: #{tpu_custom_call.1} parent=1 // pred_check_branch
      %61 = sbr.rel (0) target = $region13
    $region12: #{tpu_custom_call.1} parent=1 // pred_region
      _
    $region13: #{tpu_custom_call.1} parent=1 // pred_fallthru
      _
    // Predicated region
    $region14: #{tpu_custom_call.1} parent=1 // pred_check
      _
    $region15: #{tpu_custom_call.1} parent=1 // pred_check_branch
      %63 = sbr.rel (0) target = $region17
    $region16: #{tpu_custom_call.1} parent=1 // pred_region
      %s65 = ssub.s32 16, 16
      %66 = vsyncadd [#allocation6], %s65
      %s68 = sshll.u32 [#allocation7], 4
      %s69 = int_to_ptr.vmem [resolvable:$true] %s68
      %71 = dma.hbm_to_vmem [thread:$0]  %s3, 16, %s69, [#allocation6]
    $region17: #{tpu_custom_call.1} parent=1 // pred_fallthru
      _
    // Predicated region
    $region18: #{tpu_custom_call.1} parent=1 // pred_check
      _
    $region19: #{tpu_custom_call.1} parent=1 // pred_check_branch
      %73 = sbr.rel (0) target = $region21
    $region20: #{tpu_custom_call.1} parent=1 // pred_region
      _
    $region21: #{tpu_custom_call.1} parent=1 // pred_fallthru
      _
    // Predicated region
    $region22: #{tpu_custom_call.1} parent=1 // pred_check
      _
    $region23: #{tpu_custom_call.1} parent=1 // pred_check_branch
      %75 = sbr.rel (0) target = $region25
    $region24: #{tpu_custom_call.1} parent=1 // pred_region
      %s77 = ssub.s32 16, 16
      %78 = vsyncadd [#allocation9], %s77
      %s80 = sshll.u32 [#allocation8], 4
      %s81 = int_to_ptr.vmem [resolvable:$true] %s80
      %83 = dma.hbm_to_vmem [thread:$0]  %s5, 16, %s81, [#allocation9]
    $region25: #{tpu_custom_call.1} parent=1 // pred_fallthru
      _
    // Predicated region
    $region26: #{tpu_custom_call.1} parent=1 // pred_check
      _
    $region27: #{tpu_custom_call.1} parent=1 // pred_check_branch
      %85 = sbr.rel (0) target = $region29
    $region28: #{tpu_custom_call.1} parent=1 // pred_region
      %s87 = ssub.s32 16, 16
      %88 = vsyncadd [#allocation9], %s87
      %s90 = sshll.u32 [#allocation10], 4
      %s91 = int_to_ptr.vmem [resolvable:$true] %s90
      %93 = dma.hbm_to_vmem [thread:$0]  %s6, 16, %s91, [#allocation9]
    $region29: #{tpu_custom_call.1} parent=1 // pred_fallthru
      _
    // Predicated region
    $region30: #{tpu_custom_call.1} parent=1 // pred_check
      _
    $region31: #{tpu_custom_call.1} parent=1 // pred_check_branch
      %95 = sbr.rel (0) target = $region33
    $region32: #{tpu_custom_call.1} parent=1 // pred_region
      %s97 = ssub.s32 16, 16
      %98 = vsyncadd [#allocation12], %s97
      %s100 = sshll.u32 [#allocation11], 4
      %s101 = int_to_ptr.vmem [resolvable:$true] %s100
      %103 = dma.hbm_to_vmem [thread:$0]  %s7, 16, %s101, [#allocation12]
    $region33: #{tpu_custom_call.1} parent=1 // pred_fallthru
      _
    // Predicated region
    $region34: #{tpu_custom_call.1} parent=1 // pred_check
      _
    $region35: #{tpu_custom_call.1} parent=1 // pred_check_branch
      %105 = sbr.rel (0) target = $region37
    $region36: #{tpu_custom_call.1} parent=1 // pred_region
      _
    $region37: #{tpu_custom_call.1} parent=1 // pred_fallthru
      _
    // Predicated region
    $region38: #{tpu_custom_call.1} parent=1 // pred_check
      _
    $region39: #{tpu_custom_call.1} parent=1 // pred_check_branch
      %107 = sbr.rel (0) target = $region41
    $region40: #{tpu_custom_call.1} parent=1 // pred_region
      %s109 = ssub.s32 16, 16
      %110 = vsyncadd [#allocation12], %s109
      %s112 = sshll.u32 [#allocation13], 4
      %s113 = int_to_ptr.vmem [resolvable:$true] %s112
      %115 = dma.hbm_to_vmem [thread:$0]  %s9, 16, %s113, [#allocation12]
    $region41: #{tpu_custom_call.1} parent=1 // pred_fallthru
      _
    // Predicated region
    $region42: #{tpu_custom_call.1} parent=1 // pred_check
      _
    $region43: #{tpu_custom_call.1} parent=1 // pred_check_branch
      %117 = sbr.rel (0) target = $region45
    $region44: #{tpu_custom_call.1} parent=1 // pred_region
      _
    $region45: #{tpu_custom_call.1} parent=1 // pred_fallthru
      _
    // Predicated region
    $region46: #{tpu_custom_call.1} parent=1 // pred_check
      _
    $region47: #{tpu_custom_call.1} parent=1 // pred_check_branch
      %119 = sbr.rel (0) target = $region49
    $region48: #{tpu_custom_call.1} parent=1 // pred_region
      %s121 = ssub.s32 16, 16
      %122 = vsyncadd [#allocation15], %s121
      %s124 = sshll.u32 [#allocation14], 4
      %s125 = int_to_ptr.vmem [resolvable:$true] %s124
      %127 = dma.hbm_to_vmem [thread:$0]  %s11, 16, %s125, [#allocation15]
    $region49: #{tpu_custom_call.1} parent=1 // pred_fallthru
      _
    // Predicated region
    $region50: #{tpu_custom_call.1} parent=1 // pred_check
      _
    $region51: #{tpu_custom_call.1} parent=1 // pred_check_branch
      %129 = sbr.rel (0) target = $region53
    $region52: #{tpu_custom_call.1} parent=1 // pred_region
      %s131 = ssub.s32 512, 512
      %132 = vsyncadd [#allocation15], %s131
      %s133 = sshll.u32 [#allocation16], 4
      %s134 = int_to_ptr.vmem [resolvable:$true] %s133
      %139 = dma.hbm_to_vmem [thread:$0]  %s12, 512, %s134, [#allocation15], 128, 128, 8
    $region53: #{tpu_custom_call.1} parent=1 // pred_fallthru
      _
    // Predicated region
    $region54: #{tpu_custom_call.1} parent=1 // pred_check
      _
    $region55: #{tpu_custom_call.1} parent=1 // pred_check_branch
      %141 = sbr.rel (0) target = $region57
    $region56: #{tpu_custom_call.1} parent=1 // pred_region
      %s143 = ssub.s32 16, 16
      %144 = vsyncadd [#allocation18], %s143
      %s146 = sshll.u32 [#allocation17], 4
      %s147 = int_to_ptr.vmem [resolvable:$true] %s146
      %149 = dma.hbm_to_vmem [thread:$0]  %s13, 16, %s147, [#allocation18]
    $region57: #{tpu_custom_call.1} parent=1 // pred_fallthru
      _
    // Predicated region
    $region58: #{tpu_custom_call.1} parent=1 // pred_check
      _
    $region59: #{tpu_custom_call.1} parent=1 // pred_check_branch
      %151 = sbr.rel (0) target = $region61
    $region60: #{tpu_custom_call.1} parent=1 // pred_region
      %s153 = ssub.s32 16, 16
      %154 = vsyncadd [#allocation18], %s153
      %s156 = sshll.u32 [#allocation19], 4
      %s157 = int_to_ptr.vmem [resolvable:$true] %s156
      %159 = dma.hbm_to_vmem [thread:$0]  %s14, 16, %s157, [#allocation18]
    $region61: #{tpu_custom_call.1} parent=1 // pred_fallthru
      _
    // Predicated region
    $region62: #{tpu_custom_call.1} parent=1 // pred_check
      _
    $region63: #{tpu_custom_call.1} parent=1 // pred_check_branch
      %161 = sbr.rel (0) target = $region65
    $region64: #{tpu_custom_call.1} parent=1 // pred_region
      %s163 = ssub.s32 16, 16
      %164 = vsyncadd [#allocation21], %s163
      %s166 = sshll.u32 [#allocation20], 4
      %s167 = int_to_ptr.vmem [resolvable:$true] %s166
      %169 = dma.hbm_to_vmem [thread:$0]  %s15, 16, %s167, [#allocation21]
    $region65: #{tpu_custom_call.1} parent=1 // pred_fallthru
      _
    // Predicated region
    $region66: #{tpu_custom_call.1} parent=1 // pred_check
      _
    $region67: #{tpu_custom_call.1} parent=1 // pred_check_branch
      %171 = sbr.rel (0) target = $region69
    $region68: #{tpu_custom_call.1} parent=1 // pred_region
      %s173 = ssub.s32 512, 512
      %174 = vsyncadd [#allocation21], %s173
      %s175 = sshll.u32 [#allocation22], 4
      %s176 = int_to_ptr.vmem [resolvable:$true] %s175
      %181 = dma.hbm_to_vmem [thread:$0]  %s16, 512, %s176, [#allocation21], 128, 128, 8
    $region69: #{tpu_custom_call.1} parent=1 // pred_fallthru
      _
    // Predicated region
    $region70: #{tpu_custom_call.1} parent=1 // pred_check
      _
    $region71: #{tpu_custom_call.1} parent=1 // pred_check_branch
      %183 = sbr.rel (0) target = $region73
    $region72: #{tpu_custom_call.1} parent=1 // pred_region
      %s185 = ssub.s32 16, 16
      %186 = vsyncadd [#allocation24], %s185
      %s188 = sshll.u32 [#allocation23], 4
      %s189 = int_to_ptr.vmem [resolvable:$true] %s188
      %191 = dma.hbm_to_vmem [thread:$0]  %s17, 16, %s189, [#allocation24]
    $region73: #{tpu_custom_call.1} parent=1 // pred_fallthru
      _
    // Predicated region
    $region74: #{tpu_custom_call.1} parent=1 // pred_check
      _
    $region75: #{tpu_custom_call.1} parent=1 // pred_check_branch
      %193 = sbr.rel (0) target = $region77
    $region76: #{tpu_custom_call.1} parent=1 // pred_region
      _
    $region77: #{tpu_custom_call.1} parent=1 // pred_fallthru
      _
    // Predicated region
    $region78: #{tpu_custom_call.1} parent=1 // pred_check
      _
    $region79: #{tpu_custom_call.1} parent=1 // pred_check_branch
      %195 = sbr.rel (0) target = $region81
    $region80: #{tpu_custom_call.1} parent=1 // pred_region
      _
    $region81: #{tpu_custom_call.1} parent=1 // pred_fallthru
      _
    // Predicated region
    $region82: #{tpu_custom_call.1} parent=1 // pred_check
      _
    $region83: #{tpu_custom_call.1} parent=1 // pred_check_branch
      %197 = sbr.rel (0) target = $region85
    $region84: #{tpu_custom_call.1} parent=1 // pred_region
      _
    $region85: #{tpu_custom_call.1} parent=1 // pred_fallthru
      _
    // Predicated region
    $region86: #{tpu_custom_call.1} parent=1 // pred_check
      _
    $region87: #{tpu_custom_call.1} parent=1 // pred_check_branch
      %199 = sbr.rel (0) target = $region89
    $region88: #{tpu_custom_call.1} parent=1 // pred_region
      _
    $region89: #{tpu_custom_call.1} parent=1 // pred_fallthru
      _
    // Predicated region
    $region90: #{tpu_custom_call.1} parent=1 // pred_check
      _
    $region91: #{tpu_custom_call.1} parent=1 // pred_check_branch
      %201 = sbr.rel (0) target = $region93
    $region92: #{tpu_custom_call.1} parent=1 // pred_region
      %202 = dma.done [#allocation3], 256
    $region93: #{tpu_custom_call.1} parent=1 // pred_fallthru
      _
    // Predicated region
    $region94: #{tpu_custom_call.1} parent=1 // pred_check
      _
    $region95: #{tpu_custom_call.1} parent=1 // pred_check_branch
      %204 = sbr.rel (0) target = $region97
    $region96: #{tpu_custom_call.1} parent=1 // pred_region
      %205 = dma.done [#allocation6], 256
    $region97: #{tpu_custom_call.1} parent=1 // pred_fallthru
      _
    // Predicated region
    $region98: #{tpu_custom_call.1} parent=1 // pred_check
      _
    $region99: #{tpu_custom_call.1} parent=1 // pred_check_branch
      %207 = sbr.rel (0) target = $region101
    $region100: #{tpu_custom_call.1} parent=1 // pred_region
      %208 = dma.done [#allocation6], 16
    $region101: #{tpu_custom_call.1} parent=1 // pred_fallthru
      _
    // Predicated region
    $region102: #{tpu_custom_call.1} parent=1 // pred_check
      _
    $region103: #{tpu_custom_call.1} parent=1 // pred_check_branch
      %210 = sbr.rel (0) target = $region105
    $region104: #{tpu_custom_call.1} parent=1 // pred_region
      %211 = dma.done [#allocation9], 16
    $region105: #{tpu_custom_call.1} parent=1 // pred_fallthru
      _
    // Predicated region
    $region106: #{tpu_custom_call.1} parent=1 // pred_check
      _
    $region107: #{tpu_custom_call.1} parent=1 // pred_check_branch
      %213 = sbr.rel (0) target = $region109
    $region108: #{tpu_custom_call.1} parent=1 // pred_region
      %214 = dma.done [#allocation9], 16
    $region109: #{tpu_custom_call.1} parent=1 // pred_fallthru
      _
    // Predicated region
    $region110: #{tpu_custom_call.1} parent=1 // pred_check
      _
    $region111: #{tpu_custom_call.1} parent=1 // pred_check_branch
      %216 = sbr.rel (0) target = $region113
    $region112: #{tpu_custom_call.1} parent=1 // pred_region
      %217 = dma.done [#allocation12], 16
    $region113: #{tpu_custom_call.1} parent=1 // pred_fallthru
      _
    // Predicated region
    $region114: #{tpu_custom_call.1} parent=1 // pred_check
      _
    $region115: #{tpu_custom_call.1} parent=1 // pred_check_branch
      %219 = sbr.rel (0) target = $region117
    $region116: #{tpu_custom_call.1} parent=1 // pred_region
      %220 = dma.done [#allocation12], 16
    $region117: #{tpu_custom_call.1} parent=1 // pred_fallthru
      _
    // Predicated region
    $region118: #{tpu_custom_call.1} parent=1 // pred_check
      _
    $region119: #{tpu_custom_call.1} parent=1 // pred_check_branch
      %222 = sbr.rel (0) target = $region121
    $region120: #{tpu_custom_call.1} parent=1 // pred_region
      %223 = dma.done [#allocation15], 16
    $region121: #{tpu_custom_call.1} parent=1 // pred_fallthru
      _
    // Predicated region
    $region122: #{tpu_custom_call.1} parent=1 // pred_check
      _
    $region123: #{tpu_custom_call.1} parent=1 // pred_check_branch
      %225 = sbr.rel (0) target = $region125
    $region124: #{tpu_custom_call.1} parent=1 // pred_region
      %226 = dma.done [#allocation15], 512
    $region125: #{tpu_custom_call.1} parent=1 // pred_fallthru
      _
    // Predicated region
    $region126: #{tpu_custom_call.1} parent=1 // pred_check
      _
    $region127: #{tpu_custom_call.1} parent=1 // pred_check_branch
      %228 = sbr.rel (0) target = $region129
    $region128: #{tpu_custom_call.1} parent=1 // pred_region
      %229 = dma.done [#allocation18], 16
    $region129: #{tpu_custom_call.1} parent=1 // pred_fallthru
      _
    // Predicated region
    $region130: #{tpu_custom_call.1} parent=1 // pred_check
      _
    $region131: #{tpu_custom_call.1} parent=1 // pred_check_branch
      %231 = sbr.rel (0) target = $region133
    $region132: #{tpu_custom_call.1} parent=1 // pred_region
      %232 = dma.done [#allocation18], 16
    $region133: #{tpu_custom_call.1} parent=1 // pred_fallthru
      _
    // Predicated region
    $region134: #{tpu_custom_call.1} parent=1 // pred_check
      _
    $region135: #{tpu_custom_call.1} parent=1 // pred_check_branch
      %234 = sbr.rel (0) target = $region137
    $region136: #{tpu_custom_call.1} parent=1 // pred_region
      %235 = dma.done [#allocation21], 16
    $region137: #{tpu_custom_call.1} parent=1 // pred_fallthru
      _
    // Predicated region
    $region138: #{tpu_custom_call.1} parent=1 // pred_check
      _
    $region139: #{tpu_custom_call.1} parent=1 // pred_check_branch
      %237 = sbr.rel (0) target = $region141
    $region140: #{tpu_custom_call.1} parent=1 // pred_region
      %238 = dma.done [#allocation21], 512
    $region141: #{tpu_custom_call.1} parent=1 // pred_fallthru
      _
    // Predicated region
    $region142: #{tpu_custom_call.1} parent=1 // pred_check
      _
    $region143: #{tpu_custom_call.1} parent=1 // pred_check_branch
      %240 = sbr.rel (0) target = $region145
    $region144: #{tpu_custom_call.1} parent=1 // pred_region
      %241 = dma.done [#allocation24], 16
    $region145: #{tpu_custom_call.1} parent=1 // pred_fallthru
      _
    %v242 = vld [vmem:[#allocation2] sm:$0xff]
    %v243 = vld [vmem:[#allocation2 + $0x8] sm:$0xff]
    %v244 = vld [vmem:[#allocation5] sm:$0xff]
    %v245 = vld [vmem:[#allocation5 + $0x8] sm:$0xff]
    %v246 = vld [vmem:[%s2] sm:$0xff]
    %v247 = vld [vmem:[%s2 + $0x8] sm:$0xff]
    %v248 = vld [vmem:[%s2 + $0x10] sm:$0xff]
    %v249 = vld [vmem:[%s2 + $0x18] sm:$0xff]
    %v250 = vld [vmem:[#allocation7] sm:$0x1]
    %v252 = vlaneseq
    %v253 = vshrl.u32 %v252, 7
    %v254 = vsub.s32 0, %v253
    %v255 = vrot.slane %v250, %v254
    %vm257 = vcmask 261120
    %v259 = vsel %vm257, %v242, 0
    %v262 = vsel %vm257, %v243, 0
    %264 = vmatprep.subr.mxu0 0.0
    %265 = vmatpush1.msra.mxu0 %v246
    %266 = vmatprep.subr.mxu0 0.0
    %267 = vmatpush1.msra.mxu0 %v247
    %268 = vmatprep.subr.mxu0 0.0
    %269 = vmatpush1.msra.mxu0 %v248
    %270 = vmatprep.subr.mxu0 0.0
    %271 = vmatpush1.msra.mxu0 %v249
    %272 = vmatprep.subr.mxu0 0.0
    %273 = vmatpush1.msra.mxu0 0.0
    %274 = vmatprep.subr.mxu0 0.0
    %275 = vmatpush1.msra.mxu0 0.0
    %276 = vmatprep.subr.mxu0 0.0
    %277 = vmatpush1.msra.mxu0 0.0
    %278 = vmatprep.subr.mxu0 0.0
    %279 = vmatpush1.msra.mxu0 0.0
    %280 = vmatprep.subr.mxu0 0.0
    %281 = vmatpush1.msra.mxu0 0.0
    %282 = vmatprep.subr.mxu0 0.0
    %283 = vmatpush1.msra.mxu0 0.0
    %284 = vmatprep.subr.mxu0 0.0
    %285 = vmatpush1.msra.mxu0 0.0
    %286 = vmatprep.subr.mxu0 0.0
    %287 = vmatpush1.msra.mxu0 0.0
    %288 = vmatprep.subr.mxu0 0.0
    %289 = vmatpush1.msra.mxu0 0.0
    %290 = vmatprep.subr.mxu0 0.0
    %291 = vmatpush1.msra.mxu0 0.0
    %292 = vmatprep.subr.mxu0 0.0
    %293 = vmatpush1.msra.mxu0 0.0
    %294 = vmatprep.subr.mxu0 0.0
    %295 = vmatpush1.msra.mxu0 0.0
    %296 = vmatprep.subr.mxu0 0.0
    %297 = vmatpush1.msra.mxu0 0.0
    %298 = vmatprep.subr.mxu0 0.0
    %299 = vmatpush1.msra.mxu0 0.0
    %300 = vmatprep.subr.mxu0 0.0
    %301 = vmatpush1.msra.mxu0 0.0
    %302 = vmatprep.subr.mxu0 0.0
    %303 = vmatpush1.msra.mxu0 0.0
    %304 = vmatprep.subr.mxu0 0.0
    %305 = vmatpush1.msra.mxu0 0.0
    %306 = vmatprep.subr.mxu0 0.0
    %307 = vmatpush1.msra.mxu0 0.0
    %308 = vmatprep.subr.mxu0 0.0
    %309 = vmatpush1.msra.mxu0 0.0
    %310 = vmatprep.subr.mxu0 0.0
    %311 = vmatpush1.msra.mxu0 0.0
    %312 = vmatprep.subr.mxu0 0.0
    %313 = vmatpush1.msra.mxu0 0.0
    %314 = vmatprep.subr.mxu0 0.0
    %315 = vmatpush1.msra.mxu0 0.0
    %316 = vmatprep.subr.mxu0 0.0
    %317 = vmatpush1.msra.mxu0 0.0
    %318 = vmatprep.subr.mxu0 0.0
    %319 = vmatpush1.msra.mxu0 0.0
    %320 = vmatprep.subr.mxu0 0.0
    %321 = vmatpush1.msra.mxu0 0.0
    %322 = vmatprep.subr.mxu0 0.0
    %323 = vmatpush1.msra.mxu0 0.0
    %324 = vmatprep.subr.mxu0 0.0
    %325 = vmatpush1.msra.mxu0 0.0
    %326 = vmatprep.subr.mxu0 0.0
    %327 = vmatpush1.msra.mxu0 0.0
    %328 = vmatprep.mubr.f32.mxu0 0.0
    %329 = vmatmul.mubr.f32.gmra.mrb[0].mxu0 %v259
    %v330 = vpop.f32.mrb[0].mxu0
    %v331 = vadd.f32 %v255, %v330
    %v332 = vpop.f32.mrb[0].mxu0
    %333 = vmatprep.mubr.f32.mxu0 0.0
    %334 = vmatmul.mubr.f32.gmra.mrb[0].mxu0 %v262
    %v335 = vpop.f32.mrb[0].mxu0
    %v336 = vadd.f32 %v255, %v335
    %v337 = vpop.f32.mrb[0].mxu0
    %338 = vdwg.mxu0
    %v339 = vld [vmem:[%s4] sm:$0xff]
    %v340 = vld [vmem:[%s4 + $0x8] sm:$0xff]
    %v341 = vld [vmem:[%s4 + $0x10] sm:$0xff]
    %v342 = vld [vmem:[%s4 + $0x18] sm:$0xff]
    %v343 = vld [vmem:[#allocation8] sm:$0x1]
    %345 = vrot.lane.b32.xlu0 %v331, 120
    %v346 = vpop.permute.xlu0 %345
    %347 = vrot.lane.b32.xlu0 %v331, 112
    %v348 = vpop.permute.xlu0 %347
    %349 = vrot.lane.b32.xlu0 %v331, 104
    %v350 = vpop.permute.xlu0 %349
    %351 = vrot.lane.b32.xlu0 %v331, 96
    %v352 = vpop.permute.xlu0 %351
    %vm353 = vcmask 64512
    %v354 = vsel %vm353, %v331, 0
    %v356 = vsel %vm353, %v352, 0
    %358 = vmatprep.subr.mxu0 0.0
    %359 = vmatpush1.xpose.msra.mxu0 %v356
    %360 = vmatprep.subr.mxu0 0.0
    %361 = vmatpush1.xpose.msra.mxu0 0.0
    %362 = vmatprep.subr.mxu0 0.0
    %363 = vmatpush1.xpose.msra.mxu0 0.0
    %364 = vmatprep.subr.mxu0 0.0
    %365 = vmatpush1.xpose.msra.mxu0 0.0
    %366 = vmatprep.subr.mxu0 0.0
    %367 = vmatpush1.xpose.msra.mxu0 0.0
    %368 = vmatprep.subr.mxu0 0.0
    %369 = vmatpush1.xpose.msra.mxu0 0.0
    %370 = vmatprep.subr.mxu0 0.0
    %371 = vmatpush1.xpose.msra.mxu0 0.0
    %372 = vmatprep.subr.mxu0 0.0
    %373 = vmatpush1.xpose.msra.mxu0 0.0
    %374 = vmatprep.subr.mxu0 0.0
    %375 = vmatpush1.xpose.msra.mxu0 0.0
    %376 = vmatprep.subr.mxu0 0.0
    %377 = vmatpush1.xpose.msra.mxu0 0.0
    %378 = vmatprep.subr.mxu0 0.0
    %379 = vmatpush1.xpose.msra.mxu0 0.0
    %380 = vmatprep.subr.mxu0 0.0
    %381 = vmatpush1.xpose.msra.mxu0 0.0
    %382 = vmatprep.subr.mxu0 0.0
    %383 = vmatpush1.xpose.msra.mxu0 0.0
    %384 = vmatprep.subr.mxu0 0.0
    %385 = vmatpush1.xpose.msra.mxu0 0.0
    %386 = vmatprep.subr.mxu0 0.0
    %387 = vmatpush1.xpose.msra.mxu0 0.0
    %388 = vmatprep.subr.mxu0 0.0
    %389 = vmatpush1.xpose.msra.mxu0 0.0
    %390 = vmatprep.subr.mxu0 0.0
    %391 = vmatpush1.xpose.msra.mxu0 0.0
    %392 = vmatprep.subr.mxu0 0.0
    %393 = vmatpush1.xpose.msra.mxu0 0.0
    %394 = vmatprep.subr.mxu0 0.0
    %395 = vmatpush1.xpose.msra.mxu0 0.0
    %396 = vmatprep.subr.mxu0 0.0
    %397 = vmatpush1.xpose.msra.mxu0 0.0
    %398 = vmatprep.subr.mxu0 0.0
    %399 = vmatpush1.xpose.msra.mxu0 0.0
    %400 = vmatprep.subr.mxu0 0.0
    %401 = vmatpush1.xpose.msra.mxu0 0.0
    %402 = vmatprep.subr.mxu0 0.0
    %403 = vmatpush1.xpose.msra.mxu0 0.0
    %404 = vmatprep.subr.mxu0 0.0
    %405 = vmatpush1.xpose.msra.mxu0 0.0
    %406 = vmatprep.subr.mxu0 0.0
    %407 = vmatpush1.xpose.msra.mxu0 0.0
    %408 = vmatprep.subr.mxu0 0.0
    %409 = vmatpush1.xpose.msra.mxu0 0.0
    %410 = vmatprep.subr.mxu0 0.0
    %411 = vmatpush1.xpose.msra.mxu0 0.0
    %412 = vmatprep.subr.mxu0 0.0
    %413 = vmatpush1.xpose.msra.mxu0 0.0
    %414 = vmatprep.subr.mxu0 0.0
    %415 = vmatpush1.xpose.msra.mxu0 0.0
    %416 = vmatprep.subr.mxu0 0.0
    %417 = vmatpush1.xpose.msra.mxu0 0.0
    %418 = vmatprep.subr.mxu0 0.0
    %419 = vmatpush1.xpose.msra.mxu0 0.0
    %420 = vmatprep.subr.mxu0 0.0
    %421 = vmatpush1.xpose.msra.mxu0 0.0
    %422 = vmatprep.mubr.f32.mxu0 0.0
    %423 = vmatmul.mubr.f32.gmra.mrb[0].mxu0 %v354
    %v424 = vpop.f32.mrb[0].mxu0
    %v425 = vadd.f32 0.0, %v424
    %v426 = vpop.f32.mrb[0].mxu0
    %427 = vdwg.mxu0
    %428 = vrot.lane.b32.xlu0 %v346, 96
    %v429 = vpop.permute.xlu0 %428
    %v430 = vsel %vm353, %v346, 0
    %v432 = vsel %vm353, %v429, 0
    %434 = vmatprep.subr.mxu0 0.0
    %435 = vmatpush1.xpose.msra.mxu0 %v432
    %436 = vmatprep.subr.mxu0 0.0
    %437 = vmatpush1.xpose.msra.mxu0 0.0
    %438 = vmatprep.subr.mxu0 0.0
    %439 = vmatpush1.xpose.msra.mxu0 0.0
    %440 = vmatprep.subr.mxu0 0.0
    %441 = vmatpush1.xpose.msra.mxu0 0.0
    %442 = vmatprep.subr.mxu0 0.0
    %443 = vmatpush1.xpose.msra.mxu0 0.0
    %444 = vmatprep.subr.mxu0 0.0
    %445 = vmatpush1.xpose.msra.mxu0 0.0
    %446 = vmatprep.subr.mxu0 0.0
    %447 = vmatpush1.xpose.msra.mxu0 0.0
    %448 = vmatprep.subr.mxu0 0.0
    %449 = vmatpush1.xpose.msra.mxu0 0.0
    %450 = vmatprep.subr.mxu0 0.0
    %451 = vmatpush1.xpose.msra.mxu0 0.0
    %452 = vmatprep.subr.mxu0 0.0
    %453 = vmatpush1.xpose.msra.mxu0 0.0
    %454 = vmatprep.subr.mxu0 0.0
    %455 = vmatpush1.xpose.msra.mxu0 0.0
    %456 = vmatprep.subr.mxu0 0.0
    %457 = vmatpush1.xpose.msra.mxu0 0.0
    %458 = vmatprep.subr.mxu0 0.0
    %459 = vmatpush1.xpose.msra.mxu0 0.0
    %460 = vmatprep.subr.mxu0 0.0
    %461 = vmatpush1.xpose.msra.mxu0 0.0
    %462 = vmatprep.subr.mxu0 0.0
    %463 = vmatpush1.xpose.msra.mxu0 0.0
    %464 = vmatprep.subr.mxu0 0.0
    %465 = vmatpush1.xpose.msra.mxu0 0.0
    %466 = vmatprep.subr.mxu0 0.0
    %467 = vmatpush1.xpose.msra.mxu0 0.0
    %468 = vmatprep.subr.mxu0 0.0
    %469 = vmatpush1.xpose.msra.mxu0 0.0
    %470 = vmatprep.subr.mxu0 0.0
    %471 = vmatpush1.xpose.msra.mxu0 0.0
    %472 = vmatprep.subr.mxu0 0.0
    %473 = vmatpush1.xpose.msra.mxu0 0.0
    %474 = vmatprep.subr.mxu0 0.0
    %475 = vmatpush1.xpose.msra.mxu0 0.0
    %476 = vmatprep.subr.mxu0 0.0
    %477 = vmatpush1.xpose.msra.mxu0 0.0
    %478 = vmatprep.subr.mxu0 0.0
    %479 = vmatpush1.xpose.msra.mxu0 0.0
    %480 = vmatprep.subr.mxu0 0.0
    %481 = vmatpush1.xpose.msra.mxu0 0.0
    %482 = vmatprep.subr.mxu0 0.0
    %483 = vmatpush1.xpose.msra.mxu0 0.0
    %484 = vmatprep.subr.mxu0 0.0
    %485 = vmatpush1.xpose.msra.mxu0 0.0
    %486 = vmatprep.subr.mxu0 0.0
    %487 = vmatpush1.xpose.msra.mxu0 0.0
    %488 = vmatprep.subr.mxu0 0.0
    %489 = vmatpush1.xpose.msra.mxu0 0.0
    %490 = vmatprep.subr.mxu0 0.0
    %491 = vmatpush1.xpose.msra.mxu0 0.0
    %492 = vmatprep.subr.mxu0 0.0
    %493 = vmatpush1.xpose.msra.mxu0 0.0
    %494 = vmatprep.subr.mxu0 0.0
    %495 = vmatpush1.xpose.msra.mxu0 0.0
    %496 = vmatprep.subr.mxu0 0.0
    %497 = vmatpush1.xpose.msra.mxu0 0.0
    %498 = vmatprep.mubr.f32.mxu0 0.0
    %499 = vmatmul.mubr.f32.gmra.mrb[0].mxu0 %v430
    %v500 = vpop.f32.mrb[0].mxu0
    %v501 = vadd.f32 0.0, %v500
    %v502 = vpop.f32.mrb[0].mxu0
    %503 = vdwg.mxu0
    %504 = vrot.lane.b32.xlu0 %v348, 96
    %v505 = vpop.permute.xlu0 %504
    %v506 = vsel %vm353, %v348, 0
    %v508 = vsel %vm353, %v505, 0
    %510 = vmatprep.subr.mxu0 0.0
    %511 = vmatpush1.xpose.msra.mxu0 %v508
    %512 = vmatprep.subr.mxu0 0.0
    %513 = vmatpush1.xpose.msra.mxu0 0.0
    %514 = vmatprep.subr.mxu0 0.0
    %515 = vmatpush1.xpose.msra.mxu0 0.0
    %516 = vmatprep.subr.mxu0 0.0
    %517 = vmatpush1.xpose.msra.mxu0 0.0
    %518 = vmatprep.subr.mxu0 0.0
    %519 = vmatpush1.xpose.msra.mxu0 0.0
    %520 = vmatprep.subr.mxu0 0.0
    %521 = vmatpush1.xpose.msra.mxu0 0.0
    %522 = vmatprep.subr.mxu0 0.0
    %523 = vmatpush1.xpose.msra.mxu0 0.0
    %524 = vmatprep.subr.mxu0 0.0
    %525 = vmatpush1.xpose.msra.mxu0 0.0
    %526 = vmatprep.subr.mxu0 0.0
    %527 = vmatpush1.xpose.msra.mxu0 0.0
    %528 = vmatprep.subr.mxu0 0.0
    %529 = vmatpush1.xpose.msra.mxu0 0.0
    %530 = vmatprep.subr.mxu0 0.0
    %531 = vmatpush1.xpose.msra.mxu0 0.0
    %532 = vmatprep.subr.mxu0 0.0
    %533 = vmatpush1.xpose.msra.mxu0 0.0
    %534 = vmatprep.subr.mxu0 0.0
    %535 = vmatpush1.xpose.msra.mxu0 0.0
    %536 = vmatprep.subr.mxu0 0.0
    %537 = vmatpush1.xpose.msra.mxu0 0.0
    %538 = vmatprep.subr.mxu0 0.0
    %539 = vmatpush1.xpose.msra.mxu0 0.0
    %540 = vmatprep.subr.mxu0 0.0
    %541 = vmatpush1.xpose.msra.mxu0 0.0
    %542 = vmatprep.subr.mxu0 0.0
    %543 = vmatpush1.xpose.msra.mxu0 0.0
    %544 = vmatprep.subr.mxu0 0.0
    %545 = vmatpush1.xpose.msra.mxu0 0.0
    %546 = vmatprep.subr.mxu0 0.0
    %547 = vmatpush1.xpose.msra.mxu0 0.0
    %548 = vmatprep.subr.mxu0 0.0
    %549 = vmatpush1.xpose.msra.mxu0 0.0
    %550 = vmatprep.subr.mxu0 0.0
    %551 = vmatpush1.xpose.msra.mxu0 0.0
    %552 = vmatprep.subr.mxu0 0.0
    %553 = vmatpush1.xpose.msra.mxu0 0.0
    %554 = vmatprep.subr.mxu0 0.0
    %555 = vmatpush1.xpose.msra.mxu0 0.0
    %556 = vmatprep.subr.mxu0 0.0
    %557 = vmatpush1.xpose.msra.mxu0 0.0
    %558 = vmatprep.subr.mxu0 0.0
    %559 = vmatpush1.xpose.msra.mxu0 0.0
    %560 = vmatprep.subr.mxu0 0.0
    %561 = vmatpush1.xpose.msra.mxu0 0.0
    %562 = vmatprep.subr.mxu0 0.0
    %563 = vmatpush1.xpose.msra.mxu0 0.0
    %564 = vmatprep.subr.mxu0 0.0
    %565 = vmatpush1.xpose.msra.mxu0 0.0
    %566 = vmatprep.subr.mxu0 0.0
    %567 = vmatpush1.xpose.msra.mxu0 0.0
    %568 = vmatprep.subr.mxu0 0.0
    %569 = vmatpush1.xpose.msra.mxu0 0.0
    %570 = vmatprep.subr.mxu0 0.0
    %571 = vmatpush1.xpose.msra.mxu0 0.0
    %572 = vmatprep.subr.mxu0 0.0
    %573 = vmatpush1.xpose.msra.mxu0 0.0
    %574 = vmatprep.mubr.f32.mxu0 0.0
    %575 = vmatmul.mubr.f32.gmra.mrb[0].mxu0 %v506
    %v576 = vpop.f32.mrb[0].mxu0
    %v577 = vadd.f32 0.0, %v576
    %v578 = vpop.f32.mrb[0].mxu0
    %579 = vdwg.mxu0
    %580 = vrot.lane.b32.xlu0 %v350, 96
    %v581 = vpop.permute.xlu0 %580
    %v582 = vsel %vm353, %v350, 0
    %v584 = vsel %vm353, %v581, 0
    %586 = vmatprep.subr.mxu0 0.0
    %587 = vmatpush1.xpose.msra.mxu0 %v584
    %588 = vmatprep.subr.mxu0 0.0
    %589 = vmatpush1.xpose.msra.mxu0 0.0
    %590 = vmatprep.subr.mxu0 0.0
    %591 = vmatpush1.xpose.msra.mxu0 0.0
    %592 = vmatprep.subr.mxu0 0.0
    %593 = vmatpush1.xpose.msra.mxu0 0.0
    %594 = vmatprep.subr.mxu0 0.0
    %595 = vmatpush1.xpose.msra.mxu0 0.0
    %596 = vmatprep.subr.mxu0 0.0
    %597 = vmatpush1.xpose.msra.mxu0 0.0
    %598 = vmatprep.subr.mxu0 0.0
    %599 = vmatpush1.xpose.msra.mxu0 0.0
    %600 = vmatprep.subr.mxu0 0.0
    %601 = vmatpush1.xpose.msra.mxu0 0.0
    %602 = vmatprep.subr.mxu0 0.0
    %603 = vmatpush1.xpose.msra.mxu0 0.0
    %604 = vmatprep.subr.mxu0 0.0
    %605 = vmatpush1.xpose.msra.mxu0 0.0
    %606 = vmatprep.subr.mxu0 0.0
    %607 = vmatpush1.xpose.msra.mxu0 0.0
    %608 = vmatprep.subr.mxu0 0.0
    %609 = vmatpush1.xpose.msra.mxu0 0.0
    %610 = vmatprep.subr.mxu0 0.0
    %611 = vmatpush1.xpose.msra.mxu0 0.0
    %612 = vmatprep.subr.mxu0 0.0
    %613 = vmatpush1.xpose.msra.mxu0 0.0
    %614 = vmatprep.subr.mxu0 0.0
    %615 = vmatpush1.xpose.msra.mxu0 0.0
    %616 = vmatprep.subr.mxu0 0.0
    %617 = vmatpush1.xpose.msra.mxu0 0.0
    %618 = vmatprep.subr.mxu0 0.0
    %619 = vmatpush1.xpose.msra.mxu0 0.0
    %620 = vmatprep.subr.mxu0 0.0
    %621 = vmatpush1.xpose.msra.mxu0 0.0
    %622 = vmatprep.subr.mxu0 0.0
    %623 = vmatpush1.xpose.msra.mxu0 0.0
    %624 = vmatprep.subr.mxu0 0.0
    %625 = vmatpush1.xpose.msra.mxu0 0.0
    %626 = vmatprep.subr.mxu0 0.0
    %627 = vmatpush1.xpose.msra.mxu0 0.0
    %628 = vmatprep.subr.mxu0 0.0
    %629 = vmatpush1.xpose.msra.mxu0 0.0
    %630 = vmatprep.subr.mxu0 0.0
    %631 = vmatpush1.xpose.msra.mxu0 0.0
    %632 = vmatprep.subr.mxu0 0.0
    %633 = vmatpush1.xpose.msra.mxu0 0.0
    %634 = vmatprep.subr.mxu0 0.0
    %635 = vmatpush1.xpose.msra.mxu0 0.0
    %636 = vmatprep.subr.mxu0 0.0
    %637 = vmatpush1.xpose.msra.mxu0 0.0
    %638 = vmatprep.subr.mxu0 0.0
    %639 = vmatpush1.xpose.msra.mxu0 0.0
    %640 = vmatprep.subr.mxu0 0.0
    %641 = vmatpush1.xpose.msra.mxu0 0.0
    %642 = vmatprep.subr.mxu0 0.0
    %643 = vmatpush1.xpose.msra.mxu0 0.0
    %644 = vmatprep.subr.mxu0 0.0
    %645 = vmatpush1.xpose.msra.mxu0 0.0
    %646 = vmatprep.subr.mxu0 0.0
    %647 = vmatpush1.xpose.msra.mxu0 0.0
    %648 = vmatprep.subr.mxu0 0.0
    %649 = vmatpush1.xpose.msra.mxu0 0.0
    %650 = vmatprep.mubr.f32.mxu0 0.0
    %651 = vmatmul.mubr.f32.gmra.mrb[0].mxu0 %v582
    %v652 = vpop.f32.mrb[0].mxu0
    %v653 = vadd.f32 0.0, %v652
    %v654 = vpop.f32.mrb[0].mxu0
    %655 = vdwg.mxu0
    %v656 = vsel %vm353, %v425, -inf
    %657 = vmax.xlane.f32.xlu0 %v656
    %v658 = vpop.xlane.xlu0 %657
    %v659 = vsel %vm353, %v501, -inf
    %660 = vmax.xlane.f32.xlu0 %v659
    %v661 = vpop.xlane.xlu0 %660
    %v662 = vsel %vm353, %v577, -inf
    %663 = vmax.xlane.f32.xlu0 %v662
    %v664 = vpop.xlane.xlu0 %663
    %v665 = vsel %vm353, %v653, -inf
    %666 = vmax.xlane.f32.xlu0 %v665
    %v667 = vpop.xlane.xlu0 %666
    %v668 = vsub.f32 %v425, %v658
    %v669 = vsub.f32 %v501, %v661
    %v670 = vsub.f32 %v577, %v664
    %v671 = vsub.f32 %v653, %v667
    %v672 = vmul.f32 %v668, 1.442695
    %v673 = vpow.pop %v672
    %v674 = vmul.f32 %v669, 1.442695
    %v675 = vpow.pop %v674
    %v676 = vmul.f32 %v670, 1.442695
    %v677 = vpow.pop %v676
    %v678 = vmul.f32 %v671, 1.442695
    %v679 = vpow.pop %v678
    %v680 = vsel %vm353, %v673, 0.0
    %681 = vadd.xlane.f32.xlu0 %v680
    %v682 = vpop.xlane.xlu0 %681
    %v683 = vsel %vm353, %v675, 0.0
    %684 = vadd.xlane.f32.xlu0 %v683
    %v685 = vpop.xlane.xlu0 %684
    %v686 = vsel %vm353, %v677, 0.0
    %687 = vadd.xlane.f32.xlu0 %v686
    %v688 = vpop.xlane.xlu0 %687
    %v689 = vsel %vm353, %v679, 0.0
    %690 = vadd.xlane.f32.xlu0 %v689
    %v691 = vpop.xlane.xlu0 %690
    %v692 = vrcp.pop %v682
    %v693 = vmul.f32 1.0, %v692
    %v694 = vrcp.pop %v685
    %v695 = vmul.f32 1.0, %v694
    %v696 = vrcp.pop %v688
    %v697 = vmul.f32 1.0, %v696
    %v698 = vrcp.pop %v691
    %v699 = vmul.f32 1.0, %v698
    %v700 = vmul.f32 %v673, %v693
    %v701 = vmul.f32 %v675, %v695
    %v702 = vmul.f32 %v677, %v697
    %v703 = vmul.f32 %v679, %v699
    %704 = vrot.lane.b32.xlu0 %v331, 64
    %v705 = vpop.permute.xlu0 %704
    %v708 = vsel %vm353, %v700, 0
    %710 = vmatprep.subr.mxu0 0.0
    %711 = vmatpush1.msra.mxu0 %v705
    %712 = vmatprep.subr.mxu0 0.0
    %713 = vmatpush1.msra.mxu0 0.0
    %714 = vmatprep.subr.mxu0 0.0
    %715 = vmatpush1.msra.mxu0 0.0
    %716 = vmatprep.subr.mxu0 0.0
    %717 = vmatpush1.msra.mxu0 0.0
    %718 = vmatprep.subr.mxu0 0.0
    %719 = vmatpush1.msra.mxu0 0.0
    %720 = vmatprep.subr.mxu0 0.0
    %721 = vmatpush1.msra.mxu0 0.0
    %722 = vmatprep.subr.mxu0 0.0
    %723 = vmatpush1.msra.mxu0 0.0
    %724 = vmatprep.subr.mxu0 0.0
    %725 = vmatpush1.msra.mxu0 0.0
    %726 = vmatprep.subr.mxu0 0.0
    %727 = vmatpush1.msra.mxu0 0.0
    %728 = vmatprep.subr.mxu0 0.0
    %729 = vmatpush1.msra.mxu0 0.0
    %730 = vmatprep.subr.mxu0 0.0
    %731 = vmatpush1.msra.mxu0 0.0
    %732 = vmatprep.subr.mxu0 0.0
    %733 = vmatpush1.msra.mxu0 0.0
    %734 = vmatprep.subr.mxu0 0.0
    %735 = vmatpush1.msra.mxu0 0.0
    %736 = vmatprep.subr.mxu0 0.0
    %737 = vmatpush1.msra.mxu0 0.0
    %738 = vmatprep.subr.mxu0 0.0
    %739 = vmatpush1.msra.mxu0 0.0
    %740 = vmatprep.subr.mxu0 0.0
    %741 = vmatpush1.msra.mxu0 0.0
    %742 = vmatprep.subr.mxu0 0.0
    %743 = vmatpush1.msra.mxu0 0.0
    %744 = vmatprep.subr.mxu0 0.0
    %745 = vmatpush1.msra.mxu0 0.0
    %746 = vmatprep.subr.mxu0 0.0
    %747 = vmatpush1.msra.mxu0 0.0
    %748 = vmatprep.subr.mxu0 0.0
    %749 = vmatpush1.msra.mxu0 0.0
    %750 = vmatprep.subr.mxu0 0.0
    %751 = vmatpush1.msra.mxu0 0.0
    %752 = vmatprep.subr.mxu0 0.0
    %753 = vmatpush1.msra.mxu0 0.0
    %754 = vmatprep.subr.mxu0 0.0
    %755 = vmatpush1.msra.mxu0 0.0
    %756 = vmatprep.subr.mxu0 0.0
    %757 = vmatpush1.msra.mxu0 0.0
    %758 = vmatprep.subr.mxu0 0.0
    %759 = vmatpush1.msra.mxu0 0.0
    %760 = vmatprep.subr.mxu0 0.0
    %761 = vmatpush1.msra.mxu0 0.0
    %762 = vmatprep.subr.mxu0 0.0
    %763 = vmatpush1.msra.mxu0 0.0
    %764 = vmatprep.subr.mxu0 0.0
    %765 = vmatpush1.msra.mxu0 0.0
    %766 = vmatprep.subr.mxu0 0.0
    %767 = vmatpush1.msra.mxu0 0.0
    %768 = vmatprep.subr.mxu0 0.0
    %769 = vmatpush1.msra.mxu0 0.0
    %770 = vmatprep.subr.mxu0 0.0
    %771 = vmatpush1.msra.mxu0 0.0
    %772 = vmatprep.subr.mxu0 0.0
    %773 = vmatpush1.msra.mxu0 0.0
    %774 = vmatprep.mubr.f32.mxu0 0.0
    %775 = vmatmul.mubr.f32.gmra.mrb[0].mxu0 %v708
    %v776 = vpop.f32.mrb[0].mxu0
    %v777 = vadd.f32 0.0, %v776
    %v778 = vpop.f32.mrb[0].mxu0
    %779 = vdwg.mxu0
    %780 = vrot.lane.b32.xlu0 %v346, 64
    %v781 = vpop.permute.xlu0 %780
    %v784 = vsel %vm353, %v701, 0
    %786 = vmatprep.subr.mxu0 0.0
    %787 = vmatpush1.msra.mxu0 %v781
    %788 = vmatprep.subr.mxu0 0.0
    %789 = vmatpush1.msra.mxu0 0.0
    %790 = vmatprep.subr.mxu0 0.0
    %791 = vmatpush1.msra.mxu0 0.0
    %792 = vmatprep.subr.mxu0 0.0
    %793 = vmatpush1.msra.mxu0 0.0
    %794 = vmatprep.subr.mxu0 0.0
    %795 = vmatpush1.msra.mxu0 0.0
    %796 = vmatprep.subr.mxu0 0.0
    %797 = vmatpush1.msra.mxu0 0.0
    %798 = vmatprep.subr.mxu0 0.0
    %799 = vmatpush1.msra.mxu0 0.0
    %800 = vmatprep.subr.mxu0 0.0
    %801 = vmatpush1.msra.mxu0 0.0
    %802 = vmatprep.subr.mxu0 0.0
    %803 = vmatpush1.msra.mxu0 0.0
    %804 = vmatprep.subr.mxu0 0.0
    %805 = vmatpush1.msra.mxu0 0.0
    %806 = vmatprep.subr.mxu0 0.0
    %807 = vmatpush1.msra.mxu0 0.0
    %808 = vmatprep.subr.mxu0 0.0
    %809 = vmatpush1.msra.mxu0 0.0
    %810 = vmatprep.subr.mxu0 0.0
    %811 = vmatpush1.msra.mxu0 0.0
    %812 = vmatprep.subr.mxu0 0.0
    %813 = vmatpush1.msra.mxu0 0.0
    %814 = vmatprep.subr.mxu0 0.0
    %815 = vmatpush1.msra.mxu0 0.0
    %816 = vmatprep.subr.mxu0 0.0
    %817 = vmatpush1.msra.mxu0 0.0
    %818 = vmatprep.subr.mxu0 0.0
    %819 = vmatpush1.msra.mxu0 0.0
    %820 = vmatprep.subr.mxu0 0.0
    %821 = vmatpush1.msra.mxu0 0.0
    %822 = vmatprep.subr.mxu0 0.0
    %823 = vmatpush1.msra.mxu0 0.0
    %824 = vmatprep.subr.mxu0 0.0
    %825 = vmatpush1.msra.mxu0 0.0
    %826 = vmatprep.subr.mxu0 0.0
    %827 = vmatpush1.msra.mxu0 0.0
    %828 = vmatprep.subr.mxu0 0.0
    %829 = vmatpush1.msra.mxu0 0.0
    %830 = vmatprep.subr.mxu0 0.0
    %831 = vmatpush1.msra.mxu0 0.0
    %832 = vmatprep.subr.mxu0 0.0
    %833 = vmatpush1.msra.mxu0 0.0
    %834 = vmatprep.subr.mxu0 0.0
    %835 = vmatpush1.msra.mxu0 0.0
    %836 = vmatprep.subr.mxu0 0.0
    %837 = vmatpush1.msra.mxu0 0.0
    %838 = vmatprep.subr.mxu0 0.0
    %839 = vmatpush1.msra.mxu0 0.0
    %840 = vmatprep.subr.mxu0 0.0
    %841 = vmatpush1.msra.mxu0 0.0
    %842 = vmatprep.subr.mxu0 0.0
    %843 = vmatpush1.msra.mxu0 0.0
    %844 = vmatprep.subr.mxu0 0.0
    %845 = vmatpush1.msra.mxu0 0.0
    %846 = vmatprep.subr.mxu0 0.0
    %847 = vmatpush1.msra.mxu0 0.0
    %848 = vmatprep.subr.mxu0 0.0
    %849 = vmatpush1.msra.mxu0 0.0
    %850 = vmatprep.mubr.f32.mxu0 0.0
    %851 = vmatmul.mubr.f32.gmra.mrb[0].mxu0 %v784
    %v852 = vpop.f32.mrb[0].mxu0
    %v853 = vadd.f32 0.0, %v852
    %v854 = vpop.f32.mrb[0].mxu0
    %855 = vdwg.mxu0
    %856 = vrot.lane.b32.xlu0 %v348, 64
    %v857 = vpop.permute.xlu0 %856
    %v860 = vsel %vm353, %v702, 0
    %862 = vmatprep.subr.mxu0 0.0
    %863 = vmatpush1.msra.mxu0 %v857
    %864 = vmatprep.subr.mxu0 0.0
    %865 = vmatpush1.msra.mxu0 0.0
    %866 = vmatprep.subr.mxu0 0.0
    %867 = vmatpush1.msra.mxu0 0.0
    %868 = vmatprep.subr.mxu0 0.0
    %869 = vmatpush1.msra.mxu0 0.0
    %870 = vmatprep.subr.mxu0 0.0
    %871 = vmatpush1.msra.mxu0 0.0
    %872 = vmatprep.subr.mxu0 0.0
    %873 = vmatpush1.msra.mxu0 0.0
    %874 = vmatprep.subr.mxu0 0.0
    %875 = vmatpush1.msra.mxu0 0.0
    %876 = vmatprep.subr.mxu0 0.0
    %877 = vmatpush1.msra.mxu0 0.0
    %878 = vmatprep.subr.mxu0 0.0
    %879 = vmatpush1.msra.mxu0 0.0
    %880 = vmatprep.subr.mxu0 0.0
    %881 = vmatpush1.msra.mxu0 0.0
    %882 = vmatprep.subr.mxu0 0.0
    %883 = vmatpush1.msra.mxu0 0.0
    %884 = vmatprep.subr.mxu0 0.0
    %885 = vmatpush1.msra.mxu0 0.0
    %886 = vmatprep.subr.mxu0 0.0
    %887 = vmatpush1.msra.mxu0 0.0
    %888 = vmatprep.subr.mxu0 0.0
    %889 = vmatpush1.msra.mxu0 0.0
    %890 = vmatprep.subr.mxu0 0.0
    %891 = vmatpush1.msra.mxu0 0.0
    %892 = vmatprep.subr.mxu0 0.0
    %893 = vmatpush1.msra.mxu0 0.0
    %894 = vmatprep.subr.mxu0 0.0
    %895 = vmatpush1.msra.mxu0 0.0
    %896 = vmatprep.subr.mxu0 0.0
    %897 = vmatpush1.msra.mxu0 0.0
    %898 = vmatprep.subr.mxu0 0.0
    %899 = vmatpush1.msra.mxu0 0.0
    %900 = vmatprep.subr.mxu0 0.0
    %901 = vmatpush1.msra.mxu0 0.0
    %902 = vmatprep.subr.mxu0 0.0
    %903 = vmatpush1.msra.mxu0 0.0
    %904 = vmatprep.subr.mxu0 0.0
    %905 = vmatpush1.msra.mxu0 0.0
    %906 = vmatprep.subr.mxu0 0.0
    %907 = vmatpush1.msra.mxu0 0.0
    %908 = vmatprep.subr.mxu0 0.0
    %909 = vmatpush1.msra.mxu0 0.0
    %910 = vmatprep.subr.mxu0 0.0
    %911 = vmatpush1.msra.mxu0 0.0
    %912 = vmatprep.subr.mxu0 0.0
    %913 = vmatpush1.msra.mxu0 0.0
    %914 = vmatprep.subr.mxu0 0.0
    %915 = vmatpush1.msra.mxu0 0.0
    %916 = vmatprep.subr.mxu0 0.0
    %917 = vmatpush1.msra.mxu0 0.0
    %918 = vmatprep.subr.mxu0 0.0
    %919 = vmatpush1.msra.mxu0 0.0
    %920 = vmatprep.subr.mxu0 0.0
    %921 = vmatpush1.msra.mxu0 0.0
    %922 = vmatprep.subr.mxu0 0.0
    %923 = vmatpush1.msra.mxu0 0.0
    %924 = vmatprep.subr.mxu0 0.0
    %925 = vmatpush1.msra.mxu0 0.0
    %926 = vmatprep.mubr.f32.mxu0 0.0
    %927 = vmatmul.mubr.f32.gmra.mrb[0].mxu0 %v860
    %v928 = vpop.f32.mrb[0].mxu0
    %v929 = vadd.f32 0.0, %v928
    %v930 = vpop.f32.mrb[0].mxu0
    %931 = vdwg.mxu0
    %932 = vrot.lane.b32.xlu0 %v350, 64
    %v933 = vpop.permute.xlu0 %932
    %v936 = vsel %vm353, %v703, 0
    %938 = vmatprep.subr.mxu0 0.0
    %939 = vmatpush1.msra.mxu0 %v933
    %940 = vmatprep.subr.mxu0 0.0
    %941 = vmatpush1.msra.mxu0 0.0
    %942 = vmatprep.subr.mxu0 0.0
    %943 = vmatpush1.msra.mxu0 0.0
    %944 = vmatprep.subr.mxu0 0.0
    %945 = vmatpush1.msra.mxu0 0.0
    %946 = vmatprep.subr.mxu0 0.0
    %947 = vmatpush1.msra.mxu0 0.0
    %948 = vmatprep.subr.mxu0 0.0
    %949 = vmatpush1.msra.mxu0 0.0
    %950 = vmatprep.subr.mxu0 0.0
    %951 = vmatpush1.msra.mxu0 0.0
    %952 = vmatprep.subr.mxu0 0.0
    %953 = vmatpush1.msra.mxu0 0.0
    %954 = vmatprep.subr.mxu0 0.0
    %955 = vmatpush1.msra.mxu0 0.0
    %956 = vmatprep.subr.mxu0 0.0
    %957 = vmatpush1.msra.mxu0 0.0
    %958 = vmatprep.subr.mxu0 0.0
    %959 = vmatpush1.msra.mxu0 0.0
    %960 = vmatprep.subr.mxu0 0.0
    %961 = vmatpush1.msra.mxu0 0.0
    %962 = vmatprep.subr.mxu0 0.0
    %963 = vmatpush1.msra.mxu0 0.0
    %964 = vmatprep.subr.mxu0 0.0
    %965 = vmatpush1.msra.mxu0 0.0
    %966 = vmatprep.subr.mxu0 0.0
    %967 = vmatpush1.msra.mxu0 0.0
    %968 = vmatprep.subr.mxu0 0.0
    %969 = vmatpush1.msra.mxu0 0.0
    %970 = vmatprep.subr.mxu0 0.0
    %971 = vmatpush1.msra.mxu0 0.0
    %972 = vmatprep.subr.mxu0 0.0
    %973 = vmatpush1.msra.mxu0 0.0
    %974 = vmatprep.subr.mxu0 0.0
    %975 = vmatpush1.msra.mxu0 0.0
    %976 = vmatprep.subr.mxu0 0.0
    %977 = vmatpush1.msra.mxu0 0.0
    %978 = vmatprep.subr.mxu0 0.0
    %979 = vmatpush1.msra.mxu0 0.0
    %980 = vmatprep.subr.mxu0 0.0
    %981 = vmatpush1.msra.mxu0 0.0
    %982 = vmatprep.subr.mxu0 0.0
    %983 = vmatpush1.msra.mxu0 0.0
    %984 = vmatprep.subr.mxu0 0.0
    %985 = vmatpush1.msra.mxu0 0.0
    %986 = vmatprep.subr.mxu0 0.0
    %987 = vmatpush1.msra.mxu0 0.0
    %988 = vmatprep.subr.mxu0 0.0
    %989 = vmatpush1.msra.mxu0 0.0
    %990 = vmatprep.subr.mxu0 0.0
    %991 = vmatpush1.msra.mxu0 0.0
    %992 = vmatprep.subr.mxu0 0.0
    %993 = vmatpush1.msra.mxu0 0.0
    %994 = vmatprep.subr.mxu0 0.0
    %995 = vmatpush1.msra.mxu0 0.0
    %996 = vmatprep.subr.mxu0 0.0
    %997 = vmatpush1.msra.mxu0 0.0
    %998 = vmatprep.subr.mxu0 0.0
    %999 = vmatpush1.msra.mxu0 0.0
    %1000 = vmatprep.subr.mxu0 0.0
    %1001 = vmatpush1.msra.mxu0 0.0
    %1002 = vmatprep.mubr.f32.mxu0 0.0
    %1003 = vmatmul.mubr.f32.gmra.mrb[0].mxu0 %v936
    %v1004 = vpop.f32.mrb[0].mxu0
    %v1005 = vadd.f32 0.0, %v1004
    %v1006 = vpop.f32.mrb[0].mxu0
    %1007 = vdwg.mxu0
    %v1009 = vsel %vm353, %v777, 0
    %1011 = vmatprep.subr.mxu0 0.0
    %1012 = vmatpush1.msra.mxu0 %v339
    %1013 = vmatprep.subr.mxu0 0.0
    %1014 = vmatpush1.msra.mxu0 0.0
    %1015 = vmatprep.subr.mxu0 0.0
    %1016 = vmatpush1.msra.mxu0 0.0
    %1017 = vmatprep.subr.mxu0 0.0
    %1018 = vmatpush1.msra.mxu0 0.0
    %1019 = vmatprep.subr.mxu0 0.0
    %1020 = vmatpush1.msra.mxu0 0.0
    %1021 = vmatprep.subr.mxu0 0.0
    %1022 = vmatpush1.msra.mxu0 0.0
    %1023 = vmatprep.subr.mxu0 0.0
    %1024 = vmatpush1.msra.mxu0 0.0
    %1025 = vmatprep.subr.mxu0 0.0
    %1026 = vmatpush1.msra.mxu0 0.0
    %1027 = vmatprep.subr.mxu0 0.0
    %1028 = vmatpush1.msra.mxu0 0.0
    %1029 = vmatprep.subr.mxu0 0.0
    %1030 = vmatpush1.msra.mxu0 0.0
    %1031 = vmatprep.subr.mxu0 0.0
    %1032 = vmatpush1.msra.mxu0 0.0
    %1033 = vmatprep.subr.mxu0 0.0
    %1034 = vmatpush1.msra.mxu0 0.0
    %1035 = vmatprep.subr.mxu0 0.0
    %1036 = vmatpush1.msra.mxu0 0.0
    %1037 = vmatprep.subr.mxu0 0.0
    %1038 = vmatpush1.msra.mxu0 0.0
    %1039 = vmatprep.subr.mxu0 0.0
    %1040 = vmatpush1.msra.mxu0 0.0
    %1041 = vmatprep.subr.mxu0 0.0
    %1042 = vmatpush1.msra.mxu0 0.0
    %1043 = vmatprep.subr.mxu0 0.0
    %1044 = vmatpush1.msra.mxu0 0.0
    %1045 = vmatprep.subr.mxu0 0.0
    %1046 = vmatpush1.msra.mxu0 0.0
    %1047 = vmatprep.subr.mxu0 0.0
    %1048 = vmatpush1.msra.mxu0 0.0
    %1049 = vmatprep.subr.mxu0 0.0
    %1050 = vmatpush1.msra.mxu0 0.0
    %1051 = vmatprep.subr.mxu0 0.0
    %1052 = vmatpush1.msra.mxu0 0.0
    %1053 = vmatprep.subr.mxu0 0.0
    %1054 = vmatpush1.msra.mxu0 0.0
    %1055 = vmatprep.subr.mxu0 0.0
    %1056 = vmatpush1.msra.mxu0 0.0
    %1057 = vmatprep.subr.mxu0 0.0
    %1058 = vmatpush1.msra.mxu0 0.0
    %1059 = vmatprep.subr.mxu0 0.0
    %1060 = vmatpush1.msra.mxu0 0.0
    %1061 = vmatprep.subr.mxu0 0.0
    %1062 = vmatpush1.msra.mxu0 0.0
    %1063 = vmatprep.subr.mxu0 0.0
    %1064 = vmatpush1.msra.mxu0 0.0
    %1065 = vmatprep.subr.mxu0 0.0
    %1066 = vmatpush1.msra.mxu0 0.0
    %1067 = vmatprep.subr.mxu0 0.0
    %1068 = vmatpush1.msra.mxu0 0.0
    %1069 = vmatprep.subr.mxu0 0.0
    %1070 = vmatpush1.msra.mxu0 0.0
    %1071 = vmatprep.subr.mxu0 0.0
    %1072 = vmatpush1.msra.mxu0 0.0
    %1073 = vmatprep.subr.mxu0 0.0
    %1074 = vmatpush1.msra.mxu0 0.0
    %1075 = vmatprep.mubr.f32.mxu0 0.0
    %1076 = vmatmul.mubr.f32.gmra.mrb[0].mxu0 %v1009
    %v1077 = vpop.f32.mrb[0].mxu0
    %v1078 = vadd.f32 0.0, %v1077
    %v1079 = vpop.f32.mrb[0].mxu0
    %1080 = vdwg.mxu0
    %v1082 = vsel %vm353, %v853, 0
    %1084 = vmatprep.subr.mxu0 0.0
    %1085 = vmatpush1.msra.mxu0 %v340
    %1086 = vmatprep.subr.mxu0 0.0
    %1087 = vmatpush1.msra.mxu0 0.0
    %1088 = vmatprep.subr.mxu0 0.0
    %1089 = vmatpush1.msra.mxu0 0.0
    %1090 = vmatprep.subr.mxu0 0.0
    %1091 = vmatpush1.msra.mxu0 0.0
    %1092 = vmatprep.subr.mxu0 0.0
    %1093 = vmatpush1.msra.mxu0 0.0
    %1094 = vmatprep.subr.mxu0 0.0
    %1095 = vmatpush1.msra.mxu0 0.0
    %1096 = vmatprep.subr.mxu0 0.0
    %1097 = vmatpush1.msra.mxu0 0.0
    %1098 = vmatprep.subr.mxu0 0.0
    %1099 = vmatpush1.msra.mxu0 0.0
    %1100 = vmatprep.subr.mxu0 0.0
    %1101 = vmatpush1.msra.mxu0 0.0
    %1102 = vmatprep.subr.mxu0 0.0
    %1103 = vmatpush1.msra.mxu0 0.0
    %1104 = vmatprep.subr.mxu0 0.0
    %1105 = vmatpush1.msra.mxu0 0.0
    %1106 = vmatprep.subr.mxu0 0.0
    %1107 = vmatpush1.msra.mxu0 0.0
    %1108 = vmatprep.subr.mxu0 0.0
    %1109 = vmatpush1.msra.mxu0 0.0
    %1110 = vmatprep.subr.mxu0 0.0
    %1111 = vmatpush1.msra.mxu0 0.0
    %1112 = vmatprep.subr.mxu0 0.0
    %1113 = vmatpush1.msra.mxu0 0.0
    %1114 = vmatprep.subr.mxu0 0.0
    %1115 = vmatpush1.msra.mxu0 0.0
    %1116 = vmatprep.subr.mxu0 0.0
    %1117 = vmatpush1.msra.mxu0 0.0
    %1118 = vmatprep.subr.mxu0 0.0
    %1119 = vmatpush1.msra.mxu0 0.0
    %1120 = vmatprep.subr.mxu0 0.0
    %1121 = vmatpush1.msra.mxu0 0.0
    %1122 = vmatprep.subr.mxu0 0.0
    %1123 = vmatpush1.msra.mxu0 0.0
    %1124 = vmatprep.subr.mxu0 0.0
    %1125 = vmatpush1.msra.mxu0 0.0
    %1126 = vmatprep.subr.mxu0 0.0
    %1127 = vmatpush1.msra.mxu0 0.0
    %1128 = vmatprep.subr.mxu0 0.0
    %1129 = vmatpush1.msra.mxu0 0.0
    %1130 = vmatprep.subr.mxu0 0.0
    %1131 = vmatpush1.msra.mxu0 0.0
    %1132 = vmatprep.subr.mxu0 0.0
    %1133 = vmatpush1.msra.mxu0 0.0
    %1134 = vmatprep.subr.mxu0 0.0
    %1135 = vmatpush1.msra.mxu0 0.0
    %1136 = vmatprep.subr.mxu0 0.0
    %1137 = vmatpush1.msra.mxu0 0.0
    %1138 = vmatprep.subr.mxu0 0.0
    %1139 = vmatpush1.msra.mxu0 0.0
    %1140 = vmatprep.subr.mxu0 0.0
    %1141 = vmatpush1.msra.mxu0 0.0
    %1142 = vmatprep.subr.mxu0 0.0
    %1143 = vmatpush1.msra.mxu0 0.0
    %1144 = vmatprep.subr.mxu0 0.0
    %1145 = vmatpush1.msra.mxu0 0.0
    %1146 = vmatprep.subr.mxu0 0.0
    %1147 = vmatpush1.msra.mxu0 0.0
    %1148 = vmatprep.mubr.f32.mxu0 0.0
    %1149 = vmatmul.mubr.f32.gmra.mrb[0].mxu0 %v1082
    %v1150 = vpop.f32.mrb[0].mxu0
    %v1151 = vadd.f32 0.0, %v1150
    %v1152 = vpop.f32.mrb[0].mxu0
    %1153 = vdwg.mxu0
    %v1155 = vsel %vm353, %v929, 0
    %1157 = vmatprep.subr.mxu0 0.0
    %1158 = vmatpush1.msra.mxu0 %v341
    %1159 = vmatprep.subr.mxu0 0.0
    %1160 = vmatpush1.msra.mxu0 0.0
    %1161 = vmatprep.subr.mxu0 0.0
    %1162 = vmatpush1.msra.mxu0 0.0
    %1163 = vmatprep.subr.mxu0 0.0
    %1164 = vmatpush1.msra.mxu0 0.0
    %1165 = vmatprep.subr.mxu0 0.0
    %1166 = vmatpush1.msra.mxu0 0.0
    %1167 = vmatprep.subr.mxu0 0.0
    %1168 = vmatpush1.msra.mxu0 0.0
    %1169 = vmatprep.subr.mxu0 0.0
    %1170 = vmatpush1.msra.mxu0 0.0
    %1171 = vmatprep.subr.mxu0 0.0
    %1172 = vmatpush1.msra.mxu0 0.0
    %1173 = vmatprep.subr.mxu0 0.0
    %1174 = vmatpush1.msra.mxu0 0.0
    %1175 = vmatprep.subr.mxu0 0.0
    %1176 = vmatpush1.msra.mxu0 0.0
    %1177 = vmatprep.subr.mxu0 0.0
    %1178 = vmatpush1.msra.mxu0 0.0
    %1179 = vmatprep.subr.mxu0 0.0
    %1180 = vmatpush1.msra.mxu0 0.0
    %1181 = vmatprep.subr.mxu0 0.0
    %1182 = vmatpush1.msra.mxu0 0.0
    %1183 = vmatprep.subr.mxu0 0.0
    %1184 = vmatpush1.msra.mxu0 0.0
    %1185 = vmatprep.subr.mxu0 0.0
    %1186 = vmatpush1.msra.mxu0 0.0
    %1187 = vmatprep.subr.mxu0 0.0
    %1188 = vmatpush1.msra.mxu0 0.0
    %1189 = vmatprep.subr.mxu0 0.0
    %1190 = vmatpush1.msra.mxu0 0.0
    %1191 = vmatprep.subr.mxu0 0.0
    %1192 = vmatpush1.msra.mxu0 0.0
    %1193 = vmatprep.subr.mxu0 0.0
    %1194 = vmatpush1.msra.mxu0 0.0
    %1195 = vmatprep.subr.mxu0 0.0
    %1196 = vmatpush1.msra.mxu0 0.0
    %1197 = vmatprep.subr.mxu0 0.0
    %1198 = vmatpush1.msra.mxu0 0.0
    %1199 = vmatprep.subr.mxu0 0.0
    %1200 = vmatpush1.msra.mxu0 0.0
    %1201 = vmatprep.subr.mxu0 0.0
    %1202 = vmatpush1.msra.mxu0 0.0
    %1203 = vmatprep.subr.mxu0 0.0
    %1204 = vmatpush1.msra.mxu0 0.0
    %1205 = vmatprep.subr.mxu0 0.0
    %1206 = vmatpush1.msra.mxu0 0.0
    %1207 = vmatprep.subr.mxu0 0.0
    %1208 = vmatpush1.msra.mxu0 0.0
    %1209 = vmatprep.subr.mxu0 0.0
    %1210 = vmatpush1.msra.mxu0 0.0
    %1211 = vmatprep.subr.mxu0 0.0
    %1212 = vmatpush1.msra.mxu0 0.0
    %1213 = vmatprep.subr.mxu0 0.0
    %1214 = vmatpush1.msra.mxu0 0.0
    %1215 = vmatprep.subr.mxu0 0.0
    %1216 = vmatpush1.msra.mxu0 0.0
    %1217 = vmatprep.subr.mxu0 0.0
    %1218 = vmatpush1.msra.mxu0 0.0
    %1219 = vmatprep.subr.mxu0 0.0
    %1220 = vmatpush1.msra.mxu0 0.0
    %1221 = vmatprep.mubr.f32.mxu0 0.0
    %1222 = vmatmul.mubr.f32.gmra.mrb[0].mxu0 %v1155
    %v1223 = vpop.f32.mrb[0].mxu0
    %v1224 = vadd.f32 0.0, %v1223
    %v1225 = vpop.f32.mrb[0].mxu0
    %1226 = vdwg.mxu0
    %v1228 = vsel %vm353, %v1005, 0
    %1230 = vmatprep.subr.mxu0 0.0
    %1231 = vmatpush1.msra.mxu0 %v342
    %1232 = vmatprep.subr.mxu0 0.0
    %1233 = vmatpush1.msra.mxu0 0.0
    %1234 = vmatprep.subr.mxu0 0.0
    %1235 = vmatpush1.msra.mxu0 0.0
    %1236 = vmatprep.subr.mxu0 0.0
    %1237 = vmatpush1.msra.mxu0 0.0
    %1238 = vmatprep.subr.mxu0 0.0
    %1239 = vmatpush1.msra.mxu0 0.0
    %1240 = vmatprep.subr.mxu0 0.0
    %1241 = vmatpush1.msra.mxu0 0.0
    %1242 = vmatprep.subr.mxu0 0.0
    %1243 = vmatpush1.msra.mxu0 0.0
    %1244 = vmatprep.subr.mxu0 0.0
    %1245 = vmatpush1.msra.mxu0 0.0
    %1246 = vmatprep.subr.mxu0 0.0
    %1247 = vmatpush1.msra.mxu0 0.0
    %1248 = vmatprep.subr.mxu0 0.0
    %1249 = vmatpush1.msra.mxu0 0.0
    %1250 = vmatprep.subr.mxu0 0.0
    %1251 = vmatpush1.msra.mxu0 0.0
    %1252 = vmatprep.subr.mxu0 0.0
    %1253 = vmatpush1.msra.mxu0 0.0
    %1254 = vmatprep.subr.mxu0 0.0
    %1255 = vmatpush1.msra.mxu0 0.0
    %1256 = vmatprep.subr.mxu0 0.0
    %1257 = vmatpush1.msra.mxu0 0.0
    %1258 = vmatprep.subr.mxu0 0.0
    %1259 = vmatpush1.msra.mxu0 0.0
    %1260 = vmatprep.subr.mxu0 0.0
    %1261 = vmatpush1.msra.mxu0 0.0
    %1262 = vmatprep.subr.mxu0 0.0
    %1263 = vmatpush1.msra.mxu0 0.0
    %1264 = vmatprep.subr.mxu0 0.0
    %1265 = vmatpush1.msra.mxu0 0.0
    %1266 = vmatprep.subr.mxu0 0.0
    %1267 = vmatpush1.msra.mxu0 0.0
    %1268 = vmatprep.subr.mxu0 0.0
    %1269 = vmatpush1.msra.mxu0 0.0
    %1270 = vmatprep.subr.mxu0 0.0
    %1271 = vmatpush1.msra.mxu0 0.0
    %1272 = vmatprep.subr.mxu0 0.0
    %1273 = vmatpush1.msra.mxu0 0.0
    %1274 = vmatprep.subr.mxu0 0.0
    %1275 = vmatpush1.msra.mxu0 0.0
    %1276 = vmatprep.subr.mxu0 0.0
    %1277 = vmatpush1.msra.mxu0 0.0
    %1278 = vmatprep.subr.mxu0 0.0
    %1279 = vmatpush1.msra.mxu0 0.0
    %1280 = vmatprep.subr.mxu0 0.0
    %1281 = vmatpush1.msra.mxu0 0.0
    %1282 = vmatprep.subr.mxu0 0.0
    %1283 = vmatpush1.msra.mxu0 0.0
    %1284 = vmatprep.subr.mxu0 0.0
    %1285 = vmatpush1.msra.mxu0 0.0
    %1286 = vmatprep.subr.mxu0 0.0
    %1287 = vmatpush1.msra.mxu0 0.0
    %1288 = vmatprep.subr.mxu0 0.0
    %1289 = vmatpush1.msra.mxu0 0.0
    %1290 = vmatprep.subr.mxu0 0.0
    %1291 = vmatpush1.msra.mxu0 0.0
    %1292 = vmatprep.subr.mxu0 0.0
    %1293 = vmatpush1.msra.mxu0 0.0
    %1294 = vmatprep.mubr.f32.mxu0 0.0
    %1295 = vmatmul.mubr.f32.gmra.mrb[0].mxu0 %v1228
    %v1296 = vpop.f32.mrb[0].mxu0
    %v1297 = vadd.f32 0.0, %v1296
    %v1298 = vpop.f32.mrb[0].mxu0
    %1299 = vdwg.mxu0
    %v1300 = vsel %vm257, %v1078, 0.0
    %v1301 = vsel %vm257, %v1151, 0.0
    %v1302 = vadd.f32 %v1300, %v1301
    %v1303 = vsel %vm257, %v1224, 0.0
    %v1304 = vadd.f32 %v1302, %v1303
    %v1305 = vsel %vm257, %v1297, 0.0
    %v1306 = vadd.f32 %v1304, %v1305
    %1308 = vrot.lane.b32.xlu0 %v336, 120
    %v1309 = vpop.permute.xlu0 %1308
    %1310 = vrot.lane.b32.xlu0 %v336, 112
    %v1311 = vpop.permute.xlu0 %1310
    %1312 = vrot.lane.b32.xlu0 %v336, 104
    %v1313 = vpop.permute.xlu0 %1312
    %1314 = vrot.lane.b32.xlu0 %v336, 96
    %v1315 = vpop.permute.xlu0 %1314
    %v1316 = vsel %vm353, %v336, 0
    %v1318 = vsel %vm353, %v1315, 0
    %1320 = vmatprep.subr.mxu0 0.0
    %1321 = vmatpush1.xpose.msra.mxu0 %v1318
    %1322 = vmatprep.subr.mxu0 0.0
    %1323 = vmatpush1.xpose.msra.mxu0 0.0
    %1324 = vmatprep.subr.mxu0 0.0
    %1325 = vmatpush1.xpose.msra.mxu0 0.0
    %1326 = vmatprep.subr.mxu0 0.0
    %1327 = vmatpush1.xpose.msra.mxu0 0.0
    %1328 = vmatprep.subr.mxu0 0.0
    %1329 = vmatpush1.xpose.msra.mxu0 0.0
    %1330 = vmatprep.subr.mxu0 0.0
    %1331 = vmatpush1.xpose.msra.mxu0 0.0
    %1332 = vmatprep.subr.mxu0 0.0
    %1333 = vmatpush1.xpose.msra.mxu0 0.0
    %1334 = vmatprep.subr.mxu0 0.0
    %1335 = vmatpush1.xpose.msra.mxu0 0.0
    %1336 = vmatprep.subr.mxu0 0.0
    %1337 = vmatpush1.xpose.msra.mxu0 0.0
    %1338 = vmatprep.subr.mxu0 0.0
    %1339 = vmatpush1.xpose.msra.mxu0 0.0
    %1340 = vmatprep.subr.mxu0 0.0
    %1341 = vmatpush1.xpose.msra.mxu0 0.0
    %1342 = vmatprep.subr.mxu0 0.0
    %1343 = vmatpush1.xpose.msra.mxu0 0.0
    %1344 = vmatprep.subr.mxu0 0.0
    %1345 = vmatpush1.xpose.msra.mxu0 0.0
    %1346 = vmatprep.subr.mxu0 0.0
    %1347 = vmatpush1.xpose.msra.mxu0 0.0
    %1348 = vmatprep.subr.mxu0 0.0
    %1349 = vmatpush1.xpose.msra.mxu0 0.0
    %1350 = vmatprep.subr.mxu0 0.0
    %1351 = vmatpush1.xpose.msra.mxu0 0.0
    %1352 = vmatprep.subr.mxu0 0.0
    %1353 = vmatpush1.xpose.msra.mxu0 0.0
    %1354 = vmatprep.subr.mxu0 0.0
    %1355 = vmatpush1.xpose.msra.mxu0 0.0
    %1356 = vmatprep.subr.mxu0 0.0
    %1357 = vmatpush1.xpose.msra.mxu0 0.0
    %1358 = vmatprep.subr.mxu0 0.0
    %1359 = vmatpush1.xpose.msra.mxu0 0.0
    %1360 = vmatprep.subr.mxu0 0.0
    %1361 = vmatpush1.xpose.msra.mxu0 0.0
    %1362 = vmatprep.subr.mxu0 0.0
    %1363 = vmatpush1.xpose.msra.mxu0 0.0
    %1364 = vmatprep.subr.mxu0 0.0
    %1365 = vmatpush1.xpose.msra.mxu0 0.0
    %1366 = vmatprep.subr.mxu0 0.0
    %1367 = vmatpush1.xpose.msra.mxu0 0.0
    %1368 = vmatprep.subr.mxu0 0.0
    %1369 = vmatpush1.xpose.msra.mxu0 0.0
    %1370 = vmatprep.subr.mxu0 0.0
    %1371 = vmatpush1.xpose.msra.mxu0 0.0
    %1372 = vmatprep.subr.mxu0 0.0
    %1373 = vmatpush1.xpose.msra.mxu0 0.0
    %1374 = vmatprep.subr.mxu0 0.0
    %1375 = vmatpush1.xpose.msra.mxu0 0.0
    %1376 = vmatprep.subr.mxu0 0.0
    %1377 = vmatpush1.xpose.msra.mxu0 0.0
    %1378 = vmatprep.subr.mxu0 0.0
    %1379 = vmatpush1.xpose.msra.mxu0 0.0
    %1380 = vmatprep.subr.mxu0 0.0
    %1381 = vmatpush1.xpose.msra.mxu0 0.0
    %1382 = vmatprep.subr.mxu0 0.0
    %1383 = vmatpush1.xpose.msra.mxu0 0.0
    %1384 = vmatprep.mubr.f32.mxu0 0.0
    %1385 = vmatmul.mubr.f32.gmra.mrb[0].mxu0 %v1316
    %v1386 = vpop.f32.mrb[0].mxu0
    %v1387 = vadd.f32 0.0, %v1386
    %v1388 = vpop.f32.mrb[0].mxu0
    %1389 = vdwg.mxu0
    %1390 = vrot.lane.b32.xlu0 %v1309, 96
    %v1391 = vpop.permute.xlu0 %1390
    %v1392 = vsel %vm353, %v1309, 0
    %v1394 = vsel %vm353, %v1391, 0
    %1396 = vmatprep.subr.mxu0 0.0
    %1397 = vmatpush1.xpose.msra.mxu0 %v1394
    %1398 = vmatprep.subr.mxu0 0.0
    %1399 = vmatpush1.xpose.msra.mxu0 0.0
    %1400 = vmatprep.subr.mxu0 0.0
    %1401 = vmatpush1.xpose.msra.mxu0 0.0
    %1402 = vmatprep.subr.mxu0 0.0
    %1403 = vmatpush1.xpose.msra.mxu0 0.0
    %1404 = vmatprep.subr.mxu0 0.0
    %1405 = vmatpush1.xpose.msra.mxu0 0.0
    %1406 = vmatprep.subr.mxu0 0.0
    %1407 = vmatpush1.xpose.msra.mxu0 0.0
    %1408 = vmatprep.subr.mxu0 0.0
    %1409 = vmatpush1.xpose.msra.mxu0 0.0
    %1410 = vmatprep.subr.mxu0 0.0
    %1411 = vmatpush1.xpose.msra.mxu0 0.0
    %1412 = vmatprep.subr.mxu0 0.0
    %1413 = vmatpush1.xpose.msra.mxu0 0.0
    %1414 = vmatprep.subr.mxu0 0.0
    %1415 = vmatpush1.xpose.msra.mxu0 0.0
    %1416 = vmatprep.subr.mxu0 0.0
    %1417 = vmatpush1.xpose.msra.mxu0 0.0
    %1418 = vmatprep.subr.mxu0 0.0
    %1419 = vmatpush1.xpose.msra.mxu0 0.0
    %1420 = vmatprep.subr.mxu0 0.0
    %1421 = vmatpush1.xpose.msra.mxu0 0.0
    %1422 = vmatprep.subr.mxu0 0.0
    %1423 = vmatpush1.xpose.msra.mxu0 0.0
    %1424 = vmatprep.subr.mxu0 0.0
    %1425 = vmatpush1.xpose.msra.mxu0 0.0
    %1426 = vmatprep.subr.mxu0 0.0
    %1427 = vmatpush1.xpose.msra.mxu0 0.0
    %1428 = vmatprep.subr.mxu0 0.0
    %1429 = vmatpush1.xpose.msra.mxu0 0.0
    %1430 = vmatprep.subr.mxu0 0.0
    %1431 = vmatpush1.xpose.msra.mxu0 0.0
    %1432 = vmatprep.subr.mxu0 0.0
    %1433 = vmatpush1.xpose.msra.mxu0 0.0
    %1434 = vmatprep.subr.mxu0 0.0
    %1435 = vmatpush1.xpose.msra.mxu0 0.0
    %1436 = vmatprep.subr.mxu0 0.0
    %1437 = vmatpush1.xpose.msra.mxu0 0.0
    %1438 = vmatprep.subr.mxu0 0.0
    %1439 = vmatpush1.xpose.msra.mxu0 0.0
    %1440 = vmatprep.subr.mxu0 0.0
    %1441 = vmatpush1.xpose.msra.mxu0 0.0
    %1442 = vmatprep.subr.mxu0 0.0
    %1443 = vmatpush1.xpose.msra.mxu0 0.0
    %1444 = vmatprep.subr.mxu0 0.0
    %1445 = vmatpush1.xpose.msra.mxu0 0.0
    %1446 = vmatprep.subr.mxu0 0.0
    %1447 = vmatpush1.xpose.msra.mxu0 0.0
    %1448 = vmatprep.subr.mxu0 0.0
    %1449 = vmatpush1.xpose.msra.mxu0 0.0
    %1450 = vmatprep.subr.mxu0 0.0
    %1451 = vmatpush1.xpose.msra.mxu0 0.0
    %1452 = vmatprep.subr.mxu0 0.0
    %1453 = vmatpush1.xpose.msra.mxu0 0.0
    %1454 = vmatprep.subr.mxu0 0.0
    %1455 = vmatpush1.xpose.msra.mxu0 0.0
    %1456 = vmatprep.subr.mxu0 0.0
    %1457 = vmatpush1.xpose.msra.mxu0 0.0
    %1458 = vmatprep.subr.mxu0 0.0
    %1459 = vmatpush1.xpose.msra.mxu0 0.0
    %1460 = vmatprep.mubr.f32.mxu0 0.0
    %1461 = vmatmul.mubr.f32.gmra.mrb[0].mxu0 %v1392
    %v1462 = vpop.f32.mrb[0].mxu0
    %v1463 = vadd.f32 0.0, %v1462
    %v1464 = vpop.f32.mrb[0].mxu0
    %1465 = vdwg.mxu0
    %1466 = vrot.lane.b32.xlu0 %v1311, 96
    %v1467 = vpop.permute.xlu0 %1466
    %v1468 = vsel %vm353, %v1311, 0
    %v1470 = vsel %vm353, %v1467, 0
    %1472 = vmatprep.subr.mxu0 0.0
    %1473 = vmatpush1.xpose.msra.mxu0 %v1470
    %1474 = vmatprep.subr.mxu0 0.0
    %1475 = vmatpush1.xpose.msra.mxu0 0.0
    %1476 = vmatprep.subr.mxu0 0.0
    %1477 = vmatpush1.xpose.msra.mxu0 0.0
    %1478 = vmatprep.subr.mxu0 0.0
    %1479 = vmatpush1.xpose.msra.mxu0 0.0
    %1480 = vmatprep.subr.mxu0 0.0
    %1481 = vmatpush1.xpose.msra.mxu0 0.0
    %1482 = vmatprep.subr.mxu0 0.0
    %1483 = vmatpush1.xpose.msra.mxu0 0.0
    %1484 = vmatprep.subr.mxu0 0.0
    %1485 = vmatpush1.xpose.msra.mxu0 0.0
    %1486 = vmatprep.subr.mxu0 0.0
    %1487 = vmatpush1.xpose.msra.mxu0 0.0
    %1488 = vmatprep.subr.mxu0 0.0
    %1489 = vmatpush1.xpose.msra.mxu0 0.0
    %1490 = vmatprep.subr.mxu0 0.0
    %1491 = vmatpush1.xpose.msra.mxu0 0.0
    %1492 = vmatprep.subr.mxu0 0.0
    %1493 = vmatpush1.xpose.msra.mxu0 0.0
    %1494 = vmatprep.subr.mxu0 0.0
    %1495 = vmatpush1.xpose.msra.mxu0 0.0
    %1496 = vmatprep.subr.mxu0 0.0
    %1497 = vmatpush1.xpose.msra.mxu0 0.0
    %1498 = vmatprep.subr.mxu0 0.0
    %1499 = vmatpush1.xpose.msra.mxu0 0.0
    %1500 = vmatprep.subr.mxu0 0.0
    %1501 = vmatpush1.xpose.msra.mxu0 0.0
    %1502 = vmatprep.subr.mxu0 0.0
    %1503 = vmatpush1.xpose.msra.mxu0 0.0
    %1504 = vmatprep.subr.mxu0 0.0
    %1505 = vmatpush1.xpose.msra.mxu0 0.0
    %1506 = vmatprep.subr.mxu0 0.0
    %1507 = vmatpush1.xpose.msra.mxu0 0.0
    %1508 = vmatprep.subr.mxu0 0.0
    %1509 = vmatpush1.xpose.msra.mxu0 0.0
    %1510 = vmatprep.subr.mxu0 0.0
    %1511 = vmatpush1.xpose.msra.mxu0 0.0
    %1512 = vmatprep.subr.mxu0 0.0
    %1513 = vmatpush1.xpose.msra.mxu0 0.0
    %1514 = vmatprep.subr.mxu0 0.0
    %1515 = vmatpush1.xpose.msra.mxu0 0.0
    %1516 = vmatprep.subr.mxu0 0.0
    %1517 = vmatpush1.xpose.msra.mxu0 0.0
    %1518 = vmatprep.subr.mxu0 0.0
    %1519 = vmatpush1.xpose.msra.mxu0 0.0
    %1520 = vmatprep.subr.mxu0 0.0
    %1521 = vmatpush1.xpose.msra.mxu0 0.0
    %1522 = vmatprep.subr.mxu0 0.0
    %1523 = vmatpush1.xpose.msra.mxu0 0.0
    %1524 = vmatprep.subr.mxu0 0.0
    %1525 = vmatpush1.xpose.msra.mxu0 0.0
    %1526 = vmatprep.subr.mxu0 0.0
    %1527 = vmatpush1.xpose.msra.mxu0 0.0
    %1528 = vmatprep.subr.mxu0 0.0
    %1529 = vmatpush1.xpose.msra.mxu0 0.0
    %1530 = vmatprep.subr.mxu0 0.0
    %1531 = vmatpush1.xpose.msra.mxu0 0.0
    %1532 = vmatprep.subr.mxu0 0.0
    %1533 = vmatpush1.xpose.msra.mxu0 0.0
    %1534 = vmatprep.subr.mxu0 0.0
    %1535 = vmatpush1.xpose.msra.mxu0 0.0
    %1536 = vmatprep.mubr.f32.mxu0 0.0
    %1537 = vmatmul.mubr.f32.gmra.mrb[0].mxu0 %v1468
    %v1538 = vpop.f32.mrb[0].mxu0
    %v1539 = vadd.f32 0.0, %v1538
    %v1540 = vpop.f32.mrb[0].mxu0
    %1541 = vdwg.mxu0
    %1542 = vrot.lane.b32.xlu0 %v1313, 96
    %v1543 = vpop.permute.xlu0 %1542
    %v1544 = vsel %vm353, %v1313, 0
    %v1546 = vsel %vm353, %v1543, 0
    %1548 = vmatprep.subr.mxu0 0.0
    %1549 = vmatpush1.xpose.msra.mxu0 %v1546
    %1550 = vmatprep.subr.mxu0 0.0
    %1551 = vmatpush1.xpose.msra.mxu0 0.0
    %1552 = vmatprep.subr.mxu0 0.0
    %1553 = vmatpush1.xpose.msra.mxu0 0.0
    %1554 = vmatprep.subr.mxu0 0.0
    %1555 = vmatpush1.xpose.msra.mxu0 0.0
    %1556 = vmatprep.subr.mxu0 0.0
    %1557 = vmatpush1.xpose.msra.mxu0 0.0
    %1558 = vmatprep.subr.mxu0 0.0
    %1559 = vmatpush1.xpose.msra.mxu0 0.0
    %1560 = vmatprep.subr.mxu0 0.0
    %1561 = vmatpush1.xpose.msra.mxu0 0.0
    %1562 = vmatprep.subr.mxu0 0.0
    %1563 = vmatpush1.xpose.msra.mxu0 0.0
    %1564 = vmatprep.subr.mxu0 0.0
    %1565 = vmatpush1.xpose.msra.mxu0 0.0
    %1566 = vmatprep.subr.mxu0 0.0
    %1567 = vmatpush1.xpose.msra.mxu0 0.0
    %1568 = vmatprep.subr.mxu0 0.0
    %1569 = vmatpush1.xpose.msra.mxu0 0.0
    %1570 = vmatprep.subr.mxu0 0.0
    %1571 = vmatpush1.xpose.msra.mxu0 0.0
    %1572 = vmatprep.subr.mxu0 0.0
    %1573 = vmatpush1.xpose.msra.mxu0 0.0
    %1574 = vmatprep.subr.mxu0 0.0
    %1575 = vmatpush1.xpose.msra.mxu0 0.0
    %1576 = vmatprep.subr.mxu0 0.0
    %1577 = vmatpush1.xpose.msra.mxu0 0.0
    %1578 = vmatprep.subr.mxu0 0.0
    %1579 = vmatpush1.xpose.msra.mxu0 0.0
    %1580 = vmatprep.subr.mxu0 0.0
    %1581 = vmatpush1.xpose.msra.mxu0 0.0
    %1582 = vmatprep.subr.mxu0 0.0
    %1583 = vmatpush1.xpose.msra.mxu0 0.0
    %1584 = vmatprep.subr.mxu0 0.0
    %1585 = vmatpush1.xpose.msra.mxu0 0.0
    %1586 = vmatprep.subr.mxu0 0.0
    %1587 = vmatpush1.xpose.msra.mxu0 0.0
    %1588 = vmatprep.subr.mxu0 0.0
    %1589 = vmatpush1.xpose.msra.mxu0 0.0
    %1590 = vmatprep.subr.mxu0 0.0
    %1591 = vmatpush1.xpose.msra.mxu0 0.0
    %1592 = vmatprep.subr.mxu0 0.0
    %1593 = vmatpush1.xpose.msra.mxu0 0.0
    %1594 = vmatprep.subr.mxu0 0.0
    %1595 = vmatpush1.xpose.msra.mxu0 0.0
    %1596 = vmatprep.subr.mxu0 0.0
    %1597 = vmatpush1.xpose.msra.mxu0 0.0
    %1598 = vmatprep.subr.mxu0 0.0
    %1599 = vmatpush1.xpose.msra.mxu0 0.0
    %1600 = vmatprep.subr.mxu0 0.0
    %1601 = vmatpush1.xpose.msra.mxu0 0.0
    %1602 = vmatprep.subr.mxu0 0.0
    %1603 = vmatpush1.xpose.msra.mxu0 0.0
    %1604 = vmatprep.subr.mxu0 0.0
    %1605 = vmatpush1.xpose.msra.mxu0 0.0
    %1606 = vmatprep.subr.mxu0 0.0
    %1607 = vmatpush1.xpose.msra.mxu0 0.0
    %1608 = vmatprep.subr.mxu0 0.0
    %1609 = vmatpush1.xpose.msra.mxu0 0.0
    %1610 = vmatprep.subr.mxu0 0.0
    %1611 = vmatpush1.xpose.msra.mxu0 0.0
    %1612 = vmatprep.mubr.f32.mxu0 0.0
    %1613 = vmatmul.mubr.f32.gmra.mrb[0].mxu0 %v1544
    %v1614 = vpop.f32.mrb[0].mxu0
    %v1615 = vadd.f32 0.0, %v1614
    %v1616 = vpop.f32.mrb[0].mxu0
    %1617 = vdwg.mxu0
    %v1618 = vsel %vm353, %v1387, -inf
    %1619 = vmax.xlane.f32.xlu0 %v1618
    %v1620 = vpop.xlane.xlu0 %1619
    %v1621 = vsel %vm353, %v1463, -inf
    %1622 = vmax.xlane.f32.xlu0 %v1621
    %v1623 = vpop.xlane.xlu0 %1622
    %v1624 = vsel %vm353, %v1539, -inf
    %1625 = vmax.xlane.f32.xlu0 %v1624
    %v1626 = vpop.xlane.xlu0 %1625
    %v1627 = vsel %vm353, %v1615, -inf
    %1628 = vmax.xlane.f32.xlu0 %v1627
    %v1629 = vpop.xlane.xlu0 %1628
    %v1630 = vsub.f32 %v1387, %v1620
    %v1631 = vsub.f32 %v1463, %v1623
    %v1632 = vsub.f32 %v1539, %v1626
    %v1633 = vsub.f32 %v1615, %v1629
    %v1634 = vmul.f32 %v1630, 1.442695
    %v1635 = vpow.pop %v1634
    %v1636 = vmul.f32 %v1631, 1.442695
    %v1637 = vpow.pop %v1636
    %v1638 = vmul.f32 %v1632, 1.442695
    %v1639 = vpow.pop %v1638
    %v1640 = vmul.f32 %v1633, 1.442695
    %v1641 = vpow.pop %v1640
    %v1642 = vsel %vm353, %v1635, 0.0
    %1643 = vadd.xlane.f32.xlu0 %v1642
    %v1644 = vpop.xlane.xlu0 %1643
    %v1645 = vsel %vm353, %v1637, 0.0
    %1646 = vadd.xlane.f32.xlu0 %v1645
    %v1647 = vpop.xlane.xlu0 %1646
    %v1648 = vsel %vm353, %v1639, 0.0
    %1649 = vadd.xlane.f32.xlu0 %v1648
    %v1650 = vpop.xlane.xlu0 %1649
    %v1651 = vsel %vm353, %v1641, 0.0
    %1652 = vadd.xlane.f32.xlu0 %v1651
    %v1653 = vpop.xlane.xlu0 %1652
    %v1654 = vrcp.pop %v1644
    %v1655 = vmul.f32 1.0, %v1654
    %v1656 = vrcp.pop %v1647
    %v1657 = vmul.f32 1.0, %v1656
    %v1658 = vrcp.pop %v1650
    %v1659 = vmul.f32 1.0, %v1658
    %v1660 = vrcp.pop %v1653
    %v1661 = vmul.f32 1.0, %v1660
    %v1662 = vmul.f32 %v1635, %v1655
    %v1663 = vmul.f32 %v1637, %v1657
    %v1664 = vmul.f32 %v1639, %v1659
    %v1665 = vmul.f32 %v1641, %v1661
    %1666 = vrot.lane.b32.xlu0 %v336, 64
    %v1667 = vpop.permute.xlu0 %1666
    %v1670 = vsel %vm353, %v1662, 0
    %1672 = vmatprep.subr.mxu0 0.0
    %1673 = vmatpush1.msra.mxu0 %v1667
    %1674 = vmatprep.subr.mxu0 0.0
    %1675 = vmatpush1.msra.mxu0 0.0
    %1676 = vmatprep.subr.mxu0 0.0
    %1677 = vmatpush1.msra.mxu0 0.0
    %1678 = vmatprep.subr.mxu0 0.0
    %1679 = vmatpush1.msra.mxu0 0.0
    %1680 = vmatprep.subr.mxu0 0.0
    %1681 = vmatpush1.msra.mxu0 0.0
    %1682 = vmatprep.subr.mxu0 0.0
    %1683 = vmatpush1.msra.mxu0 0.0
    %1684 = vmatprep.subr.mxu0 0.0
    %1685 = vmatpush1.msra.mxu0 0.0
    %1686 = vmatprep.subr.mxu0 0.0
    %1687 = vmatpush1.msra.mxu0 0.0
    %1688 = vmatprep.subr.mxu0 0.0
    %1689 = vmatpush1.msra.mxu0 0.0
    %1690 = vmatprep.subr.mxu0 0.0
    %1691 = vmatpush1.msra.mxu0 0.0
    %1692 = vmatprep.subr.mxu0 0.0
    %1693 = vmatpush1.msra.mxu0 0.0
    %1694 = vmatprep.subr.mxu0 0.0
    %1695 = vmatpush1.msra.mxu0 0.0
    %1696 = vmatprep.subr.mxu0 0.0
    %1697 = vmatpush1.msra.mxu0 0.0
    %1698 = vmatprep.subr.mxu0 0.0
    %1699 = vmatpush1.msra.mxu0 0.0
    %1700 = vmatprep.subr.mxu0 0.0
    %1701 = vmatpush1.msra.mxu0 0.0
    %1702 = vmatprep.subr.mxu0 0.0
    %1703 = vmatpush1.msra.mxu0 0.0
    %1704 = vmatprep.subr.mxu0 0.0
    %1705 = vmatpush1.msra.mxu0 0.0
    %1706 = vmatprep.subr.mxu0 0.0
    %1707 = vmatpush1.msra.mxu0 0.0
    %1708 = vmatprep.subr.mxu0 0.0
    %1709 = vmatpush1.msra.mxu0 0.0
    %1710 = vmatprep.subr.mxu0 0.0
    %1711 = vmatpush1.msra.mxu0 0.0
    %1712 = vmatprep.subr.mxu0 0.0
    %1713 = vmatpush1.msra.mxu0 0.0
    %1714 = vmatprep.subr.mxu0 0.0
    %1715 = vmatpush1.msra.mxu0 0.0
    %1716 = vmatprep.subr.mxu0 0.0
    %1717 = vmatpush1.msra.mxu0 0.0
    %1718 = vmatprep.subr.mxu0 0.0
    %1719 = vmatpush1.msra.mxu0 0.0
    %1720 = vmatprep.subr.mxu0 0.0
    %1721 = vmatpush1.msra.mxu0 0.0
    %1722 = vmatprep.subr.mxu0 0.0
    %1723 = vmatpush1.msra.mxu0 0.0
    %1724 = vmatprep.subr.mxu0 0.0
    %1725 = vmatpush1.msra.mxu0 0.0
    %1726 = vmatprep.subr.mxu0 0.0
    %1727 = vmatpush1.msra.mxu0 0.0
    %1728 = vmatprep.subr.mxu0 0.0
    %1729 = vmatpush1.msra.mxu0 0.0
    %1730 = vmatprep.subr.mxu0 0.0
    %1731 = vmatpush1.msra.mxu0 0.0
    %1732 = vmatprep.subr.mxu0 0.0
    %1733 = vmatpush1.msra.mxu0 0.0
    %1734 = vmatprep.subr.mxu0 0.0
    %1735 = vmatpush1.msra.mxu0 0.0
    %1736 = vmatprep.mubr.f32.mxu0 0.0
    %1737 = vmatmul.mubr.f32.gmra.mrb[0].mxu0 %v1670
    %v1738 = vpop.f32.mrb[0].mxu0
    %v1739 = vadd.f32 0.0, %v1738
    %v1740 = vpop.f32.mrb[0].mxu0
    %1741 = vdwg.mxu0
    %1742 = vrot.lane.b32.xlu0 %v1309, 64
    %v1743 = vpop.permute.xlu0 %1742
    %v1746 = vsel %vm353, %v1663, 0
    %1748 = vmatprep.subr.mxu0 0.0
    %1749 = vmatpush1.msra.mxu0 %v1743
    %1750 = vmatprep.subr.mxu0 0.0
    %1751 = vmatpush1.msra.mxu0 0.0
    %1752 = vmatprep.subr.mxu0 0.0
    %1753 = vmatpush1.msra.mxu0 0.0
    %1754 = vmatprep.subr.mxu0 0.0
    %1755 = vmatpush1.msra.mxu0 0.0
    %1756 = vmatprep.subr.mxu0 0.0
    %1757 = vmatpush1.msra.mxu0 0.0
    %1758 = vmatprep.subr.mxu0 0.0
    %1759 = vmatpush1.msra.mxu0 0.0
    %1760 = vmatprep.subr.mxu0 0.0
    %1761 = vmatpush1.msra.mxu0 0.0
    %1762 = vmatprep.subr.mxu0 0.0
    %1763 = vmatpush1.msra.mxu0 0.0
    %1764 = vmatprep.subr.mxu0 0.0
    %1765 = vmatpush1.msra.mxu0 0.0
    %1766 = vmatprep.subr.mxu0 0.0
    %1767 = vmatpush1.msra.mxu0 0.0
    %1768 = vmatprep.subr.mxu0 0.0
    %1769 = vmatpush1.msra.mxu0 0.0
    %1770 = vmatprep.subr.mxu0 0.0
    %1771 = vmatpush1.msra.mxu0 0.0
    %1772 = vmatprep.subr.mxu0 0.0
    %1773 = vmatpush1.msra.mxu0 0.0
    %1774 = vmatprep.subr.mxu0 0.0
    %1775 = vmatpush1.msra.mxu0 0.0
    %1776 = vmatprep.subr.mxu0 0.0
    %1777 = vmatpush1.msra.mxu0 0.0
    %1778 = vmatprep.subr.mxu0 0.0
    %1779 = vmatpush1.msra.mxu0 0.0
    %1780 = vmatprep.subr.mxu0 0.0
    %1781 = vmatpush1.msra.mxu0 0.0
    %1782 = vmatprep.subr.mxu0 0.0
    %1783 = vmatpush1.msra.mxu0 0.0
    %1784 = vmatprep.subr.mxu0 0.0
    %1785 = vmatpush1.msra.mxu0 0.0
    %1786 = vmatprep.subr.mxu0 0.0
    %1787 = vmatpush1.msra.mxu0 0.0
    %1788 = vmatprep.subr.mxu0 0.0
    %1789 = vmatpush1.msra.mxu0 0.0
    %1790 = vmatprep.subr.mxu0 0.0
    %1791 = vmatpush1.msra.mxu0 0.0
    %1792 = vmatprep.subr.mxu0 0.0
    %1793 = vmatpush1.msra.mxu0 0.0
    %1794 = vmatprep.subr.mxu0 0.0
    %1795 = vmatpush1.msra.mxu0 0.0
    %1796 = vmatprep.subr.mxu0 0.0
    %1797 = vmatpush1.msra.mxu0 0.0
    %1798 = vmatprep.subr.mxu0 0.0
    %1799 = vmatpush1.msra.mxu0 0.0
    %1800 = vmatprep.subr.mxu0 0.0
    %1801 = vmatpush1.msra.mxu0 0.0
    %1802 = vmatprep.subr.mxu0 0.0
    %1803 = vmatpush1.msra.mxu0 0.0
    %1804 = vmatprep.subr.mxu0 0.0
    %1805 = vmatpush1.msra.mxu0 0.0
    %1806 = vmatprep.subr.mxu0 0.0
    %1807 = vmatpush1.msra.mxu0 0.0
    %1808 = vmatprep.subr.mxu0 0.0
    %1809 = vmatpush1.msra.mxu0 0.0
    %1810 = vmatprep.subr.mxu0 0.0
    %1811 = vmatpush1.msra.mxu0 0.0
    %1812 = vmatprep.mubr.f32.mxu0 0.0
    %1813 = vmatmul.mubr.f32.gmra.mrb[0].mxu0 %v1746
    %v1814 = vpop.f32.mrb[0].mxu0
    %v1815 = vadd.f32 0.0, %v1814
    %v1816 = vpop.f32.mrb[0].mxu0
    %1817 = vdwg.mxu0
    %1818 = vrot.lane.b32.xlu0 %v1311, 64
    %v1819 = vpop.permute.xlu0 %1818
    %v1822 = vsel %vm353, %v1664, 0
    %1824 = vmatprep.subr.mxu0 0.0
    %1825 = vmatpush1.msra.mxu0 %v1819
    %1826 = vmatprep.subr.mxu0 0.0
    %1827 = vmatpush1.msra.mxu0 0.0
    %1828 = vmatprep.subr.mxu0 0.0
    %1829 = vmatpush1.msra.mxu0 0.0
    %1830 = vmatprep.subr.mxu0 0.0
    %1831 = vmatpush1.msra.mxu0 0.0
    %1832 = vmatprep.subr.mxu0 0.0
    %1833 = vmatpush1.msra.mxu0 0.0
    %1834 = vmatprep.subr.mxu0 0.0
    %1835 = vmatpush1.msra.mxu0 0.0
    %1836 = vmatprep.subr.mxu0 0.0
    %1837 = vmatpush1.msra.mxu0 0.0
    %1838 = vmatprep.subr.mxu0 0.0
    %1839 = vmatpush1.msra.mxu0 0.0
    %1840 = vmatprep.subr.mxu0 0.0
    %1841 = vmatpush1.msra.mxu0 0.0
    %1842 = vmatprep.subr.mxu0 0.0
    %1843 = vmatpush1.msra.mxu0 0.0
    %1844 = vmatprep.subr.mxu0 0.0
    %1845 = vmatpush1.msra.mxu0 0.0
    %1846 = vmatprep.subr.mxu0 0.0
    %1847 = vmatpush1.msra.mxu0 0.0
    %1848 = vmatprep.subr.mxu0 0.0
    %1849 = vmatpush1.msra.mxu0 0.0
    %1850 = vmatprep.subr.mxu0 0.0
    %1851 = vmatpush1.msra.mxu0 0.0
    %1852 = vmatprep.subr.mxu0 0.0
    %1853 = vmatpush1.msra.mxu0 0.0
    %1854 = vmatprep.subr.mxu0 0.0
    %1855 = vmatpush1.msra.mxu0 0.0
    %1856 = vmatprep.subr.mxu0 0.0
    %1857 = vmatpush1.msra.mxu0 0.0
    %1858 = vmatprep.subr.mxu0 0.0
    %1859 = vmatpush1.msra.mxu0 0.0
    %1860 = vmatprep.subr.mxu0 0.0
    %1861 = vmatpush1.msra.mxu0 0.0
    %1862 = vmatprep.subr.mxu0 0.0
    %1863 = vmatpush1.msra.mxu0 0.0
    %1864 = vmatprep.subr.mxu0 0.0
    %1865 = vmatpush1.msra.mxu0 0.0
    %1866 = vmatprep.subr.mxu0 0.0
    %1867 = vmatpush1.msra.mxu0 0.0
    %1868 = vmatprep.subr.mxu0 0.0
    %1869 = vmatpush1.msra.mxu0 0.0
    %1870 = vmatprep.subr.mxu0 0.0
    %1871 = vmatpush1.msra.mxu0 0.0
    %1872 = vmatprep.subr.mxu0 0.0
    %1873 = vmatpush1.msra.mxu0 0.0
    %1874 = vmatprep.subr.mxu0 0.0
    %1875 = vmatpush1.msra.mxu0 0.0
    %1876 = vmatprep.subr.mxu0 0.0
    %1877 = vmatpush1.msra.mxu0 0.0
    %1878 = vmatprep.subr.mxu0 0.0
    %1879 = vmatpush1.msra.mxu0 0.0
    %1880 = vmatprep.subr.mxu0 0.0
    %1881 = vmatpush1.msra.mxu0 0.0
    %1882 = vmatprep.subr.mxu0 0.0
    %1883 = vmatpush1.msra.mxu0 0.0
    %1884 = vmatprep.subr.mxu0 0.0
    %1885 = vmatpush1.msra.mxu0 0.0
    %1886 = vmatprep.subr.mxu0 0.0
    %1887 = vmatpush1.msra.mxu0 0.0
    %1888 = vmatprep.mubr.f32.mxu0 0.0
    %1889 = vmatmul.mubr.f32.gmra.mrb[0].mxu0 %v1822
    %v1890 = vpop.f32.mrb[0].mxu0
    %v1891 = vadd.f32 0.0, %v1890
    %v1892 = vpop.f32.mrb[0].mxu0
    %1893 = vdwg.mxu0
    %1894 = vrot.lane.b32.xlu0 %v1313, 64
    %v1895 = vpop.permute.xlu0 %1894
    %v1898 = vsel %vm353, %v1665, 0
    %1900 = vmatprep.subr.mxu0 0.0
    %1901 = vmatpush1.msra.mxu0 %v1895
    %1902 = vmatprep.subr.mxu0 0.0
    %1903 = vmatpush1.msra.mxu0 0.0
    %1904 = vmatprep.subr.mxu0 0.0
    %1905 = vmatpush1.msra.mxu0 0.0
    %1906 = vmatprep.subr.mxu0 0.0
    %1907 = vmatpush1.msra.mxu0 0.0
    %1908 = vmatprep.subr.mxu0 0.0
    %1909 = vmatpush1.msra.mxu0 0.0
    %1910 = vmatprep.subr.mxu0 0.0
    %1911 = vmatpush1.msra.mxu0 0.0
    %1912 = vmatprep.subr.mxu0 0.0
    %1913 = vmatpush1.msra.mxu0 0.0
    %1914 = vmatprep.subr.mxu0 0.0
    %1915 = vmatpush1.msra.mxu0 0.0
    %1916 = vmatprep.subr.mxu0 0.0
    %1917 = vmatpush1.msra.mxu0 0.0
    %1918 = vmatprep.subr.mxu0 0.0
    %1919 = vmatpush1.msra.mxu0 0.0
    %1920 = vmatprep.subr.mxu0 0.0
    %1921 = vmatpush1.msra.mxu0 0.0
    %1922 = vmatprep.subr.mxu0 0.0
    %1923 = vmatpush1.msra.mxu0 0.0
    %1924 = vmatprep.subr.mxu0 0.0
    %1925 = vmatpush1.msra.mxu0 0.0
    %1926 = vmatprep.subr.mxu0 0.0
    %1927 = vmatpush1.msra.mxu0 0.0
    %1928 = vmatprep.subr.mxu0 0.0
    %1929 = vmatpush1.msra.mxu0 0.0
    %1930 = vmatprep.subr.mxu0 0.0
    %1931 = vmatpush1.msra.mxu0 0.0
    %1932 = vmatprep.subr.mxu0 0.0
    %1933 = vmatpush1.msra.mxu0 0.0
    %1934 = vmatprep.subr.mxu0 0.0
    %1935 = vmatpush1.msra.mxu0 0.0
    %1936 = vmatprep.subr.mxu0 0.0
    %1937 = vmatpush1.msra.mxu0 0.0
    %1938 = vmatprep.subr.mxu0 0.0
    %1939 = vmatpush1.msra.mxu0 0.0
    %1940 = vmatprep.subr.mxu0 0.0
    %1941 = vmatpush1.msra.mxu0 0.0
    %1942 = vmatprep.subr.mxu0 0.0
    %1943 = vmatpush1.msra.mxu0 0.0
    %1944 = vmatprep.subr.mxu0 0.0
    %1945 = vmatpush1.msra.mxu0 0.0
    %1946 = vmatprep.subr.mxu0 0.0
    %1947 = vmatpush1.msra.mxu0 0.0
    %1948 = vmatprep.subr.mxu0 0.0
    %1949 = vmatpush1.msra.mxu0 0.0
    %1950 = vmatprep.subr.mxu0 0.0
    %1951 = vmatpush1.msra.mxu0 0.0
    %1952 = vmatprep.subr.mxu0 0.0
    %1953 = vmatpush1.msra.mxu0 0.0
    %1954 = vmatprep.subr.mxu0 0.0
    %1955 = vmatpush1.msra.mxu0 0.0
    %1956 = vmatprep.subr.mxu0 0.0
    %1957 = vmatpush1.msra.mxu0 0.0
    %1958 = vmatprep.subr.mxu0 0.0
    %1959 = vmatpush1.msra.mxu0 0.0
    %1960 = vmatprep.subr.mxu0 0.0
    %1961 = vmatpush1.msra.mxu0 0.0
    %1962 = vmatprep.subr.mxu0 0.0
    %1963 = vmatpush1.msra.mxu0 0.0
    %1964 = vmatprep.mubr.f32.mxu0 0.0
    %1965 = vmatmul.mubr.f32.gmra.mrb[0].mxu0 %v1898
    %v1966 = vpop.f32.mrb[0].mxu0
    %v1967 = vadd.f32 0.0, %v1966
    %v1968 = vpop.f32.mrb[0].mxu0
    %1969 = vdwg.mxu0
    %v1971 = vsel %vm353, %v1739, 0
    %1973 = vmatprep.subr.mxu0 0.0
    %1974 = vmatpush1.msra.mxu0 %v339
    %1975 = vmatprep.subr.mxu0 0.0
    %1976 = vmatpush1.msra.mxu0 0.0
    %1977 = vmatprep.subr.mxu0 0.0
    %1978 = vmatpush1.msra.mxu0 0.0
    %1979 = vmatprep.subr.mxu0 0.0
    %1980 = vmatpush1.msra.mxu0 0.0
    %1981 = vmatprep.subr.mxu0 0.0
    %1982 = vmatpush1.msra.mxu0 0.0
    %1983 = vmatprep.subr.mxu0 0.0
    %1984 = vmatpush1.msra.mxu0 0.0
    %1985 = vmatprep.subr.mxu0 0.0
    %1986 = vmatpush1.msra.mxu0 0.0
    %1987 = vmatprep.subr.mxu0 0.0
    %1988 = vmatpush1.msra.mxu0 0.0
    %1989 = vmatprep.subr.mxu0 0.0
    %1990 = vmatpush1.msra.mxu0 0.0
    %1991 = vmatprep.subr.mxu0 0.0
    %1992 = vmatpush1.msra.mxu0 0.0
    %1993 = vmatprep.subr.mxu0 0.0
    %1994 = vmatpush1.msra.mxu0 0.0
    %1995 = vmatprep.subr.mxu0 0.0
    %1996 = vmatpush1.msra.mxu0 0.0
    %1997 = vmatprep.subr.mxu0 0.0
    %1998 = vmatpush1.msra.mxu0 0.0
    %1999 = vmatprep.subr.mxu0 0.0
    %2000 = vmatpush1.msra.mxu0 0.0
    %2001 = vmatprep.subr.mxu0 0.0
    %2002 = vmatpush1.msra.mxu0 0.0
    %2003 = vmatprep.subr.mxu0 0.0
    %2004 = vmatpush1.msra.mxu0 0.0
    %2005 = vmatprep.subr.mxu0 0.0
    %2006 = vmatpush1.msra.mxu0 0.0
    %2007 = vmatprep.subr.mxu0 0.0
    %2008 = vmatpush1.msra.mxu0 0.0
    %2009 = vmatprep.subr.mxu0 0.0
    %2010 = vmatpush1.msra.mxu0 0.0
    %2011 = vmatprep.subr.mxu0 0.0
    %2012 = vmatpush1.msra.mxu0 0.0
    %2013 = vmatprep.subr.mxu0 0.0
    %2014 = vmatpush1.msra.mxu0 0.0
    %2015 = vmatprep.subr.mxu0 0.0
    %2016 = vmatpush1.msra.mxu0 0.0
    %2017 = vmatprep.subr.mxu0 0.0
    %2018 = vmatpush1.msra.mxu0 0.0
    %2019 = vmatprep.subr.mxu0 0.0
    %2020 = vmatpush1.msra.mxu0 0.0
    %2021 = vmatprep.subr.mxu0 0.0
    %2022 = vmatpush1.msra.mxu0 0.0
    %2023 = vmatprep.subr.mxu0 0.0
    %2024 = vmatpush1.msra.mxu0 0.0
    %2025 = vmatprep.subr.mxu0 0.0
    %2026 = vmatpush1.msra.mxu0 0.0
    %2027 = vmatprep.subr.mxu0 0.0
    %2028 = vmatpush1.msra.mxu0 0.0
    %2029 = vmatprep.subr.mxu0 0.0
    %2030 = vmatpush1.msra.mxu0 0.0
    %2031 = vmatprep.subr.mxu0 0.0
    %2032 = vmatpush1.msra.mxu0 0.0
    %2033 = vmatprep.subr.mxu0 0.0
    %2034 = vmatpush1.msra.mxu0 0.0
    %2035 = vmatprep.subr.mxu0 0.0
    %2036 = vmatpush1.msra.mxu0 0.0
    %2037 = vmatprep.mubr.f32.mxu0 0.0
    %2038 = vmatmul.mubr.f32.gmra.mrb[0].mxu0 %v1971
    %v2039 = vpop.f32.mrb[0].mxu0
    %v2040 = vadd.f32 0.0, %v2039
    %v2041 = vpop.f32.mrb[0].mxu0
    %2042 = vdwg.mxu0
    %v2044 = vsel %vm353, %v1815, 0
    %2046 = vmatprep.subr.mxu0 0.0
    %2047 = vmatpush1.msra.mxu0 %v340
    %2048 = vmatprep.subr.mxu0 0.0
    %2049 = vmatpush1.msra.mxu0 0.0
    %2050 = vmatprep.subr.mxu0 0.0
    %2051 = vmatpush1.msra.mxu0 0.0
    %2052 = vmatprep.subr.mxu0 0.0
    %2053 = vmatpush1.msra.mxu0 0.0
    %2054 = vmatprep.subr.mxu0 0.0
    %2055 = vmatpush1.msra.mxu0 0.0
    %2056 = vmatprep.subr.mxu0 0.0
    %2057 = vmatpush1.msra.mxu0 0.0
    %2058 = vmatprep.subr.mxu0 0.0
    %2059 = vmatpush1.msra.mxu0 0.0
    %2060 = vmatprep.subr.mxu0 0.0
    %2061 = vmatpush1.msra.mxu0 0.0
    %2062 = vmatprep.subr.mxu0 0.0
    %2063 = vmatpush1.msra.mxu0 0.0
    %2064 = vmatprep.subr.mxu0 0.0
    %2065 = vmatpush1.msra.mxu0 0.0
    %2066 = vmatprep.subr.mxu0 0.0
    %2067 = vmatpush1.msra.mxu0 0.0
    %2068 = vmatprep.subr.mxu0 0.0
    %2069 = vmatpush1.msra.mxu0 0.0
    %2070 = vmatprep.subr.mxu0 0.0
    %2071 = vmatpush1.msra.mxu0 0.0
    %2072 = vmatprep.subr.mxu0 0.0
    %2073 = vmatpush1.msra.mxu0 0.0
    %2074 = vmatprep.subr.mxu0 0.0
    %2075 = vmatpush1.msra.mxu0 0.0
    %2076 = vmatprep.subr.mxu0 0.0
    %2077 = vmatpush1.msra.mxu0 0.0
    %2078 = vmatprep.subr.mxu0 0.0
    %2079 = vmatpush1.msra.mxu0 0.0
    %2080 = vmatprep.subr.mxu0 0.0
    %2081 = vmatpush1.msra.mxu0 0.0
    %2082 = vmatprep.subr.mxu0 0.0
    %2083 = vmatpush1.msra.mxu0 0.0
    %2084 = vmatprep.subr.mxu0 0.0
    %2085 = vmatpush1.msra.mxu0 0.0
    %2086 = vmatprep.subr.mxu0 0.0
    %2087 = vmatpush1.msra.mxu0 0.0
    %2088 = vmatprep.subr.mxu0 0.0
    %2089 = vmatpush1.msra.mxu0 0.0
    %2090 = vmatprep.subr.mxu0 0.0
    %2091 = vmatpush1.msra.mxu0 0.0
    %2092 = vmatprep.subr.mxu0 0.0
    %2093 = vmatpush1.msra.mxu0 0.0
    %2094 = vmatprep.subr.mxu0 0.0
    %2095 = vmatpush1.msra.mxu0 0.0
    %2096 = vmatprep.subr.mxu0 0.0
    %2097 = vmatpush1.msra.mxu0 0.0
    %2098 = vmatprep.subr.mxu0 0.0
    %2099 = vmatpush1.msra.mxu0 0.0
    %2100 = vmatprep.subr.mxu0 0.0
    %2101 = vmatpush1.msra.mxu0 0.0
    %2102 = vmatprep.subr.mxu0 0.0
    %2103 = vmatpush1.msra.mxu0 0.0
    %2104 = vmatprep.subr.mxu0 0.0
    %2105 = vmatpush1.msra.mxu0 0.0
    %2106 = vmatprep.subr.mxu0 0.0
    %2107 = vmatpush1.msra.mxu0 0.0
    %2108 = vmatprep.subr.mxu0 0.0
    %2109 = vmatpush1.msra.mxu0 0.0
    %2110 = vmatprep.mubr.f32.mxu0 0.0
    %2111 = vmatmul.mubr.f32.gmra.mrb[0].mxu0 %v2044
    %v2112 = vpop.f32.mrb[0].mxu0
    %v2113 = vadd.f32 0.0, %v2112
    %v2114 = vpop.f32.mrb[0].mxu0
    %2115 = vdwg.mxu0
    %v2117 = vsel %vm353, %v1891, 0
    %2119 = vmatprep.subr.mxu0 0.0
    %2120 = vmatpush1.msra.mxu0 %v341
    %2121 = vmatprep.subr.mxu0 0.0
    %2122 = vmatpush1.msra.mxu0 0.0
    %2123 = vmatprep.subr.mxu0 0.0
    %2124 = vmatpush1.msra.mxu0 0.0
    %2125 = vmatprep.subr.mxu0 0.0
    %2126 = vmatpush1.msra.mxu0 0.0
    %2127 = vmatprep.subr.mxu0 0.0
    %2128 = vmatpush1.msra.mxu0 0.0
    %2129 = vmatprep.subr.mxu0 0.0
    %2130 = vmatpush1.msra.mxu0 0.0
    %2131 = vmatprep.subr.mxu0 0.0
    %2132 = vmatpush1.msra.mxu0 0.0
    %2133 = vmatprep.subr.mxu0 0.0
    %2134 = vmatpush1.msra.mxu0 0.0
    %2135 = vmatprep.subr.mxu0 0.0
    %2136 = vmatpush1.msra.mxu0 0.0
    %2137 = vmatprep.subr.mxu0 0.0
    %2138 = vmatpush1.msra.mxu0 0.0
    %2139 = vmatprep.subr.mxu0 0.0
    %2140 = vmatpush1.msra.mxu0 0.0
    %2141 = vmatprep.subr.mxu0 0.0
    %2142 = vmatpush1.msra.mxu0 0.0
    %2143 = vmatprep.subr.mxu0 0.0
    %2144 = vmatpush1.msra.mxu0 0.0
    %2145 = vmatprep.subr.mxu0 0.0
    %2146 = vmatpush1.msra.mxu0 0.0
    %2147 = vmatprep.subr.mxu0 0.0
    %2148 = vmatpush1.msra.mxu0 0.0
    %2149 = vmatprep.subr.mxu0 0.0
    %2150 = vmatpush1.msra.mxu0 0.0
    %2151 = vmatprep.subr.mxu0 0.0
    %2152 = vmatpush1.msra.mxu0 0.0
    %2153 = vmatprep.subr.mxu0 0.0
    %2154 = vmatpush1.msra.mxu0 0.0
    %2155 = vmatprep.subr.mxu0 0.0
    %2156 = vmatpush1.msra.mxu0 0.0
    %2157 = vmatprep.subr.mxu0 0.0
    %2158 = vmatpush1.msra.mxu0 0.0
    %2159 = vmatprep.subr.mxu0 0.0
    %2160 = vmatpush1.msra.mxu0 0.0
    %2161 = vmatprep.subr.mxu0 0.0
    %2162 = vmatpush1.msra.mxu0 0.0
    %2163 = vmatprep.subr.mxu0 0.0
    %2164 = vmatpush1.msra.mxu0 0.0
    %2165 = vmatprep.subr.mxu0 0.0
    %2166 = vmatpush1.msra.mxu0 0.0
    %2167 = vmatprep.subr.mxu0 0.0
    %2168 = vmatpush1.msra.mxu0 0.0
    %2169 = vmatprep.subr.mxu0 0.0
    %2170 = vmatpush1.msra.mxu0 0.0
    %2171 = vmatprep.subr.mxu0 0.0
    %2172 = vmatpush1.msra.mxu0 0.0
    %2173 = vmatprep.subr.mxu0 0.0
    %2174 = vmatpush1.msra.mxu0 0.0
    %2175 = vmatprep.subr.mxu0 0.0
    %2176 = vmatpush1.msra.mxu0 0.0
    %2177 = vmatprep.subr.mxu0 0.0
    %2178 = vmatpush1.msra.mxu0 0.0
    %2179 = vmatprep.subr.mxu0 0.0
    %2180 = vmatpush1.msra.mxu0 0.0
    %2181 = vmatprep.subr.mxu0 0.0
    %2182 = vmatpush1.msra.mxu0 0.0
    %2183 = vmatprep.mubr.f32.mxu0 0.0
    %2184 = vmatmul.mubr.f32.gmra.mrb[0].mxu0 %v2117
    %v2185 = vpop.f32.mrb[0].mxu0
    %v2186 = vadd.f32 0.0, %v2185
    %v2187 = vpop.f32.mrb[0].mxu0
    %2188 = vdwg.mxu0
    %v2190 = vsel %vm353, %v1967, 0
    %2192 = vmatprep.subr.mxu0 0.0
    %2193 = vmatpush1.msra.mxu0 %v342
    %2194 = vmatprep.subr.mxu0 0.0
    %2195 = vmatpush1.msra.mxu0 0.0
    %2196 = vmatprep.subr.mxu0 0.0
    %2197 = vmatpush1.msra.mxu0 0.0
    %2198 = vmatprep.subr.mxu0 0.0
    %2199 = vmatpush1.msra.mxu0 0.0
    %2200 = vmatprep.subr.mxu0 0.0
    %2201 = vmatpush1.msra.mxu0 0.0
    %2202 = vmatprep.subr.mxu0 0.0
    %2203 = vmatpush1.msra.mxu0 0.0
    %2204 = vmatprep.subr.mxu0 0.0
    %2205 = vmatpush1.msra.mxu0 0.0
    %2206 = vmatprep.subr.mxu0 0.0
    %2207 = vmatpush1.msra.mxu0 0.0
    %2208 = vmatprep.subr.mxu0 0.0
    %2209 = vmatpush1.msra.mxu0 0.0
    %2210 = vmatprep.subr.mxu0 0.0
    %2211 = vmatpush1.msra.mxu0 0.0
    %2212 = vmatprep.subr.mxu0 0.0
    %2213 = vmatpush1.msra.mxu0 0.0
    %2214 = vmatprep.subr.mxu0 0.0
    %2215 = vmatpush1.msra.mxu0 0.0
    %2216 = vmatprep.subr.mxu0 0.0
    %2217 = vmatpush1.msra.mxu0 0.0
    %2218 = vmatprep.subr.mxu0 0.0
    %2219 = vmatpush1.msra.mxu0 0.0
    %2220 = vmatprep.subr.mxu0 0.0
    %2221 = vmatpush1.msra.mxu0 0.0
    %2222 = vmatprep.subr.mxu0 0.0
    %2223 = vmatpush1.msra.mxu0 0.0
    %2224 = vmatprep.subr.mxu0 0.0
    %2225 = vmatpush1.msra.mxu0 0.0
    %2226 = vmatprep.subr.mxu0 0.0
    %2227 = vmatpush1.msra.mxu0 0.0
    %2228 = vmatprep.subr.mxu0 0.0
    %2229 = vmatpush1.msra.mxu0 0.0
    %2230 = vmatprep.subr.mxu0 0.0
    %2231 = vmatpush1.msra.mxu0 0.0
    %2232 = vmatprep.subr.mxu0 0.0
    %2233 = vmatpush1.msra.mxu0 0.0
    %2234 = vmatprep.subr.mxu0 0.0
    %2235 = vmatpush1.msra.mxu0 0.0
    %2236 = vmatprep.subr.mxu0 0.0
    %2237 = vmatpush1.msra.mxu0 0.0
    %2238 = vmatprep.subr.mxu0 0.0
    %2239 = vmatpush1.msra.mxu0 0.0
    %2240 = vmatprep.subr.mxu0 0.0
    %2241 = vmatpush1.msra.mxu0 0.0
    %2242 = vmatprep.subr.mxu0 0.0
    %2243 = vmatpush1.msra.mxu0 0.0
    %2244 = vmatprep.subr.mxu0 0.0
    %2245 = vmatpush1.msra.mxu0 0.0
    %2246 = vmatprep.subr.mxu0 0.0
    %2247 = vmatpush1.msra.mxu0 0.0
    %2248 = vmatprep.subr.mxu0 0.0
    %2249 = vmatpush1.msra.mxu0 0.0
    %2250 = vmatprep.subr.mxu0 0.0
    %2251 = vmatpush1.msra.mxu0 0.0
    %2252 = vmatprep.subr.mxu0 0.0
    %2253 = vmatpush1.msra.mxu0 0.0
    %2254 = vmatprep.subr.mxu0 0.0
    %2255 = vmatpush1.msra.mxu0 0.0
    %2256 = vmatprep.mubr.f32.mxu0 0.0
    %2257 = vmatmul.mubr.f32.gmra.mrb[0].mxu0 %v2190
    %v2258 = vpop.f32.mrb[0].mxu0
    %v2259 = vadd.f32 0.0, %v2258
    %v2260 = vpop.f32.mrb[0].mxu0
    %2261 = vdwg.mxu0
    %v2262 = vsel %vm257, %v2040, 0.0
    %v2263 = vsel %vm257, %v2113, 0.0
    %v2264 = vadd.f32 %v2262, %v2263
    %v2265 = vsel %vm257, %v2186, 0.0
    %v2266 = vadd.f32 %v2264, %v2265
    %v2267 = vsel %vm257, %v2259, 0.0
    %v2268 = vadd.f32 %v2266, %v2267
    %v2270 = vlaneseq
    %v2271 = vshrl.u32 %v2270, 7
    %v2272 = vsub.s32 0, %v2271
    %v2273 = vrot.slane %v343, %v2272
    %v2275 = vadd.f32 %v1306, %v2273
    %v2276 = vadd.f32 %v2268, %v2273
    %v2277 = vadd.f32 %v242, %v2275
    %v2278 = vadd.f32 %v243, %v2276
    %v2279 = vld [vmem:[#allocation10] sm:$0x1]
    %v2280 = vld [vmem:[#allocation11] sm:$0x1]
    %v2281 = vsel %vm257, %v2277, 0.0
    %2282 = vadd.xlane.f32.xlu0 %v2281
    %v2283 = vpop.xlane.xlu0 %2282
    %v2284 = vsel %vm257, %v2278, 0.0
    %2285 = vadd.xlane.f32.xlu0 %v2284
    %v2286 = vpop.xlane.xlu0 %2285
    %v2287 = vrcp.pop 32.0
    %v2288 = vmul.f32 %v2283, %v2287
    %v2289 = vmul.f32 %v2286, %v2287
    %v2290 = vsub.f32 %v2277, %v2288
    %v2291 = vsub.f32 %v2278, %v2289
    %v2292 = vmul.f32 %v2290, %v2290
    %v2293 = vmul.f32 %v2291, %v2291
    %v2294 = vsel %vm257, %v2292, 0.0
    %2295 = vadd.xlane.f32.xlu0 %v2294
    %v2296 = vpop.xlane.xlu0 %2295
    %v2297 = vsel %vm257, %v2293, 0.0
    %2298 = vadd.xlane.f32.xlu0 %v2297
    %v2299 = vpop.xlane.xlu0 %2298
    %v2300 = vmul.f32 %v2296, 0.032258064
    %v2301 = vmul.f32 %v2299, 0.032258064
    %v2302 = vrsqrt.pop %v2300
    %v2303 = vmul.f32 %v2300, %v2302
    %vm2304 = vcmp.eq.f32.partialorder %v2300, inf
    %v2305 = vsel %vm2304, %v2300, %v2303
    %vm2306 = vcmp.eq.f32.partialorder %v2300, 0.0
    %v2307 = vand.u32 %v2300, 2147483648
    %v2308 = vsel %vm2306, %v2307, %v2305
    %v2309 = vrsqrt.pop %v2301
    %v2310 = vmul.f32 %v2301, %v2309
    %vm2311 = vcmp.eq.f32.partialorder %v2301, inf
    %v2312 = vsel %vm2311, %v2301, %v2310
    %vm2313 = vcmp.eq.f32.partialorder %v2301, 0.0
    %v2314 = vand.u32 %v2301, 2147483648
    %v2315 = vsel %vm2313, %v2314, %v2312
    %v2316 = vadd.f32 %v2308, 1e-12
    %v2317 = vadd.f32 %v2315, 1e-12
    %v2318 = vrcp.pop %v2316
    %v2319 = vmul.f32 1.0, %v2318
    %v2320 = vrcp.pop %v2317
    %v2321 = vmul.f32 1.0, %v2320
    %v2322 = vmul.f32 %v2290, %v2319
    %v2323 = vmul.f32 %v2291, %v2321
    %v2325 = vlaneseq
    %v2326 = vshrl.u32 %v2325, 7
    %v2327 = vsub.s32 0, %v2326
    %v2328 = vrot.slane %v2279, %v2327
    %v2330 = vmul.f32 %v2328, %v2322
    %v2331 = vmul.f32 %v2328, %v2323
    %v2333 = vlaneseq
    %v2334 = vshrl.u32 %v2333, 7
    %v2335 = vsub.s32 0, %v2334
    %v2336 = vrot.slane %v2280, %v2335
    %v2338 = vadd.f32 %v2330, %v2336
    %v2339 = vadd.f32 %v2331, %v2336
    %v2340 = vld [vmem:[%s8] sm:$0xff]
    %v2341 = vld [vmem:[%s8 + $0x8] sm:$0xff]
    %v2342 = vld [vmem:[%s8 + $0x10] sm:$0xff]
    %v2343 = vld [vmem:[%s8 + $0x18] sm:$0xff]
    %v2344 = vld [vmem:[#allocation13] sm:$0x1]
    %v2346 = vlaneseq
    %v2347 = vshrl.u32 %v2346, 7
    %v2348 = vsub.s32 0, %v2347
    %v2349 = vrot.slane %v2344, %v2348
    %v2352 = vsel %vm257, %v2338, 0
    %v2355 = vsel %vm257, %v2339, 0
    %2357 = vmatprep.subr.mxu0 0.0
    %2358 = vmatpush1.msra.mxu0 %v2340
    %2359 = vmatprep.subr.mxu0 0.0
    %2360 = vmatpush1.msra.mxu0 %v2341
    %2361 = vmatprep.subr.mxu0 0.0
    %2362 = vmatpush1.msra.mxu0 %v2342
    %2363 = vmatprep.subr.mxu0 0.0
    %2364 = vmatpush1.msra.mxu0 %v2343
    %2365 = vmatprep.subr.mxu0 0.0
    %2366 = vmatpush1.msra.mxu0 0.0
    %2367 = vmatprep.subr.mxu0 0.0
    %2368 = vmatpush1.msra.mxu0 0.0
    %2369 = vmatprep.subr.mxu0 0.0
    %2370 = vmatpush1.msra.mxu0 0.0
    %2371 = vmatprep.subr.mxu0 0.0
    %2372 = vmatpush1.msra.mxu0 0.0
    %2373 = vmatprep.subr.mxu0 0.0
    %2374 = vmatpush1.msra.mxu0 0.0
    %2375 = vmatprep.subr.mxu0 0.0
    %2376 = vmatpush1.msra.mxu0 0.0
    %2377 = vmatprep.subr.mxu0 0.0
    %2378 = vmatpush1.msra.mxu0 0.0
    %2379 = vmatprep.subr.mxu0 0.0
    %2380 = vmatpush1.msra.mxu0 0.0
    %2381 = vmatprep.subr.mxu0 0.0
    %2382 = vmatpush1.msra.mxu0 0.0
    %2383 = vmatprep.subr.mxu0 0.0
    %2384 = vmatpush1.msra.mxu0 0.0
    %2385 = vmatprep.subr.mxu0 0.0
    %2386 = vmatpush1.msra.mxu0 0.0
    %2387 = vmatprep.subr.mxu0 0.0
    %2388 = vmatpush1.msra.mxu0 0.0
    %2389 = vmatprep.subr.mxu0 0.0
    %2390 = vmatpush1.msra.mxu0 0.0
    %2391 = vmatprep.subr.mxu0 0.0
    %2392 = vmatpush1.msra.mxu0 0.0
    %2393 = vmatprep.subr.mxu0 0.0
    %2394 = vmatpush1.msra.mxu0 0.0
    %2395 = vmatprep.subr.mxu0 0.0
    %2396 = vmatpush1.msra.mxu0 0.0
    %2397 = vmatprep.subr.mxu0 0.0
    %2398 = vmatpush1.msra.mxu0 0.0
    %2399 = vmatprep.subr.mxu0 0.0
    %2400 = vmatpush1.msra.mxu0 0.0
    %2401 = vmatprep.subr.mxu0 0.0
    %2402 = vmatpush1.msra.mxu0 0.0
    %2403 = vmatprep.subr.mxu0 0.0
    %2404 = vmatpush1.msra.mxu0 0.0
    %2405 = vmatprep.subr.mxu0 0.0
    %2406 = vmatpush1.msra.mxu0 0.0
    %2407 = vmatprep.subr.mxu0 0.0
    %2408 = vmatpush1.msra.mxu0 0.0
    %2409 = vmatprep.subr.mxu0 0.0
    %2410 = vmatpush1.msra.mxu0 0.0
    %2411 = vmatprep.subr.mxu0 0.0
    %2412 = vmatpush1.msra.mxu0 0.0
    %2413 = vmatprep.subr.mxu0 0.0
    %2414 = vmatpush1.msra.mxu0 0.0
    %2415 = vmatprep.subr.mxu0 0.0
    %2416 = vmatpush1.msra.mxu0 0.0
    %2417 = vmatprep.subr.mxu0 0.0
    %2418 = vmatpush1.msra.mxu0 0.0
    %2419 = vmatprep.subr.mxu0 0.0
    %2420 = vmatpush1.msra.mxu0 0.0
    %2421 = vmatprep.mubr.f32.mxu0 0.0
    %2422 = vmatmul.mubr.f32.gmra.mrb[0].mxu0 %v2352
    %v2423 = vpop.f32.mrb[0].mxu0
    %v2424 = vadd.f32 %v2349, %v2423
    %v2425 = vpop.f32.mrb[0].mxu0
    %2426 = vmatprep.mubr.f32.mxu0 0.0
    %2427 = vmatmul.mubr.f32.gmra.mrb[0].mxu0 %v2355
    %v2428 = vpop.f32.mrb[0].mxu0
    %v2429 = vadd.f32 %v2349, %v2428
    %v2430 = vpop.f32.mrb[0].mxu0
    %2431 = vdwg.mxu0
    %v2432 = vld [vmem:[%s10] sm:$0xff]
    %v2433 = vld [vmem:[%s10 + $0x8] sm:$0xff]
    %v2434 = vld [vmem:[%s10 + $0x10] sm:$0xff]
    %v2435 = vld [vmem:[%s10 + $0x18] sm:$0xff]
    %v2436 = vld [vmem:[#allocation14] sm:$0x1]
    %v2438 = vlaneseq
    %v2439 = vshrl.u32 %v2438, 7
    %v2440 = vsub.s32 0, %v2439
    %v2441 = vrot.slane %v2436, %v2440
    %v2444 = vsel %vm257, %v244, 0
    %v2447 = vsel %vm257, %v245, 0
    %2449 = vmatprep.subr.mxu0 0.0
    %2450 = vmatpush1.msra.mxu0 %v2432
    %2451 = vmatprep.subr.mxu0 0.0
    %2452 = vmatpush1.msra.mxu0 %v2433
    %2453 = vmatprep.subr.mxu0 0.0
    %2454 = vmatpush1.msra.mxu0 %v2434
    %2455 = vmatprep.subr.mxu0 0.0
    %2456 = vmatpush1.msra.mxu0 %v2435
    %2457 = vmatprep.subr.mxu0 0.0
    %2458 = vmatpush1.msra.mxu0 0.0
    %2459 = vmatprep.subr.mxu0 0.0
    %2460 = vmatpush1.msra.mxu0 0.0
    %2461 = vmatprep.subr.mxu0 0.0
    %2462 = vmatpush1.msra.mxu0 0.0
    %2463 = vmatprep.subr.mxu0 0.0
    %2464 = vmatpush1.msra.mxu0 0.0
    %2465 = vmatprep.subr.mxu0 0.0
    %2466 = vmatpush1.msra.mxu0 0.0
    %2467 = vmatprep.subr.mxu0 0.0
    %2468 = vmatpush1.msra.mxu0 0.0
    %2469 = vmatprep.subr.mxu0 0.0
    %2470 = vmatpush1.msra.mxu0 0.0
    %2471 = vmatprep.subr.mxu0 0.0
    %2472 = vmatpush1.msra.mxu0 0.0
    %2473 = vmatprep.subr.mxu0 0.0
    %2474 = vmatpush1.msra.mxu0 0.0
    %2475 = vmatprep.subr.mxu0 0.0
    %2476 = vmatpush1.msra.mxu0 0.0
    %2477 = vmatprep.subr.mxu0 0.0
    %2478 = vmatpush1.msra.mxu0 0.0
    %2479 = vmatprep.subr.mxu0 0.0
    %2480 = vmatpush1.msra.mxu0 0.0
    %2481 = vmatprep.subr.mxu0 0.0
    %2482 = vmatpush1.msra.mxu0 0.0
    %2483 = vmatprep.subr.mxu0 0.0
    %2484 = vmatpush1.msra.mxu0 0.0
    %2485 = vmatprep.subr.mxu0 0.0
    %2486 = vmatpush1.msra.mxu0 0.0
    %2487 = vmatprep.subr.mxu0 0.0
    %2488 = vmatpush1.msra.mxu0 0.0
    %2489 = vmatprep.subr.mxu0 0.0
    %2490 = vmatpush1.msra.mxu0 0.0
    %2491 = vmatprep.subr.mxu0 0.0
    %2492 = vmatpush1.msra.mxu0 0.0
    %2493 = vmatprep.subr.mxu0 0.0
    %2494 = vmatpush1.msra.mxu0 0.0
    %2495 = vmatprep.subr.mxu0 0.0
    %2496 = vmatpush1.msra.mxu0 0.0
    %2497 = vmatprep.subr.mxu0 0.0
    %2498 = vmatpush1.msra.mxu0 0.0
    %2499 = vmatprep.subr.mxu0 0.0
    %2500 = vmatpush1.msra.mxu0 0.0
    %2501 = vmatprep.subr.mxu0 0.0
    %2502 = vmatpush1.msra.mxu0 0.0
    %2503 = vmatprep.subr.mxu0 0.0
    %2504 = vmatpush1.msra.mxu0 0.0
    %2505 = vmatprep.subr.mxu0 0.0
    %2506 = vmatpush1.msra.mxu0 0.0
    %2507 = vmatprep.subr.mxu0 0.0
    %2508 = vmatpush1.msra.mxu0 0.0
    %2509 = vmatprep.subr.mxu0 0.0
    %2510 = vmatpush1.msra.mxu0 0.0
    %2511 = vmatprep.subr.mxu0 0.0
    %2512 = vmatpush1.msra.mxu0 0.0
    %2513 = vmatprep.mubr.f32.mxu0 0.0
    %2514 = vmatmul.mubr.f32.gmra.mrb[0].mxu0 %v2444
    %v2515 = vpop.f32.mrb[0].mxu0
    %v2516 = vadd.f32 %v2441, %v2515
    %v2517 = vpop.f32.mrb[0].mxu0
    %2518 = vmatprep.mubr.f32.mxu0 0.0
    %2519 = vmatmul.mubr.f32.gmra.mrb[0].mxu0 %v2447
    %v2520 = vpop.f32.mrb[0].mxu0
    %v2521 = vadd.f32 %v2441, %v2520
    %v2522 = vpop.f32.mrb[0].mxu0
    %2523 = vdwg.mxu0
    %v2524 = vld [vmem:[#allocation16] sm:$0xff]
    %v2525 = vld [vmem:[#allocation16 + $0x8] sm:$0xff]
    %v2526 = vld [vmem:[#allocation16 + $0x10] sm:$0xff]
    %v2527 = vld [vmem:[#allocation16 + $0x18] sm:$0xff]
    %v2528 = vld [vmem:[#allocation17] sm:$0x1]
    %2530 = vrot.lane.b32.xlu0 %v2424, 120
    %v2531 = vpop.permute.xlu0 %2530
    %2532 = vrot.lane.b32.xlu0 %v2424, 112
    %v2533 = vpop.permute.xlu0 %2532
    %2534 = vrot.lane.b32.xlu0 %v2424, 104
    %v2535 = vpop.permute.xlu0 %2534
    %2537 = vrot.lane.b32.xlu0 %v2516, 120
    %v2538 = vpop.permute.xlu0 %2537
    %2539 = vrot.lane.b32.xlu0 %v2516, 112
    %v2540 = vpop.permute.xlu0 %2539
    %2541 = vrot.lane.b32.xlu0 %v2516, 104
    %v2542 = vpop.permute.xlu0 %2541
    %v2543 = vsel %vm353, %v2424, 0
    %v2545 = vsel %vm353, %v2516, 0
    %2547 = vmatprep.subr.mxu0 0.0
    %2548 = vmatpush1.xpose.msra.mxu0 %v2545
    %2549 = vmatprep.subr.mxu0 0.0
    %2550 = vmatpush1.xpose.msra.mxu0 0.0
    %2551 = vmatprep.subr.mxu0 0.0
    %2552 = vmatpush1.xpose.msra.mxu0 0.0
    %2553 = vmatprep.subr.mxu0 0.0
    %2554 = vmatpush1.xpose.msra.mxu0 0.0
    %2555 = vmatprep.subr.mxu0 0.0
    %2556 = vmatpush1.xpose.msra.mxu0 0.0
    %2557 = vmatprep.subr.mxu0 0.0
    %2558 = vmatpush1.xpose.msra.mxu0 0.0
    %2559 = vmatprep.subr.mxu0 0.0
    %2560 = vmatpush1.xpose.msra.mxu0 0.0
    %2561 = vmatprep.subr.mxu0 0.0
    %2562 = vmatpush1.xpose.msra.mxu0 0.0
    %2563 = vmatprep.subr.mxu0 0.0
    %2564 = vmatpush1.xpose.msra.mxu0 0.0
    %2565 = vmatprep.subr.mxu0 0.0
    %2566 = vmatpush1.xpose.msra.mxu0 0.0
    %2567 = vmatprep.subr.mxu0 0.0
    %2568 = vmatpush1.xpose.msra.mxu0 0.0
    %2569 = vmatprep.subr.mxu0 0.0
    %2570 = vmatpush1.xpose.msra.mxu0 0.0
    %2571 = vmatprep.subr.mxu0 0.0
    %2572 = vmatpush1.xpose.msra.mxu0 0.0
    %2573 = vmatprep.subr.mxu0 0.0
    %2574 = vmatpush1.xpose.msra.mxu0 0.0
    %2575 = vmatprep.subr.mxu0 0.0
    %2576 = vmatpush1.xpose.msra.mxu0 0.0
    %2577 = vmatprep.subr.mxu0 0.0
    %2578 = vmatpush1.xpose.msra.mxu0 0.0
    %2579 = vmatprep.subr.mxu0 0.0
    %2580 = vmatpush1.xpose.msra.mxu0 0.0
    %2581 = vmatprep.subr.mxu0 0.0
    %2582 = vmatpush1.xpose.msra.mxu0 0.0
    %2583 = vmatprep.subr.mxu0 0.0
    %2584 = vmatpush1.xpose.msra.mxu0 0.0
    %2585 = vmatprep.subr.mxu0 0.0
    %2586 = vmatpush1.xpose.msra.mxu0 0.0
    %2587 = vmatprep.subr.mxu0 0.0
    %2588 = vmatpush1.xpose.msra.mxu0 0.0
    %2589 = vmatprep.subr.mxu0 0.0
    %2590 = vmatpush1.xpose.msra.mxu0 0.0
    %2591 = vmatprep.subr.mxu0 0.0
    %2592 = vmatpush1.xpose.msra.mxu0 0.0
    %2593 = vmatprep.subr.mxu0 0.0
    %2594 = vmatpush1.xpose.msra.mxu0 0.0
    %2595 = vmatprep.subr.mxu0 0.0
    %2596 = vmatpush1.xpose.msra.mxu0 0.0
    %2597 = vmatprep.subr.mxu0 0.0
    %2598 = vmatpush1.xpose.msra.mxu0 0.0
    %2599 = vmatprep.subr.mxu0 0.0
    %2600 = vmatpush1.xpose.msra.mxu0 0.0
    %2601 = vmatprep.subr.mxu0 0.0
    %2602 = vmatpush1.xpose.msra.mxu0 0.0
    %2603 = vmatprep.subr.mxu0 0.0
    %2604 = vmatpush1.xpose.msra.mxu0 0.0
    %2605 = vmatprep.subr.mxu0 0.0
    %2606 = vmatpush1.xpose.msra.mxu0 0.0
    %2607 = vmatprep.subr.mxu0 0.0
    %2608 = vmatpush1.xpose.msra.mxu0 0.0
    %2609 = vmatprep.subr.mxu0 0.0
    %2610 = vmatpush1.xpose.msra.mxu0 0.0
    %2611 = vmatprep.mubr.f32.mxu0 0.0
    %2612 = vmatmul.mubr.f32.gmra.mrb[0].mxu0 %v2543
    %v2613 = vpop.f32.mrb[0].mxu0
    %v2614 = vadd.f32 0.0, %v2613
    %v2615 = vpop.f32.mrb[0].mxu0
    %2616 = vdwg.mxu0
    %v2617 = vsel %vm353, %v2531, 0
    %v2619 = vsel %vm353, %v2538, 0
    %2621 = vmatprep.subr.mxu0 0.0
    %2622 = vmatpush1.xpose.msra.mxu0 %v2619
    %2623 = vmatprep.subr.mxu0 0.0
    %2624 = vmatpush1.xpose.msra.mxu0 0.0
    %2625 = vmatprep.subr.mxu0 0.0
    %2626 = vmatpush1.xpose.msra.mxu0 0.0
    %2627 = vmatprep.subr.mxu0 0.0
    %2628 = vmatpush1.xpose.msra.mxu0 0.0
    %2629 = vmatprep.subr.mxu0 0.0
    %2630 = vmatpush1.xpose.msra.mxu0 0.0
    %2631 = vmatprep.subr.mxu0 0.0
    %2632 = vmatpush1.xpose.msra.mxu0 0.0
    %2633 = vmatprep.subr.mxu0 0.0
    %2634 = vmatpush1.xpose.msra.mxu0 0.0
    %2635 = vmatprep.subr.mxu0 0.0
    %2636 = vmatpush1.xpose.msra.mxu0 0.0
    %2637 = vmatprep.subr.mxu0 0.0
    %2638 = vmatpush1.xpose.msra.mxu0 0.0
    %2639 = vmatprep.subr.mxu0 0.0
    %2640 = vmatpush1.xpose.msra.mxu0 0.0
    %2641 = vmatprep.subr.mxu0 0.0
    %2642 = vmatpush1.xpose.msra.mxu0 0.0
    %2643 = vmatprep.subr.mxu0 0.0
    %2644 = vmatpush1.xpose.msra.mxu0 0.0
    %2645 = vmatprep.subr.mxu0 0.0
    %2646 = vmatpush1.xpose.msra.mxu0 0.0
    %2647 = vmatprep.subr.mxu0 0.0
    %2648 = vmatpush1.xpose.msra.mxu0 0.0
    %2649 = vmatprep.subr.mxu0 0.0
    %2650 = vmatpush1.xpose.msra.mxu0 0.0
    %2651 = vmatprep.subr.mxu0 0.0
    %2652 = vmatpush1.xpose.msra.mxu0 0.0
    %2653 = vmatprep.subr.mxu0 0.0
    %2654 = vmatpush1.xpose.msra.mxu0 0.0
    %2655 = vmatprep.subr.mxu0 0.0
    %2656 = vmatpush1.xpose.msra.mxu0 0.0
    %2657 = vmatprep.subr.mxu0 0.0
    %2658 = vmatpush1.xpose.msra.mxu0 0.0
    %2659 = vmatprep.subr.mxu0 0.0
    %2660 = vmatpush1.xpose.msra.mxu0 0.0
    %2661 = vmatprep.subr.mxu0 0.0
    %2662 = vmatpush1.xpose.msra.mxu0 0.0
    %2663 = vmatprep.subr.mxu0 0.0
    %2664 = vmatpush1.xpose.msra.mxu0 0.0
    %2665 = vmatprep.subr.mxu0 0.0
    %2666 = vmatpush1.xpose.msra.mxu0 0.0
    %2667 = vmatprep.subr.mxu0 0.0
    %2668 = vmatpush1.xpose.msra.mxu0 0.0
    %2669 = vmatprep.subr.mxu0 0.0
    %2670 = vmatpush1.xpose.msra.mxu0 0.0
    %2671 = vmatprep.subr.mxu0 0.0
    %2672 = vmatpush1.xpose.msra.mxu0 0.0
    %2673 = vmatprep.subr.mxu0 0.0
    %2674 = vmatpush1.xpose.msra.mxu0 0.0
    %2675 = vmatprep.subr.mxu0 0.0
    %2676 = vmatpush1.xpose.msra.mxu0 0.0
    %2677 = vmatprep.subr.mxu0 0.0
    %2678 = vmatpush1.xpose.msra.mxu0 0.0
    %2679 = vmatprep.subr.mxu0 0.0
    %2680 = vmatpush1.xpose.msra.mxu0 0.0
    %2681 = vmatprep.subr.mxu0 0.0
    %2682 = vmatpush1.xpose.msra.mxu0 0.0
    %2683 = vmatprep.subr.mxu0 0.0
    %2684 = vmatpush1.xpose.msra.mxu0 0.0
    %2685 = vmatprep.mubr.f32.mxu0 0.0
    %2686 = vmatmul.mubr.f32.gmra.mrb[0].mxu0 %v2617
    %v2687 = vpop.f32.mrb[0].mxu0
    %v2688 = vadd.f32 0.0, %v2687
    %v2689 = vpop.f32.mrb[0].mxu0
    %2690 = vdwg.mxu0
    %v2691 = vsel %vm353, %v2533, 0
    %v2693 = vsel %vm353, %v2540, 0
    %2695 = vmatprep.subr.mxu0 0.0
    %2696 = vmatpush1.xpose.msra.mxu0 %v2693
    %2697 = vmatprep.subr.mxu0 0.0
    %2698 = vmatpush1.xpose.msra.mxu0 0.0
    %2699 = vmatprep.subr.mxu0 0.0
    %2700 = vmatpush1.xpose.msra.mxu0 0.0
    %2701 = vmatprep.subr.mxu0 0.0
    %2702 = vmatpush1.xpose.msra.mxu0 0.0
    %2703 = vmatprep.subr.mxu0 0.0
    %2704 = vmatpush1.xpose.msra.mxu0 0.0
    %2705 = vmatprep.subr.mxu0 0.0
    %2706 = vmatpush1.xpose.msra.mxu0 0.0
    %2707 = vmatprep.subr.mxu0 0.0
    %2708 = vmatpush1.xpose.msra.mxu0 0.0
    %2709 = vmatprep.subr.mxu0 0.0
    %2710 = vmatpush1.xpose.msra.mxu0 0.0
    %2711 = vmatprep.subr.mxu0 0.0
    %2712 = vmatpush1.xpose.msra.mxu0 0.0
    %2713 = vmatprep.subr.mxu0 0.0
    %2714 = vmatpush1.xpose.msra.mxu0 0.0
    %2715 = vmatprep.subr.mxu0 0.0
    %2716 = vmatpush1.xpose.msra.mxu0 0.0
    %2717 = vmatprep.subr.mxu0 0.0
    %2718 = vmatpush1.xpose.msra.mxu0 0.0
    %2719 = vmatprep.subr.mxu0 0.0
    %2720 = vmatpush1.xpose.msra.mxu0 0.0
    %2721 = vmatprep.subr.mxu0 0.0
    %2722 = vmatpush1.xpose.msra.mxu0 0.0
    %2723 = vmatprep.subr.mxu0 0.0
    %2724 = vmatpush1.xpose.msra.mxu0 0.0
    %2725 = vmatprep.subr.mxu0 0.0
    %2726 = vmatpush1.xpose.msra.mxu0 0.0
    %2727 = vmatprep.subr.mxu0 0.0
    %2728 = vmatpush1.xpose.msra.mxu0 0.0
    %2729 = vmatprep.subr.mxu0 0.0
    %2730 = vmatpush1.xpose.msra.mxu0 0.0
    %2731 = vmatprep.subr.mxu0 0.0
    %2732 = vmatpush1.xpose.msra.mxu0 0.0
    %2733 = vmatprep.subr.mxu0 0.0
    %2734 = vmatpush1.xpose.msra.mxu0 0.0
    %2735 = vmatprep.subr.mxu0 0.0
    %2736 = vmatpush1.xpose.msra.mxu0 0.0
    %2737 = vmatprep.subr.mxu0 0.0
    %2738 = vmatpush1.xpose.msra.mxu0 0.0
    %2739 = vmatprep.subr.mxu0 0.0
    %2740 = vmatpush1.xpose.msra.mxu0 0.0
    %2741 = vmatprep.subr.mxu0 0.0
    %2742 = vmatpush1.xpose.msra.mxu0 0.0
    %2743 = vmatprep.subr.mxu0 0.0
    %2744 = vmatpush1.xpose.msra.mxu0 0.0
    %2745 = vmatprep.subr.mxu0 0.0
    %2746 = vmatpush1.xpose.msra.mxu0 0.0
    %2747 = vmatprep.subr.mxu0 0.0
    %2748 = vmatpush1.xpose.msra.mxu0 0.0
    %2749 = vmatprep.subr.mxu0 0.0
    %2750 = vmatpush1.xpose.msra.mxu0 0.0
    %2751 = vmatprep.subr.mxu0 0.0
    %2752 = vmatpush1.xpose.msra.mxu0 0.0
    %2753 = vmatprep.subr.mxu0 0.0
    %2754 = vmatpush1.xpose.msra.mxu0 0.0
    %2755 = vmatprep.subr.mxu0 0.0
    %2756 = vmatpush1.xpose.msra.mxu0 0.0
    %2757 = vmatprep.subr.mxu0 0.0
    %2758 = vmatpush1.xpose.msra.mxu0 0.0
    %2759 = vmatprep.mubr.f32.mxu0 0.0
    %2760 = vmatmul.mubr.f32.gmra.mrb[0].mxu0 %v2691
    %v2761 = vpop.f32.mrb[0].mxu0
    %v2762 = vadd.f32 0.0, %v2761
    %v2763 = vpop.f32.mrb[0].mxu0
    %2764 = vdwg.mxu0
    %v2765 = vsel %vm353, %v2535, 0
    %v2767 = vsel %vm353, %v2542, 0
    %2769 = vmatprep.subr.mxu0 0.0
    %2770 = vmatpush1.xpose.msra.mxu0 %v2767
    %2771 = vmatprep.subr.mxu0 0.0
    %2772 = vmatpush1.xpose.msra.mxu0 0.0
    %2773 = vmatprep.subr.mxu0 0.0
    %2774 = vmatpush1.xpose.msra.mxu0 0.0
    %2775 = vmatprep.subr.mxu0 0.0
    %2776 = vmatpush1.xpose.msra.mxu0 0.0
    %2777 = vmatprep.subr.mxu0 0.0
    %2778 = vmatpush1.xpose.msra.mxu0 0.0
    %2779 = vmatprep.subr.mxu0 0.0
    %2780 = vmatpush1.xpose.msra.mxu0 0.0
    %2781 = vmatprep.subr.mxu0 0.0
    %2782 = vmatpush1.xpose.msra.mxu0 0.0
    %2783 = vmatprep.subr.mxu0 0.0
    %2784 = vmatpush1.xpose.msra.mxu0 0.0
    %2785 = vmatprep.subr.mxu0 0.0
    %2786 = vmatpush1.xpose.msra.mxu0 0.0
    %2787 = vmatprep.subr.mxu0 0.0
    %2788 = vmatpush1.xpose.msra.mxu0 0.0
    %2789 = vmatprep.subr.mxu0 0.0
    %2790 = vmatpush1.xpose.msra.mxu0 0.0
    %2791 = vmatprep.subr.mxu0 0.0
    %2792 = vmatpush1.xpose.msra.mxu0 0.0
    %2793 = vmatprep.subr.mxu0 0.0
    %2794 = vmatpush1.xpose.msra.mxu0 0.0
    %2795 = vmatprep.subr.mxu0 0.0
    %2796 = vmatpush1.xpose.msra.mxu0 0.0
    %2797 = vmatprep.subr.mxu0 0.0
    %2798 = vmatpush1.xpose.msra.mxu0 0.0
    %2799 = vmatprep.subr.mxu0 0.0
    %2800 = vmatpush1.xpose.msra.mxu0 0.0
    %2801 = vmatprep.subr.mxu0 0.0
    %2802 = vmatpush1.xpose.msra.mxu0 0.0
    %2803 = vmatprep.subr.mxu0 0.0
    %2804 = vmatpush1.xpose.msra.mxu0 0.0
    %2805 = vmatprep.subr.mxu0 0.0
    %2806 = vmatpush1.xpose.msra.mxu0 0.0
    %2807 = vmatprep.subr.mxu0 0.0
    %2808 = vmatpush1.xpose.msra.mxu0 0.0
    %2809 = vmatprep.subr.mxu0 0.0
    %2810 = vmatpush1.xpose.msra.mxu0 0.0
    %2811 = vmatprep.subr.mxu0 0.0
    %2812 = vmatpush1.xpose.msra.mxu0 0.0
    %2813 = vmatprep.subr.mxu0 0.0
    %2814 = vmatpush1.xpose.msra.mxu0 0.0
    %2815 = vmatprep.subr.mxu0 0.0
    %2816 = vmatpush1.xpose.msra.mxu0 0.0
    %2817 = vmatprep.subr.mxu0 0.0
    %2818 = vmatpush1.xpose.msra.mxu0 0.0
    %2819 = vmatprep.subr.mxu0 0.0
    %2820 = vmatpush1.xpose.msra.mxu0 0.0
    %2821 = vmatprep.subr.mxu0 0.0
    %2822 = vmatpush1.xpose.msra.mxu0 0.0
    %2823 = vmatprep.subr.mxu0 0.0
    %2824 = vmatpush1.xpose.msra.mxu0 0.0
    %2825 = vmatprep.subr.mxu0 0.0
    %2826 = vmatpush1.xpose.msra.mxu0 0.0
    %2827 = vmatprep.subr.mxu0 0.0
    %2828 = vmatpush1.xpose.msra.mxu0 0.0
    %2829 = vmatprep.subr.mxu0 0.0
    %2830 = vmatpush1.xpose.msra.mxu0 0.0
    %2831 = vmatprep.subr.mxu0 0.0
    %2832 = vmatpush1.xpose.msra.mxu0 0.0
    %2833 = vmatprep.mubr.f32.mxu0 0.0
    %2834 = vmatmul.mubr.f32.gmra.mrb[0].mxu0 %v2765
    %v2835 = vpop.f32.mrb[0].mxu0
    %v2836 = vadd.f32 0.0, %v2835
    %v2837 = vpop.f32.mrb[0].mxu0
    %2838 = vdwg.mxu0
    %v2839 = vsel %vm353, %v2614, -inf
    %2840 = vmax.xlane.f32.xlu0 %v2839
    %v2841 = vpop.xlane.xlu0 %2840
    %v2842 = vsel %vm353, %v2688, -inf
    %2843 = vmax.xlane.f32.xlu0 %v2842
    %v2844 = vpop.xlane.xlu0 %2843
    %v2845 = vsel %vm353, %v2762, -inf
    %2846 = vmax.xlane.f32.xlu0 %v2845
    %v2847 = vpop.xlane.xlu0 %2846
    %v2848 = vsel %vm353, %v2836, -inf
    %2849 = vmax.xlane.f32.xlu0 %v2848
    %v2850 = vpop.xlane.xlu0 %2849
    %v2851 = vsub.f32 %v2614, %v2841
    %v2852 = vsub.f32 %v2688, %v2844
    %v2853 = vsub.f32 %v2762, %v2847
    %v2854 = vsub.f32 %v2836, %v2850
    %v2855 = vmul.f32 %v2851, 1.442695
    %v2856 = vpow.pop %v2855
    %v2857 = vmul.f32 %v2852, 1.442695
    %v2858 = vpow.pop %v2857
    %v2859 = vmul.f32 %v2853, 1.442695
    %v2860 = vpow.pop %v2859
    %v2861 = vmul.f32 %v2854, 1.442695
    %v2862 = vpow.pop %v2861
    %v2863 = vsel %vm353, %v2856, 0.0
    %2864 = vadd.xlane.f32.xlu0 %v2863
    %v2865 = vpop.xlane.xlu0 %2864
    %v2866 = vsel %vm353, %v2858, 0.0
    %2867 = vadd.xlane.f32.xlu0 %v2866
    %v2868 = vpop.xlane.xlu0 %2867
    %v2869 = vsel %vm353, %v2860, 0.0
    %2870 = vadd.xlane.f32.xlu0 %v2869
    %v2871 = vpop.xlane.xlu0 %2870
    %v2872 = vsel %vm353, %v2862, 0.0
    %2873 = vadd.xlane.f32.xlu0 %v2872
    %v2874 = vpop.xlane.xlu0 %2873
    %v2875 = vrcp.pop %v2865
    %v2876 = vmul.f32 1.0, %v2875
    %v2877 = vrcp.pop %v2868
    %v2878 = vmul.f32 1.0, %v2877
    %v2879 = vrcp.pop %v2871
    %v2880 = vmul.f32 1.0, %v2879
    %v2881 = vrcp.pop %v2874
    %v2882 = vmul.f32 1.0, %v2881
    %v2883 = vmul.f32 %v2856, %v2876
    %v2884 = vmul.f32 %v2858, %v2878
    %v2885 = vmul.f32 %v2860, %v2880
    %v2886 = vmul.f32 %v2862, %v2882
    %2887 = vrot.lane.b32.xlu0 %v2516, 96
    %v2888 = vpop.permute.xlu0 %2887
    %v2891 = vsel %vm353, %v2883, 0
    %2893 = vmatprep.subr.mxu0 0.0
    %2894 = vmatpush1.msra.mxu0 %v2888
    %2895 = vmatprep.subr.mxu0 0.0
    %2896 = vmatpush1.msra.mxu0 0.0
    %2897 = vmatprep.subr.mxu0 0.0
    %2898 = vmatpush1.msra.mxu0 0.0
    %2899 = vmatprep.subr.mxu0 0.0
    %2900 = vmatpush1.msra.mxu0 0.0
    %2901 = vmatprep.subr.mxu0 0.0
    %2902 = vmatpush1.msra.mxu0 0.0
    %2903 = vmatprep.subr.mxu0 0.0
    %2904 = vmatpush1.msra.mxu0 0.0
    %2905 = vmatprep.subr.mxu0 0.0
    %2906 = vmatpush1.msra.mxu0 0.0
    %2907 = vmatprep.subr.mxu0 0.0
    %2908 = vmatpush1.msra.mxu0 0.0
    %2909 = vmatprep.subr.mxu0 0.0
    %2910 = vmatpush1.msra.mxu0 0.0
    %2911 = vmatprep.subr.mxu0 0.0
    %2912 = vmatpush1.msra.mxu0 0.0
    %2913 = vmatprep.subr.mxu0 0.0
    %2914 = vmatpush1.msra.mxu0 0.0
    %2915 = vmatprep.subr.mxu0 0.0
    %2916 = vmatpush1.msra.mxu0 0.0
    %2917 = vmatprep.subr.mxu0 0.0
    %2918 = vmatpush1.msra.mxu0 0.0
    %2919 = vmatprep.subr.mxu0 0.0
    %2920 = vmatpush1.msra.mxu0 0.0
    %2921 = vmatprep.subr.mxu0 0.0
    %2922 = vmatpush1.msra.mxu0 0.0
    %2923 = vmatprep.subr.mxu0 0.0
    %2924 = vmatpush1.msra.mxu0 0.0
    %2925 = vmatprep.subr.mxu0 0.0
    %2926 = vmatpush1.msra.mxu0 0.0
    %2927 = vmatprep.subr.mxu0 0.0
    %2928 = vmatpush1.msra.mxu0 0.0
    %2929 = vmatprep.subr.mxu0 0.0
    %2930 = vmatpush1.msra.mxu0 0.0
    %2931 = vmatprep.subr.mxu0 0.0
    %2932 = vmatpush1.msra.mxu0 0.0
    %2933 = vmatprep.subr.mxu0 0.0
    %2934 = vmatpush1.msra.mxu0 0.0
    %2935 = vmatprep.subr.mxu0 0.0
    %2936 = vmatpush1.msra.mxu0 0.0
    %2937 = vmatprep.subr.mxu0 0.0
    %2938 = vmatpush1.msra.mxu0 0.0
    %2939 = vmatprep.subr.mxu0 0.0
    %2940 = vmatpush1.msra.mxu0 0.0
    %2941 = vmatprep.subr.mxu0 0.0
    %2942 = vmatpush1.msra.mxu0 0.0
    %2943 = vmatprep.subr.mxu0 0.0
    %2944 = vmatpush1.msra.mxu0 0.0
    %2945 = vmatprep.subr.mxu0 0.0
    %2946 = vmatpush1.msra.mxu0 0.0
    %2947 = vmatprep.subr.mxu0 0.0
    %2948 = vmatpush1.msra.mxu0 0.0
    %2949 = vmatprep.subr.mxu0 0.0
    %2950 = vmatpush1.msra.mxu0 0.0
    %2951 = vmatprep.subr.mxu0 0.0
    %2952 = vmatpush1.msra.mxu0 0.0
    %2953 = vmatprep.subr.mxu0 0.0
    %2954 = vmatpush1.msra.mxu0 0.0
    %2955 = vmatprep.subr.mxu0 0.0
    %2956 = vmatpush1.msra.mxu0 0.0
    %2957 = vmatprep.mubr.f32.mxu0 0.0
    %2958 = vmatmul.mubr.f32.gmra.mrb[0].mxu0 %v2891
    %v2959 = vpop.f32.mrb[0].mxu0
    %v2960 = vadd.f32 0.0, %v2959
    %v2961 = vpop.f32.mrb[0].mxu0
    %2962 = vdwg.mxu0
    %2963 = vrot.lane.b32.xlu0 %v2538, 96
    %v2964 = vpop.permute.xlu0 %2963
    %v2967 = vsel %vm353, %v2884, 0
    %2969 = vmatprep.subr.mxu0 0.0
    %2970 = vmatpush1.msra.mxu0 %v2964
    %2971 = vmatprep.subr.mxu0 0.0
    %2972 = vmatpush1.msra.mxu0 0.0
    %2973 = vmatprep.subr.mxu0 0.0
    %2974 = vmatpush1.msra.mxu0 0.0
    %2975 = vmatprep.subr.mxu0 0.0
    %2976 = vmatpush1.msra.mxu0 0.0
    %2977 = vmatprep.subr.mxu0 0.0
    %2978 = vmatpush1.msra.mxu0 0.0
    %2979 = vmatprep.subr.mxu0 0.0
    %2980 = vmatpush1.msra.mxu0 0.0
    %2981 = vmatprep.subr.mxu0 0.0
    %2982 = vmatpush1.msra.mxu0 0.0
    %2983 = vmatprep.subr.mxu0 0.0
    %2984 = vmatpush1.msra.mxu0 0.0
    %2985 = vmatprep.subr.mxu0 0.0
    %2986 = vmatpush1.msra.mxu0 0.0
    %2987 = vmatprep.subr.mxu0 0.0
    %2988 = vmatpush1.msra.mxu0 0.0
    %2989 = vmatprep.subr.mxu0 0.0
    %2990 = vmatpush1.msra.mxu0 0.0
    %2991 = vmatprep.subr.mxu0 0.0
    %2992 = vmatpush1.msra.mxu0 0.0
    %2993 = vmatprep.subr.mxu0 0.0
    %2994 = vmatpush1.msra.mxu0 0.0
    %2995 = vmatprep.subr.mxu0 0.0
    %2996 = vmatpush1.msra.mxu0 0.0
    %2997 = vmatprep.subr.mxu0 0.0
    %2998 = vmatpush1.msra.mxu0 0.0
    %2999 = vmatprep.subr.mxu0 0.0
    %3000 = vmatpush1.msra.mxu0 0.0
    %3001 = vmatprep.subr.mxu0 0.0
    %3002 = vmatpush1.msra.mxu0 0.0
    %3003 = vmatprep.subr.mxu0 0.0
    %3004 = vmatpush1.msra.mxu0 0.0
    %3005 = vmatprep.subr.mxu0 0.0
    %3006 = vmatpush1.msra.mxu0 0.0
    %3007 = vmatprep.subr.mxu0 0.0
    %3008 = vmatpush1.msra.mxu0 0.0
    %3009 = vmatprep.subr.mxu0 0.0
    %3010 = vmatpush1.msra.mxu0 0.0
    %3011 = vmatprep.subr.mxu0 0.0
    %3012 = vmatpush1.msra.mxu0 0.0
    %3013 = vmatprep.subr.mxu0 0.0
    %3014 = vmatpush1.msra.mxu0 0.0
    %3015 = vmatprep.subr.mxu0 0.0
    %3016 = vmatpush1.msra.mxu0 0.0
    %3017 = vmatprep.subr.mxu0 0.0
    %3018 = vmatpush1.msra.mxu0 0.0
    %3019 = vmatprep.subr.mxu0 0.0
    %3020 = vmatpush1.msra.mxu0 0.0
    %3021 = vmatprep.subr.mxu0 0.0
    %3022 = vmatpush1.msra.mxu0 0.0
    %3023 = vmatprep.subr.mxu0 0.0
    %3024 = vmatpush1.msra.mxu0 0.0
    %3025 = vmatprep.subr.mxu0 0.0
    %3026 = vmatpush1.msra.mxu0 0.0
    %3027 = vmatprep.subr.mxu0 0.0
    %3028 = vmatpush1.msra.mxu0 0.0
    %3029 = vmatprep.subr.mxu0 0.0
    %3030 = vmatpush1.msra.mxu0 0.0
    %3031 = vmatprep.subr.mxu0 0.0
    %3032 = vmatpush1.msra.mxu0 0.0
    %3033 = vmatprep.mubr.f32.mxu0 0.0
    %3034 = vmatmul.mubr.f32.gmra.mrb[0].mxu0 %v2967
    %v3035 = vpop.f32.mrb[0].mxu0
    %v3036 = vadd.f32 0.0, %v3035
    %v3037 = vpop.f32.mrb[0].mxu0
    %3038 = vdwg.mxu0
    %3039 = vrot.lane.b32.xlu0 %v2540, 96
    %v3040 = vpop.permute.xlu0 %3039
    %v3043 = vsel %vm353, %v2885, 0
    %3045 = vmatprep.subr.mxu0 0.0
    %3046 = vmatpush1.msra.mxu0 %v3040
    %3047 = vmatprep.subr.mxu0 0.0
    %3048 = vmatpush1.msra.mxu0 0.0
    %3049 = vmatprep.subr.mxu0 0.0
    %3050 = vmatpush1.msra.mxu0 0.0
    %3051 = vmatprep.subr.mxu0 0.0
    %3052 = vmatpush1.msra.mxu0 0.0
    %3053 = vmatprep.subr.mxu0 0.0
    %3054 = vmatpush1.msra.mxu0 0.0
    %3055 = vmatprep.subr.mxu0 0.0
    %3056 = vmatpush1.msra.mxu0 0.0
    %3057 = vmatprep.subr.mxu0 0.0
    %3058 = vmatpush1.msra.mxu0 0.0
    %3059 = vmatprep.subr.mxu0 0.0
    %3060 = vmatpush1.msra.mxu0 0.0
    %3061 = vmatprep.subr.mxu0 0.0
    %3062 = vmatpush1.msra.mxu0 0.0
    %3063 = vmatprep.subr.mxu0 0.0
    %3064 = vmatpush1.msra.mxu0 0.0
    %3065 = vmatprep.subr.mxu0 0.0
    %3066 = vmatpush1.msra.mxu0 0.0
    %3067 = vmatprep.subr.mxu0 0.0
    %3068 = vmatpush1.msra.mxu0 0.0
    %3069 = vmatprep.subr.mxu0 0.0
    %3070 = vmatpush1.msra.mxu0 0.0
    %3071 = vmatprep.subr.mxu0 0.0
    %3072 = vmatpush1.msra.mxu0 0.0
    %3073 = vmatprep.subr.mxu0 0.0
    %3074 = vmatpush1.msra.mxu0 0.0
    %3075 = vmatprep.subr.mxu0 0.0
    %3076 = vmatpush1.msra.mxu0 0.0
    %3077 = vmatprep.subr.mxu0 0.0
    %3078 = vmatpush1.msra.mxu0 0.0
    %3079 = vmatprep.subr.mxu0 0.0
    %3080 = vmatpush1.msra.mxu0 0.0
    %3081 = vmatprep.subr.mxu0 0.0
    %3082 = vmatpush1.msra.mxu0 0.0
    %3083 = vmatprep.subr.mxu0 0.0
    %3084 = vmatpush1.msra.mxu0 0.0
    %3085 = vmatprep.subr.mxu0 0.0
    %3086 = vmatpush1.msra.mxu0 0.0
    %3087 = vmatprep.subr.mxu0 0.0
    %3088 = vmatpush1.msra.mxu0 0.0
    %3089 = vmatprep.subr.mxu0 0.0
    %3090 = vmatpush1.msra.mxu0 0.0
    %3091 = vmatprep.subr.mxu0 0.0
    %3092 = vmatpush1.msra.mxu0 0.0
    %3093 = vmatprep.subr.mxu0 0.0
    %3094 = vmatpush1.msra.mxu0 0.0
    %3095 = vmatprep.subr.mxu0 0.0
    %3096 = vmatpush1.msra.mxu0 0.0
    %3097 = vmatprep.subr.mxu0 0.0
    %3098 = vmatpush1.msra.mxu0 0.0
    %3099 = vmatprep.subr.mxu0 0.0
    %3100 = vmatpush1.msra.mxu0 0.0
    %3101 = vmatprep.subr.mxu0 0.0
    %3102 = vmatpush1.msra.mxu0 0.0
    %3103 = vmatprep.subr.mxu0 0.0
    %3104 = vmatpush1.msra.mxu0 0.0
    %3105 = vmatprep.subr.mxu0 0.0
    %3106 = vmatpush1.msra.mxu0 0.0
    %3107 = vmatprep.subr.mxu0 0.0
    %3108 = vmatpush1.msra.mxu0 0.0
    %3109 = vmatprep.mubr.f32.mxu0 0.0
    %3110 = vmatmul.mubr.f32.gmra.mrb[0].mxu0 %v3043
    %v3111 = vpop.f32.mrb[0].mxu0
    %v3112 = vadd.f32 0.0, %v3111
    %v3113 = vpop.f32.mrb[0].mxu0
    %3114 = vdwg.mxu0
    %3115 = vrot.lane.b32.xlu0 %v2542, 96
    %v3116 = vpop.permute.xlu0 %3115
    %v3119 = vsel %vm353, %v2886, 0
    %3121 = vmatprep.subr.mxu0 0.0
    %3122 = vmatpush1.msra.mxu0 %v3116
    %3123 = vmatprep.subr.mxu0 0.0
    %3124 = vmatpush1.msra.mxu0 0.0
    %3125 = vmatprep.subr.mxu0 0.0
    %3126 = vmatpush1.msra.mxu0 0.0
    %3127 = vmatprep.subr.mxu0 0.0
    %3128 = vmatpush1.msra.mxu0 0.0
    %3129 = vmatprep.subr.mxu0 0.0
    %3130 = vmatpush1.msra.mxu0 0.0
    %3131 = vmatprep.subr.mxu0 0.0
    %3132 = vmatpush1.msra.mxu0 0.0
    %3133 = vmatprep.subr.mxu0 0.0
    %3134 = vmatpush1.msra.mxu0 0.0
    %3135 = vmatprep.subr.mxu0 0.0
    %3136 = vmatpush1.msra.mxu0 0.0
    %3137 = vmatprep.subr.mxu0 0.0
    %3138 = vmatpush1.msra.mxu0 0.0
    %3139 = vmatprep.subr.mxu0 0.0
    %3140 = vmatpush1.msra.mxu0 0.0
    %3141 = vmatprep.subr.mxu0 0.0
    %3142 = vmatpush1.msra.mxu0 0.0
    %3143 = vmatprep.subr.mxu0 0.0
    %3144 = vmatpush1.msra.mxu0 0.0
    %3145 = vmatprep.subr.mxu0 0.0
    %3146 = vmatpush1.msra.mxu0 0.0
    %3147 = vmatprep.subr.mxu0 0.0
    %3148 = vmatpush1.msra.mxu0 0.0
    %3149 = vmatprep.subr.mxu0 0.0
    %3150 = vmatpush1.msra.mxu0 0.0
    %3151 = vmatprep.subr.mxu0 0.0
    %3152 = vmatpush1.msra.mxu0 0.0
    %3153 = vmatprep.subr.mxu0 0.0
    %3154 = vmatpush1.msra.mxu0 0.0
    %3155 = vmatprep.subr.mxu0 0.0
    %3156 = vmatpush1.msra.mxu0 0.0
    %3157 = vmatprep.subr.mxu0 0.0
    %3158 = vmatpush1.msra.mxu0 0.0
    %3159 = vmatprep.subr.mxu0 0.0
    %3160 = vmatpush1.msra.mxu0 0.0
    %3161 = vmatprep.subr.mxu0 0.0
    %3162 = vmatpush1.msra.mxu0 0.0
    %3163 = vmatprep.subr.mxu0 0.0
    %3164 = vmatpush1.msra.mxu0 0.0
    %3165 = vmatprep.subr.mxu0 0.0
    %3166 = vmatpush1.msra.mxu0 0.0
    %3167 = vmatprep.subr.mxu0 0.0
    %3168 = vmatpush1.msra.mxu0 0.0
    %3169 = vmatprep.subr.mxu0 0.0
    %3170 = vmatpush1.msra.mxu0 0.0
    %3171 = vmatprep.subr.mxu0 0.0
    %3172 = vmatpush1.msra.mxu0 0.0
    %3173 = vmatprep.subr.mxu0 0.0
    %3174 = vmatpush1.msra.mxu0 0.0
    %3175 = vmatprep.subr.mxu0 0.0
    %3176 = vmatpush1.msra.mxu0 0.0
    %3177 = vmatprep.subr.mxu0 0.0
    %3178 = vmatpush1.msra.mxu0 0.0
    %3179 = vmatprep.subr.mxu0 0.0
    %3180 = vmatpush1.msra.mxu0 0.0
    %3181 = vmatprep.subr.mxu0 0.0
    %3182 = vmatpush1.msra.mxu0 0.0
    %3183 = vmatprep.subr.mxu0 0.0
    %3184 = vmatpush1.msra.mxu0 0.0
    %3185 = vmatprep.mubr.f32.mxu0 0.0
    %3186 = vmatmul.mubr.f32.gmra.mrb[0].mxu0 %v3119
    %v3187 = vpop.f32.mrb[0].mxu0
    %v3188 = vadd.f32 0.0, %v3187
    %v3189 = vpop.f32.mrb[0].mxu0
    %3190 = vdwg.mxu0
    %v3192 = vsel %vm353, %v2960, 0
    %3194 = vmatprep.subr.mxu0 0.0
    %3195 = vmatpush1.msra.mxu0 %v2524
    %3196 = vmatprep.subr.mxu0 0.0
    %3197 = vmatpush1.msra.mxu0 0.0
    %3198 = vmatprep.subr.mxu0 0.0
    %3199 = vmatpush1.msra.mxu0 0.0
    %3200 = vmatprep.subr.mxu0 0.0
    %3201 = vmatpush1.msra.mxu0 0.0
    %3202 = vmatprep.subr.mxu0 0.0
    %3203 = vmatpush1.msra.mxu0 0.0
    %3204 = vmatprep.subr.mxu0 0.0
    %3205 = vmatpush1.msra.mxu0 0.0
    %3206 = vmatprep.subr.mxu0 0.0
    %3207 = vmatpush1.msra.mxu0 0.0
    %3208 = vmatprep.subr.mxu0 0.0
    %3209 = vmatpush1.msra.mxu0 0.0
    %3210 = vmatprep.subr.mxu0 0.0
    %3211 = vmatpush1.msra.mxu0 0.0
    %3212 = vmatprep.subr.mxu0 0.0
    %3213 = vmatpush1.msra.mxu0 0.0
    %3214 = vmatprep.subr.mxu0 0.0
    %3215 = vmatpush1.msra.mxu0 0.0
    %3216 = vmatprep.subr.mxu0 0.0
    %3217 = vmatpush1.msra.mxu0 0.0
    %3218 = vmatprep.subr.mxu0 0.0
    %3219 = vmatpush1.msra.mxu0 0.0
    %3220 = vmatprep.subr.mxu0 0.0
    %3221 = vmatpush1.msra.mxu0 0.0
    %3222 = vmatprep.subr.mxu0 0.0
    %3223 = vmatpush1.msra.mxu0 0.0
    %3224 = vmatprep.subr.mxu0 0.0
    %3225 = vmatpush1.msra.mxu0 0.0
    %3226 = vmatprep.subr.mxu0 0.0
    %3227 = vmatpush1.msra.mxu0 0.0
    %3228 = vmatprep.subr.mxu0 0.0
    %3229 = vmatpush1.msra.mxu0 0.0
    %3230 = vmatprep.subr.mxu0 0.0
    %3231 = vmatpush1.msra.mxu0 0.0
    %3232 = vmatprep.subr.mxu0 0.0
    %3233 = vmatpush1.msra.mxu0 0.0
    %3234 = vmatprep.subr.mxu0 0.0
    %3235 = vmatpush1.msra.mxu0 0.0
    %3236 = vmatprep.subr.mxu0 0.0
    %3237 = vmatpush1.msra.mxu0 0.0
    %3238 = vmatprep.subr.mxu0 0.0
    %3239 = vmatpush1.msra.mxu0 0.0
    %3240 = vmatprep.subr.mxu0 0.0
    %3241 = vmatpush1.msra.mxu0 0.0
    %3242 = vmatprep.subr.mxu0 0.0
    %3243 = vmatpush1.msra.mxu0 0.0
    %3244 = vmatprep.subr.mxu0 0.0
    %3245 = vmatpush1.msra.mxu0 0.0
    %3246 = vmatprep.subr.mxu0 0.0
    %3247 = vmatpush1.msra.mxu0 0.0
    %3248 = vmatprep.subr.mxu0 0.0
    %3249 = vmatpush1.msra.mxu0 0.0
    %3250 = vmatprep.subr.mxu0 0.0
    %3251 = vmatpush1.msra.mxu0 0.0
    %3252 = vmatprep.subr.mxu0 0.0
    %3253 = vmatpush1.msra.mxu0 0.0
    %3254 = vmatprep.subr.mxu0 0.0
    %3255 = vmatpush1.msra.mxu0 0.0
    %3256 = vmatprep.subr.mxu0 0.0
    %3257 = vmatpush1.msra.mxu0 0.0
    %3258 = vmatprep.mubr.f32.mxu0 0.0
    %3259 = vmatmul.mubr.f32.gmra.mrb[0].mxu0 %v3192
    %v3260 = vpop.f32.mrb[0].mxu0
    %v3261 = vadd.f32 0.0, %v3260
    %v3262 = vpop.f32.mrb[0].mxu0
    %3263 = vdwg.mxu0
    %v3265 = vsel %vm353, %v3036, 0
    %3267 = vmatprep.subr.mxu0 0.0
    %3268 = vmatpush1.msra.mxu0 %v2525
    %3269 = vmatprep.subr.mxu0 0.0
    %3270 = vmatpush1.msra.mxu0 0.0
    %3271 = vmatprep.subr.mxu0 0.0
    %3272 = vmatpush1.msra.mxu0 0.0
    %3273 = vmatprep.subr.mxu0 0.0
    %3274 = vmatpush1.msra.mxu0 0.0
    %3275 = vmatprep.subr.mxu0 0.0
    %3276 = vmatpush1.msra.mxu0 0.0
    %3277 = vmatprep.subr.mxu0 0.0
    %3278 = vmatpush1.msra.mxu0 0.0
    %3279 = vmatprep.subr.mxu0 0.0
    %3280 = vmatpush1.msra.mxu0 0.0
    %3281 = vmatprep.subr.mxu0 0.0
    %3282 = vmatpush1.msra.mxu0 0.0
    %3283 = vmatprep.subr.mxu0 0.0
    %3284 = vmatpush1.msra.mxu0 0.0
    %3285 = vmatprep.subr.mxu0 0.0
    %3286 = vmatpush1.msra.mxu0 0.0
    %3287 = vmatprep.subr.mxu0 0.0
    %3288 = vmatpush1.msra.mxu0 0.0
    %3289 = vmatprep.subr.mxu0 0.0
    %3290 = vmatpush1.msra.mxu0 0.0
    %3291 = vmatprep.subr.mxu0 0.0
    %3292 = vmatpush1.msra.mxu0 0.0
    %3293 = vmatprep.subr.mxu0 0.0
    %3294 = vmatpush1.msra.mxu0 0.0
    %3295 = vmatprep.subr.mxu0 0.0
    %3296 = vmatpush1.msra.mxu0 0.0
    %3297 = vmatprep.subr.mxu0 0.0
    %3298 = vmatpush1.msra.mxu0 0.0
    %3299 = vmatprep.subr.mxu0 0.0
    %3300 = vmatpush1.msra.mxu0 0.0
    %3301 = vmatprep.subr.mxu0 0.0
    %3302 = vmatpush1.msra.mxu0 0.0
    %3303 = vmatprep.subr.mxu0 0.0
    %3304 = vmatpush1.msra.mxu0 0.0
    %3305 = vmatprep.subr.mxu0 0.0
    %3306 = vmatpush1.msra.mxu0 0.0
    %3307 = vmatprep.subr.mxu0 0.0
    %3308 = vmatpush1.msra.mxu0 0.0
    %3309 = vmatprep.subr.mxu0 0.0
    %3310 = vmatpush1.msra.mxu0 0.0
    %3311 = vmatprep.subr.mxu0 0.0
    %3312 = vmatpush1.msra.mxu0 0.0
    %3313 = vmatprep.subr.mxu0 0.0
    %3314 = vmatpush1.msra.mxu0 0.0
    %3315 = vmatprep.subr.mxu0 0.0
    %3316 = vmatpush1.msra.mxu0 0.0
    %3317 = vmatprep.subr.mxu0 0.0
    %3318 = vmatpush1.msra.mxu0 0.0
    %3319 = vmatprep.subr.mxu0 0.0
    %3320 = vmatpush1.msra.mxu0 0.0
    %3321 = vmatprep.subr.mxu0 0.0
    %3322 = vmatpush1.msra.mxu0 0.0
    %3323 = vmatprep.subr.mxu0 0.0
    %3324 = vmatpush1.msra.mxu0 0.0
    %3325 = vmatprep.subr.mxu0 0.0
    %3326 = vmatpush1.msra.mxu0 0.0
    %3327 = vmatprep.subr.mxu0 0.0
    %3328 = vmatpush1.msra.mxu0 0.0
    %3329 = vmatprep.subr.mxu0 0.0
    %3330 = vmatpush1.msra.mxu0 0.0
    %3331 = vmatprep.mubr.f32.mxu0 0.0
    %3332 = vmatmul.mubr.f32.gmra.mrb[0].mxu0 %v3265
    %v3333 = vpop.f32.mrb[0].mxu0
    %v3334 = vadd.f32 0.0, %v3333
    %v3335 = vpop.f32.mrb[0].mxu0
    %3336 = vdwg.mxu0
    %v3338 = vsel %vm353, %v3112, 0
    %3340 = vmatprep.subr.mxu0 0.0
    %3341 = vmatpush1.msra.mxu0 %v2526
    %3342 = vmatprep.subr.mxu0 0.0
    %3343 = vmatpush1.msra.mxu0 0.0
    %3344 = vmatprep.subr.mxu0 0.0
    %3345 = vmatpush1.msra.mxu0 0.0
    %3346 = vmatprep.subr.mxu0 0.0
    %3347 = vmatpush1.msra.mxu0 0.0
    %3348 = vmatprep.subr.mxu0 0.0
    %3349 = vmatpush1.msra.mxu0 0.0
    %3350 = vmatprep.subr.mxu0 0.0
    %3351 = vmatpush1.msra.mxu0 0.0
    %3352 = vmatprep.subr.mxu0 0.0
    %3353 = vmatpush1.msra.mxu0 0.0
    %3354 = vmatprep.subr.mxu0 0.0
    %3355 = vmatpush1.msra.mxu0 0.0
    %3356 = vmatprep.subr.mxu0 0.0
    %3357 = vmatpush1.msra.mxu0 0.0
    %3358 = vmatprep.subr.mxu0 0.0
    %3359 = vmatpush1.msra.mxu0 0.0
    %3360 = vmatprep.subr.mxu0 0.0
    %3361 = vmatpush1.msra.mxu0 0.0
    %3362 = vmatprep.subr.mxu0 0.0
    %3363 = vmatpush1.msra.mxu0 0.0
    %3364 = vmatprep.subr.mxu0 0.0
    %3365 = vmatpush1.msra.mxu0 0.0
    %3366 = vmatprep.subr.mxu0 0.0
    %3367 = vmatpush1.msra.mxu0 0.0
    %3368 = vmatprep.subr.mxu0 0.0
    %3369 = vmatpush1.msra.mxu0 0.0
    %3370 = vmatprep.subr.mxu0 0.0
    %3371 = vmatpush1.msra.mxu0 0.0
    %3372 = vmatprep.subr.mxu0 0.0
    %3373 = vmatpush1.msra.mxu0 0.0
    %3374 = vmatprep.subr.mxu0 0.0
    %3375 = vmatpush1.msra.mxu0 0.0
    %3376 = vmatprep.subr.mxu0 0.0
    %3377 = vmatpush1.msra.mxu0 0.0
    %3378 = vmatprep.subr.mxu0 0.0
    %3379 = vmatpush1.msra.mxu0 0.0
    %3380 = vmatprep.subr.mxu0 0.0
    %3381 = vmatpush1.msra.mxu0 0.0
    %3382 = vmatprep.subr.mxu0 0.0
    %3383 = vmatpush1.msra.mxu0 0.0
    %3384 = vmatprep.subr.mxu0 0.0
    %3385 = vmatpush1.msra.mxu0 0.0
    %3386 = vmatprep.subr.mxu0 0.0
    %3387 = vmatpush1.msra.mxu0 0.0
    %3388 = vmatprep.subr.mxu0 0.0
    %3389 = vmatpush1.msra.mxu0 0.0
    %3390 = vmatprep.subr.mxu0 0.0
    %3391 = vmatpush1.msra.mxu0 0.0
    %3392 = vmatprep.subr.mxu0 0.0
    %3393 = vmatpush1.msra.mxu0 0.0
    %3394 = vmatprep.subr.mxu0 0.0
    %3395 = vmatpush1.msra.mxu0 0.0
    %3396 = vmatprep.subr.mxu0 0.0
    %3397 = vmatpush1.msra.mxu0 0.0
    %3398 = vmatprep.subr.mxu0 0.0
    %3399 = vmatpush1.msra.mxu0 0.0
    %3400 = vmatprep.subr.mxu0 0.0
    %3401 = vmatpush1.msra.mxu0 0.0
    %3402 = vmatprep.subr.mxu0 0.0
    %3403 = vmatpush1.msra.mxu0 0.0
    %3404 = vmatprep.mubr.f32.mxu0 0.0
    %3405 = vmatmul.mubr.f32.gmra.mrb[0].mxu0 %v3338
    %v3406 = vpop.f32.mrb[0].mxu0
    %v3407 = vadd.f32 0.0, %v3406
    %v3408 = vpop.f32.mrb[0].mxu0
    %3409 = vdwg.mxu0
    %v3411 = vsel %vm353, %v3188, 0
    %3413 = vmatprep.subr.mxu0 0.0
    %3414 = vmatpush1.msra.mxu0 %v2527
    %3415 = vmatprep.subr.mxu0 0.0
    %3416 = vmatpush1.msra.mxu0 0.0
    %3417 = vmatprep.subr.mxu0 0.0
    %3418 = vmatpush1.msra.mxu0 0.0
    %3419 = vmatprep.subr.mxu0 0.0
    %3420 = vmatpush1.msra.mxu0 0.0
    %3421 = vmatprep.subr.mxu0 0.0
    %3422 = vmatpush1.msra.mxu0 0.0
    %3423 = vmatprep.subr.mxu0 0.0
    %3424 = vmatpush1.msra.mxu0 0.0
    %3425 = vmatprep.subr.mxu0 0.0
    %3426 = vmatpush1.msra.mxu0 0.0
    %3427 = vmatprep.subr.mxu0 0.0
    %3428 = vmatpush1.msra.mxu0 0.0
    %3429 = vmatprep.subr.mxu0 0.0
    %3430 = vmatpush1.msra.mxu0 0.0
    %3431 = vmatprep.subr.mxu0 0.0
    %3432 = vmatpush1.msra.mxu0 0.0
    %3433 = vmatprep.subr.mxu0 0.0
    %3434 = vmatpush1.msra.mxu0 0.0
    %3435 = vmatprep.subr.mxu0 0.0
    %3436 = vmatpush1.msra.mxu0 0.0
    %3437 = vmatprep.subr.mxu0 0.0
    %3438 = vmatpush1.msra.mxu0 0.0
    %3439 = vmatprep.subr.mxu0 0.0
    %3440 = vmatpush1.msra.mxu0 0.0
    %3441 = vmatprep.subr.mxu0 0.0
    %3442 = vmatpush1.msra.mxu0 0.0
    %3443 = vmatprep.subr.mxu0 0.0
    %3444 = vmatpush1.msra.mxu0 0.0
    %3445 = vmatprep.subr.mxu0 0.0
    %3446 = vmatpush1.msra.mxu0 0.0
    %3447 = vmatprep.subr.mxu0 0.0
    %3448 = vmatpush1.msra.mxu0 0.0
    %3449 = vmatprep.subr.mxu0 0.0
    %3450 = vmatpush1.msra.mxu0 0.0
    %3451 = vmatprep.subr.mxu0 0.0
    %3452 = vmatpush1.msra.mxu0 0.0
    %3453 = vmatprep.subr.mxu0 0.0
    %3454 = vmatpush1.msra.mxu0 0.0
    %3455 = vmatprep.subr.mxu0 0.0
    %3456 = vmatpush1.msra.mxu0 0.0
    %3457 = vmatprep.subr.mxu0 0.0
    %3458 = vmatpush1.msra.mxu0 0.0
    %3459 = vmatprep.subr.mxu0 0.0
    %3460 = vmatpush1.msra.mxu0 0.0
    %3461 = vmatprep.subr.mxu0 0.0
    %3462 = vmatpush1.msra.mxu0 0.0
    %3463 = vmatprep.subr.mxu0 0.0
    %3464 = vmatpush1.msra.mxu0 0.0
    %3465 = vmatprep.subr.mxu0 0.0
    %3466 = vmatpush1.msra.mxu0 0.0
    %3467 = vmatprep.subr.mxu0 0.0
    %3468 = vmatpush1.msra.mxu0 0.0
    %3469 = vmatprep.subr.mxu0 0.0
    %3470 = vmatpush1.msra.mxu0 0.0
    %3471 = vmatprep.subr.mxu0 0.0
    %3472 = vmatpush1.msra.mxu0 0.0
    %3473 = vmatprep.subr.mxu0 0.0
    %3474 = vmatpush1.msra.mxu0 0.0
    %3475 = vmatprep.subr.mxu0 0.0
    %3476 = vmatpush1.msra.mxu0 0.0
    %3477 = vmatprep.mubr.f32.mxu0 0.0
    %3478 = vmatmul.mubr.f32.gmra.mrb[0].mxu0 %v3411
    %v3479 = vpop.f32.mrb[0].mxu0
    %v3480 = vadd.f32 0.0, %v3479
    %v3481 = vpop.f32.mrb[0].mxu0
    %3482 = vdwg.mxu0
    %v3483 = vsel %vm257, %v3261, 0.0
    %v3484 = vsel %vm257, %v3334, 0.0
    %v3485 = vadd.f32 %v3483, %v3484
    %v3486 = vsel %vm257, %v3407, 0.0
    %v3487 = vadd.f32 %v3485, %v3486
    %v3488 = vsel %vm257, %v3480, 0.0
    %v3489 = vadd.f32 %v3487, %v3488
    %3491 = vrot.lane.b32.xlu0 %v2429, 120
    %v3492 = vpop.permute.xlu0 %3491
    %3493 = vrot.lane.b32.xlu0 %v2429, 112
    %v3494 = vpop.permute.xlu0 %3493
    %3495 = vrot.lane.b32.xlu0 %v2429, 104
    %v3496 = vpop.permute.xlu0 %3495
    %3498 = vrot.lane.b32.xlu0 %v2521, 120
    %v3499 = vpop.permute.xlu0 %3498
    %3500 = vrot.lane.b32.xlu0 %v2521, 112
    %v3501 = vpop.permute.xlu0 %3500
    %3502 = vrot.lane.b32.xlu0 %v2521, 104
    %v3503 = vpop.permute.xlu0 %3502
    %v3504 = vsel %vm353, %v2429, 0
    %v3506 = vsel %vm353, %v2521, 0
    %3508 = vmatprep.subr.mxu0 0.0
    %3509 = vmatpush1.xpose.msra.mxu0 %v3506
    %3510 = vmatprep.subr.mxu0 0.0
    %3511 = vmatpush1.xpose.msra.mxu0 0.0
    %3512 = vmatprep.subr.mxu0 0.0
    %3513 = vmatpush1.xpose.msra.mxu0 0.0
    %3514 = vmatprep.subr.mxu0 0.0
    %3515 = vmatpush1.xpose.msra.mxu0 0.0
    %3516 = vmatprep.subr.mxu0 0.0
    %3517 = vmatpush1.xpose.msra.mxu0 0.0
    %3518 = vmatprep.subr.mxu0 0.0
    %3519 = vmatpush1.xpose.msra.mxu0 0.0
    %3520 = vmatprep.subr.mxu0 0.0
    %3521 = vmatpush1.xpose.msra.mxu0 0.0
    %3522 = vmatprep.subr.mxu0 0.0
    %3523 = vmatpush1.xpose.msra.mxu0 0.0
    %3524 = vmatprep.subr.mxu0 0.0
    %3525 = vmatpush1.xpose.msra.mxu0 0.0
    %3526 = vmatprep.subr.mxu0 0.0
    %3527 = vmatpush1.xpose.msra.mxu0 0.0
    %3528 = vmatprep.subr.mxu0 0.0
    %3529 = vmatpush1.xpose.msra.mxu0 0.0
    %3530 = vmatprep.subr.mxu0 0.0
    %3531 = vmatpush1.xpose.msra.mxu0 0.0
    %3532 = vmatprep.subr.mxu0 0.0
    %3533 = vmatpush1.xpose.msra.mxu0 0.0
    %3534 = vmatprep.subr.mxu0 0.0
    %3535 = vmatpush1.xpose.msra.mxu0 0.0
    %3536 = vmatprep.subr.mxu0 0.0
    %3537 = vmatpush1.xpose.msra.mxu0 0.0
    %3538 = vmatprep.subr.mxu0 0.0
    %3539 = vmatpush1.xpose.msra.mxu0 0.0
    %3540 = vmatprep.subr.mxu0 0.0
    %3541 = vmatpush1.xpose.msra.mxu0 0.0
    %3542 = vmatprep.subr.mxu0 0.0
    %3543 = vmatpush1.xpose.msra.mxu0 0.0
    %3544 = vmatprep.subr.mxu0 0.0
    %3545 = vmatpush1.xpose.msra.mxu0 0.0
    %3546 = vmatprep.subr.mxu0 0.0
    %3547 = vmatpush1.xpose.msra.mxu0 0.0
    %3548 = vmatprep.subr.mxu0 0.0
    %3549 = vmatpush1.xpose.msra.mxu0 0.0
    %3550 = vmatprep.subr.mxu0 0.0
    %3551 = vmatpush1.xpose.msra.mxu0 0.0
    %3552 = vmatprep.subr.mxu0 0.0
    %3553 = vmatpush1.xpose.msra.mxu0 0.0
    %3554 = vmatprep.subr.mxu0 0.0
    %3555 = vmatpush1.xpose.msra.mxu0 0.0
    %3556 = vmatprep.subr.mxu0 0.0
    %3557 = vmatpush1.xpose.msra.mxu0 0.0
    %3558 = vmatprep.subr.mxu0 0.0
    %3559 = vmatpush1.xpose.msra.mxu0 0.0
    %3560 = vmatprep.subr.mxu0 0.0
    %3561 = vmatpush1.xpose.msra.mxu0 0.0
    %3562 = vmatprep.subr.mxu0 0.0
    %3563 = vmatpush1.xpose.msra.mxu0 0.0
    %3564 = vmatprep.subr.mxu0 0.0
    %3565 = vmatpush1.xpose.msra.mxu0 0.0
    %3566 = vmatprep.subr.mxu0 0.0
    %3567 = vmatpush1.xpose.msra.mxu0 0.0
    %3568 = vmatprep.subr.mxu0 0.0
    %3569 = vmatpush1.xpose.msra.mxu0 0.0
    %3570 = vmatprep.subr.mxu0 0.0
    %3571 = vmatpush1.xpose.msra.mxu0 0.0
    %3572 = vmatprep.mubr.f32.mxu0 0.0
    %3573 = vmatmul.mubr.f32.gmra.mrb[0].mxu0 %v3504
    %v3574 = vpop.f32.mrb[0].mxu0
    %v3575 = vadd.f32 0.0, %v3574
    %v3576 = vpop.f32.mrb[0].mxu0
    %3577 = vdwg.mxu0
    %v3578 = vsel %vm353, %v3492, 0
    %v3580 = vsel %vm353, %v3499, 0
    %3582 = vmatprep.subr.mxu0 0.0
    %3583 = vmatpush1.xpose.msra.mxu0 %v3580
    %3584 = vmatprep.subr.mxu0 0.0
    %3585 = vmatpush1.xpose.msra.mxu0 0.0
    %3586 = vmatprep.subr.mxu0 0.0
    %3587 = vmatpush1.xpose.msra.mxu0 0.0
    %3588 = vmatprep.subr.mxu0 0.0
    %3589 = vmatpush1.xpose.msra.mxu0 0.0
    %3590 = vmatprep.subr.mxu0 0.0
    %3591 = vmatpush1.xpose.msra.mxu0 0.0
    %3592 = vmatprep.subr.mxu0 0.0
    %3593 = vmatpush1.xpose.msra.mxu0 0.0
    %3594 = vmatprep.subr.mxu0 0.0
    %3595 = vmatpush1.xpose.msra.mxu0 0.0
    %3596 = vmatprep.subr.mxu0 0.0
    %3597 = vmatpush1.xpose.msra.mxu0 0.0
    %3598 = vmatprep.subr.mxu0 0.0
    %3599 = vmatpush1.xpose.msra.mxu0 0.0
    %3600 = vmatprep.subr.mxu0 0.0
    %3601 = vmatpush1.xpose.msra.mxu0 0.0
    %3602 = vmatprep.subr.mxu0 0.0
    %3603 = vmatpush1.xpose.msra.mxu0 0.0
    %3604 = vmatprep.subr.mxu0 0.0
    %3605 = vmatpush1.xpose.msra.mxu0 0.0
    %3606 = vmatprep.subr.mxu0 0.0
    %3607 = vmatpush1.xpose.msra.mxu0 0.0
    %3608 = vmatprep.subr.mxu0 0.0
    %3609 = vmatpush1.xpose.msra.mxu0 0.0
    %3610 = vmatprep.subr.mxu0 0.0
    %3611 = vmatpush1.xpose.msra.mxu0 0.0
    %3612 = vmatprep.subr.mxu0 0.0
    %3613 = vmatpush1.xpose.msra.mxu0 0.0
    %3614 = vmatprep.subr.mxu0 0.0
    %3615 = vmatpush1.xpose.msra.mxu0 0.0
    %3616 = vmatprep.subr.mxu0 0.0
    %3617 = vmatpush1.xpose.msra.mxu0 0.0
    %3618 = vmatprep.subr.mxu0 0.0
    %3619 = vmatpush1.xpose.msra.mxu0 0.0
    %3620 = vmatprep.subr.mxu0 0.0
    %3621 = vmatpush1.xpose.msra.mxu0 0.0
    %3622 = vmatprep.subr.mxu0 0.0
    %3623 = vmatpush1.xpose.msra.mxu0 0.0
    %3624 = vmatprep.subr.mxu0 0.0
    %3625 = vmatpush1.xpose.msra.mxu0 0.0
    %3626 = vmatprep.subr.mxu0 0.0
    %3627 = vmatpush1.xpose.msra.mxu0 0.0
    %3628 = vmatprep.subr.mxu0 0.0
    %3629 = vmatpush1.xpose.msra.mxu0 0.0
    %3630 = vmatprep.subr.mxu0 0.0
    %3631 = vmatpush1.xpose.msra.mxu0 0.0
    %3632 = vmatprep.subr.mxu0 0.0
    %3633 = vmatpush1.xpose.msra.mxu0 0.0
    %3634 = vmatprep.subr.mxu0 0.0
    %3635 = vmatpush1.xpose.msra.mxu0 0.0
    %3636 = vmatprep.subr.mxu0 0.0
    %3637 = vmatpush1.xpose.msra.mxu0 0.0
    %3638 = vmatprep.subr.mxu0 0.0
    %3639 = vmatpush1.xpose.msra.mxu0 0.0
    %3640 = vmatprep.subr.mxu0 0.0
    %3641 = vmatpush1.xpose.msra.mxu0 0.0
    %3642 = vmatprep.subr.mxu0 0.0
    %3643 = vmatpush1.xpose.msra.mxu0 0.0
    %3644 = vmatprep.subr.mxu0 0.0
    %3645 = vmatpush1.xpose.msra.mxu0 0.0
    %3646 = vmatprep.mubr.f32.mxu0 0.0
    %3647 = vmatmul.mubr.f32.gmra.mrb[0].mxu0 %v3578
    %v3648 = vpop.f32.mrb[0].mxu0
    %v3649 = vadd.f32 0.0, %v3648
    %v3650 = vpop.f32.mrb[0].mxu0
    %3651 = vdwg.mxu0
    %v3652 = vsel %vm353, %v3494, 0
    %v3654 = vsel %vm353, %v3501, 0
    %3656 = vmatprep.subr.mxu0 0.0
    %3657 = vmatpush1.xpose.msra.mxu0 %v3654
    %3658 = vmatprep.subr.mxu0 0.0
    %3659 = vmatpush1.xpose.msra.mxu0 0.0
    %3660 = vmatprep.subr.mxu0 0.0
    %3661 = vmatpush1.xpose.msra.mxu0 0.0
    %3662 = vmatprep.subr.mxu0 0.0
    %3663 = vmatpush1.xpose.msra.mxu0 0.0
    %3664 = vmatprep.subr.mxu0 0.0
    %3665 = vmatpush1.xpose.msra.mxu0 0.0
    %3666 = vmatprep.subr.mxu0 0.0
    %3667 = vmatpush1.xpose.msra.mxu0 0.0
    %3668 = vmatprep.subr.mxu0 0.0
    %3669 = vmatpush1.xpose.msra.mxu0 0.0
    %3670 = vmatprep.subr.mxu0 0.0
    %3671 = vmatpush1.xpose.msra.mxu0 0.0
    %3672 = vmatprep.subr.mxu0 0.0
    %3673 = vmatpush1.xpose.msra.mxu0 0.0
    %3674 = vmatprep.subr.mxu0 0.0
    %3675 = vmatpush1.xpose.msra.mxu0 0.0
    %3676 = vmatprep.subr.mxu0 0.0
    %3677 = vmatpush1.xpose.msra.mxu0 0.0
    %3678 = vmatprep.subr.mxu0 0.0
    %3679 = vmatpush1.xpose.msra.mxu0 0.0
    %3680 = vmatprep.subr.mxu0 0.0
    %3681 = vmatpush1.xpose.msra.mxu0 0.0
    %3682 = vmatprep.subr.mxu0 0.0
    %3683 = vmatpush1.xpose.msra.mxu0 0.0
    %3684 = vmatprep.subr.mxu0 0.0
    %3685 = vmatpush1.xpose.msra.mxu0 0.0
    %3686 = vmatprep.subr.mxu0 0.0
    %3687 = vmatpush1.xpose.msra.mxu0 0.0
    %3688 = vmatprep.subr.mxu0 0.0
    %3689 = vmatpush1.xpose.msra.mxu0 0.0
    %3690 = vmatprep.subr.mxu0 0.0
    %3691 = vmatpush1.xpose.msra.mxu0 0.0
    %3692 = vmatprep.subr.mxu0 0.0
    %3693 = vmatpush1.xpose.msra.mxu0 0.0
    %3694 = vmatprep.subr.mxu0 0.0
    %3695 = vmatpush1.xpose.msra.mxu0 0.0
    %3696 = vmatprep.subr.mxu0 0.0
    %3697 = vmatpush1.xpose.msra.mxu0 0.0
    %3698 = vmatprep.subr.mxu0 0.0
    %3699 = vmatpush1.xpose.msra.mxu0 0.0
    %3700 = vmatprep.subr.mxu0 0.0
    %3701 = vmatpush1.xpose.msra.mxu0 0.0
    %3702 = vmatprep.subr.mxu0 0.0
    %3703 = vmatpush1.xpose.msra.mxu0 0.0
    %3704 = vmatprep.subr.mxu0 0.0
    %3705 = vmatpush1.xpose.msra.mxu0 0.0
    %3706 = vmatprep.subr.mxu0 0.0
    %3707 = vmatpush1.xpose.msra.mxu0 0.0
    %3708 = vmatprep.subr.mxu0 0.0
    %3709 = vmatpush1.xpose.msra.mxu0 0.0
    %3710 = vmatprep.subr.mxu0 0.0
    %3711 = vmatpush1.xpose.msra.mxu0 0.0
    %3712 = vmatprep.subr.mxu0 0.0
    %3713 = vmatpush1.xpose.msra.mxu0 0.0
    %3714 = vmatprep.subr.mxu0 0.0
    %3715 = vmatpush1.xpose.msra.mxu0 0.0
    %3716 = vmatprep.subr.mxu0 0.0
    %3717 = vmatpush1.xpose.msra.mxu0 0.0
    %3718 = vmatprep.subr.mxu0 0.0
    %3719 = vmatpush1.xpose.msra.mxu0 0.0
    %3720 = vmatprep.mubr.f32.mxu0 0.0
    %3721 = vmatmul.mubr.f32.gmra.mrb[0].mxu0 %v3652
    %v3722 = vpop.f32.mrb[0].mxu0
    %v3723 = vadd.f32 0.0, %v3722
    %v3724 = vpop.f32.mrb[0].mxu0
    %3725 = vdwg.mxu0
    %v3726 = vsel %vm353, %v3496, 0
    %v3728 = vsel %vm353, %v3503, 0
    %3730 = vmatprep.subr.mxu0 0.0
    %3731 = vmatpush1.xpose.msra.mxu0 %v3728
    %3732 = vmatprep.subr.mxu0 0.0
    %3733 = vmatpush1.xpose.msra.mxu0 0.0
    %3734 = vmatprep.subr.mxu0 0.0
    %3735 = vmatpush1.xpose.msra.mxu0 0.0
    %3736 = vmatprep.subr.mxu0 0.0
    %3737 = vmatpush1.xpose.msra.mxu0 0.0
    %3738 = vmatprep.subr.mxu0 0.0
    %3739 = vmatpush1.xpose.msra.mxu0 0.0
    %3740 = vmatprep.subr.mxu0 0.0
    %3741 = vmatpush1.xpose.msra.mxu0 0.0
    %3742 = vmatprep.subr.mxu0 0.0
    %3743 = vmatpush1.xpose.msra.mxu0 0.0
    %3744 = vmatprep.subr.mxu0 0.0
    %3745 = vmatpush1.xpose.msra.mxu0 0.0
    %3746 = vmatprep.subr.mxu0 0.0
    %3747 = vmatpush1.xpose.msra.mxu0 0.0
    %3748 = vmatprep.subr.mxu0 0.0
    %3749 = vmatpush1.xpose.msra.mxu0 0.0
    %3750 = vmatprep.subr.mxu0 0.0
    %3751 = vmatpush1.xpose.msra.mxu0 0.0
    %3752 = vmatprep.subr.mxu0 0.0
    %3753 = vmatpush1.xpose.msra.mxu0 0.0
    %3754 = vmatprep.subr.mxu0 0.0
    %3755 = vmatpush1.xpose.msra.mxu0 0.0
    %3756 = vmatprep.subr.mxu0 0.0
    %3757 = vmatpush1.xpose.msra.mxu0 0.0
    %3758 = vmatprep.subr.mxu0 0.0
    %3759 = vmatpush1.xpose.msra.mxu0 0.0
    %3760 = vmatprep.subr.mxu0 0.0
    %3761 = vmatpush1.xpose.msra.mxu0 0.0
    %3762 = vmatprep.subr.mxu0 0.0
    %3763 = vmatpush1.xpose.msra.mxu0 0.0
    %3764 = vmatprep.subr.mxu0 0.0
    %3765 = vmatpush1.xpose.msra.mxu0 0.0
    %3766 = vmatprep.subr.mxu0 0.0
    %3767 = vmatpush1.xpose.msra.mxu0 0.0
    %3768 = vmatprep.subr.mxu0 0.0
    %3769 = vmatpush1.xpose.msra.mxu0 0.0
    %3770 = vmatprep.subr.mxu0 0.0
    %3771 = vmatpush1.xpose.msra.mxu0 0.0
    %3772 = vmatprep.subr.mxu0 0.0
    %3773 = vmatpush1.xpose.msra.mxu0 0.0
    %3774 = vmatprep.subr.mxu0 0.0
    %3775 = vmatpush1.xpose.msra.mxu0 0.0
    %3776 = vmatprep.subr.mxu0 0.0
    %3777 = vmatpush1.xpose.msra.mxu0 0.0
    %3778 = vmatprep.subr.mxu0 0.0
    %3779 = vmatpush1.xpose.msra.mxu0 0.0
    %3780 = vmatprep.subr.mxu0 0.0
    %3781 = vmatpush1.xpose.msra.mxu0 0.0
    %3782 = vmatprep.subr.mxu0 0.0
    %3783 = vmatpush1.xpose.msra.mxu0 0.0
    %3784 = vmatprep.subr.mxu0 0.0
    %3785 = vmatpush1.xpose.msra.mxu0 0.0
    %3786 = vmatprep.subr.mxu0 0.0
    %3787 = vmatpush1.xpose.msra.mxu0 0.0
    %3788 = vmatprep.subr.mxu0 0.0
    %3789 = vmatpush1.xpose.msra.mxu0 0.0
    %3790 = vmatprep.subr.mxu0 0.0
    %3791 = vmatpush1.xpose.msra.mxu0 0.0
    %3792 = vmatprep.subr.mxu0 0.0
    %3793 = vmatpush1.xpose.msra.mxu0 0.0
    %3794 = vmatprep.mubr.f32.mxu0 0.0
    %3795 = vmatmul.mubr.f32.gmra.mrb[0].mxu0 %v3726
    %v3796 = vpop.f32.mrb[0].mxu0
    %v3797 = vadd.f32 0.0, %v3796
    %v3798 = vpop.f32.mrb[0].mxu0
    %3799 = vdwg.mxu0
    %v3800 = vsel %vm353, %v3575, -inf
    %3801 = vmax.xlane.f32.xlu0 %v3800
    %v3802 = vpop.xlane.xlu0 %3801
    %v3803 = vsel %vm353, %v3649, -inf
    %3804 = vmax.xlane.f32.xlu0 %v3803
    %v3805 = vpop.xlane.xlu0 %3804
    %v3806 = vsel %vm353, %v3723, -inf
    %3807 = vmax.xlane.f32.xlu0 %v3806
    %v3808 = vpop.xlane.xlu0 %3807
    %v3809 = vsel %vm353, %v3797, -inf
    %3810 = vmax.xlane.f32.xlu0 %v3809
    %v3811 = vpop.xlane.xlu0 %3810
    %v3812 = vsub.f32 %v3575, %v3802
    %v3813 = vsub.f32 %v3649, %v3805
    %v3814 = vsub.f32 %v3723, %v3808
    %v3815 = vsub.f32 %v3797, %v3811
    %v3816 = vmul.f32 %v3812, 1.442695
    %v3817 = vpow.pop %v3816
    %v3818 = vmul.f32 %v3813, 1.442695
    %v3819 = vpow.pop %v3818
    %v3820 = vmul.f32 %v3814, 1.442695
    %v3821 = vpow.pop %v3820
    %v3822 = vmul.f32 %v3815, 1.442695
    %v3823 = vpow.pop %v3822
    %v3824 = vsel %vm353, %v3817, 0.0
    %3825 = vadd.xlane.f32.xlu0 %v3824
    %v3826 = vpop.xlane.xlu0 %3825
    %v3827 = vsel %vm353, %v3819, 0.0
    %3828 = vadd.xlane.f32.xlu0 %v3827
    %v3829 = vpop.xlane.xlu0 %3828
    %v3830 = vsel %vm353, %v3821, 0.0
    %3831 = vadd.xlane.f32.xlu0 %v3830
    %v3832 = vpop.xlane.xlu0 %3831
    %v3833 = vsel %vm353, %v3823, 0.0
    %3834 = vadd.xlane.f32.xlu0 %v3833
    %v3835 = vpop.xlane.xlu0 %3834
    %v3836 = vrcp.pop %v3826
    %v3837 = vmul.f32 1.0, %v3836
    %v3838 = vrcp.pop %v3829
    %v3839 = vmul.f32 1.0, %v3838
    %v3840 = vrcp.pop %v3832
    %v3841 = vmul.f32 1.0, %v3840
    %v3842 = vrcp.pop %v3835
    %v3843 = vmul.f32 1.0, %v3842
    %v3844 = vmul.f32 %v3817, %v3837
    %v3845 = vmul.f32 %v3819, %v3839
    %v3846 = vmul.f32 %v3821, %v3841
    %v3847 = vmul.f32 %v3823, %v3843
    %3848 = vrot.lane.b32.xlu0 %v2521, 96
    %v3849 = vpop.permute.xlu0 %3848
    %v3852 = vsel %vm353, %v3844, 0
    %3854 = vmatprep.subr.mxu0 0.0
    %3855 = vmatpush1.msra.mxu0 %v3849
    %3856 = vmatprep.subr.mxu0 0.0
    %3857 = vmatpush1.msra.mxu0 0.0
    %3858 = vmatprep.subr.mxu0 0.0
    %3859 = vmatpush1.msra.mxu0 0.0
    %3860 = vmatprep.subr.mxu0 0.0
    %3861 = vmatpush1.msra.mxu0 0.0
    %3862 = vmatprep.subr.mxu0 0.0
    %3863 = vmatpush1.msra.mxu0 0.0
    %3864 = vmatprep.subr.mxu0 0.0
    %3865 = vmatpush1.msra.mxu0 0.0
    %3866 = vmatprep.subr.mxu0 0.0
    %3867 = vmatpush1.msra.mxu0 0.0
    %3868 = vmatprep.subr.mxu0 0.0
    %3869 = vmatpush1.msra.mxu0 0.0
    %3870 = vmatprep.subr.mxu0 0.0
    %3871 = vmatpush1.msra.mxu0 0.0
    %3872 = vmatprep.subr.mxu0 0.0
    %3873 = vmatpush1.msra.mxu0 0.0
    %3874 = vmatprep.subr.mxu0 0.0
    %3875 = vmatpush1.msra.mxu0 0.0
    %3876 = vmatprep.subr.mxu0 0.0
    %3877 = vmatpush1.msra.mxu0 0.0
    %3878 = vmatprep.subr.mxu0 0.0
    %3879 = vmatpush1.msra.mxu0 0.0
    %3880 = vmatprep.subr.mxu0 0.0
    %3881 = vmatpush1.msra.mxu0 0.0
    %3882 = vmatprep.subr.mxu0 0.0
    %3883 = vmatpush1.msra.mxu0 0.0
    %3884 = vmatprep.subr.mxu0 0.0
    %3885 = vmatpush1.msra.mxu0 0.0
    %3886 = vmatprep.subr.mxu0 0.0
    %3887 = vmatpush1.msra.mxu0 0.0
    %3888 = vmatprep.subr.mxu0 0.0
    %3889 = vmatpush1.msra.mxu0 0.0
    %3890 = vmatprep.subr.mxu0 0.0
    %3891 = vmatpush1.msra.mxu0 0.0
    %3892 = vmatprep.subr.mxu0 0.0
    %3893 = vmatpush1.msra.mxu0 0.0
    %3894 = vmatprep.subr.mxu0 0.0
    %3895 = vmatpush1.msra.mxu0 0.0
    %3896 = vmatprep.subr.mxu0 0.0
    %3897 = vmatpush1.msra.mxu0 0.0
    %3898 = vmatprep.subr.mxu0 0.0
    %3899 = vmatpush1.msra.mxu0 0.0
    %3900 = vmatprep.subr.mxu0 0.0
    %3901 = vmatpush1.msra.mxu0 0.0
    %3902 = vmatprep.subr.mxu0 0.0
    %3903 = vmatpush1.msra.mxu0 0.0
    %3904 = vmatprep.subr.mxu0 0.0
    %3905 = vmatpush1.msra.mxu0 0.0
    %3906 = vmatprep.subr.mxu0 0.0
    %3907 = vmatpush1.msra.mxu0 0.0
    %3908 = vmatprep.subr.mxu0 0.0
    %3909 = vmatpush1.msra.mxu0 0.0
    %3910 = vmatprep.subr.mxu0 0.0
    %3911 = vmatpush1.msra.mxu0 0.0
    %3912 = vmatprep.subr.mxu0 0.0
    %3913 = vmatpush1.msra.mxu0 0.0
    %3914 = vmatprep.subr.mxu0 0.0
    %3915 = vmatpush1.msra.mxu0 0.0
    %3916 = vmatprep.subr.mxu0 0.0
    %3917 = vmatpush1.msra.mxu0 0.0
    %3918 = vmatprep.mubr.f32.mxu0 0.0
    %3919 = vmatmul.mubr.f32.gmra.mrb[0].mxu0 %v3852
    %v3920 = vpop.f32.mrb[0].mxu0
    %v3921 = vadd.f32 0.0, %v3920
    %v3922 = vpop.f32.mrb[0].mxu0
    %3923 = vdwg.mxu0
    %3924 = vrot.lane.b32.xlu0 %v3499, 96
    %v3925 = vpop.permute.xlu0 %3924
    %v3928 = vsel %vm353, %v3845, 0
    %3930 = vmatprep.subr.mxu0 0.0
    %3931 = vmatpush1.msra.mxu0 %v3925
    %3932 = vmatprep.subr.mxu0 0.0
    %3933 = vmatpush1.msra.mxu0 0.0
    %3934 = vmatprep.subr.mxu0 0.0
    %3935 = vmatpush1.msra.mxu0 0.0
    %3936 = vmatprep.subr.mxu0 0.0
    %3937 = vmatpush1.msra.mxu0 0.0
    %3938 = vmatprep.subr.mxu0 0.0
    %3939 = vmatpush1.msra.mxu0 0.0
    %3940 = vmatprep.subr.mxu0 0.0
    %3941 = vmatpush1.msra.mxu0 0.0
    %3942 = vmatprep.subr.mxu0 0.0
    %3943 = vmatpush1.msra.mxu0 0.0
    %3944 = vmatprep.subr.mxu0 0.0
    %3945 = vmatpush1.msra.mxu0 0.0
    %3946 = vmatprep.subr.mxu0 0.0
    %3947 = vmatpush1.msra.mxu0 0.0
    %3948 = vmatprep.subr.mxu0 0.0
    %3949 = vmatpush1.msra.mxu0 0.0
    %3950 = vmatprep.subr.mxu0 0.0
    %3951 = vmatpush1.msra.mxu0 0.0
    %3952 = vmatprep.subr.mxu0 0.0
    %3953 = vmatpush1.msra.mxu0 0.0
    %3954 = vmatprep.subr.mxu0 0.0
    %3955 = vmatpush1.msra.mxu0 0.0
    %3956 = vmatprep.subr.mxu0 0.0
    %3957 = vmatpush1.msra.mxu0 0.0
    %3958 = vmatprep.subr.mxu0 0.0
    %3959 = vmatpush1.msra.mxu0 0.0
    %3960 = vmatprep.subr.mxu0 0.0
    %3961 = vmatpush1.msra.mxu0 0.0
    %3962 = vmatprep.subr.mxu0 0.0
    %3963 = vmatpush1.msra.mxu0 0.0
    %3964 = vmatprep.subr.mxu0 0.0
    %3965 = vmatpush1.msra.mxu0 0.0
    %3966 = vmatprep.subr.mxu0 0.0
    %3967 = vmatpush1.msra.mxu0 0.0
    %3968 = vmatprep.subr.mxu0 0.0
    %3969 = vmatpush1.msra.mxu0 0.0
    %3970 = vmatprep.subr.mxu0 0.0
    %3971 = vmatpush1.msra.mxu0 0.0
    %3972 = vmatprep.subr.mxu0 0.0
    %3973 = vmatpush1.msra.mxu0 0.0
    %3974 = vmatprep.subr.mxu0 0.0
    %3975 = vmatpush1.msra.mxu0 0.0
    %3976 = vmatprep.subr.mxu0 0.0
    %3977 = vmatpush1.msra.mxu0 0.0
    %3978 = vmatprep.subr.mxu0 0.0
    %3979 = vmatpush1.msra.mxu0 0.0
    %3980 = vmatprep.subr.mxu0 0.0
    %3981 = vmatpush1.msra.mxu0 0.0
    %3982 = vmatprep.subr.mxu0 0.0
    %3983 = vmatpush1.msra.mxu0 0.0
    %3984 = vmatprep.subr.mxu0 0.0
    %3985 = vmatpush1.msra.mxu0 0.0
    %3986 = vmatprep.subr.mxu0 0.0
    %3987 = vmatpush1.msra.mxu0 0.0
    %3988 = vmatprep.subr.mxu0 0.0
    %3989 = vmatpush1.msra.mxu0 0.0
    %3990 = vmatprep.subr.mxu0 0.0
    %3991 = vmatpush1.msra.mxu0 0.0
    %3992 = vmatprep.subr.mxu0 0.0
    %3993 = vmatpush1.msra.mxu0 0.0
    %3994 = vmatprep.mubr.f32.mxu0 0.0
    %3995 = vmatmul.mubr.f32.gmra.mrb[0].mxu0 %v3928
    %v3996 = vpop.f32.mrb[0].mxu0
    %v3997 = vadd.f32 0.0, %v3996
    %v3998 = vpop.f32.mrb[0].mxu0
    %3999 = vdwg.mxu0
    %4000 = vrot.lane.b32.xlu0 %v3501, 96
    %v4001 = vpop.permute.xlu0 %4000
    %v4004 = vsel %vm353, %v3846, 0
    %4006 = vmatprep.subr.mxu0 0.0
    %4007 = vmatpush1.msra.mxu0 %v4001
    %4008 = vmatprep.subr.mxu0 0.0
    %4009 = vmatpush1.msra.mxu0 0.0
    %4010 = vmatprep.subr.mxu0 0.0
    %4011 = vmatpush1.msra.mxu0 0.0
    %4012 = vmatprep.subr.mxu0 0.0
    %4013 = vmatpush1.msra.mxu0 0.0
    %4014 = vmatprep.subr.mxu0 0.0
    %4015 = vmatpush1.msra.mxu0 0.0
    %4016 = vmatprep.subr.mxu0 0.0
    %4017 = vmatpush1.msra.mxu0 0.0
    %4018 = vmatprep.subr.mxu0 0.0
    %4019 = vmatpush1.msra.mxu0 0.0
    %4020 = vmatprep.subr.mxu0 0.0
    %4021 = vmatpush1.msra.mxu0 0.0
    %4022 = vmatprep.subr.mxu0 0.0
    %4023 = vmatpush1.msra.mxu0 0.0
    %4024 = vmatprep.subr.mxu0 0.0
    %4025 = vmatpush1.msra.mxu0 0.0
    %4026 = vmatprep.subr.mxu0 0.0
    %4027 = vmatpush1.msra.mxu0 0.0
    %4028 = vmatprep.subr.mxu0 0.0
    %4029 = vmatpush1.msra.mxu0 0.0
    %4030 = vmatprep.subr.mxu0 0.0
    %4031 = vmatpush1.msra.mxu0 0.0
    %4032 = vmatprep.subr.mxu0 0.0
    %4033 = vmatpush1.msra.mxu0 0.0
    %4034 = vmatprep.subr.mxu0 0.0
    %4035 = vmatpush1.msra.mxu0 0.0
    %4036 = vmatprep.subr.mxu0 0.0
    %4037 = vmatpush1.msra.mxu0 0.0
    %4038 = vmatprep.subr.mxu0 0.0
    %4039 = vmatpush1.msra.mxu0 0.0
    %4040 = vmatprep.subr.mxu0 0.0
    %4041 = vmatpush1.msra.mxu0 0.0
    %4042 = vmatprep.subr.mxu0 0.0
    %4043 = vmatpush1.msra.mxu0 0.0
    %4044 = vmatprep.subr.mxu0 0.0
    %4045 = vmatpush1.msra.mxu0 0.0
    %4046 = vmatprep.subr.mxu0 0.0
    %4047 = vmatpush1.msra.mxu0 0.0
    %4048 = vmatprep.subr.mxu0 0.0
    %4049 = vmatpush1.msra.mxu0 0.0
    %4050 = vmatprep.subr.mxu0 0.0
    %4051 = vmatpush1.msra.mxu0 0.0
    %4052 = vmatprep.subr.mxu0 0.0
    %4053 = vmatpush1.msra.mxu0 0.0
    %4054 = vmatprep.subr.mxu0 0.0
    %4055 = vmatpush1.msra.mxu0 0.0
    %4056 = vmatprep.subr.mxu0 0.0
    %4057 = vmatpush1.msra.mxu0 0.0
    %4058 = vmatprep.subr.mxu0 0.0
    %4059 = vmatpush1.msra.mxu0 0.0
    %4060 = vmatprep.subr.mxu0 0.0
    %4061 = vmatpush1.msra.mxu0 0.0
    %4062 = vmatprep.subr.mxu0 0.0
    %4063 = vmatpush1.msra.mxu0 0.0
    %4064 = vmatprep.subr.mxu0 0.0
    %4065 = vmatpush1.msra.mxu0 0.0
    %4066 = vmatprep.subr.mxu0 0.0
    %4067 = vmatpush1.msra.mxu0 0.0
    %4068 = vmatprep.subr.mxu0 0.0
    %4069 = vmatpush1.msra.mxu0 0.0
    %4070 = vmatprep.mubr.f32.mxu0 0.0
    %4071 = vmatmul.mubr.f32.gmra.mrb[0].mxu0 %v4004
    %v4072 = vpop.f32.mrb[0].mxu0
    %v4073 = vadd.f32 0.0, %v4072
    %v4074 = vpop.f32.mrb[0].mxu0
    %4075 = vdwg.mxu0
    %4076 = vrot.lane.b32.xlu0 %v3503, 96
    %v4077 = vpop.permute.xlu0 %4076
    %v4080 = vsel %vm353, %v3847, 0
    %4082 = vmatprep.subr.mxu0 0.0
    %4083 = vmatpush1.msra.mxu0 %v4077
    %4084 = vmatprep.subr.mxu0 0.0
    %4085 = vmatpush1.msra.mxu0 0.0
    %4086 = vmatprep.subr.mxu0 0.0
    %4087 = vmatpush1.msra.mxu0 0.0
    %4088 = vmatprep.subr.mxu0 0.0
    %4089 = vmatpush1.msra.mxu0 0.0
    %4090 = vmatprep.subr.mxu0 0.0
    %4091 = vmatpush1.msra.mxu0 0.0
    %4092 = vmatprep.subr.mxu0 0.0
    %4093 = vmatpush1.msra.mxu0 0.0
    %4094 = vmatprep.subr.mxu0 0.0
    %4095 = vmatpush1.msra.mxu0 0.0
    %4096 = vmatprep.subr.mxu0 0.0
    %4097 = vmatpush1.msra.mxu0 0.0
    %4098 = vmatprep.subr.mxu0 0.0
    %4099 = vmatpush1.msra.mxu0 0.0
    %4100 = vmatprep.subr.mxu0 0.0
    %4101 = vmatpush1.msra.mxu0 0.0
    %4102 = vmatprep.subr.mxu0 0.0
    %4103 = vmatpush1.msra.mxu0 0.0
    %4104 = vmatprep.subr.mxu0 0.0
    %4105 = vmatpush1.msra.mxu0 0.0
    %4106 = vmatprep.subr.mxu0 0.0
    %4107 = vmatpush1.msra.mxu0 0.0
    %4108 = vmatprep.subr.mxu0 0.0
    %4109 = vmatpush1.msra.mxu0 0.0
    %4110 = vmatprep.subr.mxu0 0.0
    %4111 = vmatpush1.msra.mxu0 0.0
    %4112 = vmatprep.subr.mxu0 0.0
    %4113 = vmatpush1.msra.mxu0 0.0
    %4114 = vmatprep.subr.mxu0 0.0
    %4115 = vmatpush1.msra.mxu0 0.0
    %4116 = vmatprep.subr.mxu0 0.0
    %4117 = vmatpush1.msra.mxu0 0.0
    %4118 = vmatprep.subr.mxu0 0.0
    %4119 = vmatpush1.msra.mxu0 0.0
    %4120 = vmatprep.subr.mxu0 0.0
    %4121 = vmatpush1.msra.mxu0 0.0
    %4122 = vmatprep.subr.mxu0 0.0
    %4123 = vmatpush1.msra.mxu0 0.0
    %4124 = vmatprep.subr.mxu0 0.0
    %4125 = vmatpush1.msra.mxu0 0.0
    %4126 = vmatprep.subr.mxu0 0.0
    %4127 = vmatpush1.msra.mxu0 0.0
    %4128 = vmatprep.subr.mxu0 0.0
    %4129 = vmatpush1.msra.mxu0 0.0
    %4130 = vmatprep.subr.mxu0 0.0
    %4131 = vmatpush1.msra.mxu0 0.0
    %4132 = vmatprep.subr.mxu0 0.0
    %4133 = vmatpush1.msra.mxu0 0.0
    %4134 = vmatprep.subr.mxu0 0.0
    %4135 = vmatpush1.msra.mxu0 0.0
    %4136 = vmatprep.subr.mxu0 0.0
    %4137 = vmatpush1.msra.mxu0 0.0
    %4138 = vmatprep.subr.mxu0 0.0
    %4139 = vmatpush1.msra.mxu0 0.0
    %4140 = vmatprep.subr.mxu0 0.0
    %4141 = vmatpush1.msra.mxu0 0.0
    %4142 = vmatprep.subr.mxu0 0.0
    %4143 = vmatpush1.msra.mxu0 0.0
    %4144 = vmatprep.subr.mxu0 0.0
    %4145 = vmatpush1.msra.mxu0 0.0
    %4146 = vmatprep.mubr.f32.mxu0 0.0
    %4147 = vmatmul.mubr.f32.gmra.mrb[0].mxu0 %v4080
    %v4148 = vpop.f32.mrb[0].mxu0
    %v4149 = vadd.f32 0.0, %v4148
    %v4150 = vpop.f32.mrb[0].mxu0
    %4151 = vdwg.mxu0
    %v4153 = vsel %vm353, %v3921, 0
    %4155 = vmatprep.subr.mxu0 0.0
    %4156 = vmatpush1.msra.mxu0 %v2524
    %4157 = vmatprep.subr.mxu0 0.0
    %4158 = vmatpush1.msra.mxu0 0.0
    %4159 = vmatprep.subr.mxu0 0.0
    %4160 = vmatpush1.msra.mxu0 0.0
    %4161 = vmatprep.subr.mxu0 0.0
    %4162 = vmatpush1.msra.mxu0 0.0
    %4163 = vmatprep.subr.mxu0 0.0
    %4164 = vmatpush1.msra.mxu0 0.0
    %4165 = vmatprep.subr.mxu0 0.0
    %4166 = vmatpush1.msra.mxu0 0.0
    %4167 = vmatprep.subr.mxu0 0.0
    %4168 = vmatpush1.msra.mxu0 0.0
    %4169 = vmatprep.subr.mxu0 0.0
    %4170 = vmatpush1.msra.mxu0 0.0
    %4171 = vmatprep.subr.mxu0 0.0
    %4172 = vmatpush1.msra.mxu0 0.0
    %4173 = vmatprep.subr.mxu0 0.0
    %4174 = vmatpush1.msra.mxu0 0.0
    %4175 = vmatprep.subr.mxu0 0.0
    %4176 = vmatpush1.msra.mxu0 0.0
    %4177 = vmatprep.subr.mxu0 0.0
    %4178 = vmatpush1.msra.mxu0 0.0
    %4179 = vmatprep.subr.mxu0 0.0
    %4180 = vmatpush1.msra.mxu0 0.0
    %4181 = vmatprep.subr.mxu0 0.0
    %4182 = vmatpush1.msra.mxu0 0.0
    %4183 = vmatprep.subr.mxu0 0.0
    %4184 = vmatpush1.msra.mxu0 0.0
    %4185 = vmatprep.subr.mxu0 0.0
    %4186 = vmatpush1.msra.mxu0 0.0
    %4187 = vmatprep.subr.mxu0 0.0
    %4188 = vmatpush1.msra.mxu0 0.0
    %4189 = vmatprep.subr.mxu0 0.0
    %4190 = vmatpush1.msra.mxu0 0.0
    %4191 = vmatprep.subr.mxu0 0.0
    %4192 = vmatpush1.msra.mxu0 0.0
    %4193 = vmatprep.subr.mxu0 0.0
    %4194 = vmatpush1.msra.mxu0 0.0
    %4195 = vmatprep.subr.mxu0 0.0
    %4196 = vmatpush1.msra.mxu0 0.0
    %4197 = vmatprep.subr.mxu0 0.0
    %4198 = vmatpush1.msra.mxu0 0.0
    %4199 = vmatprep.subr.mxu0 0.0
    %4200 = vmatpush1.msra.mxu0 0.0
    %4201 = vmatprep.subr.mxu0 0.0
    %4202 = vmatpush1.msra.mxu0 0.0
    %4203 = vmatprep.subr.mxu0 0.0
    %4204 = vmatpush1.msra.mxu0 0.0
    %4205 = vmatprep.subr.mxu0 0.0
    %4206 = vmatpush1.msra.mxu0 0.0
    %4207 = vmatprep.subr.mxu0 0.0
    %4208 = vmatpush1.msra.mxu0 0.0
    %4209 = vmatprep.subr.mxu0 0.0
    %4210 = vmatpush1.msra.mxu0 0.0
    %4211 = vmatprep.subr.mxu0 0.0
    %4212 = vmatpush1.msra.mxu0 0.0
    %4213 = vmatprep.subr.mxu0 0.0
    %4214 = vmatpush1.msra.mxu0 0.0
    %4215 = vmatprep.subr.mxu0 0.0
    %4216 = vmatpush1.msra.mxu0 0.0
    %4217 = vmatprep.subr.mxu0 0.0
    %4218 = vmatpush1.msra.mxu0 0.0
    %4219 = vmatprep.mubr.f32.mxu0 0.0
    %4220 = vmatmul.mubr.f32.gmra.mrb[0].mxu0 %v4153
    %v4221 = vpop.f32.mrb[0].mxu0
    %v4222 = vadd.f32 0.0, %v4221
    %v4223 = vpop.f32.mrb[0].mxu0
    %4224 = vdwg.mxu0
    %v4226 = vsel %vm353, %v3997, 0
    %4228 = vmatprep.subr.mxu0 0.0
    %4229 = vmatpush1.msra.mxu0 %v2525
    %4230 = vmatprep.subr.mxu0 0.0
    %4231 = vmatpush1.msra.mxu0 0.0
    %4232 = vmatprep.subr.mxu0 0.0
    %4233 = vmatpush1.msra.mxu0 0.0
    %4234 = vmatprep.subr.mxu0 0.0
    %4235 = vmatpush1.msra.mxu0 0.0
    %4236 = vmatprep.subr.mxu0 0.0
    %4237 = vmatpush1.msra.mxu0 0.0
    %4238 = vmatprep.subr.mxu0 0.0
    %4239 = vmatpush1.msra.mxu0 0.0
    %4240 = vmatprep.subr.mxu0 0.0
    %4241 = vmatpush1.msra.mxu0 0.0
    %4242 = vmatprep.subr.mxu0 0.0
    %4243 = vmatpush1.msra.mxu0 0.0
    %4244 = vmatprep.subr.mxu0 0.0
    %4245 = vmatpush1.msra.mxu0 0.0
    %4246 = vmatprep.subr.mxu0 0.0
    %4247 = vmatpush1.msra.mxu0 0.0
    %4248 = vmatprep.subr.mxu0 0.0
    %4249 = vmatpush1.msra.mxu0 0.0
    %4250 = vmatprep.subr.mxu0 0.0
    %4251 = vmatpush1.msra.mxu0 0.0
    %4252 = vmatprep.subr.mxu0 0.0
    %4253 = vmatpush1.msra.mxu0 0.0
    %4254 = vmatprep.subr.mxu0 0.0
    %4255 = vmatpush1.msra.mxu0 0.0
    %4256 = vmatprep.subr.mxu0 0.0
    %4257 = vmatpush1.msra.mxu0 0.0
    %4258 = vmatprep.subr.mxu0 0.0
    %4259 = vmatpush1.msra.mxu0 0.0
    %4260 = vmatprep.subr.mxu0 0.0
    %4261 = vmatpush1.msra.mxu0 0.0
    %4262 = vmatprep.subr.mxu0 0.0
    %4263 = vmatpush1.msra.mxu0 0.0
    %4264 = vmatprep.subr.mxu0 0.0
    %4265 = vmatpush1.msra.mxu0 0.0
    %4266 = vmatprep.subr.mxu0 0.0
    %4267 = vmatpush1.msra.mxu0 0.0
    %4268 = vmatprep.subr.mxu0 0.0
    %4269 = vmatpush1.msra.mxu0 0.0
    %4270 = vmatprep.subr.mxu0 0.0
    %4271 = vmatpush1.msra.mxu0 0.0
    %4272 = vmatprep.subr.mxu0 0.0
    %4273 = vmatpush1.msra.mxu0 0.0
    %4274 = vmatprep.subr.mxu0 0.0
    %4275 = vmatpush1.msra.mxu0 0.0
    %4276 = vmatprep.subr.mxu0 0.0
    %4277 = vmatpush1.msra.mxu0 0.0
    %4278 = vmatprep.subr.mxu0 0.0
    %4279 = vmatpush1.msra.mxu0 0.0
    %4280 = vmatprep.subr.mxu0 0.0
    %4281 = vmatpush1.msra.mxu0 0.0
    %4282 = vmatprep.subr.mxu0 0.0
    %4283 = vmatpush1.msra.mxu0 0.0
    %4284 = vmatprep.subr.mxu0 0.0
    %4285 = vmatpush1.msra.mxu0 0.0
    %4286 = vmatprep.subr.mxu0 0.0
    %4287 = vmatpush1.msra.mxu0 0.0
    %4288 = vmatprep.subr.mxu0 0.0
    %4289 = vmatpush1.msra.mxu0 0.0
    %4290 = vmatprep.subr.mxu0 0.0
    %4291 = vmatpush1.msra.mxu0 0.0
    %4292 = vmatprep.mubr.f32.mxu0 0.0
    %4293 = vmatmul.mubr.f32.gmra.mrb[0].mxu0 %v4226
    %v4294 = vpop.f32.mrb[0].mxu0
    %v4295 = vadd.f32 0.0, %v4294
    %v4296 = vpop.f32.mrb[0].mxu0
    %4297 = vdwg.mxu0
    %v4299 = vsel %vm353, %v4073, 0
    %4301 = vmatprep.subr.mxu0 0.0
    %4302 = vmatpush1.msra.mxu0 %v2526
    %4303 = vmatprep.subr.mxu0 0.0
    %4304 = vmatpush1.msra.mxu0 0.0
    %4305 = vmatprep.subr.mxu0 0.0
    %4306 = vmatpush1.msra.mxu0 0.0
    %4307 = vmatprep.subr.mxu0 0.0
    %4308 = vmatpush1.msra.mxu0 0.0
    %4309 = vmatprep.subr.mxu0 0.0
    %4310 = vmatpush1.msra.mxu0 0.0
    %4311 = vmatprep.subr.mxu0 0.0
    %4312 = vmatpush1.msra.mxu0 0.0
    %4313 = vmatprep.subr.mxu0 0.0
    %4314 = vmatpush1.msra.mxu0 0.0
    %4315 = vmatprep.subr.mxu0 0.0
    %4316 = vmatpush1.msra.mxu0 0.0
    %4317 = vmatprep.subr.mxu0 0.0
    %4318 = vmatpush1.msra.mxu0 0.0
    %4319 = vmatprep.subr.mxu0 0.0
    %4320 = vmatpush1.msra.mxu0 0.0
    %4321 = vmatprep.subr.mxu0 0.0
    %4322 = vmatpush1.msra.mxu0 0.0
    %4323 = vmatprep.subr.mxu0 0.0
    %4324 = vmatpush1.msra.mxu0 0.0
    %4325 = vmatprep.subr.mxu0 0.0
    %4326 = vmatpush1.msra.mxu0 0.0
    %4327 = vmatprep.subr.mxu0 0.0
    %4328 = vmatpush1.msra.mxu0 0.0
    %4329 = vmatprep.subr.mxu0 0.0
    %4330 = vmatpush1.msra.mxu0 0.0
    %4331 = vmatprep.subr.mxu0 0.0
    %4332 = vmatpush1.msra.mxu0 0.0
    %4333 = vmatprep.subr.mxu0 0.0
    %4334 = vmatpush1.msra.mxu0 0.0
    %4335 = vmatprep.subr.mxu0 0.0
    %4336 = vmatpush1.msra.mxu0 0.0
    %4337 = vmatprep.subr.mxu0 0.0
    %4338 = vmatpush1.msra.mxu0 0.0
    %4339 = vmatprep.subr.mxu0 0.0
    %4340 = vmatpush1.msra.mxu0 0.0
    %4341 = vmatprep.subr.mxu0 0.0
    %4342 = vmatpush1.msra.mxu0 0.0
    %4343 = vmatprep.subr.mxu0 0.0
    %4344 = vmatpush1.msra.mxu0 0.0
    %4345 = vmatprep.subr.mxu0 0.0
    %4346 = vmatpush1.msra.mxu0 0.0
    %4347 = vmatprep.subr.mxu0 0.0
    %4348 = vmatpush1.msra.mxu0 0.0
    %4349 = vmatprep.subr.mxu0 0.0
    %4350 = vmatpush1.msra.mxu0 0.0
    %4351 = vmatprep.subr.mxu0 0.0
    %4352 = vmatpush1.msra.mxu0 0.0
    %4353 = vmatprep.subr.mxu0 0.0
    %4354 = vmatpush1.msra.mxu0 0.0
    %4355 = vmatprep.subr.mxu0 0.0
    %4356 = vmatpush1.msra.mxu0 0.0
    %4357 = vmatprep.subr.mxu0 0.0
    %4358 = vmatpush1.msra.mxu0 0.0
    %4359 = vmatprep.subr.mxu0 0.0
    %4360 = vmatpush1.msra.mxu0 0.0
    %4361 = vmatprep.subr.mxu0 0.0
    %4362 = vmatpush1.msra.mxu0 0.0
    %4363 = vmatprep.subr.mxu0 0.0
    %4364 = vmatpush1.msra.mxu0 0.0
    %4365 = vmatprep.mubr.f32.mxu0 0.0
    %4366 = vmatmul.mubr.f32.gmra.mrb[0].mxu0 %v4299
    %v4367 = vpop.f32.mrb[0].mxu0
    %v4368 = vadd.f32 0.0, %v4367
    %v4369 = vpop.f32.mrb[0].mxu0
    %4370 = vdwg.mxu0
    %v4372 = vsel %vm353, %v4149, 0
    %4374 = vmatprep.subr.mxu0 0.0
    %4375 = vmatpush1.msra.mxu0 %v2527
    %4376 = vmatprep.subr.mxu0 0.0
    %4377 = vmatpush1.msra.mxu0 0.0
    %4378 = vmatprep.subr.mxu0 0.0
    %4379 = vmatpush1.msra.mxu0 0.0
    %4380 = vmatprep.subr.mxu0 0.0
    %4381 = vmatpush1.msra.mxu0 0.0
    %4382 = vmatprep.subr.mxu0 0.0
    %4383 = vmatpush1.msra.mxu0 0.0
    %4384 = vmatprep.subr.mxu0 0.0
    %4385 = vmatpush1.msra.mxu0 0.0
    %4386 = vmatprep.subr.mxu0 0.0
    %4387 = vmatpush1.msra.mxu0 0.0
    %4388 = vmatprep.subr.mxu0 0.0
    %4389 = vmatpush1.msra.mxu0 0.0
    %4390 = vmatprep.subr.mxu0 0.0
    %4391 = vmatpush1.msra.mxu0 0.0
    %4392 = vmatprep.subr.mxu0 0.0
    %4393 = vmatpush1.msra.mxu0 0.0
    %4394 = vmatprep.subr.mxu0 0.0
    %4395 = vmatpush1.msra.mxu0 0.0
    %4396 = vmatprep.subr.mxu0 0.0
    %4397 = vmatpush1.msra.mxu0 0.0
    %4398 = vmatprep.subr.mxu0 0.0
    %4399 = vmatpush1.msra.mxu0 0.0
    %4400 = vmatprep.subr.mxu0 0.0
    %4401 = vmatpush1.msra.mxu0 0.0
    %4402 = vmatprep.subr.mxu0 0.0
    %4403 = vmatpush1.msra.mxu0 0.0
    %4404 = vmatprep.subr.mxu0 0.0
    %4405 = vmatpush1.msra.mxu0 0.0
    %4406 = vmatprep.subr.mxu0 0.0
    %4407 = vmatpush1.msra.mxu0 0.0
    %4408 = vmatprep.subr.mxu0 0.0
    %4409 = vmatpush1.msra.mxu0 0.0
    %4410 = vmatprep.subr.mxu0 0.0
    %4411 = vmatpush1.msra.mxu0 0.0
    %4412 = vmatprep.subr.mxu0 0.0
    %4413 = vmatpush1.msra.mxu0 0.0
    %4414 = vmatprep.subr.mxu0 0.0
    %4415 = vmatpush1.msra.mxu0 0.0
    %4416 = vmatprep.subr.mxu0 0.0
    %4417 = vmatpush1.msra.mxu0 0.0
    %4418 = vmatprep.subr.mxu0 0.0
    %4419 = vmatpush1.msra.mxu0 0.0
    %4420 = vmatprep.subr.mxu0 0.0
    %4421 = vmatpush1.msra.mxu0 0.0
    %4422 = vmatprep.subr.mxu0 0.0
    %4423 = vmatpush1.msra.mxu0 0.0
    %4424 = vmatprep.subr.mxu0 0.0
    %4425 = vmatpush1.msra.mxu0 0.0
    %4426 = vmatprep.subr.mxu0 0.0
    %4427 = vmatpush1.msra.mxu0 0.0
    %4428 = vmatprep.subr.mxu0 0.0
    %4429 = vmatpush1.msra.mxu0 0.0
    %4430 = vmatprep.subr.mxu0 0.0
    %4431 = vmatpush1.msra.mxu0 0.0
    %4432 = vmatprep.subr.mxu0 0.0
    %4433 = vmatpush1.msra.mxu0 0.0
    %4434 = vmatprep.subr.mxu0 0.0
    %4435 = vmatpush1.msra.mxu0 0.0
    %4436 = vmatprep.subr.mxu0 0.0
    %4437 = vmatpush1.msra.mxu0 0.0
    %4438 = vmatprep.mubr.f32.mxu0 0.0
    %4439 = vmatmul.mubr.f32.gmra.mrb[0].mxu0 %v4372
    %v4440 = vpop.f32.mrb[0].mxu0
    %v4441 = vadd.f32 0.0, %v4440
    %v4442 = vpop.f32.mrb[0].mxu0
    %4443 = vdwg.mxu0
    %v4444 = vsel %vm257, %v4222, 0.0
    %v4445 = vsel %vm257, %v4295, 0.0
    %v4446 = vadd.f32 %v4444, %v4445
    %v4447 = vsel %vm257, %v4368, 0.0
    %v4448 = vadd.f32 %v4446, %v4447
    %v4449 = vsel %vm257, %v4441, 0.0
    %v4450 = vadd.f32 %v4448, %v4449
    %v4452 = vlaneseq
    %v4453 = vshrl.u32 %v4452, 7
    %v4454 = vsub.s32 0, %v4453
    %v4455 = vrot.slane %v2528, %v4454
    %v4457 = vadd.f32 %v3489, %v4455
    %v4458 = vadd.f32 %v4450, %v4455
    %v4459 = vadd.f32 %v2338, %v4457
    %v4460 = vadd.f32 %v2339, %v4458
    %v4461 = vld [vmem:[#allocation19] sm:$0x1]
    %v4462 = vld [vmem:[#allocation20] sm:$0x1]
    %v4463 = vsel %vm257, %v4459, 0.0
    %4464 = vadd.xlane.f32.xlu0 %v4463
    %v4465 = vpop.xlane.xlu0 %4464
    %v4466 = vsel %vm257, %v4460, 0.0
    %4467 = vadd.xlane.f32.xlu0 %v4466
    %v4468 = vpop.xlane.xlu0 %4467
    %v4469 = vmul.f32 %v4465, %v2287
    %v4470 = vmul.f32 %v4468, %v2287
    %v4471 = vsub.f32 %v4459, %v4469
    %v4472 = vsub.f32 %v4460, %v4470
    %v4473 = vmul.f32 %v4471, %v4471
    %v4474 = vmul.f32 %v4472, %v4472
    %v4475 = vsel %vm257, %v4473, 0.0
    %4476 = vadd.xlane.f32.xlu0 %v4475
    %v4477 = vpop.xlane.xlu0 %4476
    %v4478 = vsel %vm257, %v4474, 0.0
    %4479 = vadd.xlane.f32.xlu0 %v4478
    %v4480 = vpop.xlane.xlu0 %4479
    %v4481 = vmul.f32 %v4477, 0.032258064
    %v4482 = vmul.f32 %v4480, 0.032258064
    %v4483 = vrsqrt.pop %v4481
    %v4484 = vmul.f32 %v4481, %v4483
    %vm4485 = vcmp.eq.f32.partialorder %v4481, inf
    %v4486 = vsel %vm4485, %v4481, %v4484
    %vm4487 = vcmp.eq.f32.partialorder %v4481, 0.0
    %v4488 = vand.u32 %v4481, 2147483648
    %v4489 = vsel %vm4487, %v4488, %v4486
    %v4490 = vrsqrt.pop %v4482
    %v4491 = vmul.f32 %v4482, %v4490
    %vm4492 = vcmp.eq.f32.partialorder %v4482, inf
    %v4493 = vsel %vm4492, %v4482, %v4491
    %vm4494 = vcmp.eq.f32.partialorder %v4482, 0.0
    %v4495 = vand.u32 %v4482, 2147483648
    %v4496 = vsel %vm4494, %v4495, %v4493
    %v4497 = vadd.f32 %v4489, 1e-12
    %v4498 = vadd.f32 %v4496, 1e-12
    %v4499 = vrcp.pop %v4497
    %v4500 = vmul.f32 1.0, %v4499
    %v4501 = vrcp.pop %v4498
    %v4502 = vmul.f32 1.0, %v4501
    %v4503 = vmul.f32 %v4471, %v4500
    %v4504 = vmul.f32 %v4472, %v4502
    %v4506 = vlaneseq
    %v4507 = vshrl.u32 %v4506, 7
    %v4508 = vsub.s32 0, %v4507
    %v4509 = vrot.slane %v4461, %v4508
    %v4511 = vmul.f32 %v4509, %v4503
    %v4512 = vmul.f32 %v4509, %v4504
    %v4514 = vlaneseq
    %v4515 = vshrl.u32 %v4514, 7
    %v4516 = vsub.s32 0, %v4515
    %v4517 = vrot.slane %v4462, %v4516
    %v4519 = vadd.f32 %v4511, %v4517
    %v4520 = vadd.f32 %v4512, %v4517
    %v4521 = vld [vmem:[#allocation22] sm:$0xff]
    %v4522 = vld [vmem:[#allocation22 + $0x8] sm:$0xff]
    %v4523 = vld [vmem:[#allocation22 + $0x10] sm:$0xff]
    %v4524 = vld [vmem:[#allocation22 + $0x18] sm:$0xff]
    %v4525 = vld [vmem:[#allocation23] sm:$0x1]
    %v4527 = vlaneseq
    %v4528 = vshrl.u32 %v4527, 7
    %v4529 = vsub.s32 0, %v4528
    %v4530 = vrot.slane %v4525, %v4529
    %v4533 = vsel %vm257, %v4519, 0
    %v4536 = vsel %vm257, %v4520, 0
    %4538 = vmatprep.subr.mxu0 0.0
    %4539 = vmatpush1.msra.mxu0 %v4521
    %4540 = vmatprep.subr.mxu0 0.0
    %4541 = vmatpush1.msra.mxu0 %v4522
    %4542 = vmatprep.subr.mxu0 0.0
    %4543 = vmatpush1.msra.mxu0 %v4523
    %4544 = vmatprep.subr.mxu0 0.0
    %4545 = vmatpush1.msra.mxu0 %v4524
    %4546 = vmatprep.subr.mxu0 0.0
    %4547 = vmatpush1.msra.mxu0 0.0
    %4548 = vmatprep.subr.mxu0 0.0
    %4549 = vmatpush1.msra.mxu0 0.0
    %4550 = vmatprep.subr.mxu0 0.0
    %4551 = vmatpush1.msra.mxu0 0.0
    %4552 = vmatprep.subr.mxu0 0.0
    %4553 = vmatpush1.msra.mxu0 0.0
    %4554 = vmatprep.subr.mxu0 0.0
    %4555 = vmatpush1.msra.mxu0 0.0
    %4556 = vmatprep.subr.mxu0 0.0
    %4557 = vmatpush1.msra.mxu0 0.0
    %4558 = vmatprep.subr.mxu0 0.0
    %4559 = vmatpush1.msra.mxu0 0.0
    %4560 = vmatprep.subr.mxu0 0.0
    %4561 = vmatpush1.msra.mxu0 0.0
    %4562 = vmatprep.subr.mxu0 0.0
    %4563 = vmatpush1.msra.mxu0 0.0
    %4564 = vmatprep.subr.mxu0 0.0
    %4565 = vmatpush1.msra.mxu0 0.0
    %4566 = vmatprep.subr.mxu0 0.0
    %4567 = vmatpush1.msra.mxu0 0.0
    %4568 = vmatprep.subr.mxu0 0.0
    %4569 = vmatpush1.msra.mxu0 0.0
    %4570 = vmatprep.subr.mxu0 0.0
    %4571 = vmatpush1.msra.mxu0 0.0
    %4572 = vmatprep.subr.mxu0 0.0
    %4573 = vmatpush1.msra.mxu0 0.0
    %4574 = vmatprep.subr.mxu0 0.0
    %4575 = vmatpush1.msra.mxu0 0.0
    %4576 = vmatprep.subr.mxu0 0.0
    %4577 = vmatpush1.msra.mxu0 0.0
    %4578 = vmatprep.subr.mxu0 0.0
    %4579 = vmatpush1.msra.mxu0 0.0
    %4580 = vmatprep.subr.mxu0 0.0
    %4581 = vmatpush1.msra.mxu0 0.0
    %4582 = vmatprep.subr.mxu0 0.0
    %4583 = vmatpush1.msra.mxu0 0.0
    %4584 = vmatprep.subr.mxu0 0.0
    %4585 = vmatpush1.msra.mxu0 0.0
    %4586 = vmatprep.subr.mxu0 0.0
    %4587 = vmatpush1.msra.mxu0 0.0
    %4588 = vmatprep.subr.mxu0 0.0
    %4589 = vmatpush1.msra.mxu0 0.0
    %4590 = vmatprep.subr.mxu0 0.0
    %4591 = vmatpush1.msra.mxu0 0.0
    %4592 = vmatprep.subr.mxu0 0.0
    %4593 = vmatpush1.msra.mxu0 0.0
    %4594 = vmatprep.subr.mxu0 0.0
    %4595 = vmatpush1.msra.mxu0 0.0
    %4596 = vmatprep.subr.mxu0 0.0
    %4597 = vmatpush1.msra.mxu0 0.0
    %4598 = vmatprep.subr.mxu0 0.0
    %4599 = vmatpush1.msra.mxu0 0.0
    %4600 = vmatprep.subr.mxu0 0.0
    %4601 = vmatpush1.msra.mxu0 0.0
    %4602 = vmatprep.mubr.f32.mxu0 0.0
    %4603 = vmatmul.mubr.f32.gmra.mrb[0].mxu0 %v4533
    %v4604 = vpop.f32.mrb[0].mxu0
    %v4605 = vadd.f32 %v4530, %v4604
    %v4606 = vpop.f32.mrb[0].mxu0
    %4607 = vmatprep.mubr.f32.mxu0 0.0
    %4608 = vmatmul.mubr.f32.gmra.mrb[0].mxu0 %v4536
    %v4609 = vpop.f32.mrb[0].mxu0
    %v4610 = vadd.f32 %v4530, %v4609
    %v4611 = vpop.f32.mrb[0].mxu0
    %4612 = vdwg.mxu0
    %v4613 = vmax.f32 %v4605, 0.0
    %v4614 = vmax.f32 %v4610, 0.0
    %v4615 = vld [vmem:[%s18] sm:$0xff]
    %v4616 = vld [vmem:[%s18 + $0x8] sm:$0xff]
    %v4617 = vld [vmem:[%s18 + $0x10] sm:$0xff]
    %v4618 = vld [vmem:[%s18 + $0x18] sm:$0xff]
    %v4619 = vld [vmem:[%s18 + $0x20] sm:$0xff]
    %v4620 = vld [vmem:[%s18 + $0x28] sm:$0xff]
    %v4621 = vld [vmem:[%s18 + $0x30] sm:$0xff]
    %v4622 = vld [vmem:[%s18 + $0x38] sm:$0xff]
    %v4623 = vld [vmem:[%s19] sm:$0x1]
    %v4625 = vlaneseq
    %v4626 = vshrl.u32 %v4625, 7
    %v4627 = vsub.s32 0, %v4626
    %v4628 = vrot.slane %v4623, %v4627
    %vm4630 = vcmask 523264
    %v4632 = vsel %vm4630, %v4613, 0
    %v4635 = vsel %vm4630, %v4614, 0
    %4637 = vmatprep.subr.mxu0 0.0
    %4638 = vmatpush1.msra.mxu0 %v4615
    %4639 = vmatprep.subr.mxu0 0.0
    %4640 = vmatpush1.msra.mxu0 %v4616
    %4641 = vmatprep.subr.mxu0 0.0
    %4642 = vmatpush1.msra.mxu0 %v4617
    %4643 = vmatprep.subr.mxu0 0.0
    %4644 = vmatpush1.msra.mxu0 %v4618
    %4645 = vmatprep.subr.mxu0 0.0
    %4646 = vmatpush1.msra.mxu0 %v4619
    %4647 = vmatprep.subr.mxu0 0.0
    %4648 = vmatpush1.msra.mxu0 %v4620
    %4649 = vmatprep.subr.mxu0 0.0
    %4650 = vmatpush1.msra.mxu0 %v4621
    %4651 = vmatprep.subr.mxu0 0.0
    %4652 = vmatpush1.msra.mxu0 %v4622
    %4653 = vmatprep.subr.mxu0 0.0
    %4654 = vmatpush1.msra.mxu0 0.0
    %4655 = vmatprep.subr.mxu0 0.0
    %4656 = vmatpush1.msra.mxu0 0.0
    %4657 = vmatprep.subr.mxu0 0.0
    %4658 = vmatpush1.msra.mxu0 0.0
    %4659 = vmatprep.subr.mxu0 0.0
    %4660 = vmatpush1.msra.mxu0 0.0
    %4661 = vmatprep.subr.mxu0 0.0
    %4662 = vmatpush1.msra.mxu0 0.0
    %4663 = vmatprep.subr.mxu0 0.0
    %4664 = vmatpush1.msra.mxu0 0.0
    %4665 = vmatprep.subr.mxu0 0.0
    %4666 = vmatpush1.msra.mxu0 0.0
    %4667 = vmatprep.subr.mxu0 0.0
    %4668 = vmatpush1.msra.mxu0 0.0
    %4669 = vmatprep.subr.mxu0 0.0
    %4670 = vmatpush1.msra.mxu0 0.0
    %4671 = vmatprep.subr.mxu0 0.0
    %4672 = vmatpush1.msra.mxu0 0.0
    %4673 = vmatprep.subr.mxu0 0.0
    %4674 = vmatpush1.msra.mxu0 0.0
    %4675 = vmatprep.subr.mxu0 0.0
    %4676 = vmatpush1.msra.mxu0 0.0
    %4677 = vmatprep.subr.mxu0 0.0
    %4678 = vmatpush1.msra.mxu0 0.0
    %4679 = vmatprep.subr.mxu0 0.0
    %4680 = vmatpush1.msra.mxu0 0.0
    %4681 = vmatprep.subr.mxu0 0.0
    %4682 = vmatpush1.msra.mxu0 0.0
    %4683 = vmatprep.subr.mxu0 0.0
    %4684 = vmatpush1.msra.mxu0 0.0
    %4685 = vmatprep.subr.mxu0 0.0
    %4686 = vmatpush1.msra.mxu0 0.0
    %4687 = vmatprep.subr.mxu0 0.0
    %4688 = vmatpush1.msra.mxu0 0.0
    %4689 = vmatprep.subr.mxu0 0.0
    %4690 = vmatpush1.msra.mxu0 0.0
    %4691 = vmatprep.subr.mxu0 0.0
    %4692 = vmatpush1.msra.mxu0 0.0
    %4693 = vmatprep.subr.mxu0 0.0
    %4694 = vmatpush1.msra.mxu0 0.0
    %4695 = vmatprep.subr.mxu0 0.0
    %4696 = vmatpush1.msra.mxu0 0.0
    %4697 = vmatprep.subr.mxu0 0.0
    %4698 = vmatpush1.msra.mxu0 0.0
    %4699 = vmatprep.subr.mxu0 0.0
    %4700 = vmatpush1.msra.mxu0 0.0
    %4701 = vmatprep.mubr.f32.mxu0 0.0
    %4702 = vmatmul.mubr.f32.gmra.mrb[0].mxu0 %v4632
    %v4703 = vpop.f32.mrb[0].mxu0
    %v4704 = vadd.f32 %v4628, %v4703
    %v4705 = vpop.f32.mrb[0].mxu0
    %4706 = vmatprep.mubr.f32.mxu0 0.0
    %4707 = vmatmul.mubr.f32.gmra.mrb[0].mxu0 %v4635
    %v4708 = vpop.f32.mrb[0].mxu0
    %v4709 = vadd.f32 %v4628, %v4708
    %v4710 = vpop.f32.mrb[0].mxu0
    %4711 = vdwg.mxu0
    %v4712 = vadd.f32 %v4519, %v4704
    %v4713 = vadd.f32 %v4520, %v4709
    %v4714 = vld [vmem:[%s20] sm:$0x1]
    %v4715 = vld [vmem:[%s21] sm:$0x1]
    %v4716 = vsel %vm257, %v4712, 0.0
    %4717 = vadd.xlane.f32.xlu0 %v4716
    %v4718 = vpop.xlane.xlu0 %4717
    %v4719 = vsel %vm257, %v4713, 0.0
    %4720 = vadd.xlane.f32.xlu0 %v4719
    %v4721 = vpop.xlane.xlu0 %4720
    %v4722 = vmul.f32 %v4718, %v2287
    %v4723 = vmul.f32 %v4721, %v2287
    %v4724 = vsub.f32 %v4712, %v4722
    %v4725 = vsub.f32 %v4713, %v4723
    %v4726 = vmul.f32 %v4724, %v4724
    %v4727 = vmul.f32 %v4725, %v4725
    %v4728 = vsel %vm257, %v4726, 0.0
    %4729 = vadd.xlane.f32.xlu0 %v4728
    %v4730 = vpop.xlane.xlu0 %4729
    %v4731 = vsel %vm257, %v4727, 0.0
    %4732 = vadd.xlane.f32.xlu0 %v4731
    %v4733 = vpop.xlane.xlu0 %4732
    %v4734 = vmul.f32 %v4730, 0.032258064
    %v4735 = vmul.f32 %v4733, 0.032258064
    %v4736 = vrsqrt.pop %v4734
    %v4737 = vmul.f32 %v4734, %v4736
    %vm4738 = vcmp.eq.f32.partialorder %v4734, inf
    %v4739 = vsel %vm4738, %v4734, %v4737
    %vm4740 = vcmp.eq.f32.partialorder %v4734, 0.0
    %v4741 = vand.u32 %v4734, 2147483648
    %v4742 = vsel %vm4740, %v4741, %v4739
    %v4743 = vrsqrt.pop %v4735
    %v4744 = vmul.f32 %v4735, %v4743
    %vm4745 = vcmp.eq.f32.partialorder %v4735, inf
    %v4746 = vsel %vm4745, %v4735, %v4744
    %vm4747 = vcmp.eq.f32.partialorder %v4735, 0.0
    %v4748 = vand.u32 %v4735, 2147483648
    %v4749 = vsel %vm4747, %v4748, %v4746
    %v4750 = vadd.f32 %v4742, 1e-12
    %v4751 = vadd.f32 %v4749, 1e-12
    %v4752 = vrcp.pop %v4750
    %v4753 = vmul.f32 1.0, %v4752
    %v4754 = vrcp.pop %v4751
    %v4755 = vmul.f32 1.0, %v4754
    %v4756 = vmul.f32 %v4724, %v4753
    %v4757 = vmul.f32 %v4725, %v4755
    %v4759 = vlaneseq
    %v4760 = vshrl.u32 %v4759, 7
    %v4761 = vsub.s32 0, %v4760
    %v4762 = vrot.slane %v4714, %v4761
    %v4764 = vmul.f32 %v4762, %v4756
    %v4765 = vmul.f32 %v4762, %v4757
    %v4767 = vlaneseq
    %v4768 = vshrl.u32 %v4767, 7
    %v4769 = vsub.s32 0, %v4768
    %v4770 = vrot.slane %v4715, %v4769
    %v4772 = vadd.f32 %v4764, %v4770
    %v4773 = vadd.f32 %v4765, %v4770
    %4774 = vst.msk [vmem:[#allocation25] sm:$0xff] %vm257, %v4772
    %4775 = vst.msk [vmem:[#allocation25 + $0x8] sm:$0xff] %vm257, %v4773
    // Predicated region
    $region146: #{tpu_custom_call.1} parent=1 // pred_check
      _
    $region147: #{tpu_custom_call.1} parent=1 // pred_check_branch
      %4777 = sbr.rel (0) target = $region149
    $region148: #{tpu_custom_call.1} parent=1 // pred_region
      %s4779 = ssub.s32 256, 256
      %4780 = vsyncadd [#allocation4], %s4779
      %s4781 = sshll.u32 [#allocation25], 4
      %s4782 = int_to_ptr.vmem [resolvable:$true] %s4781
      %4787 = dma.vmem_to_hbm [thread:$0]  %s4782, 256, %s22, [#allocation4], 128, 128, 8
    $region149: #{tpu_custom_call.1} parent=1 // pred_fallthru
      _
    // Predicated region
    $region150: #{tpu_custom_call.1} parent=1 // pred_check
      _
    $region151: #{tpu_custom_call.1} parent=1 // pred_check_branch
      %4789 = sbr.rel (0) target = $region153
    $region152: #{tpu_custom_call.1} parent=1 // pred_region
      %4790 = dma.done [#allocation4], 256
    $region153: #{tpu_custom_call.1} parent=1 // pred_fallthru
      _
    %4791 = vsyncpa [#allocation3], 1
    %4792 = vsyncpa [#allocation6], 1
    %4793 = vsyncpa [#allocation9], 1
    %4794 = vsyncpa [#allocation12], 1
    %4795 = vsyncpa [#allocation15], 1
    %4796 = vsyncpa [#allocation18], 1
    %4797 = vsyncpa [#allocation21], 1
    %4798 = vsyncpa [#allocation24], 1
    %4799 = vsyncpa [#allocation4], 1

// kernel: tpu_custom_call.1
$region0: #{tpu_custom_call.1}
  #allocation0 [shape = 'u32[]', space=smem, size = 0x4, offset = 0x4, fixed_abs, tag = 'smem constant byte address 0x4 - core index']
  #allocation1 [shape = 'u32[144,128]{1,0:T(1,128)}', space=vmem, size = 0x12000, scoped, tag = 'internal scratch']
  %s0 = inlined_call_operand.hbm [shape: f32[2,8,32], index: 0, kind: input, shape index: {}]
  %s1 = inlined_call_operand.hbm [shape: f32[2,8,32], index: 1, kind: input, shape index: {}]
  %s2 = inlined_call_operand.vmem [shape: f32[32,96], index: 2, kind: input, shape index: {}]
  %s3 = inlined_call_operand.hbm [shape: f32[1,96], index: 3, kind: input, shape index: {}]
  %s4 = inlined_call_operand.vmem [shape: f32[4,8,32], index: 4, kind: input, shape index: {}]
  %s5 = inlined_call_operand.hbm [shape: f32[1,32], index: 5, kind: input, shape index: {}]
  %s6 = inlined_call_operand.hbm [shape: f32[1,32], index: 6, kind: input, shape index: {}]
  %s7 = inlined_call_operand.hbm [shape: f32[1,32], index: 7, kind: input, shape index: {}]
  %s8 = inlined_call_operand.vmem [shape: f32[32,32], index: 8, kind: input, shape index: {}]
  %s9 = inlined_call_operand.hbm [shape: f32[1,32], index: 9, kind: input, shape index: {}]
  %s10 = inlined_call_operand.vmem [shape: f32[32,64], index: 10, kind: input, shape index: {}]
  %s11 = inlined_call_operand.hbm [shape: f32[1,64], index: 11, kind: input, shape index: {}]
  %s12 = inlined_call_operand.hbm [shape: f32[4,8,32], index: 12, kind: input, shape index: {}]
  %s13 = inlined_call_operand.hbm [shape: f32[1,32], index: 13, kind: input, shape index: {}]
  %s14 = inlined_call_operand.hbm [shape: f32[1,32], index: 14, kind: input, shape index: {}]
  %s15 = inlined_call_operand.hbm [shape: f32[1,32], index: 15, kind: input, shape index: {}]
  %s16 = inlined_call_operand.hbm [shape: f32[32,64], index: 16, kind: input, shape index: {}]
  %s17 = inlined_call_operand.hbm [shape: f32[1,64], index: 17, kind: input, shape index: {}]
  %s18 = inlined_call_operand.vmem [shape: f32[64,32], index: 18, kind: input, shape index: {}]
  %s19 = inlined_call_operand.vmem [shape: f32[1,32], index: 19, kind: input, shape index: {}]
  %s20 = inlined_call_operand.vmem [shape: f32[1,32], index: 20, kind: input, shape index: {}]
  %s21 = inlined_call_operand.vmem [shape: f32[1,32], index: 21, kind: input, shape index: {}]
  %s22 = inlined_call_operand.hbm [shape: f32[2,8,32], index: 22, kind: output, shape index: {}]
  %s23 = sld [smem:[#allocation0]]
  $region154: #{tpu_custom_call.1} parent=0
    _
  %s25 = ssub.s32 1, %s23
  %s26 = scalar_select 0, %s25, %s23
  $region1: #{tpu_custom_call.1} parent=0
    #allocation2 [shape = 'u8[8192]{0}', space=vmem, size = 0x2000, scoped, tag = 'input window, operand 0, single buffered']
    #allocation3 [shape = 's32[1]{0}', space=sflag, size = 0x4, scoped, tag = 'scoped memory for tpu_custom_call.1']
    #allocation4 [shape = 's32[1]{0}', space=sflag, size = 0x4, scoped, tag = 'scoped memory for tpu_custom_call.1']
    #allocation5 [shape = 'u8[8192]{0}', space=vmem, size = 0x2000, scoped, tag = 'input window, operand 1, single buffered']
    #allocation6 [shape = 's32[1]{0}', space=sflag, size = 0x4, scoped, tag = 'scoped memory for tpu_custom_call.1']
    #allocation7 [shape = 'u8[512]{0}', space=vmem, size = 0x400, scoped, tag = 'input window, operand 3, single buffered']
    #allocation8 [shape = 'u8[512]{0}', space=vmem, size = 0x400, scoped, tag = 'input window, operand 5, single buffered']
    #allocation9 [shape = 's32[1]{0}', space=sflag, size = 0x4, scoped, tag = 'scoped memory for tpu_custom_call.1']
    #allocation10 [shape = 'u8[512]{0}', space=vmem, size = 0x400, scoped, tag = 'input window, operand 6, single buffered']
    #allocation11 [shape = 'u8[512]{0}', space=vmem, size = 0x400, scoped, tag = 'input window, operand 7, single buffered']
    #allocation12 [shape = 's32[1]{0}', space=sflag, size = 0x4, scoped, tag = 'scoped memory for tpu_custom_call.1']
    #allocation13 [shape = 'u8[512]{0}', space=vmem, size = 0x400, scoped, tag = 'input window, operand 9, single buffered']
    #allocation14 [shape = 'u8[512]{0}', space=vmem, size = 0x400, scoped, tag = 'input window, operand 11, single buffered']
    #allocation15 [shape = 's32[1]{0}', space=sflag, size = 0x4, scoped, tag = 'scoped memory for tpu_custom_call.1']
    #allocation16 [shape = 'u8[16384]{0}', space=vmem, size = 0x4000, scoped, tag = 'input window, operand 12, single buffered']
    #allocation17 [shape = 'u8[512]{0}', space=vmem, size = 0x400, scoped, tag = 'input window, operand 13, single buffered']
    #allocation18 [shape = 's32[1]{0}', space=sflag, size = 0x4, scoped, tag = 'scoped memory for tpu_custom_call.1']
    #allocation19 [shape = 'u8[512]{0}', space=vmem, size = 0x400, scoped, tag = 'input window, operand 14, single buffered']
    #allocation20 [shape = 'u8[512]{0}', space=vmem, size = 0x400, scoped, tag = 'input window, operand 15, single buffered']
    #allocation21 [shape = 's32[1]{0}', space=sflag, size = 0x4, scoped, tag = 'scoped memory for tpu_custom_call.1']
    #allocation22 [shape = 'u8[16384]{0}', space=vmem, size = 0x4000, scoped, tag = 'input window, operand 16, single buffered']
    #allocation23 [shape = 'u8[512]{0}', space=vmem, size = 0x400, scoped, tag = 'input window, operand 17, single buffered']
    #allocation24 [shape = 's32[1]{0}', space=sflag, size = 0x4, scoped, tag = 'scoped memory for tpu_custom_call.1']
    #allocation25 [shape = 'u8[8192]{0}', space=vmem, size = 0x2000, scoped, tag = 'output window, operand 0, single buffered']
    %27 = vsyncpa [#allocation3], 0
    %28 = vsyncpa [#allocation6], 0
    %29 = vsyncpa [#allocation9], 0
    %30 = vsyncpa [#allocation12], 0
    %31 = vsyncpa [#allocation15], 0
    %32 = vsyncpa [#allocation18], 0
    %33 = vsyncpa [#allocation21], 0
    %34 = vsyncpa [#allocation24], 0
    %35 = vsyncpa [#allocation4], 0
    // Predicated region
    $region2: #{tpu_custom_call.1} parent=1 // pred_check
      _
    $region3: #{tpu_custom_call.1} parent=1 // pred_check_branch
      %37 = sbr.rel (0) target = $region5
    $region4: #{tpu_custom_call.1} parent=1 // pred_region
      %s39 = ssub.s32 256, 256
      %40 = vsyncadd [#allocation3], %s39
      %s41 = sshll.u32 [#allocation2], 4
      %s42 = int_to_ptr.vmem [resolvable:$true] %s41
      %47 = dma.hbm_to_vmem [thread:$0]  %s0, 256, %s42, [#allocation3], 128, 128, 8
    $region5: #{tpu_custom_call.1} parent=1 // pred_fallthru
      _
    // Predicated region
    $region6: #{tpu_custom_call.1} parent=1 // pred_check
      _
    $region7: #{tpu_custom_call.1} parent=1 // pred_check_branch
      %49 = sbr.rel (0) target = $region9
    $region8: #{tpu_custom_call.1} parent=1 // pred_region
      %s51 = ssub.s32 256, 256
      %52 = vsyncadd [#allocation6], %s51
      %s53 = sshll.u32 [#allocation5], 4
      %s54 = int_to_ptr.vmem [resolvable:$true] %s53
      %59 = dma.hbm_to_vmem [thread:$0]  %s1, 256, %s54, [#allocation6], 128, 128, 8
    $region9: #{tpu_custom_call.1} parent=1 // pred_fallthru
      _
    // Predicated region
    $region10: #{tpu_custom_call.1} parent=1 // pred_check
      _
    $region11: #{tpu_custom_call.1} parent=1 // pred_check_branch
      %61 = sbr.rel (0) target = $region13
    $region12: #{tpu_custom_call.1} parent=1 // pred_region
      _
    $region13: #{tpu_custom_call.1} parent=1 // pred_fallthru
      _
    // Predicated region
    $region14: #{tpu_custom_call.1} parent=1 // pred_check
      _
    $region15: #{tpu_custom_call.1} parent=1 // pred_check_branch
      %63 = sbr.rel (0) target = $region17
    $region16: #{tpu_custom_call.1} parent=1 // pred_region
      %s65 = ssub.s32 16, 16
      %66 = vsyncadd [#allocation6], %s65
      %s68 = sshll.u32 [#allocation7], 4
      %s69 = int_to_ptr.vmem [resolvable:$true] %s68
      %71 = dma.hbm_to_vmem [thread:$0]  %s3, 16, %s69, [#allocation6]
    $region17: #{tpu_custom_call.1} parent=1 // pred_fallthru
      _
    // Predicated region
    $region18: #{tpu_custom_call.1} parent=1 // pred_check
      _
    $region19: #{tpu_custom_call.1} parent=1 // pred_check_branch
      %73 = sbr.rel (0) target = $region21
    $region20: #{tpu_custom_call.1} parent=1 // pred_region
      _
    $region21: #{tpu_custom_call.1} parent=1 // pred_fallthru
      _
    // Predicated region
    $region22: #{tpu_custom_call.1} parent=1 // pred_check
      _
    $region23: #{tpu_custom_call.1} parent=1 // pred_check_branch
      %75 = sbr.rel (0) target = $region25
    $region24: #{tpu_custom_call.1} parent=1 // pred_region
      %s77 = ssub.s32 16, 16
      %78 = vsyncadd [#allocation9], %s77
      %s80 = sshll.u32 [#allocation8], 4
      %s81 = int_to_ptr.vmem [resolvable:$true] %s80
      %83 = dma.hbm_to_vmem [thread:$0]  %s5, 16, %s81, [#allocation9]
    $region25: #{tpu_custom_call.1} parent=1 // pred_fallthru
      _
    // Predicated region
    $region26: #{tpu_custom_call.1} parent=1 // pred_check
      _
    $region27: #{tpu_custom_call.1} parent=1 // pred_check_branch
      %85 = sbr.rel (0) target = $region29
    $region28: #{tpu_custom_call.1} parent=1 // pred_region
      %s87 = ssub.s32 16, 16
      %88 = vsyncadd [#allocation9], %s87
      %s90 = sshll.u32 [#allocation10], 4
      %s91 = int_to_ptr.vmem [resolvable:$true] %s90
      %93 = dma.hbm_to_vmem [thread:$0]  %s6, 16, %s91, [#allocation9]
    $region29: #{tpu_custom_call.1} parent=1 // pred_fallthru
      _
    // Predicated region
    $region30: #{tpu_custom_call.1} parent=1 // pred_check
      _
    $region31: #{tpu_custom_call.1} parent=1 // pred_check_branch
      %95 = sbr.rel (0) target = $region33
    $region32: #{tpu_custom_call.1} parent=1 // pred_region
      %s97 = ssub.s32 16, 16
      %98 = vsyncadd [#allocation12], %s97
      %s100 = sshll.u32 [#allocation11], 4
      %s101 = int_to_ptr.vmem [resolvable:$true] %s100
      %103 = dma.hbm_to_vmem [thread:$0]  %s7, 16, %s101, [#allocation12]
    $region33: #{tpu_custom_call.1} parent=1 // pred_fallthru
      _
    // Predicated region
    $region34: #{tpu_custom_call.1} parent=1 // pred_check
      _
    $region35: #{tpu_custom_call.1} parent=1 // pred_check_branch
      %105 = sbr.rel (0) target = $region37
    $region36: #{tpu_custom_call.1} parent=1 // pred_region
      _
    $region37: #{tpu_custom_call.1} parent=1 // pred_fallthru
      _
    // Predicated region
    $region38: #{tpu_custom_call.1} parent=1 // pred_check
      _
    $region39: #{tpu_custom_call.1} parent=1 // pred_check_branch
      %107 = sbr.rel (0) target = $region41
    $region40: #{tpu_custom_call.1} parent=1 // pred_region
      %s109 = ssub.s32 16, 16
      %110 = vsyncadd [#allocation12], %s109
      %s112 = sshll.u32 [#allocation13], 4
      %s113 = int_to_ptr.vmem [resolvable:$true] %s112
      %115 = dma.hbm_to_vmem [thread:$0]  %s9, 16, %s113, [#allocation12]
    $region41: #{tpu_custom_call.1} parent=1 // pred_fallthru
      _
    // Predicated region
    $region42: #{tpu_custom_call.1} parent=1 // pred_check
      _
    $region43: #{tpu_custom_call.1} parent=1 // pred_check_branch
      %117 = sbr.rel (0) target = $region45
    $region44: #{tpu_custom_call.1} parent=1 // pred_region
      _
    $region45: #{tpu_custom_call.1} parent=1 // pred_fallthru
      _
    // Predicated region
    $region46: #{tpu_custom_call.1} parent=1 // pred_check
      _
    $region47: #{tpu_custom_call.1} parent=1 // pred_check_branch
      %119 = sbr.rel (0) target = $region49
    $region48: #{tpu_custom_call.1} parent=1 // pred_region
      %s121 = ssub.s32 16, 16
      %122 = vsyncadd [#allocation15], %s121
      %s124 = sshll.u32 [#allocation14], 4
      %s125 = int_to_ptr.vmem [resolvable:$true] %s124
      %127 = dma.hbm_to_vmem [thread:$0]  %s11, 16, %s125, [#allocation15]
    $region49: #{tpu_custom_call.1} parent=1 // pred_fallthru
      _
    // Predicated region
    $region50: #{tpu_custom_call.1} parent=1 // pred_check
      _
    $region51: #{tpu_custom_call.1} parent=1 // pred_check_branch
      %129 = sbr.rel (0) target = $region53
    $region52: #{tpu_custom_call.1} parent=1 // pred_region
      %s131 = ssub.s32 512, 512
      %132 = vsyncadd [#allocation15], %s131
      %s133 = sshll.u32 [#allocation16], 4
      %s134 = int_to_ptr.vmem [resolvable:$true] %s133
      %139 = dma.hbm_to_vmem [thread:$0]  %s12, 512, %s134, [#allocation15], 128, 128, 8
    $region53: #{tpu_custom_call.1} parent=1 // pred_fallthru
      _
    // Predicated region
    $region54: #{tpu_custom_call.1} parent=1 // pred_check
      _
    $region55: #{tpu_custom_call.1} parent=1 // pred_check_branch
      %141 = sbr.rel (0) target = $region57
    $region56: #{tpu_custom_call.1} parent=1 // pred_region
      %s143 = ssub.s32 16, 16
      %144 = vsyncadd [#allocation18], %s143
      %s146 = sshll.u32 [#allocation17], 4
      %s147 = int_to_ptr.vmem [resolvable:$true] %s146
      %149 = dma.hbm_to_vmem [thread:$0]  %s13, 16, %s147, [#allocation18]
    $region57: #{tpu_custom_call.1} parent=1 // pred_fallthru
      _
    // Predicated region
    $region58: #{tpu_custom_call.1} parent=1 // pred_check
      _
    $region59: #{tpu_custom_call.1} parent=1 // pred_check_branch
      %151 = sbr.rel (0) target = $region61
    $region60: #{tpu_custom_call.1} parent=1 // pred_region
      %s153 = ssub.s32 16, 16
      %154 = vsyncadd [#allocation18], %s153
      %s156 = sshll.u32 [#allocation19], 4
      %s157 = int_to_ptr.vmem [resolvable:$true] %s156
      %159 = dma.hbm_to_vmem [thread:$0]  %s14, 16, %s157, [#allocation18]
    $region61: #{tpu_custom_call.1} parent=1 // pred_fallthru
      _
    // Predicated region
    $region62: #{tpu_custom_call.1} parent=1 // pred_check
      _
    $region63: #{tpu_custom_call.1} parent=1 // pred_check_branch
      %161 = sbr.rel (0) target = $region65
    $region64: #{tpu_custom_call.1} parent=1 // pred_region
      %s163 = ssub.s32 16, 16
      %164 = vsyncadd [#allocation21], %s163
      %s166 = sshll.u32 [#allocation20], 4
      %s167 = int_to_ptr.vmem [resolvable:$true] %s166
      %169 = dma.hbm_to_vmem [thread:$0]  %s15, 16, %s167, [#allocation21]
    $region65: #{tpu_custom_call.1} parent=1 // pred_fallthru
      _
    // Predicated region
    $region66: #{tpu_custom_call.1} parent=1 // pred_check
      _
    $region67: #{tpu_custom_call.1} parent=1 // pred_check_branch
      %171 = sbr.rel (0) target = $region69
    $region68: #{tpu_custom_call.1} parent=1 // pred_region
      %s173 = ssub.s32 512, 512
      %174 = vsyncadd [#allocation21], %s173
      %s175 = sshll.u32 [#allocation22], 4
      %s176 = int_to_ptr.vmem [resolvable:$true] %s175
      %181 = dma.hbm_to_vmem [thread:$0]  %s16, 512, %s176, [#allocation21], 128, 128, 8
    $region69: #{tpu_custom_call.1} parent=1 // pred_fallthru
      _
    // Predicated region
    $region70: #{tpu_custom_call.1} parent=1 // pred_check
      _
    $region71: #{tpu_custom_call.1} parent=1 // pred_check_branch
      %183 = sbr.rel (0) target = $region73
    $region72: #{tpu_custom_call.1} parent=1 // pred_region
      %s185 = ssub.s32 16, 16
      %186 = vsyncadd [#allocation24], %s185
      %s188 = sshll.u32 [#allocation23], 4
      %s189 = int_to_ptr.vmem [resolvable:$true] %s188
      %191 = dma.hbm_to_vmem [thread:$0]  %s17, 16, %s189, [#allocation24]
    $region73: #{tpu_custom_call.1} parent=1 // pred_fallthru
      _
    // Predicated region
    $region74: #{tpu_custom_call.1} parent=1 // pred_check
      _
    $region75: #{tpu_custom_call.1} parent=1 // pred_check_branch
      %193 = sbr.rel (0) target = $region77
    $region76: #{tpu_custom_call.1} parent=1 // pred_region
      _
    $region77: #{tpu_custom_call.1} parent=1 // pred_fallthru
      _
    // Predicated region
    $region78: #{tpu_custom_call.1} parent=1 // pred_check
      _
    $region79: #{tpu_custom_call.1} parent=1 // pred_check_branch
      %195 = sbr.rel (0) target = $region81
    $region80: #{tpu_custom_call.1} parent=1 // pred_region
      _
    $region81: #{tpu_custom_call.1} parent=1 // pred_fallthru
      _
    // Predicated region
    $region82: #{tpu_custom_call.1} parent=1 // pred_check
      _
    $region83: #{tpu_custom_call.1} parent=1 // pred_check_branch
      %197 = sbr.rel (0) target = $region85
    $region84: #{tpu_custom_call.1} parent=1 // pred_region
      _
    $region85: #{tpu_custom_call.1} parent=1 // pred_fallthru
      _
    // Predicated region
    $region86: #{tpu_custom_call.1} parent=1 // pred_check
      _
    $region87: #{tpu_custom_call.1} parent=1 // pred_check_branch
      %199 = sbr.rel (0) target = $region89
    $region88: #{tpu_custom_call.1} parent=1 // pred_region
      _
    $region89: #{tpu_custom_call.1} parent=1 // pred_fallthru
      _
    // Predicated region
    $region90: #{tpu_custom_call.1} parent=1 // pred_check
      _
    $region91: #{tpu_custom_call.1} parent=1 // pred_check_branch
      %201 = sbr.rel (0) target = $region93
    $region92: #{tpu_custom_call.1} parent=1 // pred_region
      %202 = dma.done [#allocation3], 256
    $region93: #{tpu_custom_call.1} parent=1 // pred_fallthru
      _
    // Predicated region
    $region94: #{tpu_custom_call.1} parent=1 // pred_check
      _
    $region95: #{tpu_custom_call.1} parent=1 // pred_check_branch
      %204 = sbr.rel (0) target = $region97
    $region96: #{tpu_custom_call.1} parent=1 // pred_region
      %205 = dma.done [#allocation6], 256
    $region97: #{tpu_custom_call.1} parent=1 // pred_fallthru
      _
    // Predicated region
    $region98: #{tpu_custom_call.1} parent=1 // pred_check
      _
    $region99: #{tpu_custom_call.1} parent=1 // pred_check_branch
      %207 = sbr.rel (0) target = $region101
    $region100: #{tpu_custom_call.1} parent=1 // pred_region
      %208 = dma.done [#allocation6], 16
    $region101: #{tpu_custom_call.1} parent=1 // pred_fallthru
      _
    // Predicated region
    $region102: #{tpu_custom_call.1} parent=1 // pred_check
      _
    $region103: #{tpu_custom_call.1} parent=1 // pred_check_branch
      %210 = sbr.rel (0) target = $region105
    $region104: #{tpu_custom_call.1} parent=1 // pred_region
      %211 = dma.done [#allocation9], 16
    $region105: #{tpu_custom_call.1} parent=1 // pred_fallthru
      _
    // Predicated region
    $region106: #{tpu_custom_call.1} parent=1 // pred_check
      _
    $region107: #{tpu_custom_call.1} parent=1 // pred_check_branch
      %213 = sbr.rel (0) target = $region109
    $region108: #{tpu_custom_call.1} parent=1 // pred_region
      %214 = dma.done [#allocation9], 16
    $region109: #{tpu_custom_call.1} parent=1 // pred_fallthru
      _
    // Predicated region
    $region110: #{tpu_custom_call.1} parent=1 // pred_check
      _
    $region111: #{tpu_custom_call.1} parent=1 // pred_check_branch
      %216 = sbr.rel (0) target = $region113
    $region112: #{tpu_custom_call.1} parent=1 // pred_region
      %217 = dma.done [#allocation12], 16
    $region113: #{tpu_custom_call.1} parent=1 // pred_fallthru
      _
    // Predicated region
    $region114: #{tpu_custom_call.1} parent=1 // pred_check
      _
    $region115: #{tpu_custom_call.1} parent=1 // pred_check_branch
      %219 = sbr.rel (0) target = $region117
    $region116: #{tpu_custom_call.1} parent=1 // pred_region
      %220 = dma.done [#allocation12], 16
    $region117: #{tpu_custom_call.1} parent=1 // pred_fallthru
      _
    // Predicated region
    $region118: #{tpu_custom_call.1} parent=1 // pred_check
      _
    $region119: #{tpu_custom_call.1} parent=1 // pred_check_branch
      %222 = sbr.rel (0) target = $region121
    $region120: #{tpu_custom_call.1} parent=1 // pred_region
      %223 = dma.done [#allocation15], 16
    $region121: #{tpu_custom_call.1} parent=1 // pred_fallthru
      _
    // Predicated region
    $region122: #{tpu_custom_call.1} parent=1 // pred_check
      _
    $region123: #{tpu_custom_call.1} parent=1 // pred_check_branch
      %225 = sbr.rel (0) target = $region125
    $region124: #{tpu_custom_call.1} parent=1 // pred_region
      %226 = dma.done [#allocation15], 512
    $region125: #{tpu_custom_call.1} parent=1 // pred_fallthru
      _
    // Predicated region
    $region126: #{tpu_custom_call.1} parent=1 // pred_check
      _
    $region127: #{tpu_custom_call.1} parent=1 // pred_check_branch
      %228 = sbr.rel (0) target = $region129
    $region128: #{tpu_custom_call.1} parent=1 // pred_region
      %229 = dma.done [#allocation18], 16
    $region129: #{tpu_custom_call.1} parent=1 // pred_fallthru
      _
    // Predicated region
    $region130: #{tpu_custom_call.1} parent=1 // pred_check
      _
    $region131: #{tpu_custom_call.1} parent=1 // pred_check_branch
      %231 = sbr.rel (0) target = $region133
    $region132: #{tpu_custom_call.1} parent=1 // pred_region
      %232 = dma.done [#allocation18], 16
    $region133: #{tpu_custom_call.1} parent=1 // pred_fallthru
      _
    // Predicated region
    $region134: #{tpu_custom_call.1} parent=1 // pred_check
      _
    $region135: #{tpu_custom_call.1} parent=1 // pred_check_branch
      %234 = sbr.rel (0) target = $region137
    $region136: #{tpu_custom_call.1} parent=1 // pred_region
      %235 = dma.done [#allocation21], 16
    $region137: #{tpu_custom_call.1} parent=1 // pred_fallthru
      _
    // Predicated region
    $region138: #{tpu_custom_call.1} parent=1 // pred_check
      _
    $region139: #{tpu_custom_call.1} parent=1 // pred_check_branch
      %237 = sbr.rel (0) target = $region141
    $region140: #{tpu_custom_call.1} parent=1 // pred_region
      %238 = dma.done [#allocation21], 512
    $region141: #{tpu_custom_call.1} parent=1 // pred_fallthru
      _
    // Predicated region
    $region142: #{tpu_custom_call.1} parent=1 // pred_check
      _
    $region143: #{tpu_custom_call.1} parent=1 // pred_check_branch
      %240 = sbr.rel (0) target = $region145
    $region144: #{tpu_custom_call.1} parent=1 // pred_region
      %241 = dma.done [#allocation24], 16
    $region145: #{tpu_custom_call.1} parent=1 // pred_fallthru
      _
    %v242 = vld [vmem:[#allocation2] sm:$0xff]
    %v243 = vld [vmem:[#allocation2 + $0x8] sm:$0xff]
    %v244 = vld [vmem:[#allocation5] sm:$0xff]
    %v245 = vld [vmem:[#allocation5 + $0x8] sm:$0xff]
    %v246 = vld [vmem:[%s2] sm:$0xff]
    %v247 = vld [vmem:[%s2 + $0x8] sm:$0xff]
    %v248 = vld [vmem:[%s2 + $0x10] sm:$0xff]
    %v249 = vld [vmem:[%s2 + $0x18] sm:$0xff]
    %v250 = vld [vmem:[#allocation7] sm:$0x1]
    %v252 = vlaneseq
    %v253 = vshrl.u32 %v252, 7
    %v254 = vsub.s32 0, %v253
    %v255 = vrot.slane %v250, %v254
    %vm257 = vcmask 261120
    %v259 = vsel %vm257, %v242, 0
    %v262 = vsel %vm257, %v243, 0
    %264 = vmatprep.subr.mxu0 0.0
    %265 = vmatpush1.msra.mxu0 %v246
    %266 = vmatprep.subr.mxu0 0.0
    %267 = vmatpush1.msra.mxu0 %v247
    %268 = vmatprep.subr.mxu0 0.0
    %269 = vmatpush1.msra.mxu0 %v248
    %270 = vmatprep.subr.mxu0 0.0
    %271 = vmatpush1.msra.mxu0 %v249
    %272 = vmatprep.subr.mxu0 0.0
    %273 = vmatpush1.msra.mxu0 0.0
    %274 = vmatprep.subr.mxu0 0.0
    %275 = vmatpush1.msra.mxu0 0.0
    %276 = vmatprep.subr.mxu0 0.0
    %277 = vmatpush1.msra.mxu0 0.0
    %278 = vmatprep.subr.mxu0 0.0
    %279 = vmatpush1.msra.mxu0 0.0
    %280 = vmatprep.subr.mxu0 0.0
    %281 = vmatpush1.msra.mxu0 0.0
    %282 = vmatprep.subr.mxu0 0.0
    %283 = vmatpush1.msra.mxu0 0.0
    %284 = vmatprep.subr.mxu0 0.0
    %285 = vmatpush1.msra.mxu0 0.0
    %286 = vmatprep.subr.mxu0 0.0
    %287 = vmatpush1.msra.mxu0 0.0
    %288 = vmatprep.subr.mxu0 0.0
    %289 = vmatpush1.msra.mxu0 0.0
    %290 = vmatprep.subr.mxu0 0.0
    %291 = vmatpush1.msra.mxu0 0.0
    %292 = vmatprep.subr.mxu0 0.0
    %293 = vmatpush1.msra.mxu0 0.0
    %294 = vmatprep.subr.mxu0 0.0
    %295 = vmatpush1.msra.mxu0 0.0
    %296 = vmatprep.subr.mxu0 0.0
    %297 = vmatpush1.msra.mxu0 0.0
    %298 = vmatprep.subr.mxu0 0.0
    %299 = vmatpush1.msra.mxu0 0.0
    %300 = vmatprep.subr.mxu0 0.0
    %301 = vmatpush1.msra.mxu0 0.0
    %302 = vmatprep.subr.mxu0 0.0
    %303 = vmatpush1.msra.mxu0 0.0
    %304 = vmatprep.subr.mxu0 0.0
    %305 = vmatpush1.msra.mxu0 0.0
    %306 = vmatprep.subr.mxu0 0.0
    %307 = vmatpush1.msra.mxu0 0.0
    %308 = vmatprep.subr.mxu0 0.0
    %309 = vmatpush1.msra.mxu0 0.0
    %310 = vmatprep.subr.mxu0 0.0
    %311 = vmatpush1.msra.mxu0 0.0
    %312 = vmatprep.subr.mxu0 0.0
    %313 = vmatpush1.msra.mxu0 0.0
    %314 = vmatprep.subr.mxu0 0.0
    %315 = vmatpush1.msra.mxu0 0.0
    %316 = vmatprep.subr.mxu0 0.0
    %317 = vmatpush1.msra.mxu0 0.0
    %318 = vmatprep.subr.mxu0 0.0
    %319 = vmatpush1.msra.mxu0 0.0
    %320 = vmatprep.subr.mxu0 0.0
    %321 = vmatpush1.msra.mxu0 0.0
    %322 = vmatprep.subr.mxu0 0.0
    %323 = vmatpush1.msra.mxu0 0.0
    %324 = vmatprep.subr.mxu0 0.0
    %325 = vmatpush1.msra.mxu0 0.0
    %326 = vmatprep.subr.mxu0 0.0
    %327 = vmatpush1.msra.mxu0 0.0
    %328 = vmatprep.mubr.f32.mxu0 0.0
    %329 = vmatmul.mubr.f32.gmra.mrb[0].mxu0 %v259
    %v330 = vpop.f32.mrb[0].mxu0
    %v331 = vadd.f32 %v255, %v330
    %v332 = vpop.f32.mrb[0].mxu0
    %333 = vmatprep.mubr.f32.mxu0 0.0
    %334 = vmatmul.mubr.f32.gmra.mrb[0].mxu0 %v262
    %v335 = vpop.f32.mrb[0].mxu0
    %v336 = vadd.f32 %v255, %v335
    %v337 = vpop.f32.mrb[0].mxu0
    %338 = vdwg.mxu0
    %v339 = vld [vmem:[%s4] sm:$0xff]
    %v340 = vld [vmem:[%s4 + $0x8] sm:$0xff]
    %v341 = vld [vmem:[%s4 + $0x10] sm:$0xff]
    %v342 = vld [vmem:[%s4 + $0x18] sm:$0xff]
    %v343 = vld [vmem:[#allocation8] sm:$0x1]
    %345 = vrot.lane.b32.xlu0 %v331, 120
    %v346 = vpop.permute.xlu0 %345
    %347 = vrot.lane.b32.xlu0 %v331, 112
    %v348 = vpop.permute.xlu0 %347
    %349 = vrot.lane.b32.xlu0 %v331, 104
    %v350 = vpop.permute.xlu0 %349
    %351 = vrot.lane.b32.xlu0 %v331, 96
    %v352 = vpop.permute.xlu0 %351
    %vm353 = vcmask 64512
    %v354 = vsel %vm353, %v331, 0
    %v356 = vsel %vm353, %v352, 0
    %358 = vmatprep.subr.mxu0 0.0
    %359 = vmatpush1.xpose.msra.mxu0 %v356
    %360 = vmatprep.subr.mxu0 0.0
    %361 = vmatpush1.xpose.msra.mxu0 0.0
    %362 = vmatprep.subr.mxu0 0.0
    %363 = vmatpush1.xpose.msra.mxu0 0.0
    %364 = vmatprep.subr.mxu0 0.0
    %365 = vmatpush1.xpose.msra.mxu0 0.0
    %366 = vmatprep.subr.mxu0 0.0
    %367 = vmatpush1.xpose.msra.mxu0 0.0
    %368 = vmatprep.subr.mxu0 0.0
    %369 = vmatpush1.xpose.msra.mxu0 0.0
    %370 = vmatprep.subr.mxu0 0.0
    %371 = vmatpush1.xpose.msra.mxu0 0.0
    %372 = vmatprep.subr.mxu0 0.0
    %373 = vmatpush1.xpose.msra.mxu0 0.0
    %374 = vmatprep.subr.mxu0 0.0
    %375 = vmatpush1.xpose.msra.mxu0 0.0
    %376 = vmatprep.subr.mxu0 0.0
    %377 = vmatpush1.xpose.msra.mxu0 0.0
    %378 = vmatprep.subr.mxu0 0.0
    %379 = vmatpush1.xpose.msra.mxu0 0.0
    %380 = vmatprep.subr.mxu0 0.0
    %381 = vmatpush1.xpose.msra.mxu0 0.0
    %382 = vmatprep.subr.mxu0 0.0
    %383 = vmatpush1.xpose.msra.mxu0 0.0
    %384 = vmatprep.subr.mxu0 0.0
    %385 = vmatpush1.xpose.msra.mxu0 0.0
    %386 = vmatprep.subr.mxu0 0.0
    %387 = vmatpush1.xpose.msra.mxu0 0.0
    %388 = vmatprep.subr.mxu0 0.0
    %389 = vmatpush1.xpose.msra.mxu0 0.0
    %390 = vmatprep.subr.mxu0 0.0
    %391 = vmatpush1.xpose.msra.mxu0 0.0
    %392 = vmatprep.subr.mxu0 0.0
    %393 = vmatpush1.xpose.msra.mxu0 0.0
    %394 = vmatprep.subr.mxu0 0.0
    %395 = vmatpush1.xpose.msra.mxu0 0.0
    %396 = vmatprep.subr.mxu0 0.0
    %397 = vmatpush1.xpose.msra.mxu0 0.0
    %398 = vmatprep.subr.mxu0 0.0
    %399 = vmatpush1.xpose.msra.mxu0 0.0
    %400 = vmatprep.subr.mxu0 0.0
    %401 = vmatpush1.xpose.msra.mxu0 0.0
    %402 = vmatprep.subr.mxu0 0.0
    %403 = vmatpush1.xpose.msra.mxu0 0.0
    %404 = vmatprep.subr.mxu0 0.0
    %405 = vmatpush1.xpose.msra.mxu0 0.0
    %406 = vmatprep.subr.mxu0 0.0
    %407 = vmatpush1.xpose.msra.mxu0 0.0
    %408 = vmatprep.subr.mxu0 0.0
    %409 = vmatpush1.xpose.msra.mxu0 0.0
    %410 = vmatprep.subr.mxu0 0.0
    %411 = vmatpush1.xpose.msra.mxu0 0.0
    %412 = vmatprep.subr.mxu0 0.0
    %413 = vmatpush1.xpose.msra.mxu0 0.0
    %414 = vmatprep.subr.mxu0 0.0
    %415 = vmatpush1.xpose.msra.mxu0 0.0
    %416 = vmatprep.subr.mxu0 0.0
    %417 = vmatpush1.xpose.msra.mxu0 0.0
    %418 = vmatprep.subr.mxu0 0.0
    %419 = vmatpush1.xpose.msra.mxu0 0.0
    %420 = vmatprep.subr.mxu0 0.0
    %421 = vmatpush1.xpose.msra.mxu0 0.0
    %422 = vmatprep.mubr.f32.mxu0 0.0
    %423 = vmatmul.mubr.f32.gmra.mrb[0].mxu0 %v354
    %v424 = vpop.f32.mrb[0].mxu0
    %v425 = vadd.f32 0.0, %v424
    %v426 = vpop.f32.mrb[0].mxu0
    %427 = vdwg.mxu0
    %428 = vrot.lane.b32.xlu0 %v346, 96
    %v429 = vpop.permute.xlu0 %428
    %v430 = vsel %vm353, %v346, 0
    %v432 = vsel %vm353, %v429, 0
    %434 = vmatprep.subr.mxu0 0.0
    %435 = vmatpush1.xpose.msra.mxu0 %v432
    %436 = vmatprep.subr.mxu0 0.0
    %437 = vmatpush1.xpose.msra.mxu0 0.0
    %438 = vmatprep.subr.mxu0 0.0
    %439 = vmatpush1.xpose.msra.mxu0 0.0
    %440 = vmatprep.subr.mxu0 0.0
    %441 = vmatpush1.xpose.msra.mxu0 0.0
    %442 = vmatprep.subr.mxu0 0.0
    %443 = vmatpush1.xpose.msra.mxu0 0.0
    %444 = vmatprep.subr.mxu0 0.0
    %445 = vmatpush1.xpose.msra.mxu0 0.0
    %446 = vmatprep.subr.mxu0 0.0
    %447 = vmatpush1.xpose.msra.mxu0 0.0
    %448 = vmatprep.subr.mxu0 0.0
    %449 = vmatpush1.xpose.msra.mxu0 0.0
    %450 = vmatprep.subr.mxu0 0.0
    %451 = vmatpush1.xpose.msra.mxu0 0.0
    %452 = vmatprep.subr.mxu0 0.0
    %453 = vmatpush1.xpose.msra.mxu0 0.0
    %454 = vmatprep.subr.mxu0 0.0
    %455 = vmatpush1.xpose.msra.mxu0 0.0
    %456 = vmatprep.subr.mxu0 0.0
    %457 = vmatpush1.xpose.msra.mxu0 0.0
    %458 = vmatprep.subr.mxu0 0.0
    %459 = vmatpush1.xpose.msra.mxu0 0.0
    %460 = vmatprep.subr.mxu0 0.0
    %461 = vmatpush1.xpose.msra.mxu0 0.0
    %462 = vmatprep.subr.mxu0 0.0
    %463 = vmatpush1.xpose.msra.mxu0 0.0
    %464 = vmatprep.subr.mxu0 0.0
    %465 = vmatpush1.xpose.msra.mxu0 0.0
    %466 = vmatprep.subr.mxu0 0.0
    %467 = vmatpush1.xpose.msra.mxu0 0.0
    %468 = vmatprep.subr.mxu0 0.0
    %469 = vmatpush1.xpose.msra.mxu0 0.0
    %470 = vmatprep.subr.mxu0 0.0
    %471 = vmatpush1.xpose.msra.mxu0 0.0
    %472 = vmatprep.subr.mxu0 0.0
    %473 = vmatpush1.xpose.msra.mxu0 0.0
    %474 = vmatprep.subr.mxu0 0.0
    %475 = vmatpush1.xpose.msra.mxu0 0.0
    %476 = vmatprep.subr.mxu0 0.0
    %477 = vmatpush1.xpose.msra.mxu0 0.0
    %478 = vmatprep.subr.mxu0 0.0
    %479 = vmatpush1.xpose.msra.mxu0 0.0
    %480 = vmatprep.subr.mxu0 0.0
    %481 = vmatpush1.xpose.msra.mxu0 0.0
    %482 = vmatprep.subr.mxu0 0.0
    %483 = vmatpush1.xpose.msra.mxu0 0.0
    %484 = vmatprep.subr.mxu0 0.0
    %485 = vmatpush1.xpose.msra.mxu0 0.0
    %486 = vmatprep.subr.mxu0 0.0
    %487 = vmatpush1.xpose.msra.mxu0 0.0
    %488 = vmatprep.subr.mxu0 0.0
    %489 = vmatpush1.xpose.msra.mxu0 0.0
    %490 = vmatprep.subr.mxu0 0.0
    %491 = vmatpush1.xpose.msra.mxu0 0.0
    %492 = vmatprep.subr.mxu0 0.0
    %493 = vmatpush1.xpose.msra.mxu0 0.0
    %494 = vmatprep.subr.mxu0 0.0
    %495 = vmatpush1.xpose.msra.mxu0 0.0
    %496 = vmatprep.subr.mxu0 0.0
    %497 = vmatpush1.xpose.msra.mxu0 0.0
    %498 = vmatprep.mubr.f32.mxu0 0.0
    %499 = vmatmul.mubr.f32.gmra.mrb[0].mxu0 %v430
    %v500 = vpop.f32.mrb[0].mxu0
    %v501 = vadd.f32 0.0, %v500
    %v502 = vpop.f32.mrb[0].mxu0
    %503 = vdwg.mxu0
    %504 = vrot.lane.b32.xlu0 %v348, 96
    %v505 = vpop.permute.xlu0 %504
    %v506 = vsel %vm353, %v348, 0
    %v508 = vsel %vm353, %v505, 0
    %510 = vmatprep.subr.mxu0 0.0
    %511 = vmatpush1.xpose.msra.mxu0 %v508
    %512 = vmatprep.subr.mxu0 0.0
    %513 = vmatpush1.xpose.msra.mxu0 0.0
    %514 = vmatprep.subr.mxu0 0.0
    %515 = vmatpush1.xpose.msra.mxu0 0.0
    %516 = vmatprep.subr.mxu0 0.0
    %517 = vmatpush1.xpose.msra.mxu0 0.0
    %518 = vmatprep.subr.mxu0 0.0
    %519 = vmatpush1.xpose.msra.mxu0 0.0
    %520 = vmatprep.subr.mxu0 0.0
    %521 = vmatpush1.xpose.msra.mxu0 0.0
    %522 = vmatprep.subr.mxu0 0.0
    %523 = vmatpush1.xpose.msra.mxu0 0.0
    %524 = vmatprep.subr.mxu0 0.0
    %525 = vmatpush1.xpose.msra.mxu0 0.0
    %526 = vmatprep.subr.mxu0 0.0
    %527 = vmatpush1.xpose.msra.mxu0 0.0
    %528 = vmatprep.subr.mxu0 0.0
    %529 = vmatpush1.xpose.msra.mxu0 0.0
    %530 = vmatprep.subr.mxu0 0.0
    %531 = vmatpush1.xpose.msra.mxu0 0.0
    %532 = vmatprep.subr.mxu0 0.0
    %533 = vmatpush1.xpose.msra.mxu0 0.0
    %534 = vmatprep.subr.mxu0 0.0
    %535 = vmatpush1.xpose.msra.mxu0 0.0
    %536 = vmatprep.subr.mxu0 0.0
    %537 = vmatpush1.xpose.msra.mxu0 0.0
    %538 = vmatprep.subr.mxu0 0.0
    %539 = vmatpush1.xpose.msra.mxu0 0.0
    %540 = vmatprep.subr.mxu0 0.0
    %541 = vmatpush1.xpose.msra.mxu0 0.0
    %542 = vmatprep.subr.mxu0 0.0
    %543 = vmatpush1.xpose.msra.mxu0 0.0
    %544 = vmatprep.subr.mxu0 0.0
    %545 = vmatpush1.xpose.msra.mxu0 0.0
    %546 = vmatprep.subr.mxu0 0.0
    %547 = vmatpush1.xpose.msra.mxu0 0.0
    %548 = vmatprep.subr.mxu0 0.0
    %549 = vmatpush1.xpose.msra.mxu0 0.0
    %550 = vmatprep.subr.mxu0 0.0
    %551 = vmatpush1.xpose.msra.mxu0 0.0
    %552 = vmatprep.subr.mxu0 0.0
    %553 = vmatpush1.xpose.msra.mxu0 0.0
    %554 = vmatprep.subr.mxu0 0.0
    %555 = vmatpush1.xpose.msra.mxu0 0.0
    %556 = vmatprep.subr.mxu0 0.0
    %557 = vmatpush1.xpose.msra.mxu0 0.0
    %558 = vmatprep.subr.mxu0 0.0
    %559 = vmatpush1.xpose.msra.mxu0 0.0
    %560 = vmatprep.subr.mxu0 0.0
    %561 = vmatpush1.xpose.msra.mxu0 0.0
    %562 = vmatprep.subr.mxu0 0.0
    %563 = vmatpush1.xpose.msra.mxu0 0.0
    %564 = vmatprep.subr.mxu0 0.0
    %565 = vmatpush1.xpose.msra.mxu0 0.0
    %566 = vmatprep.subr.mxu0 0.0
    %567 = vmatpush1.xpose.msra.mxu0 0.0
    %568 = vmatprep.subr.mxu0 0.0
    %569 = vmatpush1.xpose.msra.mxu0 0.0
    %570 = vmatprep.subr.mxu0 0.0
    %571 = vmatpush1.xpose.msra.mxu0 0.0
    %572 = vmatprep.subr.mxu0 0.0
    %573 = vmatpush1.xpose.msra.mxu0 0.0
    %574 = vmatprep.mubr.f32.mxu0 0.0
    %575 = vmatmul.mubr.f32.gmra.mrb[0].mxu0 %v506
    %v576 = vpop.f32.mrb[0].mxu0
    %v577 = vadd.f32 0.0, %v576
    %v578 = vpop.f32.mrb[0].mxu0
    %579 = vdwg.mxu0
    %580 = vrot.lane.b32.xlu0 %v350, 96
    %v581 = vpop.permute.xlu0 %580
    %v582 = vsel %vm353, %v350, 0
    %v584 = vsel %vm353, %v581, 0
    %586 = vmatprep.subr.mxu0 0.0
    %587 = vmatpush1.xpose.msra.mxu0 %v584
    %588 = vmatprep.subr.mxu0 0.0
    %589 = vmatpush1.xpose.msra.mxu0 0.0
    %590 = vmatprep.subr.mxu0 0.0
    %591 = vmatpush1.xpose.msra.mxu0 0.0
    %592 = vmatprep.subr.mxu0 0.0
    %593 = vmatpush1.xpose.msra.mxu0 0.0
    %594 = vmatprep.subr.mxu0 0.0
    %595 = vmatpush1.xpose.msra.mxu0 0.0
    %596 = vmatprep.subr.mxu0 0.0
    %597 = vmatpush1.xpose.msra.mxu0 0.0
    %598 = vmatprep.subr.mxu0 0.0
    %599 = vmatpush1.xpose.msra.mxu0 0.0
    %600 = vmatprep.subr.mxu0 0.0
    %601 = vmatpush1.xpose.msra.mxu0 0.0
    %602 = vmatprep.subr.mxu0 0.0
    %603 = vmatpush1.xpose.msra.mxu0 0.0
    %604 = vmatprep.subr.mxu0 0.0
    %605 = vmatpush1.xpose.msra.mxu0 0.0
    %606 = vmatprep.subr.mxu0 0.0
    %607 = vmatpush1.xpose.msra.mxu0 0.0
    %608 = vmatprep.subr.mxu0 0.0
    %609 = vmatpush1.xpose.msra.mxu0 0.0
    %610 = vmatprep.subr.mxu0 0.0
    %611 = vmatpush1.xpose.msra.mxu0 0.0
    %612 = vmatprep.subr.mxu0 0.0
    %613 = vmatpush1.xpose.msra.mxu0 0.0
    %614 = vmatprep.subr.mxu0 0.0
    %615 = vmatpush1.xpose.msra.mxu0 0.0
    %616 = vmatprep.subr.mxu0 0.0
    %617 = vmatpush1.xpose.msra.mxu0 0.0
    %618 = vmatprep.subr.mxu0 0.0
    %619 = vmatpush1.xpose.msra.mxu0 0.0
    %620 = vmatprep.subr.mxu0 0.0
    %621 = vmatpush1.xpose.msra.mxu0 0.0
    %622 = vmatprep.subr.mxu0 0.0
    %623 = vmatpush1.xpose.msra.mxu0 0.0
    %624 = vmatprep.subr.mxu0 0.0
    %625 = vmatpush1.xpose.msra.mxu0 0.0
    %626 = vmatprep.subr.mxu0 0.0
    %627 = vmatpush1.xpose.msra.mxu0 0.0
    %628 = vmatprep.subr.mxu0 0.0
    %629 = vmatpush1.xpose.msra.mxu0 0.0
    %630 = vmatprep.subr.mxu0 0.0
    %631 = vmatpush1.xpose.msra.mxu0 0.0
    %632 = vmatprep.subr.mxu0 0.0
    %633 = vmatpush1.xpose.msra.mxu0 0.0
    %634 = vmatprep.subr.mxu0 0.0
    %635 = vmatpush1.xpose.msra.mxu0 0.0
    %636 = vmatprep.subr.mxu0 0.0
    %637 = vmatpush1.xpose.msra.mxu0 0.0
    %638 = vmatprep.subr.mxu0 0.0
    %639 = vmatpush1.xpose.msra.mxu0 0.0
    %640 = vmatprep.subr.mxu0 0.0
    %641 = vmatpush1.xpose.msra.mxu0 0.0
    %642 = vmatprep.subr.mxu0 0.0
    %643 = vmatpush1.xpose.msra.mxu0 0.0
    %644 = vmatprep.subr.mxu0 0.0
    %645 = vmatpush1.xpose.msra.mxu0 0.0
    %646 = vmatprep.subr.mxu0 0.0
    %647 = vmatpush1.xpose.msra.mxu0 0.0
    %648 = vmatprep.subr.mxu0 0.0
    %649 = vmatpush1.xpose.msra.mxu0 0.0
    %650 = vmatprep.mubr.f32.mxu0 0.0
    %651 = vmatmul.mubr.f32.gmra.mrb[0].mxu0 %v582
    %v652 = vpop.f32.mrb[0].mxu0
    %v653 = vadd.f32 0.0, %v652
    %v654 = vpop.f32.mrb[0].mxu0
    %655 = vdwg.mxu0
    %v656 = vsel %vm353, %v425, -inf
    %657 = vmax.xlane.f32.xlu0 %v656
    %v658 = vpop.xlane.xlu0 %657
    %v659 = vsel %vm353, %v501, -inf
    %660 = vmax.xlane.f32.xlu0 %v659
    %v661 = vpop.xlane.xlu0 %660
    %v662 = vsel %vm353, %v577, -inf
    %663 = vmax.xlane.f32.xlu0 %v662
    %v664 = vpop.xlane.xlu0 %663
    %v665 = vsel %vm353, %v653, -inf
    %666 = vmax.xlane.f32.xlu0 %v665
    %v667 = vpop.xlane.xlu0 %666
    %v668 = vsub.f32 %v425, %v658
    %v669 = vsub.f32 %v501, %v661
    %v670 = vsub.f32 %v577, %v664
    %v671 = vsub.f32 %v653, %v667
    %v672 = vmul.f32 %v668, 1.442695
    %v673 = vpow.pop %v672
    %v674 = vmul.f32 %v669, 1.442695
    %v675 = vpow.pop %v674
    %v676 = vmul.f32 %v670, 1.442695
    %v677 = vpow.pop %v676
    %v678 = vmul.f32 %v671, 1.442695
    %v679 = vpow.pop %v678
    %v680 = vsel %vm353, %v673, 0.0
    %681 = vadd.xlane.f32.xlu0 %v680
    %v682 = vpop.xlane.xlu0 %681
    %v683 = vsel %vm353, %v675, 0.0
    %684 = vadd.xlane.f32.xlu0 %v683
    %v685 = vpop.xlane.xlu0 %684
    %v686 = vsel %vm353, %v677, 0.0
    %687 = vadd.xlane.f32.xlu0 %v686
    %v688 = vpop.xlane.xlu0 %687
    %v689 = vsel %vm353, %v679, 0.0
    %690 = vadd.xlane.f32.xlu0 %v689
    %v691 = vpop.xlane.xlu0 %690
    %v692 = vrcp.pop %v682
    %v693 = vmul.f32 1.0, %v692
    %v694 = vrcp.pop %v685
    %v695 = vmul.f32 1.0, %v694
    %v696 = vrcp.pop %v688
    %v697 = vmul.f32 1.0, %v696
    %v698 = vrcp.pop %v691
    %v699 = vmul.f32 1.0, %v698
    %v700 = vmul.f32 %v673, %v693
    %v701 = vmul.f32 %v675, %v695
    %v702 = vmul.f32 %v677, %v697
    %v703 = vmul.f32 %v679, %v699
    %704 = vrot.lane.b32.xlu0 %v331, 64
    %v705 = vpop.permute.xlu0 %704
    %v708 = vsel %vm353, %v700, 0
    %710 = vmatprep.subr.mxu0 0.0
    %711 = vmatpush1.msra.mxu0 %v705
    %712 = vmatprep.subr.mxu0 0.0
    %713 = vmatpush1.msra.mxu0 0.0
    %714 = vmatprep.subr.mxu0 0.0
    %715 = vmatpush1.msra.mxu0 0.0
    %716 = vmatprep.subr.mxu0 0.0
    %717 = vmatpush1.msra.mxu0 0.0
    %718 = vmatprep.subr.mxu0 0.0
    %719 = vmatpush1.msra.mxu0 0.0
    %720 = vmatprep.subr.mxu0 0.0
    %721 = vmatpush1.msra.mxu0 0.0
    %722 = vmatprep.subr.mxu0 0.0
    %723 = vmatpush1.msra.mxu0 0.0
    %724 = vmatprep.subr.mxu0 0.0
    %725 = vmatpush1.msra.mxu0 0.0
    %726 = vmatprep.subr.mxu0 0.0
    %727 = vmatpush1.msra.mxu0 0.0
    %728 = vmatprep.subr.mxu0 0.0
    %729 = vmatpush1.msra.mxu0 0.0
    %730 = vmatprep.subr.mxu0 0.0
    %731 = vmatpush1.msra.mxu0 0.0
    %732 = vmatprep.subr.mxu0 0.0
    %733 = vmatpush1.msra.mxu0 0.0
    %734 = vmatprep.subr.mxu0 0.0
    %735 = vmatpush1.msra.mxu0 0.0
    %736 = vmatprep.subr.mxu0 0.0
    %737 = vmatpush1.msra.mxu0 0.0
    %738 = vmatprep.subr.mxu0 0.0
    %739 = vmatpush1.msra.mxu0 0.0
    %740 = vmatprep.subr.mxu0 0.0
    %741 = vmatpush1.msra.mxu0 0.0
    %742 = vmatprep.subr.mxu0 0.0
    %743 = vmatpush1.msra.mxu0 0.0
    %744 = vmatprep.subr.mxu0 0.0
    %745 = vmatpush1.msra.mxu0 0.0
    %746 = vmatprep.subr.mxu0 0.0
    %747 = vmatpush1.msra.mxu0 0.0
    %748 = vmatprep.subr.mxu0 0.0
    %749 = vmatpush1.msra.mxu0 0.0
    %750 = vmatprep.subr.mxu0 0.0
    %751 = vmatpush1.msra.mxu0 0.0
    %752 = vmatprep.subr.mxu0 0.0
    %753 = vmatpush1.msra.mxu0 0.0
    %754 = vmatprep.subr.mxu0 0.0
    %755 = vmatpush1.msra.mxu0 0.0
    %756 = vmatprep.subr.mxu0 0.0
    %757 = vmatpush1.msra.mxu0 0.0
    %758 = vmatprep.subr.mxu0 0.0
    %759 = vmatpush1.msra.mxu0 0.0
    %760 = vmatprep.subr.mxu0 0.0
    %761 = vmatpush1.msra.mxu0 0.0
    %762 = vmatprep.subr.mxu0 0.0
    %763 = vmatpush1.msra.mxu0 0.0
    %764 = vmatprep.subr.mxu0 0.0
    %765 = vmatpush1.msra.mxu0 0.0
    %766 = vmatprep.subr.mxu0 0.0
    %767 = vmatpush1.msra.mxu0 0.0
    %768 = vmatprep.subr.mxu0 0.0
    %769 = vmatpush1.msra.mxu0 0.0
    %770 = vmatprep.subr.mxu0 0.0
    %771 = vmatpush1.msra.mxu0 0.0
    %772 = vmatprep.subr.mxu0 0.0
    %773 = vmatpush1.msra.mxu0 0.0
    %774 = vmatprep.mubr.f32.mxu0 0.0
    %775 = vmatmul.mubr.f32.gmra.mrb[0].mxu0 %v708
    %v776 = vpop.f32.mrb[0].mxu0
    %v777 = vadd.f32 0.0, %v776
    %v778 = vpop.f32.mrb[0].mxu0
    %779 = vdwg.mxu0
    %780 = vrot.lane.b32.xlu0 %v346, 64
    %v781 = vpop.permute.xlu0 %780
    %v784 = vsel %vm353, %v701, 0
    %786 = vmatprep.subr.mxu0 0.0
    %787 = vmatpush1.msra.mxu0 %v781
    %788 = vmatprep.subr.mxu0 0.0
    %789 = vmatpush1.msra.mxu0 0.0
    %790 = vmatprep.subr.mxu0 0.0
    %791 = vmatpush1.msra.mxu0 0.0
    %792 = vmatprep.subr.mxu0 0.0
    %793 = vmatpush1.msra.mxu0 0.0
    %794 = vmatprep.subr.mxu0 0.0
    %795 = vmatpush1.msra.mxu0 0.0
    %796 = vmatprep.subr.mxu0 0.0
    %797 = vmatpush1.msra.mxu0 0.0
    %798 = vmatprep.subr.mxu0 0.0
    %799 = vmatpush1.msra.mxu0 0.0
    %800 = vmatprep.subr.mxu0 0.0
    %801 = vmatpush1.msra.mxu0 0.0
    %802 = vmatprep.subr.mxu0 0.0
    %803 = vmatpush1.msra.mxu0 0.0
    %804 = vmatprep.subr.mxu0 0.0
    %805 = vmatpush1.msra.mxu0 0.0
    %806 = vmatprep.subr.mxu0 0.0
    %807 = vmatpush1.msra.mxu0 0.0
    %808 = vmatprep.subr.mxu0 0.0
    %809 = vmatpush1.msra.mxu0 0.0
    %810 = vmatprep.subr.mxu0 0.0
    %811 = vmatpush1.msra.mxu0 0.0
    %812 = vmatprep.subr.mxu0 0.0
    %813 = vmatpush1.msra.mxu0 0.0
    %814 = vmatprep.subr.mxu0 0.0
    %815 = vmatpush1.msra.mxu0 0.0
    %816 = vmatprep.subr.mxu0 0.0
    %817 = vmatpush1.msra.mxu0 0.0
    %818 = vmatprep.subr.mxu0 0.0
    %819 = vmatpush1.msra.mxu0 0.0
    %820 = vmatprep.subr.mxu0 0.0
    %821 = vmatpush1.msra.mxu0 0.0
    %822 = vmatprep.subr.mxu0 0.0
    %823 = vmatpush1.msra.mxu0 0.0
    %824 = vmatprep.subr.mxu0 0.0
    %825 = vmatpush1.msra.mxu0 0.0
    %826 = vmatprep.subr.mxu0 0.0
    %827 = vmatpush1.msra.mxu0 0.0
    %828 = vmatprep.subr.mxu0 0.0
    %829 = vmatpush1.msra.mxu0 0.0
    %830 = vmatprep.subr.mxu0 0.0
    %831 = vmatpush1.msra.mxu0 0.0
    %832 = vmatprep.subr.mxu0 0.0
    %833 = vmatpush1.msra.mxu0 0.0
    %834 = vmatprep.subr.mxu0 0.0
    %835 = vmatpush1.msra.mxu0 0.0
    %836 = vmatprep.subr.mxu0 0.0
    %837 = vmatpush1.msra.mxu0 0.0
    %838 = vmatprep.subr.mxu0 0.0
    %839 = vmatpush1.msra.mxu0 0.0
    %840 = vmatprep.subr.mxu0 0.0
    %841 = vmatpush1.msra.mxu0 0.0
    %842 = vmatprep.subr.mxu0 0.0
    %843 = vmatpush1.msra.mxu0 0.0
    %844 = vmatprep.subr.mxu0 0.0
    %845 = vmatpush1.msra.mxu0 0.0
    %846 = vmatprep.subr.mxu0 0.0
    %847 = vmatpush1.msra.mxu0 0.0
    %848 = vmatprep.subr.mxu0 0.0
    %849 = vmatpush1.msra.mxu0 0.0
    %850 = vmatprep.mubr.f32.mxu0 0.0
    %851 = vmatmul.mubr.f32.gmra.mrb[0].mxu0 %v784
    %v852 = vpop.f32.mrb[0].mxu0
    %v853 = vadd.f32 0.0, %v852
    %v854 = vpop.f32.mrb[0].mxu0
    %855 = vdwg.mxu0
    %856 = vrot.lane.b32.xlu0 %v348, 64
    %v857 = vpop.permute.xlu0 %856
    %v860 = vsel %vm353, %v702, 0
    %862 = vmatprep.subr.mxu0 0.0
    %863 = vmatpush1.msra.mxu0 %v857
    %864 = vmatprep.subr.mxu0 0.0
    %865 = vmatpush1.msra.mxu0 0.0
    %866 = vmatprep.subr.mxu0 0.0
    %867 = vmatpush1.msra.mxu0 0.0
    %868 = vmatprep.subr.mxu0 0.0
    %869 = vmatpush1.msra.mxu0 0.0
    %870 = vmatprep.subr.mxu0 0.0
    %871 = vmatpush1.msra.mxu0 0.0
    %872 = vmatprep.subr.mxu0 0.0
    %873 = vmatpush1.msra.mxu0 0.0
    %874 = vmatprep.subr.mxu0 0.0
    %875 = vmatpush1.msra.mxu0 0.0
    %876 = vmatprep.subr.mxu0 0.0
    %877 = vmatpush1.msra.mxu0 0.0
    %878 = vmatprep.subr.mxu0 0.0
    %879 = vmatpush1.msra.mxu0 0.0
    %880 = vmatprep.subr.mxu0 0.0
    %881 = vmatpush1.msra.mxu0 0.0
    %882 = vmatprep.subr.mxu0 0.0
    %883 = vmatpush1.msra.mxu0 0.0
    %884 = vmatprep.subr.mxu0 0.0
    %885 = vmatpush1.msra.mxu0 0.0
    %886 = vmatprep.subr.mxu0 0.0
    %887 = vmatpush1.msra.mxu0 0.0
    %888 = vmatprep.subr.mxu0 0.0
    %889 = vmatpush1.msra.mxu0 0.0
    %890 = vmatprep.subr.mxu0 0.0
    %891 = vmatpush1.msra.mxu0 0.0
    %892 = vmatprep.subr.mxu0 0.0
    %893 = vmatpush1.msra.mxu0 0.0
    %894 = vmatprep.subr.mxu0 0.0
    %895 = vmatpush1.msra.mxu0 0.0
    %896 = vmatprep.subr.mxu0 0.0
    %897 = vmatpush1.msra.mxu0 0.0
    %898 = vmatprep.subr.mxu0 0.0
    %899 = vmatpush1.msra.mxu0 0.0
    %900 = vmatprep.subr.mxu0 0.0
    %901 = vmatpush1.msra.mxu0 0.0
    %902 = vmatprep.subr.mxu0 0.0
    %903 = vmatpush1.msra.mxu0 0.0
    %904 = vmatprep.subr.mxu0 0.0
    %905 = vmatpush1.msra.mxu0 0.0
    %906 = vmatprep.subr.mxu0 0.0
    %907 = vmatpush1.msra.mxu0 0.0
    %908 = vmatprep.subr.mxu0 0.0
    %909 = vmatpush1.msra.mxu0 0.0
    %910 = vmatprep.subr.mxu0 0.0
    %911 = vmatpush1.msra.mxu0 0.0
    %912 = vmatprep.subr.mxu0 0.0
    %913 = vmatpush1.msra.mxu0 0.0
    %914 = vmatprep.subr.mxu0 0.0
    %915 = vmatpush1.msra.mxu0 0.0
    %916 = vmatprep.subr.mxu0 0.0
    %917 = vmatpush1.msra.mxu0 0.0
    %918 = vmatprep.subr.mxu0 0.0
    %919 = vmatpush1.msra.mxu0 0.0
    %920 = vmatprep.subr.mxu0 0.0
    %921 = vmatpush1.msra.mxu0 0.0
    %922 = vmatprep.subr.mxu0 0.0
    %923 = vmatpush1.msra.mxu0 0.0
    %924 = vmatprep.subr.mxu0 0.0
    %925 = vmatpush1.msra.mxu0 0.0
    %926 = vmatprep.mubr.f32.mxu0 0.0
    %927 = vmatmul.mubr.f32.gmra.mrb[0].mxu0 %v860
    %v928 = vpop.f32.mrb[0].mxu0
    %v929 = vadd.f32 0.0, %v928
    %v930 = vpop.f32.mrb[0].mxu0
    %931 = vdwg.mxu0
    %932 = vrot.lane.b32.xlu0 %v350, 64
    %v933 = vpop.permute.xlu0 %932
    %v936 = vsel %vm353, %v703, 0
    %938 = vmatprep.subr.mxu0 0.0
    %939 = vmatpush1.msra.mxu0 %v933
    %940 = vmatprep.subr.mxu0 0.0
    %941 = vmatpush1.msra.mxu0 0.0
    %942 = vmatprep.subr.mxu0 0.0
    %943 = vmatpush1.msra.mxu0 0.0
    %944 = vmatprep.subr.mxu0 0.0
    %945 = vmatpush1.msra.mxu0 0.0
    %946 = vmatprep.subr.mxu0 0.0
    %947 = vmatpush1.msra.mxu0 0.0
    %948 = vmatprep.subr.mxu0 0.0
    %949 = vmatpush1.msra.mxu0 0.0
    %950 = vmatprep.subr.mxu0 0.0
    %951 = vmatpush1.msra.mxu0 0.0
    %952 = vmatprep.subr.mxu0 0.0
    %953 = vmatpush1.msra.mxu0 0.0
    %954 = vmatprep.subr.mxu0 0.0
    %955 = vmatpush1.msra.mxu0 0.0
    %956 = vmatprep.subr.mxu0 0.0
    %957 = vmatpush1.msra.mxu0 0.0
    %958 = vmatprep.subr.mxu0 0.0
    %959 = vmatpush1.msra.mxu0 0.0
    %960 = vmatprep.subr.mxu0 0.0
    %961 = vmatpush1.msra.mxu0 0.0
    %962 = vmatprep.subr.mxu0 0.0
    %963 = vmatpush1.msra.mxu0 0.0
    %964 = vmatprep.subr.mxu0 0.0
    %965 = vmatpush1.msra.mxu0 0.0
    %966 = vmatprep.subr.mxu0 0.0
    %967 = vmatpush1.msra.mxu0 0.0
    %968 = vmatprep.subr.mxu0 0.0
    %969 = vmatpush1.msra.mxu0 0.0
    %970 = vmatprep.subr.mxu0 0.0
    %971 = vmatpush1.msra.mxu0 0.0
    %972 = vmatprep.subr.mxu0 0.0
    %973 = vmatpush1.msra.mxu0 0.0
    %974 = vmatprep.subr.mxu0 0.0
    %975 = vmatpush1.msra.mxu0 0.0
    %976 = vmatprep.subr.mxu0 0.0
    %977 = vmatpush1.msra.mxu0 0.0
    %978 = vmatprep.subr.mxu0 0.0
    %979 = vmatpush1.msra.mxu0 0.0
    %980 = vmatprep.subr.mxu0 0.0
    %981 = vmatpush1.msra.mxu0 0.0
    %982 = vmatprep.subr.mxu0 0.0
    %983 = vmatpush1.msra.mxu0 0.0
    %984 = vmatprep.subr.mxu0 0.0
    %985 = vmatpush1.msra.mxu0 0.0
    %986 = vmatprep.subr.mxu0 0.0
    %987 = vmatpush1.msra.mxu0 0.0
    %988 = vmatprep.subr.mxu0 0.0
    %989 = vmatpush1.msra.mxu0 0.0
    %990 = vmatprep.subr.mxu0 0.0
    %991 = vmatpush1.msra.mxu0 0.0
    %992 = vmatprep.subr.mxu0 0.0
    %993 = vmatpush1.msra.mxu0 0.0
    %994 = vmatprep.subr.mxu0 0.0
    %995 = vmatpush1.msra.mxu0 0.0
    %996 = vmatprep.subr.mxu0 0.0
    %997 = vmatpush1.msra.mxu0 0.0
    %998 = vmatprep.subr.mxu0 0.0
    %999 = vmatpush1.msra.mxu0 0.0
    %1000 = vmatprep.subr.mxu0 0.0
    %1001 = vmatpush1.msra.mxu0 0.0
    %1002 = vmatprep.mubr.f32.mxu0 0.0
    %1003 = vmatmul.mubr.f32.gmra.mrb[0].mxu0 %v936
    %v1004 = vpop.f32.mrb[0].mxu0
    %v1005 = vadd.f32 0.0, %v1004
    %v1006 = vpop.f32.mrb[0].mxu0
    %1007 = vdwg.mxu0
    %v1009 = vsel %vm353, %v777, 0
    %1011 = vmatprep.subr.mxu0 0.0
    %1012 = vmatpush1.msra.mxu0 %v339
    %1013 = vmatprep.subr.mxu0 0.0
    %1014 = vmatpush1.msra.mxu0 0.0
    %1015 = vmatprep.subr.mxu0 0.0
    %1016 = vmatpush1.msra.mxu0 0.0
    %1017 = vmatprep.subr.mxu0 0.0
    %1018 = vmatpush1.msra.mxu0 0.0
    %1019 = vmatprep.subr.mxu0 0.0
    %1020 = vmatpush1.msra.mxu0 0.0
    %1021 = vmatprep.subr.mxu0 0.0
    %1022 = vmatpush1.msra.mxu0 0.0
    %1023 = vmatprep.subr.mxu0 0.0
    %1024 = vmatpush1.msra.mxu0 0.0
    %1025 = vmatprep.subr.mxu0 0.0
    %1026 = vmatpush1.msra.mxu0 0.0
    %1027 = vmatprep.subr.mxu0 0.0
    %1028 = vmatpush1.msra.mxu0 0.0
    %1029 = vmatprep.subr.mxu0 0.0
    %1030 = vmatpush1.msra.mxu0 0.0
    %1031 = vmatprep.subr.mxu0 0.0
    %1032 = vmatpush1.msra.mxu0 0.0
    %1033 = vmatprep.subr.mxu0 0.0
    %1034 = vmatpush1.msra.mxu0 0.0
    %1035 = vmatprep.subr.mxu0 0.0
    %1036 = vmatpush1.msra.mxu0 0.0
    %1037 = vmatprep.subr.mxu0 0.0
    %1038 = vmatpush1.msra.mxu0 0.0
    %1039 = vmatprep.subr.mxu0 0.0
    %1040 = vmatpush1.msra.mxu0 0.0
    %1041 = vmatprep.subr.mxu0 0.0
    %1042 = vmatpush1.msra.mxu0 0.0
    %1043 = vmatprep.subr.mxu0 0.0
    %1044 = vmatpush1.msra.mxu0 0.0
    %1045 = vmatprep.subr.mxu0 0.0
    %1046 = vmatpush1.msra.mxu0 0.0
    %1047 = vmatprep.subr.mxu0 0.0
    %1048 = vmatpush1.msra.mxu0 0.0
    %1049 = vmatprep.subr.mxu0 0.0
    %1050 = vmatpush1.msra.mxu0 0.0
    %1051 = vmatprep.subr.mxu0 0.0
    %1052 = vmatpush1.msra.mxu0 0.0
    %1053 = vmatprep.subr.mxu0 0.0
    %1054 = vmatpush1.msra.mxu0 0.0
    %1055 = vmatprep.subr.mxu0 0.0
    %1056 = vmatpush1.msra.mxu0 0.0
    %1057 = vmatprep.subr.mxu0 0.0
    %1058 = vmatpush1.msra.mxu0 0.0
    %1059 = vmatprep.subr.mxu0 0.0
    %1060 = vmatpush1.msra.mxu0 0.0
    %1061 = vmatprep.subr.mxu0 0.0
    %1062 = vmatpush1.msra.mxu0 0.0
    %1063 = vmatprep.subr.mxu0 0.0
    %1064 = vmatpush1.msra.mxu0 0.0
    %1065 = vmatprep.subr.mxu0 0.0
    %1066 = vmatpush1.msra.mxu0 0.0
    %1067 = vmatprep.subr.mxu0 0.0
    %1068 = vmatpush1.msra.mxu0 0.0
    %1069 = vmatprep.subr.mxu0 0.0
    %1070 = vmatpush1.msra.mxu0 0.0
    %1071 = vmatprep.subr.mxu0 0.0
    %1072 = vmatpush1.msra.mxu0 0.0
    %1073 = vmatprep.subr.mxu0 0.0
    %1074 = vmatpush1.msra.mxu0 0.0
    %1075 = vmatprep.mubr.f32.mxu0 0.0
    %1076 = vmatmul.mubr.f32.gmra.mrb[0].mxu0 %v1009
    %v1077 = vpop.f32.mrb[0].mxu0
    %v1078 = vadd.f32 0.0, %v1077
    %v1079 = vpop.f32.mrb[0].mxu0
    %1080 = vdwg.mxu0
    %v1082 = vsel %vm353, %v853, 0
    %1084 = vmatprep.subr.mxu0 0.0
    %1085 = vmatpush1.msra.mxu0 %v340
    %1086 = vmatprep.subr.mxu0 0.0
    %1087 = vmatpush1.msra.mxu0 0.0
    %1088 = vmatprep.subr.mxu0 0.0
    %1089 = vmatpush1.msra.mxu0 0.0
    %1090 = vmatprep.subr.mxu0 0.0
    %1091 = vmatpush1.msra.mxu0 0.0
    %1092 = vmatprep.subr.mxu0 0.0
    %1093 = vmatpush1.msra.mxu0 0.0
    %1094 = vmatprep.subr.mxu0 0.0
    %1095 = vmatpush1.msra.mxu0 0.0
    %1096 = vmatprep.subr.mxu0 0.0
    %1097 = vmatpush1.msra.mxu0 0.0
    %1098 = vmatprep.subr.mxu0 0.0
    %1099 = vmatpush1.msra.mxu0 0.0
    %1100 = vmatprep.subr.mxu0 0.0
    %1101 = vmatpush1.msra.mxu0 0.0
    %1102 = vmatprep.subr.mxu0 0.0
    %1103 = vmatpush1.msra.mxu0 0.0
    %1104 = vmatprep.subr.mxu0 0.0
    %1105 = vmatpush1.msra.mxu0 0.0
    %1106 = vmatprep.subr.mxu0 0.0
    %1107 = vmatpush1.msra.mxu0 0.0
    %1108 = vmatprep.subr.mxu0 0.0
    %1109 = vmatpush1.msra.mxu0 0.0
    %1110 = vmatprep.subr.mxu0 0.0
    %1111 = vmatpush1.msra.mxu0 0.0
    %1112 = vmatprep.subr.mxu0 0.0
    %1113 = vmatpush1.msra.mxu0 0.0
    %1114 = vmatprep.subr.mxu0 0.0
    %1115 = vmatpush1.msra.mxu0 0.0
    %1116 = vmatprep.subr.mxu0 0.0
    %1117 = vmatpush1.msra.mxu0 0.0
    %1118 = vmatprep.subr.mxu0 0.0
    %1119 = vmatpush1.msra.mxu0 0.0
    %1120 = vmatprep.subr.mxu0 0.0
    %1121 = vmatpush1.msra.mxu0 0.0
    %1122 = vmatprep.subr.mxu0 0.0
    %1123 = vmatpush1.msra.mxu0 0.0
    %1124 = vmatprep.subr.mxu0 0.0
    %1125 = vmatpush1.msra.mxu0 0.0
    %1126 = vmatprep.subr.mxu0 0.0
    %1127 = vmatpush1.msra.mxu0 0.0
    %1128 = vmatprep.subr.mxu0 0.0
    %1129 = vmatpush1.msra.mxu0 0.0
    %1130 = vmatprep.subr.mxu0 0.0
    %1131 = vmatpush1.msra.mxu0 0.0
    %1132 = vmatprep.subr.mxu0 0.0
    %1133 = vmatpush1.msra.mxu0 0.0
    %1134 = vmatprep.subr.mxu0 0.0
    %1135 = vmatpush1.msra.mxu0 0.0
    %1136 = vmatprep.subr.mxu0 0.0
    %1137 = vmatpush1.msra.mxu0 0.0
    %1138 = vmatprep.subr.mxu0 0.0
    %1139 = vmatpush1.msra.mxu0 0.0
    %1140 = vmatprep.subr.mxu0 0.0
    %1141 = vmatpush1.msra.mxu0 0.0
    %1142 = vmatprep.subr.mxu0 0.0
    %1143 = vmatpush1.msra.mxu0 0.0
    %1144 = vmatprep.subr.mxu0 0.0
    %1145 = vmatpush1.msra.mxu0 0.0
    %1146 = vmatprep.subr.mxu0 0.0
    %1147 = vmatpush1.msra.mxu0 0.0
    %1148 = vmatprep.mubr.f32.mxu0 0.0
    %1149 = vmatmul.mubr.f32.gmra.mrb[0].mxu0 %v1082
    %v1150 = vpop.f32.mrb[0].mxu0
    %v1151 = vadd.f32 0.0, %v1150
    %v1152 = vpop.f32.mrb[0].mxu0
    %1153 = vdwg.mxu0
    %v1155 = vsel %vm353, %v929, 0
    %1157 = vmatprep.subr.mxu0 0.0
    %1158 = vmatpush1.msra.mxu0 %v341
    %1159 = vmatprep.subr.mxu0 0.0
    %1160 = vmatpush1.msra.mxu0 0.0
    %1161 = vmatprep.subr.mxu0 0.0
    %1162 = vmatpush1.msra.mxu0 0.0
    %1163 = vmatprep.subr.mxu0 0.0
    %1164 = vmatpush1.msra.mxu0 0.0
    %1165 = vmatprep.subr.mxu0 0.0
    %1166 = vmatpush1.msra.mxu0 0.0
    %1167 = vmatprep.subr.mxu0 0.0
    %1168 = vmatpush1.msra.mxu0 0.0
    %1169 = vmatprep.subr.mxu0 0.0
    %1170 = vmatpush1.msra.mxu0 0.0
    %1171 = vmatprep.subr.mxu0 0.0
    %1172 = vmatpush1.msra.mxu0 0.0
    %1173 = vmatprep.subr.mxu0 0.0
    %1174 = vmatpush1.msra.mxu0 0.0
    %1175 = vmatprep.subr.mxu0 0.0
    %1176 = vmatpush1.msra.mxu0 0.0
    %1177 = vmatprep.subr.mxu0 0.0
    %1178 = vmatpush1.msra.mxu0 0.0
    %1179 = vmatprep.subr.mxu0 0.0
    %1180 = vmatpush1.msra.mxu0 0.0
    %1181 = vmatprep.subr.mxu0 0.0
    %1182 = vmatpush1.msra.mxu0 0.0
    %1183 = vmatprep.subr.mxu0 0.0
    %1184 = vmatpush1.msra.mxu0 0.0
    %1185 = vmatprep.subr.mxu0 0.0
    %1186 = vmatpush1.msra.mxu0 0.0
    %1187 = vmatprep.subr.mxu0 0.0
    %1188 = vmatpush1.msra.mxu0 0.0
    %1189 = vmatprep.subr.mxu0 0.0
    %1190 = vmatpush1.msra.mxu0 0.0
    %1191 = vmatprep.subr.mxu0 0.0
    %1192 = vmatpush1.msra.mxu0 0.0
    %1193 = vmatprep.subr.mxu0 0.0
    %1194 = vmatpush1.msra.mxu0 0.0
    %1195 = vmatprep.subr.mxu0 0.0
    %1196 = vmatpush1.msra.mxu0 0.0
    %1197 = vmatprep.subr.mxu0 0.0
    %1198 = vmatpush1.msra.mxu0 0.0
    %1199 = vmatprep.subr.mxu0 0.0
    %1200 = vmatpush1.msra.mxu0 0.0
    %1201 = vmatprep.subr.mxu0 0.0
    %1202 = vmatpush1.msra.mxu0 0.0
    %1203 = vmatprep.subr.mxu0 0.0
    %1204 = vmatpush1.msra.mxu0 0.0
    %1205 = vmatprep.subr.mxu0 0.0
    %1206 = vmatpush1.msra.mxu0 0.0
    %1207 = vmatprep.subr.mxu0 0.0
    %1208 = vmatpush1.msra.mxu0 0.0
    %1209 = vmatprep.subr.mxu0 0.0
    %1210 = vmatpush1.msra.mxu0 0.0
    %1211 = vmatprep.subr.mxu0 0.0
    %1212 = vmatpush1.msra.mxu0 0.0
    %1213 = vmatprep.subr.mxu0 0.0
    %1214 = vmatpush1.msra.mxu0 0.0
    %1215 = vmatprep.subr.mxu0 0.0
    %1216 = vmatpush1.msra.mxu0 0.0
    %1217 = vmatprep.subr.mxu0 0.0
    %1218 = vmatpush1.msra.mxu0 0.0
    %1219 = vmatprep.subr.mxu0 0.0
    %1220 = vmatpush1.msra.mxu0 0.0
    %1221 = vmatprep.mubr.f32.mxu0 0.0
    %1222 = vmatmul.mubr.f32.gmra.mrb[0].mxu0 %v1155
    %v1223 = vpop.f32.mrb[0].mxu0
    %v1224 = vadd.f32 0.0, %v1223
    %v1225 = vpop.f32.mrb[0].mxu0
    %1226 = vdwg.mxu0
    %v1228 = vsel %vm353, %v1005, 0
    %1230 = vmatprep.subr.mxu0 0.0
    %1231 = vmatpush1.msra.mxu0 %v342
    %1232 = vmatprep.subr.mxu0 0.0
    %1233 = vmatpush1.msra.mxu0 0.0
    %1234 = vmatprep.subr.mxu0 0.0
    %1235 = vmatpush1.msra.mxu0 0.0
    %1236 = vmatprep.subr.mxu0 0.0
    %1237 = vmatpush1.msra.mxu0 0.0
    %1238 = vmatprep.subr.mxu0 0.0
    %1239 = vmatpush1.msra.mxu0 0.0
    %1240 = vmatprep.subr.mxu0 0.0
    %1241 = vmatpush1.msra.mxu0 0.0
    %1242 = vmatprep.subr.mxu0 0.0
    %1243 = vmatpush1.msra.mxu0 0.0
    %1244 = vmatprep.subr.mxu0 0.0
    %1245 = vmatpush1.msra.mxu0 0.0
    %1246 = vmatprep.subr.mxu0 0.0
    %1247 = vmatpush1.msra.mxu0 0.0
    %1248 = vmatprep.subr.mxu0 0.0
    %1249 = vmatpush1.msra.mxu0 0.0
    %1250 = vmatprep.subr.mxu0 0.0
    %1251 = vmatpush1.msra.mxu0 0.0
    %1252 = vmatprep.subr.mxu0 0.0
    %1253 = vmatpush1.msra.mxu0 0.0
    %1254 = vmatprep.subr.mxu0 0.0
    %1255 = vmatpush1.msra.mxu0 0.0
    %1256 = vmatprep.subr.mxu0 0.0
    %1257 = vmatpush1.msra.mxu0 0.0
    %1258 = vmatprep.subr.mxu0 0.0
    %1259 = vmatpush1.msra.mxu0 0.0
    %1260 = vmatprep.subr.mxu0 0.0
    %1261 = vmatpush1.msra.mxu0 0.0
    %1262 = vmatprep.subr.mxu0 0.0
    %1263 = vmatpush1.msra.mxu0 0.0
    %1264 = vmatprep.subr.mxu0 0.0
    %1265 = vmatpush1.msra.mxu0 0.0
    %1266 = vmatprep.subr.mxu0 0.0
    %1267 = vmatpush1.msra.mxu0 0.0
    %1268 = vmatprep.subr.mxu0 0.0
    %1269 = vmatpush1.msra.mxu0 0.0
    %1270 = vmatprep.subr.mxu0 0.0
    %1271 = vmatpush1.msra.mxu0 0.0
    %1272 = vmatprep.subr.mxu0 0.0
    %1273 = vmatpush1.msra.mxu0 0.0
    %1274 = vmatprep.subr.mxu0 0.0
    %1275 = vmatpush1.msra.mxu0 0.0
    %1276 = vmatprep.subr.mxu0 0.0
    %1277 = vmatpush1.msra.mxu0 0.0
    %1278 = vmatprep.subr.mxu0 0.0
    %1279 = vmatpush1.msra.mxu0 0.0
    %1280 = vmatprep.subr.mxu0 0.0
    %1281 = vmatpush1.msra.mxu0 0.0
    %1282 = vmatprep.subr.mxu0 0.0
    %1283 = vmatpush1.msra.mxu0 0.0
    %1284 = vmatprep.subr.mxu0 0.0
    %1285 = vmatpush1.msra.mxu0 0.0
    %1286 = vmatprep.subr.mxu0 0.0
    %1287 = vmatpush1.msra.mxu0 0.0
    %1288 = vmatprep.subr.mxu0 0.0
    %1289 = vmatpush1.msra.mxu0 0.0
    %1290 = vmatprep.subr.mxu0 0.0
    %1291 = vmatpush1.msra.mxu0 0.0
    %1292 = vmatprep.subr.mxu0 0.0
    %1293 = vmatpush1.msra.mxu0 0.0
    %1294 = vmatprep.mubr.f32.mxu0 0.0
    %1295 = vmatmul.mubr.f32.gmra.mrb[0].mxu0 %v1228
    %v1296 = vpop.f32.mrb[0].mxu0
    %v1297 = vadd.f32 0.0, %v1296
    %v1298 = vpop.f32.mrb[0].mxu0
    %1299 = vdwg.mxu0
    %v1300 = vsel %vm257, %v1078, 0.0
    %v1301 = vsel %vm257, %v1151, 0.0
    %v1302 = vadd.f32 %v1300, %v1301
    %v1303 = vsel %vm257, %v1224, 0.0
    %v1304 = vadd.f32 %v1302, %v1303
    %v1305 = vsel %vm257, %v1297, 0.0
    %v1306 = vadd.f32 %v1304, %v1305
    %1308 = vrot.lane.b32.xlu0 %v336, 120
    %v1309 = vpop.permute.xlu0 %1308
    %1310 = vrot.lane.b32.xlu0 %v336, 112
    %v1311 = vpop.permute.xlu0 %1310
    %1312 = vrot.lane.b32.xlu0 %v336, 104
    %v1313 = vpop.permute.xlu0 %1312
    %1314 = vrot.lane.b32.xlu0 %v336, 96
    %v1315 = vpop.permute.xlu0 %1314
    %v1316 = vsel %vm353, %v336, 0
    %v1318 = vsel %vm353, %v1315, 0
    %1320 = vmatprep.subr.mxu0 0.0
    %1321 = vmatpush1.xpose.msra.mxu0 %v1318
    %1322 = vmatprep.subr.mxu0 0.0
    %1323 = vmatpush1.xpose.msra.mxu0 0.0
    %1324 = vmatprep.subr.mxu0 0.0
    %1325 = vmatpush1.xpose.msra.mxu0 0.0
    %1326 = vmatprep.subr.mxu0 0.0
    %1327 = vmatpush1.xpose.msra.mxu0 0.0
    %1328 = vmatprep.subr.mxu0 0.0
    %1329 = vmatpush1.xpose.msra.mxu0 0.0
    %1330 = vmatprep.subr.mxu0 0.0
    %1331 = vmatpush1.xpose.msra.mxu0 0.0
    %1332 = vmatprep.subr.mxu0 0.0
    %1333 = vmatpush1.xpose.msra.mxu0 0.0
    %1334 = vmatprep.subr.mxu0 0.0
    %1335 = vmatpush1.xpose.msra.mxu0 0.0
    %1336 = vmatprep.subr.mxu0 0.0
    %1337 = vmatpush1.xpose.msra.mxu0 0.0
    %1338 = vmatprep.subr.mxu0 0.0
    %1339 = vmatpush1.xpose.msra.mxu0 0.0
    %1340 = vmatprep.subr.mxu0 0.0
    %1341 = vmatpush1.xpose.msra.mxu0 0.0
    %1342 = vmatprep.subr.mxu0 0.0
    %1343 = vmatpush1.xpose.msra.mxu0 0.0
    %1344 = vmatprep.subr.mxu0 0.0
    %1345 = vmatpush1.xpose.msra.mxu0 0.0
    %1346 = vmatprep.subr.mxu0 0.0
    %1347 = vmatpush1.xpose.msra.mxu0 0.0
    %1348 = vmatprep.subr.mxu0 0.0
    %1349 = vmatpush1.xpose.msra.mxu0 0.0
    %1350 = vmatprep.subr.mxu0 0.0
    %1351 = vmatpush1.xpose.msra.mxu0 0.0
    %1352 = vmatprep.subr.mxu0 0.0
    %1353 = vmatpush1.xpose.msra.mxu0 0.0
    %1354 = vmatprep.subr.mxu0 0.0
    %1355 = vmatpush1.xpose.msra.mxu0 0.0
    %1356 = vmatprep.subr.mxu0 0.0
    %1357 = vmatpush1.xpose.msra.mxu0 0.0
    %1358 = vmatprep.subr.mxu0 0.0
    %1359 = vmatpush1.xpose.msra.mxu0 0.0
    %1360 = vmatprep.subr.mxu0 0.0
    %1361 = vmatpush1.xpose.msra.mxu0 0.0
    %1362 = vmatprep.subr.mxu0 0.0
    %1363 = vmatpush1.xpose.msra.mxu0 0.0
    %1364 = vmatprep.subr.mxu0 0.0
    %1365 = vmatpush1.xpose.msra.mxu0 0.0
    %1366 = vmatprep.subr.mxu0 0.0
    %1367 = vmatpush1.xpose.msra.mxu0 0.0
    %1368 = vmatprep.subr.mxu0 0.0
    %1369 = vmatpush1.xpose.msra.mxu0 0.0
    %1370 = vmatprep.subr.mxu0 0.0
    %1371 = vmatpush1.xpose.msra.mxu0 0.0
    %1372 = vmatprep.subr.mxu0 0.0
    %1373 = vmatpush1.xpose.msra.mxu0 0.0
    %1374 = vmatprep.subr.mxu0 0.0
    %1375 = vmatpush1.xpose.msra.mxu0 0.0
    %1376 = vmatprep.subr.mxu0 0.0
    %1377 = vmatpush1.xpose.msra.mxu0 0.0
    %1378 = vmatprep.subr.mxu0 0.0
    %1379 = vmatpush1.xpose.msra.mxu0 0.0
    %1380 = vmatprep.subr.mxu0 0.0
    %1381 = vmatpush1.xpose.msra.mxu0 0.0
    %1382 = vmatprep.subr.mxu0 0.0
    %1383 = vmatpush1.xpose.msra.mxu0 0.0
    %1384 = vmatprep.mubr.f32.mxu0 0.0
    %1385 = vmatmul.mubr.f32.gmra.mrb[0].mxu0 %v1316
    %v1386 = vpop.f32.mrb[0].mxu0
    %v1387 = vadd.f32 0.0, %v1386
    %v1388 = vpop.f32.mrb[0].mxu0
    %1389 = vdwg.mxu0
    %1390 = vrot.lane.b32.xlu0 %v1309, 96
    %v1391 = vpop.permute.xlu0 %1390
    %v1392 = vsel %vm353, %v1309, 0
    %v1394 = vsel %vm353, %v1391, 0
    %1396 = vmatprep.subr.mxu0 0.0
    %1397 = vmatpush1.xpose.msra.mxu0 %v1394
    %1398 = vmatprep.subr.mxu0 0.0
    %1399 = vmatpush1.xpose.msra.mxu0 0.0
    %1400 = vmatprep.subr.mxu0 0.0
    %1401 = vmatpush1.xpose.msra.mxu0 0.0
    %1402 = vmatprep.subr.mxu0 0.0
    %1403 = vmatpush1.xpose.msra.mxu0 0.0
    %1404 = vmatprep.subr.mxu0 0.0
    %1405 = vmatpush1.xpose.msra.mxu0 0.0
    %1406 = vmatprep.subr.mxu0 0.0
    %1407 = vmatpush1.xpose.msra.mxu0 0.0
    %1408 = vmatprep.subr.mxu0 0.0
    %1409 = vmatpush1.xpose.msra.mxu0 0.0
    %1410 = vmatprep.subr.mxu0 0.0
    %1411 = vmatpush1.xpose.msra.mxu0 0.0
    %1412 = vmatprep.subr.mxu0 0.0
    %1413 = vmatpush1.xpose.msra.mxu0 0.0
    %1414 = vmatprep.subr.mxu0 0.0
    %1415 = vmatpush1.xpose.msra.mxu0 0.0
    %1416 = vmatprep.subr.mxu0 0.0
    %1417 = vmatpush1.xpose.msra.mxu0 0.0
    %1418 = vmatprep.subr.mxu0 0.0
    %1419 = vmatpush1.xpose.msra.mxu0 0.0
    %1420 = vmatprep.subr.mxu0 0.0
    %1421 = vmatpush1.xpose.msra.mxu0 0.0
    %1422 = vmatprep.subr.mxu0 0.0
    %1423 = vmatpush1.xpose.msra.mxu0 0.0
    %1424 = vmatprep.subr.mxu0 0.0
    %1425 = vmatpush1.xpose.msra.mxu0 0.0
    %1426 = vmatprep.subr.mxu0 0.0
    %1427 = vmatpush1.xpose.msra.mxu0 0.0
    %1428 = vmatprep.subr.mxu0 0.0
    %1429 = vmatpush1.xpose.msra.mxu0 0.0
    %1430 = vmatprep.subr.mxu0 0.0
    %1431 = vmatpush1.xpose.msra.mxu0 0.0
    %1432 = vmatprep.subr.mxu0 0.0
    %1433 = vmatpush1.xpose.msra.mxu0 0.0
    %1434 = vmatprep.subr.mxu0 0.0
    %1435 = vmatpush1.xpose.msra.mxu0 0.0
    %1436 = vmatprep.subr.mxu0 0.0
    %1437 = vmatpush1.xpose.msra.mxu0 0.0
    %1438 = vmatprep.subr.mxu0 0.0
    %1439 = vmatpush1.xpose.msra.mxu0 0.0
    %1440 = vmatprep.subr.mxu0 0.0
    %1441 = vmatpush1.xpose.msra.mxu0 0.0
    %1442 = vmatprep.subr.mxu0 0.0
    %1443 = vmatpush1.xpose.msra.mxu0 0.0
    %1444 = vmatprep.subr.mxu0 0.0
    %1445 = vmatpush1.xpose.msra.mxu0 0.0
    %1446 = vmatprep.subr.mxu0 0.0
    %1447 = vmatpush1.xpose.msra.mxu0 0.0
    %1448 = vmatprep.subr.mxu0 0.0
    %1449 = vmatpush1.xpose.msra.mxu0 0.0
    %1450 = vmatprep.subr.mxu0 0.0
    %1451 = vmatpush1.xpose.msra.mxu0 0.0
    %1452 = vmatprep.subr.mxu0 0.0
    %1453 = vmatpush1.xpose.msra.mxu0 0.0
    %1454 = vmatprep.subr.mxu0 0.0
    %1455 = vmatpush1.xpose.msra.mxu0 0.0
    %1456 = vmatprep.subr.mxu0 0.0
    %1457 = vmatpush1.xpose.msra.mxu0 0.0
    %1458 = vmatprep.subr.mxu0 0.0
    %1459 = vmatpush1.xpose.msra.mxu0 0.0
    %1460 = vmatprep.mubr.f32.mxu0 0.0
    %1461 = vmatmul.mubr.f32.gmra.mrb[0].mxu0 %v1392
    %v1462 = vpop.f32.mrb[0].mxu0
    %v1463 = vadd.f32 0.0, %v1462
    %v1464 = vpop.f32.mrb[0].mxu0
    %1465 = vdwg.mxu0
    %1466 = vrot.lane.b32.xlu0 %v1311, 96
    %v1467 = vpop.permute.xlu0 %1466
    %v1468 = vsel %vm353, %v1311, 0
    %v1470 = vsel %vm353, %v1467, 0
    %1472 = vmatprep.subr.mxu0 0.0
    %1473 = vmatpush1.xpose.msra.mxu0 %v1470
    %1474 = vmatprep.subr.mxu0 0.0
    %1475 = vmatpush1.xpose.msra.mxu0 0.0
    %1476 = vmatprep.subr.mxu0 0.0
    %1477 = vmatpush1.xpose.msra.mxu0 0.0
    %1478 = vmatprep.subr.mxu0 0.0
    %1479 = vmatpush1.xpose.msra.mxu0 0.0
    %1480 = vmatprep.subr.mxu0 0.0
    %1481 = vmatpush1.xpose.msra.mxu0 0.0
    %1482 = vmatprep.subr.mxu0 0.0
    %1483 = vmatpush1.xpose.msra.mxu0 0.0
    %1484 = vmatprep.subr.mxu0 0.0
    %1485 = vmatpush1.xpose.msra.mxu0 0.0
    %1486 = vmatprep.subr.mxu0 0.0
    %1487 = vmatpush1.xpose.msra.mxu0 0.0
    %1488 = vmatprep.subr.mxu0 0.0
    %1489 = vmatpush1.xpose.msra.mxu0 0.0
    %1490 = vmatprep.subr.mxu0 0.0
    %1491 = vmatpush1.xpose.msra.mxu0 0.0
    %1492 = vmatprep.subr.mxu0 0.0
    %1493 = vmatpush1.xpose.msra.mxu0 0.0
    %1494 = vmatprep.subr.mxu0 0.0
    %1495 = vmatpush1.xpose.msra.mxu0 0.0
    %1496 = vmatprep.subr.mxu0 0.0
    %1497 = vmatpush1.xpose.msra.mxu0 0.0
    %1498 = vmatprep.subr.mxu0 0.0
    %1499 = vmatpush1.xpose.msra.mxu0 0.0
    %1500 = vmatprep.subr.mxu0 0.0
    %1501 = vmatpush1.xpose.msra.mxu0 0.0
    %1502 = vmatprep.subr.mxu0 0.0
    %1503 = vmatpush1.xpose.msra.mxu0 0.0
    %1504 = vmatprep.subr.mxu0 0.0
    %1505 = vmatpush1.xpose.msra.mxu0 0.0
    %1506 = vmatprep.subr.mxu0 0.0
    %1507 = vmatpush1.xpose.msra.mxu0 0.0
    %1508 = vmatprep.subr.mxu0 0.0
    %1509 = vmatpush1.xpose.msra.mxu0 0.0
    %1510 = vmatprep.subr.mxu0 0.0
    %1511 = vmatpush1.xpose.msra.mxu0 0.0
    %1512 = vmatprep.subr.mxu0 0.0
    %1513 = vmatpush1.xpose.msra.mxu0 0.0
    %1514 = vmatprep.subr.mxu0 0.0
    %1515 = vmatpush1.xpose.msra.mxu0 0.0
    %1516 = vmatprep.subr.mxu0 0.0
    %1517 = vmatpush1.xpose.msra.mxu0 0.0
    %1518 = vmatprep.subr.mxu0 0.0
    %1519 = vmatpush1.xpose.msra.mxu0 0.0
    %1520 = vmatprep.subr.mxu0 0.0
    %1521 = vmatpush1.xpose.msra.mxu0 0.0
    %1522 = vmatprep.subr.mxu0 0.0
    %1523 = vmatpush1.xpose.msra.mxu0 0.0
    %1524 = vmatprep.subr.mxu0 0.0
    %1525 = vmatpush1.xpose.msra.mxu0 0.0
    %1526 = vmatprep.subr.mxu0 0.0
    %1527 = vmatpush1.xpose.msra.mxu0 0.0
    %1528 = vmatprep.subr.mxu0 0.0
    %1529 = vmatpush1.xpose.msra.mxu0 0.0
    %1530 = vmatprep.subr.mxu0 0.0
    %1531 = vmatpush1.xpose.msra.mxu0 0.0
    %1532 = vmatprep.subr.mxu0 0.0
    %1533 = vmatpush1.xpose.msra.mxu0 0.0
    %1534 = vmatprep.subr.mxu0 0.0
    %1535 = vmatpush1.xpose.msra.mxu0 0.0
    %1536 = vmatprep.mubr.f32.mxu0 0.0
    %1537 = vmatmul.mubr.f32.gmra.mrb[0].mxu0 %v1468
    %v1538 = vpop.f32.mrb[0].mxu0
    %v1539 = vadd.f32 0.0, %v1538
    %v1540 = vpop.f32.mrb[0].mxu0
    %1541 = vdwg.mxu0
    %1542 = vrot.lane.b32.xlu0 %v1313, 96
    %v1543 = vpop.permute.xlu0 %1542
    %v1544 = vsel %vm353, %v1313, 0
    %v1546 = vsel %vm353, %v1543, 0
    %1548 = vmatprep.subr.mxu0 0.0
    %1549 = vmatpush1.xpose.msra.mxu0 %v1546
    %1550 = vmatprep.subr.mxu0 0.0
    %1551 = vmatpush1.xpose.msra.mxu0 0.0
    %1552 = vmatprep.subr.mxu0 0.0
    %1553 = vmatpush1.xpose.msra.mxu0 0.0
    %1554 = vmatprep.subr.mxu0 0.0
    %1555 = vmatpush1.xpose.msra.mxu0 0.0
    %1556 = vmatprep.subr.mxu0 0.0
    %1557 = vmatpush1.xpose.msra.mxu0 0.0
    %1558 = vmatprep.subr.mxu0 0.0
    %1559 = vmatpush1.xpose.msra.mxu0 0.0
    %1560 = vmatprep.subr.mxu0 0.0
    %1561 = vmatpush1.xpose.msra.mxu0 0.0
    %1562 = vmatprep.subr.mxu0 0.0
    %1563 = vmatpush1.xpose.msra.mxu0 0.0
    %1564 = vmatprep.subr.mxu0 0.0
    %1565 = vmatpush1.xpose.msra.mxu0 0.0
    %1566 = vmatprep.subr.mxu0 0.0
    %1567 = vmatpush1.xpose.msra.mxu0 0.0
    %1568 = vmatprep.subr.mxu0 0.0
    %1569 = vmatpush1.xpose.msra.mxu0 0.0
    %1570 = vmatprep.subr.mxu0 0.0
    %1571 = vmatpush1.xpose.msra.mxu0 0.0
    %1572 = vmatprep.subr.mxu0 0.0
    %1573 = vmatpush1.xpose.msra.mxu0 0.0
    %1574 = vmatprep.subr.mxu0 0.0
    %1575 = vmatpush1.xpose.msra.mxu0 0.0
    %1576 = vmatprep.subr.mxu0 0.0
    %1577 = vmatpush1.xpose.msra.mxu0 0.0
    %1578 = vmatprep.subr.mxu0 0.0
    %1579 = vmatpush1.xpose.msra.mxu0 0.0
    %1580 = vmatprep.subr.mxu0 0.0
    %1581 = vmatpush1.xpose.msra.mxu0 0.0
    %1582 = vmatprep.subr.mxu0 0.0
    %1583 = vmatpush1.xpose.msra.mxu0 0.0
    %1584 = vmatprep.subr.mxu0 0.0
    %1585 = vmatpush1.xpose.msra.mxu0 0.0
    %1586 = vmatprep.subr.mxu0 0.0
    %1587 = vmatpush1.xpose.msra.mxu0 0.0
    %1588 = vmatprep.subr.mxu0 0.0
    %1589 = vmatpush1.xpose.msra.mxu0 0.0
    %1590 = vmatprep.subr.mxu0 0.0
    %1591 = vmatpush1.xpose.msra.mxu0 0.0
    %1592 = vmatprep.subr.mxu0 0.0
    %1593 = vmatpush1.xpose.msra.mxu0 0.0
    %1594 = vmatprep.subr.mxu0 0.0
    %1595 = vmatpush1.xpose.msra.mxu0 0.0
    %1596 = vmatprep.subr.mxu0 0.0
    %1597 = vmatpush1.xpose.msra.mxu0 0.0
    %1598 = vmatprep.subr.mxu0 0.0
    %1599 = vmatpush1.xpose.msra.mxu0 0.0
    %1600 = vmatprep.subr.mxu0 0.0
    %1601 = vmatpush1.xpose.msra.mxu0 0.0
    %1602 = vmatprep.subr.mxu0 0.0
    %1603 = vmatpush1.xpose.msra.mxu0 0.0
    %1604 = vmatprep.subr.mxu0 0.0
    %1605 = vmatpush1.xpose.msra.mxu0 0.0
    %1606 = vmatprep.subr.mxu0 0.0
    %1607 = vmatpush1.xpose.msra.mxu0 0.0
    %1608 = vmatprep.subr.mxu0 0.0
    %1609 = vmatpush1.xpose.msra.mxu0 0.0
    %1610 = vmatprep.subr.mxu0 0.0
    %1611 = vmatpush1.xpose.msra.mxu0 0.0
    %1612 = vmatprep.mubr.f32.mxu0 0.0
    %1613 = vmatmul.mubr.f32.gmra.mrb[0].mxu0 %v1544
    %v1614 = vpop.f32.mrb[0].mxu0
    %v1615 = vadd.f32 0.0, %v1614
    %v1616 = vpop.f32.mrb[0].mxu0
    %1617 = vdwg.mxu0
    %v1618 = vsel %vm353, %v1387, -inf
    %1619 = vmax.xlane.f32.xlu0 %v1618
    %v1620 = vpop.xlane.xlu0 %1619
    %v1621 = vsel %vm353, %v1463, -inf
    %1622 = vmax.xlane.f32.xlu0 %v1621
    %v1623 = vpop.xlane.xlu0 %1622
    %v1624 = vsel %vm353, %v1539, -inf
    %1625 = vmax.xlane.f32.xlu0 %v1624
    %v1626 = vpop.xlane.xlu0 %1625
    %v1627 = vsel %vm353, %v1615, -inf
    %1628 = vmax.xlane.f32.xlu0 %v1627
    %v1629 = vpop.xlane.xlu0 %1628
    %v1630 = vsub.f32 %v1387, %v1620
    %v1631 = vsub.f32 %v1463, %v1623
    %v1632 = vsub.f32 %v1539, %v1626
    %v1633 = vsub.f32 %v1615, %v1629
    %v1634 = vmul.f32 %v1630, 1.442695
    %v1635 = vpow.pop %v1634
    %v1636 = vmul.f32 %v1631, 1.442695
    %v1637 = vpow.pop %v1636
    %v1638 = vmul.f32 %v1632, 1.442695
    %v1639 = vpow.pop %v1638
    %v1640 = vmul.f32 %v1633, 1.442695
    %v1641 = vpow.pop %v1640
    %v1642 = vsel %vm353, %v1635, 0.0
    %1643 = vadd.xlane.f32.xlu0 %v1642
    %v1644 = vpop.xlane.xlu0 %1643
    %v1645 = vsel %vm353, %v1637, 0.0
    %1646 = vadd.xlane.f32.xlu0 %v1645
    %v1647 = vpop.xlane.xlu0 %1646
    %v1648 = vsel %vm353, %v1639, 0.0
    %1649 = vadd.xlane.f32.xlu0 %v1648
    %v1650 = vpop.xlane.xlu0 %1649
    %v1651 = vsel %vm353, %v1641, 0.0
    %1652 = vadd.xlane.f32.xlu0 %v1651
    %v1653 = vpop.xlane.xlu0 %1652
    %v1654 = vrcp.pop %v1644
    %v1655 = vmul.f32 1.0, %v1654
    %v1656 = vrcp.pop %v1647
    %v1657 = vmul.f32 1.0, %v1656
    %v1658 = vrcp.pop %v1650
    %v1659 = vmul.f32 1.0, %v1658
    %v1660 = vrcp.pop %v1653
    %v1661 = vmul.f32 1.0, %v1660
    %v1662 = vmul.f32 %v1635, %v1655
    %v1663 = vmul.f32 %v1637, %v1657
    %v1664 = vmul.f32 %v1639, %v1659
    %v1665 = vmul.f32 %v1641, %v1661
    %1666 = vrot.lane.b32.xlu0 %v336, 64
    %v1667 = vpop.permute.xlu0 %1666
    %v1670 = vsel %vm353, %v1662, 0
    %1672 = vmatprep.subr.mxu0 0.0
    %1673 = vmatpush1.msra.mxu0 %v1667
    %1674 = vmatprep.subr.mxu0 0.0
    %1675 = vmatpush1.msra.mxu0 0.0
    %1676 = vmatprep.subr.mxu0 0.0
    %1677 = vmatpush1.msra.mxu0 0.0
    %1678 = vmatprep.subr.mxu0 0.0
    %1679 = vmatpush1.msra.mxu0 0.0
    %1680 = vmatprep.subr.mxu0 0.0
    %1681 = vmatpush1.msra.mxu0 0.0
    %1682 = vmatprep.subr.mxu0 0.0
    %1683 = vmatpush1.msra.mxu0 0.0
    %1684 = vmatprep.subr.mxu0 0.0
    %1685 = vmatpush1.msra.mxu0 0.0
    %1686 = vmatprep.subr.mxu0 0.0
    %1687 = vmatpush1.msra.mxu0 0.0
    %1688 = vmatprep.subr.mxu0 0.0
    %1689 = vmatpush1.msra.mxu0 0.0
    %1690 = vmatprep.subr.mxu0 0.0
    %1691 = vmatpush1.msra.mxu0 0.0
    %1692 = vmatprep.subr.mxu0 0.0
    %1693 = vmatpush1.msra.mxu0 0.0
    %1694 = vmatprep.subr.mxu0 0.0
    %1695 = vmatpush1.msra.mxu0 0.0
    %1696 = vmatprep.subr.mxu0 0.0
    %1697 = vmatpush1.msra.mxu0 0.0
    %1698 = vmatprep.subr.mxu0 0.0
    %1699 = vmatpush1.msra.mxu0 0.0
    %1700 = vmatprep.subr.mxu0 0.0
    %1701 = vmatpush1.msra.mxu0 0.0
    %1702 = vmatprep.subr.mxu0 0.0
    %1703 = vmatpush1.msra.mxu0 0.0
    %1704 = vmatprep.subr.mxu0 0.0
    %1705 = vmatpush1.msra.mxu0 0.0
    %1706 = vmatprep.subr.mxu0 0.0
    %1707 = vmatpush1.msra.mxu0 0.0
    %1708 = vmatprep.subr.mxu0 0.0
    %1709 = vmatpush1.msra.mxu0 0.0
    %1710 = vmatprep.subr.mxu0 0.0
    %1711 = vmatpush1.msra.mxu0 0.0
    %1712 = vmatprep.subr.mxu0 0.0
    %1713 = vmatpush1.msra.mxu0 0.0
    %1714 = vmatprep.subr.mxu0 0.0
    %1715 = vmatpush1.msra.mxu0 0.0
    %1716 = vmatprep.subr.mxu0 0.0
    %1717 = vmatpush1.msra.mxu0 0.0
    %1718 = vmatprep.subr.mxu0 0.0
    %1719 = vmatpush1.msra.mxu0 0.0
    %1720 = vmatprep.subr.mxu0 0.0
    %1721 = vmatpush1.msra.mxu0 0.0
    %1722 = vmatprep.subr.mxu0 0.0
    %1723 = vmatpush1.msra.mxu0 0.0
    %1724 = vmatprep.subr.mxu0 0.0
    %1725 = vmatpush1.msra.mxu0 0.0
    %1726 = vmatprep.subr.mxu0 0.0
    %1727 = vmatpush1.msra.mxu0 0.0
    %1728 = vmatprep.subr.mxu0 0.0
    %1729 = vmatpush1.msra.mxu0 0.0
    %1730 = vmatprep.subr.mxu0 0.0
    %1731 = vmatpush1.msra.mxu0 0.0
    %1732 = vmatprep.subr.mxu0 0.0
    %1733 = vmatpush1.msra.mxu0 0.0
    %1734 = vmatprep.subr.mxu0 0.0
    %1735 = vmatpush1.msra.mxu0 0.0
    %1736 = vmatprep.mubr.f32.mxu0 0.0
    %1737 = vmatmul.mubr.f32.gmra.mrb[0].mxu0 %v1670
    %v1738 = vpop.f32.mrb[0].mxu0
    %v1739 = vadd.f32 0.0, %v1738
    %v1740 = vpop.f32.mrb[0].mxu0
    %1741 = vdwg.mxu0
    %1742 = vrot.lane.b32.xlu0 %v1309, 64
    %v1743 = vpop.permute.xlu0 %1742
    %v1746 = vsel %vm353, %v1663, 0
    %1748 = vmatprep.subr.mxu0 0.0
    %1749 = vmatpush1.msra.mxu0 %v1743
    %1750 = vmatprep.subr.mxu0 0.0
    %1751 = vmatpush1.msra.mxu0 0.0
    %1752 = vmatprep.subr.mxu0 0.0
    %1753 = vmatpush1.msra.mxu0 0.0
    %1754 = vmatprep.subr.mxu0 0.0
    %1755 = vmatpush1.msra.mxu0 0.0
    %1756 = vmatprep.subr.mxu0 0.0
    %1757 = vmatpush1.msra.mxu0 0.0
    %1758 = vmatprep.subr.mxu0 0.0
    %1759 = vmatpush1.msra.mxu0 0.0
    %1760 = vmatprep.subr.mxu0 0.0
    %1761 = vmatpush1.msra.mxu0 0.0
    %1762 = vmatprep.subr.mxu0 0.0
    %1763 = vmatpush1.msra.mxu0 0.0
    %1764 = vmatprep.subr.mxu0 0.0
    %1765 = vmatpush1.msra.mxu0 0.0
    %1766 = vmatprep.subr.mxu0 0.0
    %1767 = vmatpush1.msra.mxu0 0.0
    %1768 = vmatprep.subr.mxu0 0.0
    %1769 = vmatpush1.msra.mxu0 0.0
    %1770 = vmatprep.subr.mxu0 0.0
    %1771 = vmatpush1.msra.mxu0 0.0
    %1772 = vmatprep.subr.mxu0 0.0
    %1773 = vmatpush1.msra.mxu0 0.0
    %1774 = vmatprep.subr.mxu0 0.0
    %1775 = vmatpush1.msra.mxu0 0.0
    %1776 = vmatprep.subr.mxu0 0.0
    %1777 = vmatpush1.msra.mxu0 0.0
    %1778 = vmatprep.subr.mxu0 0.0
    %1779 = vmatpush1.msra.mxu0 0.0
    %1780 = vmatprep.subr.mxu0 0.0
    %1781 = vmatpush1.msra.mxu0 0.0
    %1782 = vmatprep.subr.mxu0 0.0
    %1783 = vmatpush1.msra.mxu0 0.0
    %1784 = vmatprep.subr.mxu0 0.0
    %1785 = vmatpush1.msra.mxu0 0.0
    %1786 = vmatprep.subr.mxu0 0.0
    %1787 = vmatpush1.msra.mxu0 0.0
    %1788 = vmatprep.subr.mxu0 0.0
    %1789 = vmatpush1.msra.mxu0 0.0
    %1790 = vmatprep.subr.mxu0 0.0
    %1791 = vmatpush1.msra.mxu0 0.0
    %1792 = vmatprep.subr.mxu0 0.0
    %1793 = vmatpush1.msra.mxu0 0.0
    %1794 = vmatprep.subr.mxu0 0.0
    %1795 = vmatpush1.msra.mxu0 0.0
    %1796 = vmatprep.subr.mxu0 0.0
    %1797 = vmatpush1.msra.mxu0 0.0
    %1798 = vmatprep.subr.mxu0 0.0
    %1799 = vmatpush1.msra.mxu0 0.0
    %1800 = vmatprep.subr.mxu0 0.0
    %1801 = vmatpush1.msra.mxu0 0.0
    %1802 = vmatprep.subr.mxu0 0.0
    %1803 = vmatpush1.msra.mxu0 0.0
    %1804 = vmatprep.subr.mxu0 0.0
    %1805 = vmatpush1.msra.mxu0 0.0
    %1806 = vmatprep.subr.mxu0 0.0
    %1807 = vmatpush1.msra.mxu0 0.0
    %1808 = vmatprep.subr.mxu0 0.0
    %1809 = vmatpush1.msra.mxu0 0.0
    %1810 = vmatprep.subr.mxu0 0.0
    %1811 = vmatpush1.msra.mxu0 0.0
    %1812 = vmatprep.mubr.f32.mxu0 0.0
    %1813 = vmatmul.mubr.f32.gmra.mrb[0].mxu0 %v1746
    %v1814 = vpop.f32.mrb[0].mxu0
    %v1815 = vadd.f32 0.0, %v1814
    %v1816 = vpop.f32.mrb[0].mxu0
    %1817 = vdwg.mxu0
    %1818 = vrot.lane.b32.xlu0 %v1311, 64
    %v1819 = vpop.permute.xlu0 %1818
    %v1822 = vsel %vm353, %v1664, 0
    %1824 = vmatprep.subr.mxu0 0.0
    %1825 = vmatpush1.msra.mxu0 %v1819
    %1826 = vmatprep.subr.mxu0 0.0
    %1827 = vmatpush1.msra.mxu0 0.0
    %1828 = vmatprep.subr.mxu0 0.0
    %1829 = vmatpush1.msra.mxu0 0.0
    %1830 = vmatprep.subr.mxu0 0.0
    %1831 = vmatpush1.msra.mxu0 0.0
    %1832 = vmatprep.subr.mxu0 0.0
    %1833 = vmatpush1.msra.mxu0 0.0
    %1834 = vmatprep.subr.mxu0 0.0
    %1835 = vmatpush1.msra.mxu0 0.0
    %1836 = vmatprep.subr.mxu0 0.0
    %1837 = vmatpush1.msra.mxu0 0.0
    %1838 = vmatprep.subr.mxu0 0.0
    %1839 = vmatpush1.msra.mxu0 0.0
    %1840 = vmatprep.subr.mxu0 0.0
    %1841 = vmatpush1.msra.mxu0 0.0
    %1842 = vmatprep.subr.mxu0 0.0
    %1843 = vmatpush1.msra.mxu0 0.0
    %1844 = vmatprep.subr.mxu0 0.0
    %1845 = vmatpush1.msra.mxu0 0.0
    %1846 = vmatprep.subr.mxu0 0.0
    %1847 = vmatpush1.msra.mxu0 0.0
    %1848 = vmatprep.subr.mxu0 0.0
    %1849 = vmatpush1.msra.mxu0 0.0
    %1850 = vmatprep.subr.mxu0 0.0
    %1851 = vmatpush1.msra.mxu0 0.0
    %1852 = vmatprep.subr.mxu0 0.0
    %1853 = vmatpush1.msra.mxu0 0.0
    %1854 = vmatprep.subr.mxu0 0.0
    %1855 = vmatpush1.msra.mxu0 0.0
    %1856 = vmatprep.subr.mxu0 0.0
    %1857 = vmatpush1.msra.mxu0 0.0
    %1858 = vmatprep.subr.mxu0 0.0
    %1859 = vmatpush1.msra.mxu0 0.0
    %1860 = vmatprep.subr.mxu0 0.0
    %1861 = vmatpush1.msra.mxu0 0.0
    %1862 = vmatprep.subr.mxu0 0.0
    %1863 = vmatpush1.msra.mxu0 0.0
    %1864 = vmatprep.subr.mxu0 0.0
    %1865 = vmatpush1.msra.mxu0 0.0
    %1866 = vmatprep.subr.mxu0 0.0
    %1867 = vmatpush1.msra.mxu0 0.0
    %1868 = vmatprep.subr.mxu0 0.0
    %1869 = vmatpush1.msra.mxu0 0.0
    %1870 = vmatprep.subr.mxu0 0.0
    %1871 = vmatpush1.msra.mxu0 0.0
    %1872 = vmatprep.subr.mxu0 0.0
    %1873 = vmatpush1.msra.mxu0 0.0
    %1874 = vmatprep.subr.mxu0 0.0
    %1875 = vmatpush1.msra.mxu0 0.0
    %1876 = vmatprep.subr.mxu0 0.0
    %1877 = vmatpush1.msra.mxu0 0.0
    %1878 = vmatprep.subr.mxu0 0.0
    %1879 = vmatpush1.msra.mxu0 0.0
    %1880 = vmatprep.subr.mxu0 0.0
    %1881 = vmatpush1.msra.mxu0 0.0
    %1882 = vmatprep.subr.mxu0 0.0
    %1883 = vmatpush1.msra.mxu0 0.0
    %1884 = vmatprep.subr.mxu0 0.0
    %1885 = vmatpush1.msra.mxu0 0.0
    %1886 = vmatprep.subr.mxu0 0.0
    %1887 = vmatpush1.msra.mxu0 0.0
    %1888 = vmatprep.mubr.f32.mxu0 0.0
    %1889 = vmatmul.mubr.f32.gmra.mrb[0].mxu0 %v1822
    %v1890 = vpop.f32.mrb[0].mxu0
    %v1891 = vadd.f32 0.0, %v1890
    %v1892 = vpop.f32.mrb[0].mxu0
    %1893 = vdwg.mxu0
    %1894 = vrot.lane.b32.xlu0 %v1313, 64
    %v1895 = vpop.permute.xlu0 %1894
    %v1898 = vsel %vm353, %v1665, 0
    %1900 = vmatprep.subr.mxu0 0.0
    %1901 = vmatpush1.msra.mxu0 %v1895
    %1902 = vmatprep.subr.mxu0 0.0
    %1903 = vmatpush1.msra.mxu0 0.0
    %1904 = vmatprep.subr.mxu0 0.0
    %1905 = vmatpush1.msra.mxu0 0.0
    %1906 = vmatprep.subr.mxu0 0.0
    %1907 = vmatpush1.msra.mxu0 0.0
    %1908 = vmatprep.subr.mxu0 0.0
    %1909 = vmatpush1.msra.mxu0 0.0
    %1910 = vmatprep.subr.mxu0 0.0
    %1911 = vmatpush1.msra.mxu0 0.0
    %1912 = vmatprep.subr.mxu0 0.0
    %1913 = vmatpush1.msra.mxu0 0.0
    %1914 = vmatprep.subr.mxu0 0.0
    %1915 = vmatpush1.msra.mxu0 0.0
    %1916 = vmatprep.subr.mxu0 0.0
    %1917 = vmatpush1.msra.mxu0 0.0
    %1918 = vmatprep.subr.mxu0 0.0
    %1919 = vmatpush1.msra.mxu0 0.0
    %1920 = vmatprep.subr.mxu0 0.0
    %1921 = vmatpush1.msra.mxu0 0.0
    %1922 = vmatprep.subr.mxu0 0.0
    %1923 = vmatpush1.msra.mxu0 0.0
    %1924 = vmatprep.subr.mxu0 0.0
    %1925 = vmatpush1.msra.mxu0 0.0
    %1926 = vmatprep.subr.mxu0 0.0
    %1927 = vmatpush1.msra.mxu0 0.0
    %1928 = vmatprep.subr.mxu0 0.0
    %1929 = vmatpush1.msra.mxu0 0.0
    %1930 = vmatprep.subr.mxu0 0.0
    %1931 = vmatpush1.msra.mxu0 0.0
    %1932 = vmatprep.subr.mxu0 0.0
    %1933 = vmatpush1.msra.mxu0 0.0
    %1934 = vmatprep.subr.mxu0 0.0
    %1935 = vmatpush1.msra.mxu0 0.0
    %1936 = vmatprep.subr.mxu0 0.0
    %1937 = vmatpush1.msra.mxu0 0.0
    %1938 = vmatprep.subr.mxu0 0.0
    %1939 = vmatpush1.msra.mxu0 0.0
    %1940 = vmatprep.subr.mxu0 0.0
    %1941 = vmatpush1.msra.mxu0 0.0
    %1942 = vmatprep.subr.mxu0 0.0
    %1943 = vmatpush1.msra.mxu0 0.0
    %1944 = vmatprep.subr.mxu0 0.0
    %1945 = vmatpush1.msra.mxu0 0.0
    %1946 = vmatprep.subr.mxu0 0.0
    %1947 = vmatpush1.msra.mxu0 0.0
    %1948 = vmatprep.subr.mxu0 0.0
    %1949 = vmatpush1.msra.mxu0 0.0
    %1950 = vmatprep.subr.mxu0 0.0
    %1951 = vmatpush1.msra.mxu0 0.0
    %1952 = vmatprep.subr.mxu0 0.0
    %1953 = vmatpush1.msra.mxu0 0.0
    %1954 = vmatprep.subr.mxu0 0.0
    %1955 = vmatpush1.msra.mxu0 0.0
    %1956 = vmatprep.subr.mxu0 0.0
    %1957 = vmatpush1.msra.mxu0 0.0
    %1958 = vmatprep.subr.mxu0 0.0
    %1959 = vmatpush1.msra.mxu0 0.0
    %1960 = vmatprep.subr.mxu0 0.0
    %1961 = vmatpush1.msra.mxu0 0.0
    %1962 = vmatprep.subr.mxu0 0.0
    %1963 = vmatpush1.msra.mxu0 0.0
    %1964 = vmatprep.mubr.f32.mxu0 0.0
    %1965 = vmatmul.mubr.f32.gmra.mrb[0].mxu0 %v1898
    %v1966 = vpop.f32.mrb[0].mxu0
    %v1967 = vadd.f32 0.0, %v1966
    %v1968 = vpop.f32.mrb[0].mxu0
    %1969 = vdwg.mxu0
    %v1971 = vsel %vm353, %v1739, 0
    %1973 = vmatprep.subr.mxu0 0.0
    %1974 = vmatpush1.msra.mxu0 %v339
    %1975 = vmatprep.subr.mxu0 0.0
    %1976 = vmatpush1.msra.mxu0 0.0
    %1977 = vmatprep.subr.mxu0 0.0
    %1978 = vmatpush1.msra.mxu0 0.0
    %1979 = vmatprep.subr.mxu0 0.0
    %1980 = vmatpush1.msra.mxu0 0.0
    %1981 = vmatprep.subr.mxu0 0.0
    %1982 = vmatpush1.msra.mxu0 0.0
    %1983 = vmatprep.subr.mxu0 0.0
    %1984 = vmatpush1.msra.mxu0 0.0
    %1985 = vmatprep.subr.mxu0 0.0
    %1986 = vmatpush1.msra.mxu0 0.0
    %1987 = vmatprep.subr.mxu0 0.0
    %1988 = vmatpush1.msra.mxu0 0.0
    %1989 = vmatprep.subr.mxu0 0.0
    %1990 = vmatpush1.msra.mxu0 0.0
    %1991 = vmatprep.subr.mxu0 0.0
    %1992 = vmatpush1.msra.mxu0 0.0
    %1993 = vmatprep.subr.mxu0 0.0
    %1994 = vmatpush1.msra.mxu0 0.0
    %1995 = vmatprep.subr.mxu0 0.0
    %1996 = vmatpush1.msra.mxu0 0.0
    %1997 = vmatprep.subr.mxu0 0.0
    %1998 = vmatpush1.msra.mxu0 0.0
    %1999 = vmatprep.subr.mxu0 0.0
    %2000 = vmatpush1.msra.mxu0 0.0
    %2001 = vmatprep.subr.mxu0 0.0
    %2002 = vmatpush1.msra.mxu0 0.0
    %2003 = vmatprep.subr.mxu0 0.0
    %2004 = vmatpush1.msra.mxu0 0.0
    %2005 = vmatprep.subr.mxu0 0.0
    %2006 = vmatpush1.msra.mxu0 0.0
    %2007 = vmatprep.subr.mxu0 0.0
    %2008 = vmatpush1.msra.mxu0 0.0
    %2009 = vmatprep.subr.mxu0 0.0
    %2010 = vmatpush1.msra.mxu0 0.0
    %2011 = vmatprep.subr.mxu0 0.0
    %2012 = vmatpush1.msra.mxu0 0.0
    %2013 = vmatprep.subr.mxu0 0.0
    %2014 = vmatpush1.msra.mxu0 0.0
    %2015 = vmatprep.subr.mxu0 0.0
    %2016 = vmatpush1.msra.mxu0 0.0
    %2017 = vmatprep.subr.mxu0 0.0
    %2018 = vmatpush1.msra.mxu0 0.0
    %2019 = vmatprep.subr.mxu0 0.0
    %2020 = vmatpush1.msra.mxu0 0.0
    %2021 = vmatprep.subr.mxu0 0.0
    %2022 = vmatpush1.msra.mxu0 0.0
    %2023 = vmatprep.subr.mxu0 0.0
    %2024 = vmatpush1.msra.mxu0 0.0
    %2025 = vmatprep.subr.mxu0 0.0
    %2026 = vmatpush1.msra.mxu0 0.0
    %2027 = vmatprep.subr.mxu0 0.0
    %2028 = vmatpush1.msra.mxu0 0.0
    %2029 = vmatprep.subr.mxu0 0.0
    %2030 = vmatpush1.msra.mxu0 0.0
    %2031 = vmatprep.subr.mxu0 0.0
    %2032 = vmatpush1.msra.mxu0 0.0
    %2033 = vmatprep.subr.mxu0 0.0
    %2034 = vmatpush1.msra.mxu0 0.0
    %2035 = vmatprep.subr.mxu0 0.0
    %2036 = vmatpush1.msra.mxu0 0.0
    %2037 = vmatprep.mubr.f32.mxu0 0.0
    %2038 = vmatmul.mubr.f32.gmra.mrb[0].mxu0 %v1971
    %v2039 = vpop.f32.mrb[0].mxu0
    %v2040 = vadd.f32 0.0, %v2039
    %v2041 = vpop.f32.mrb[0].mxu0
    %2042 = vdwg.mxu0
    %v2044 = vsel %vm353, %v1815, 0
    %2046 = vmatprep.subr.mxu0 0.0
    %2047 = vmatpush1.msra.mxu0 %v340
    %2048 = vmatprep.subr.mxu0 0.0
    %2049 = vmatpush1.msra.mxu0 0.0
    %2050 = vmatprep.subr.mxu0 0.0
    %2051 = vmatpush1.msra.mxu0 0.0
    %2052 = vmatprep.subr.mxu0 0.0
    %2053 = vmatpush1.msra.mxu0 0.0
    %2054 = vmatprep.subr.mxu0 0.0
    %2055 = vmatpush1.msra.mxu0 0.0
    %2056 = vmatprep.subr.mxu0 0.0
    %2057 = vmatpush1.msra.mxu0 0.0
    %2058 = vmatprep.subr.mxu0 0.0
    %2059 = vmatpush1.msra.mxu0 0.0
    %2060 = vmatprep.subr.mxu0 0.0
    %2061 = vmatpush1.msra.mxu0 0.0
    %2062 = vmatprep.subr.mxu0 0.0
    %2063 = vmatpush1.msra.mxu0 0.0
    %2064 = vmatprep.subr.mxu0 0.0
    %2065 = vmatpush1.msra.mxu0 0.0
    %2066 = vmatprep.subr.mxu0 0.0
    %2067 = vmatpush1.msra.mxu0 0.0
    %2068 = vmatprep.subr.mxu0 0.0
    %2069 = vmatpush1.msra.mxu0 0.0
    %2070 = vmatprep.subr.mxu0 0.0
    %2071 = vmatpush1.msra.mxu0 0.0
    %2072 = vmatprep.subr.mxu0 0.0
    %2073 = vmatpush1.msra.mxu0 0.0
    %2074 = vmatprep.subr.mxu0 0.0
    %2075 = vmatpush1.msra.mxu0 0.0
    %2076 = vmatprep.subr.mxu0 0.0
    %2077 = vmatpush1.msra.mxu0 0.0
    %2078 = vmatprep.subr.mxu0 0.0
    %2079 = vmatpush1.msra.mxu0 0.0
    %2080 = vmatprep.subr.mxu0 0.0
    %2081 = vmatpush1.msra.mxu0 0.0
    %2082 = vmatprep.subr.mxu0 0.0
    %2083 = vmatpush1.msra.mxu0 0.0
    %2084 = vmatprep.subr.mxu0 0.0
    %2085 = vmatpush1.msra.mxu0 0.0
    %2086 = vmatprep.subr.mxu0 0.0
    %2087 = vmatpush1.msra.mxu0 0.0
    %2088 = vmatprep.subr.mxu0 0.0
    %2089 = vmatpush1.msra.mxu0 0.0
    %2090 = vmatprep.subr.mxu0 0.0
    %2091 = vmatpush1.msra.mxu0 0.0
    %2092 = vmatprep.subr.mxu0 0.0
    %2093 = vmatpush1.msra.mxu0 0.0
    %2094 = vmatprep.subr.mxu0 0.0
    %2095 = vmatpush1.msra.mxu0 0.0
    %2096 = vmatprep.subr.mxu0 0.0
    %2097 = vmatpush1.msra.mxu0 0.0
    %2098 = vmatprep.subr.mxu0 0.0
    %2099 = vmatpush1.msra.mxu0 0.0
    %2100 = vmatprep.subr.mxu0 0.0
    %2101 = vmatpush1.msra.mxu0 0.0
    %2102 = vmatprep.subr.mxu0 0.0
    %2103 = vmatpush1.msra.mxu0 0.0
    %2104 = vmatprep.subr.mxu0 0.0
    %2105 = vmatpush1.msra.mxu0 0.0
    %2106 = vmatprep.subr.mxu0 0.0
    %2107 = vmatpush1.msra.mxu0 0.0
    %2108 = vmatprep.subr.mxu0 0.0
    %2109 = vmatpush1.msra.mxu0 0.0
    %2110 = vmatprep.mubr.f32.mxu0 0.0
    %2111 = vmatmul.mubr.f32.gmra.mrb[0].mxu0 %v2044
    %v2112 = vpop.f32.mrb[0].mxu0
    %v2113 = vadd.f32 0.0, %v2112
    %v2114 = vpop.f32.mrb[0].mxu0
    %2115 = vdwg.mxu0
    %v2117 = vsel %vm353, %v1891, 0
    %2119 = vmatprep.subr.mxu0 0.0
    %2120 = vmatpush1.msra.mxu0 %v341
    %2121 = vmatprep.subr.mxu0 0.0
    %2122 = vmatpush1.msra.mxu0 0.0
    %2123 = vmatprep.subr.mxu0 0.0
    %2124 = vmatpush1.msra.mxu0 0.0
    %2125 = vmatprep.subr.mxu0 0.0
    %2126 = vmatpush1.msra.mxu0 0.0
    %2127 = vmatprep.subr.mxu0 0.0
    %2128 = vmatpush1.msra.mxu0 0.0
    %2129 = vmatprep.subr.mxu0 0.0
    %2130 = vmatpush1.msra.mxu0 0.0
    %2131 = vmatprep.subr.mxu0 0.0
    %2132 = vmatpush1.msra.mxu0 0.0
    %2133 = vmatprep.subr.mxu0 0.0
    %2134 = vmatpush1.msra.mxu0 0.0
    %2135 = vmatprep.subr.mxu0 0.0
    %2136 = vmatpush1.msra.mxu0 0.0
    %2137 = vmatprep.subr.mxu0 0.0
    %2138 = vmatpush1.msra.mxu0 0.0
    %2139 = vmatprep.subr.mxu0 0.0
    %2140 = vmatpush1.msra.mxu0 0.0
    %2141 = vmatprep.subr.mxu0 0.0
    %2142 = vmatpush1.msra.mxu0 0.0
    %2143 = vmatprep.subr.mxu0 0.0
    %2144 = vmatpush1.msra.mxu0 0.0
    %2145 = vmatprep.subr.mxu0 0.0
    %2146 = vmatpush1.msra.mxu0 0.0
    %2147 = vmatprep.subr.mxu0 0.0
    %2148 = vmatpush1.msra.mxu0 0.0
    %2149 = vmatprep.subr.mxu0 0.0
    %2150 = vmatpush1.msra.mxu0 0.0
    %2151 = vmatprep.subr.mxu0 0.0
    %2152 = vmatpush1.msra.mxu0 0.0
    %2153 = vmatprep.subr.mxu0 0.0
    %2154 = vmatpush1.msra.mxu0 0.0
    %2155 = vmatprep.subr.mxu0 0.0
    %2156 = vmatpush1.msra.mxu0 0.0
    %2157 = vmatprep.subr.mxu0 0.0
    %2158 = vmatpush1.msra.mxu0 0.0
    %2159 = vmatprep.subr.mxu0 0.0
    %2160 = vmatpush1.msra.mxu0 0.0
    %2161 = vmatprep.subr.mxu0 0.0
    %2162 = vmatpush1.msra.mxu0 0.0
    %2163 = vmatprep.subr.mxu0 0.0
    %2164 = vmatpush1.msra.mxu0 0.0
    %2165 = vmatprep.subr.mxu0 0.0
    %2166 = vmatpush1.msra.mxu0 0.0
    %2167 = vmatprep.subr.mxu0 0.0
    %2168 = vmatpush1.msra.mxu0 0.0
    %2169 = vmatprep.subr.mxu0 0.0
    %2170 = vmatpush1.msra.mxu0 0.0
    %2171 = vmatprep.subr.mxu0 0.0
    %2172 = vmatpush1.msra.mxu0 0.0
    %2173 = vmatprep.subr.mxu0 0.0
    %2174 = vmatpush1.msra.mxu0 0.0
    %2175 = vmatprep.subr.mxu0 0.0
    %2176 = vmatpush1.msra.mxu0 0.0
    %2177 = vmatprep.subr.mxu0 0.0
    %2178 = vmatpush1.msra.mxu0 0.0
    %2179 = vmatprep.subr.mxu0 0.0
    %2180 = vmatpush1.msra.mxu0 0.0
    %2181 = vmatprep.subr.mxu0 0.0
    %2182 = vmatpush1.msra.mxu0 0.0
    %2183 = vmatprep.mubr.f32.mxu0 0.0
    %2184 = vmatmul.mubr.f32.gmra.mrb[0].mxu0 %v2117
    %v2185 = vpop.f32.mrb[0].mxu0
    %v2186 = vadd.f32 0.0, %v2185
    %v2187 = vpop.f32.mrb[0].mxu0
    %2188 = vdwg.mxu0
    %v2190 = vsel %vm353, %v1967, 0
    %2192 = vmatprep.subr.mxu0 0.0
    %2193 = vmatpush1.msra.mxu0 %v342
    %2194 = vmatprep.subr.mxu0 0.0
    %2195 = vmatpush1.msra.mxu0 0.0
    %2196 = vmatprep.subr.mxu0 0.0
    %2197 = vmatpush1.msra.mxu0 0.0
    %2198 = vmatprep.subr.mxu0 0.0
    %2199 = vmatpush1.msra.mxu0 0.0
    %2200 = vmatprep.subr.mxu0 0.0
    %2201 = vmatpush1.msra.mxu0 0.0
    %2202 = vmatprep.subr.mxu0 0.0
    %2203 = vmatpush1.msra.mxu0 0.0
    %2204 = vmatprep.subr.mxu0 0.0
    %2205 = vmatpush1.msra.mxu0 0.0
    %2206 = vmatprep.subr.mxu0 0.0
    %2207 = vmatpush1.msra.mxu0 0.0
    %2208 = vmatprep.subr.mxu0 0.0
    %2209 = vmatpush1.msra.mxu0 0.0
    %2210 = vmatprep.subr.mxu0 0.0
    %2211 = vmatpush1.msra.mxu0 0.0
    %2212 = vmatprep.subr.mxu0 0.0
    %2213 = vmatpush1.msra.mxu0 0.0
    %2214 = vmatprep.subr.mxu0 0.0
    %2215 = vmatpush1.msra.mxu0 0.0
    %2216 = vmatprep.subr.mxu0 0.0
    %2217 = vmatpush1.msra.mxu0 0.0
    %2218 = vmatprep.subr.mxu0 0.0
    %2219 = vmatpush1.msra.mxu0 0.0
    %2220 = vmatprep.subr.mxu0 0.0
    %2221 = vmatpush1.msra.mxu0 0.0
    %2222 = vmatprep.subr.mxu0 0.0
    %2223 = vmatpush1.msra.mxu0 0.0
    %2224 = vmatprep.subr.mxu0 0.0
    %2225 = vmatpush1.msra.mxu0 0.0
    %2226 = vmatprep.subr.mxu0 0.0
    %2227 = vmatpush1.msra.mxu0 0.0
    %2228 = vmatprep.subr.mxu0 0.0
    %2229 = vmatpush1.msra.mxu0 0.0
    %2230 = vmatprep.subr.mxu0 0.0
    %2231 = vmatpush1.msra.mxu0 0.0
    %2232 = vmatprep.subr.mxu0 0.0
    %2233 = vmatpush1.msra.mxu0 0.0
    %2234 = vmatprep.subr.mxu0 0.0
    %2235 = vmatpush1.msra.mxu0 0.0
    %2236 = vmatprep.subr.mxu0 0.0
    %2237 = vmatpush1.msra.mxu0 0.0
    %2238 = vmatprep.subr.mxu0 0.0
    %2239 = vmatpush1.msra.mxu0 0.0
    %2240 = vmatprep.subr.mxu0 0.0
    %2241 = vmatpush1.msra.mxu0 0.0
    %2242 = vmatprep.subr.mxu0 0.0
    %2243 = vmatpush1.msra.mxu0 0.0
    %2244 = vmatprep.subr.mxu0 0.0
    %2245 = vmatpush1.msra.mxu0 0.0
    %2246 = vmatprep.subr.mxu0 0.0
    %2247 = vmatpush1.msra.mxu0 0.0
    %2248 = vmatprep.subr.mxu0 0.0
    %2249 = vmatpush1.msra.mxu0 0.0
    %2250 = vmatprep.subr.mxu0 0.0
    %2251 = vmatpush1.msra.mxu0 0.0
    %2252 = vmatprep.subr.mxu0 0.0
    %2253 = vmatpush1.msra.mxu0 0.0
    %2254 = vmatprep.subr.mxu0 0.0
    %2255 = vmatpush1.msra.mxu0 0.0
    %2256 = vmatprep.mubr.f32.mxu0 0.0
    %2257 = vmatmul.mubr.f32.gmra.mrb[0].mxu0 %v2190
    %v2258 = vpop.f32.mrb[0].mxu0
    %v2259 = vadd.f32 0.0, %v2258
    %v2260 = vpop.f32.mrb[0].mxu0
    %2261 = vdwg.mxu0
    %v2262 = vsel %vm257, %v2040, 0.0
    %v2263 = vsel %vm257, %v2113, 0.0
    %v2264 = vadd.f32 %v2262, %v2263
    %v2265 = vsel %vm257, %v2186, 0.0
    %v2266 = vadd.f32 %v2264, %v2265
    %v2267 = vsel %vm257, %v2259, 0.0
    %v2268 = vadd.f32 %v2266, %v2267
    %v2270 = vlaneseq
    %v2271 = vshrl.u32 %v2270, 7
    %v2272 = vsub.s32 0, %v2271
    %v2273 = vrot.slane %v343, %v2272
    %v2275 = vadd.f32 %v1306, %v2273
    %v2276 = vadd.f32 %v2268, %v2273
    %v2277 = vadd.f32 %v242, %v2275
    %v2278 = vadd.f32 %v243, %v2276
    %v2279 = vld [vmem:[#allocation10] sm:$0x1]
    %v2280 = vld [vmem:[#allocation11] sm:$0x1]
    %v2281 = vsel %vm257, %v2277, 0.0
    %2282 = vadd.xlane.f32.xlu0 %v2281
    %v2283 = vpop.xlane.xlu0 %2282
    %v2284 = vsel %vm257, %v2278, 0.0
    %2285 = vadd.xlane.f32.xlu0 %v2284
    %v2286 = vpop.xlane.xlu0 %2285
    %v2287 = vrcp.pop 32.0
    %v2288 = vmul.f32 %v2283, %v2287
    %v2289 = vmul.f32 %v2286, %v2287
    %v2290 = vsub.f32 %v2277, %v2288
    %v2291 = vsub.f32 %v2278, %v2289
    %v2292 = vmul.f32 %v2290, %v2290
    %v2293 = vmul.f32 %v2291, %v2291
    %v2294 = vsel %vm257, %v2292, 0.0
    %2295 = vadd.xlane.f32.xlu0 %v2294
    %v2296 = vpop.xlane.xlu0 %2295
    %v2297 = vsel %vm257, %v2293, 0.0
    %2298 = vadd.xlane.f32.xlu0 %v2297
    %v2299 = vpop.xlane.xlu0 %2298
    %v2300 = vmul.f32 %v2296, 0.032258064
    %v2301 = vmul.f32 %v2299, 0.032258064
    %v2302 = vrsqrt.pop %v2300
    %v2303 = vmul.f32 %v2300, %v2302
    %vm2304 = vcmp.eq.f32.partialorder %v2300, inf
    %v2305 = vsel %vm2304, %v2300, %v2303
    %vm2306 = vcmp.eq.f32.partialorder %v2300, 0.0
    %v2307 = vand.u32 %v2300, 2147483648
    %v2308 = vsel %vm2306, %v2307, %v2305
    %v2309 = vrsqrt.pop %v2301
    %v2310 = vmul.f32 %v2301, %v2309
    %vm2311 = vcmp.eq.f32.partialorder %v2301, inf
    %v2312 = vsel %vm2311, %v2301, %v2310
    %vm2313 = vcmp.eq.f32.partialorder %v2301, 0.0
    %v2314 = vand.u32 %v2301, 2147483648
    %v2315 = vsel %vm2313, %v2314, %v2312
    %v2316 = vadd.f32 %v2308, 1e-12
    %v2317 = vadd.f32 %v2315, 1e-12
    %v2318 = vrcp.pop %v2316
    %v2319 = vmul.f32 1.0, %v2318
    %v2320 = vrcp.pop %v2317
    %v2321 = vmul.f32 1.0, %v2320
    %v2322 = vmul.f32 %v2290, %v2319
    %v2323 = vmul.f32 %v2291, %v2321
    %v2325 = vlaneseq
    %v2326 = vshrl.u32 %v2325, 7
    %v2327 = vsub.s32 0, %v2326
    %v2328 = vrot.slane %v2279, %v2327
    %v2330 = vmul.f32 %v2328, %v2322
    %v2331 = vmul.f32 %v2328, %v2323
    %v2333 = vlaneseq
    %v2334 = vshrl.u32 %v2333, 7
    %v2335 = vsub.s32 0, %v2334
    %v2336 = vrot.slane %v2280, %v2335
    %v2338 = vadd.f32 %v2330, %v2336
    %v2339 = vadd.f32 %v2331, %v2336
    %v2340 = vld [vmem:[%s8] sm:$0xff]
    %v2341 = vld [vmem:[%s8 + $0x8] sm:$0xff]
    %v2342 = vld [vmem:[%s8 + $0x10] sm:$0xff]
    %v2343 = vld [vmem:[%s8 + $0x18] sm:$0xff]
    %v2344 = vld [vmem:[#allocation13] sm:$0x1]
    %v2346 = vlaneseq
    %v2347 = vshrl.u32 %v2346, 7
    %v2348 = vsub.s32 0, %v2347
    %v2349 = vrot.slane %v2344, %v2348
    %v2352 = vsel %vm257, %v2338, 0
    %v2355 = vsel %vm257, %v2339, 0
    %2357 = vmatprep.subr.mxu0 0.0
    %2358 = vmatpush1.msra.mxu0 %v2340
    %2359 = vmatprep.subr.mxu0 0.0
    %2360 = vmatpush1.msra.mxu0 %v2341
    %2361 = vmatprep.subr.mxu0 0.0
    %2362 = vmatpush1.msra.mxu0 %v2342
    %2363 = vmatprep.subr.mxu0 0.0
    %2364 = vmatpush1.msra.mxu0 %v2343
    %2365 = vmatprep.subr.mxu0 0.0
    %2366 = vmatpush1.msra.mxu0 0.0
    %2367 = vmatprep.subr.mxu0 0.0
    %2368 = vmatpush1.msra.mxu0 0.0
    %2369 = vmatprep.subr.mxu0 0.0
    %2370 = vmatpush1.msra.mxu0 0.0
    %2371 = vmatprep.subr.mxu0 0.0
    %2372 = vmatpush1.msra.mxu0 0.0
    %2373 = vmatprep.subr.mxu0 0.0
    %2374 = vmatpush1.msra.mxu0 0.0
    %2375 = vmatprep.subr.mxu0 0.0
    %2376 = vmatpush1.msra.mxu0 0.0
    %2377 = vmatprep.subr.mxu0 0.0
    %2378 = vmatpush1.msra.mxu0 0.0
    %2379 = vmatprep.subr.mxu0 0.0
    %2380 = vmatpush1.msra.mxu0 0.0
    %2381 = vmatprep.subr.mxu0 0.0
    %2382 = vmatpush1.msra.mxu0 0.0
    %2383 = vmatprep.subr.mxu0 0.0
    %2384 = vmatpush1.msra.mxu0 0.0
    %2385 = vmatprep.subr.mxu0 0.0
    %2386 = vmatpush1.msra.mxu0 0.0
    %2387 = vmatprep.subr.mxu0 0.0
    %2388 = vmatpush1.msra.mxu0 0.0
    %2389 = vmatprep.subr.mxu0 0.0
    %2390 = vmatpush1.msra.mxu0 0.0
    %2391 = vmatprep.subr.mxu0 0.0
    %2392 = vmatpush1.msra.mxu0 0.0
    %2393 = vmatprep.subr.mxu0 0.0
    %2394 = vmatpush1.msra.mxu0 0.0
    %2395 = vmatprep.subr.mxu0 0.0
    %2396 = vmatpush1.msra.mxu0 0.0
    %2397 = vmatprep.subr.mxu0 0.0
    %2398 = vmatpush1.msra.mxu0 0.0
    %2399 = vmatprep.subr.mxu0 0.0
    %2400 = vmatpush1.msra.mxu0 0.0
    %2401 = vmatprep.subr.mxu0 0.0
    %2402 = vmatpush1.msra.mxu0 0.0
    %2403 = vmatprep.subr.mxu0 0.0
    %2404 = vmatpush1.msra.mxu0 0.0
    %2405 = vmatprep.subr.mxu0 0.0
    %2406 = vmatpush1.msra.mxu0 0.0
    %2407 = vmatprep.subr.mxu0 0.0
    %2408 = vmatpush1.msra.mxu0 0.0
    %2409 = vmatprep.subr.mxu0 0.0
    %2410 = vmatpush1.msra.mxu0 0.0
    %2411 = vmatprep.subr.mxu0 0.0
    %2412 = vmatpush1.msra.mxu0 0.0
    %2413 = vmatprep.subr.mxu0 0.0
    %2414 = vmatpush1.msra.mxu0 0.0
    %2415 = vmatprep.subr.mxu0 0.0
    %2416 = vmatpush1.msra.mxu0 0.0
    %2417 = vmatprep.subr.mxu0 0.0
    %2418 = vmatpush1.msra.mxu0 0.0
    %2419 = vmatprep.subr.mxu0 0.0
    %2420 = vmatpush1.msra.mxu0 0.0
    %2421 = vmatprep.mubr.f32.mxu0 0.0
    %2422 = vmatmul.mubr.f32.gmra.mrb[0].mxu0 %v2352
    %v2423 = vpop.f32.mrb[0].mxu0
    %v2424 = vadd.f32 %v2349, %v2423
    %v2425 = vpop.f32.mrb[0].mxu0
    %2426 = vmatprep.mubr.f32.mxu0 0.0
    %2427 = vmatmul.mubr.f32.gmra.mrb[0].mxu0 %v2355
    %v2428 = vpop.f32.mrb[0].mxu0
    %v2429 = vadd.f32 %v2349, %v2428
    %v2430 = vpop.f32.mrb[0].mxu0
    %2431 = vdwg.mxu0
    %v2432 = vld [vmem:[%s10] sm:$0xff]
    %v2433 = vld [vmem:[%s10 + $0x8] sm:$0xff]
    %v2434 = vld [vmem:[%s10 + $0x10] sm:$0xff]
    %v2435 = vld [vmem:[%s10 + $0x18] sm:$0xff]
    %v2436 = vld [vmem:[#allocation14] sm:$0x1]
    %v2438 = vlaneseq
    %v2439 = vshrl.u32 %v2438, 7
    %v2440 = vsub.s32 0, %v2439
    %v2441 = vrot.slane %v2436, %v2440
    %v2444 = vsel %vm257, %v244, 0
    %v2447 = vsel %vm257, %v245, 0
    %2449 = vmatprep.subr.mxu0 0.0
    %2450 = vmatpush1.msra.mxu0 %v2432
    %2451 = vmatprep.subr.mxu0 0.0
    %2452 = vmatpush1.msra.mxu0 %v2433
    %2453 = vmatprep.subr.mxu0 0.0
    %2454 = vmatpush1.msra.mxu0 %v2434
    %2455 = vmatprep.subr.mxu0 0.0
    %2456 = vmatpush1.msra.mxu0 %v2435
    %2457 = vmatprep.subr.mxu0 0.0
    %2458 = vmatpush1.msra.mxu0 0.0
    %2459 = vmatprep.subr.mxu0 0.0
    %2460 = vmatpush1.msra.mxu0 0.0
    %2461 = vmatprep.subr.mxu0 0.0
    %2462 = vmatpush1.msra.mxu0 0.0
    %2463 = vmatprep.subr.mxu0 0.0
    %2464 = vmatpush1.msra.mxu0 0.0
    %2465 = vmatprep.subr.mxu0 0.0
    %2466 = vmatpush1.msra.mxu0 0.0
    %2467 = vmatprep.subr.mxu0 0.0
    %2468 = vmatpush1.msra.mxu0 0.0
    %2469 = vmatprep.subr.mxu0 0.0
    %2470 = vmatpush1.msra.mxu0 0.0
    %2471 = vmatprep.subr.mxu0 0.0
    %2472 = vmatpush1.msra.mxu0 0.0
    %2473 = vmatprep.subr.mxu0 0.0
    %2474 = vmatpush1.msra.mxu0 0.0
    %2475 = vmatprep.subr.mxu0 0.0
    %2476 = vmatpush1.msra.mxu0 0.0
    %2477 = vmatprep.subr.mxu0 0.0
    %2478 = vmatpush1.msra.mxu0 0.0
    %2479 = vmatprep.subr.mxu0 0.0
    %2480 = vmatpush1.msra.mxu0 0.0
    %2481 = vmatprep.subr.mxu0 0.0
    %2482 = vmatpush1.msra.mxu0 0.0
    %2483 = vmatprep.subr.mxu0 0.0
    %2484 = vmatpush1.msra.mxu0 0.0
    %2485 = vmatprep.subr.mxu0 0.0
    %2486 = vmatpush1.msra.mxu0 0.0
    %2487 = vmatprep.subr.mxu0 0.0
    %2488 = vmatpush1.msra.mxu0 0.0
    %2489 = vmatprep.subr.mxu0 0.0
    %2490 = vmatpush1.msra.mxu0 0.0
    %2491 = vmatprep.subr.mxu0 0.0
    %2492 = vmatpush1.msra.mxu0 0.0
    %2493 = vmatprep.subr.mxu0 0.0
    %2494 = vmatpush1.msra.mxu0 0.0
    %2495 = vmatprep.subr.mxu0 0.0
    %2496 = vmatpush1.msra.mxu0 0.0
    %2497 = vmatprep.subr.mxu0 0.0
    %2498 = vmatpush1.msra.mxu0 0.0
    %2499 = vmatprep.subr.mxu0 0.0
    %2500 = vmatpush1.msra.mxu0 0.0
    %2501 = vmatprep.subr.mxu0 0.0
    %2502 = vmatpush1.msra.mxu0 0.0
    %2503 = vmatprep.subr.mxu0 0.0
    %2504 = vmatpush1.msra.mxu0 0.0
    %2505 = vmatprep.subr.mxu0 0.0
    %2506 = vmatpush1.msra.mxu0 0.0
    %2507 = vmatprep.subr.mxu0 0.0
    %2508 = vmatpush1.msra.mxu0 0.0
    %2509 = vmatprep.subr.mxu0 0.0
    %2510 = vmatpush1.msra.mxu0 0.0
    %2511 = vmatprep.subr.mxu0 0.0
    %2512 = vmatpush1.msra.mxu0 0.0
    %2513 = vmatprep.mubr.f32.mxu0 0.0
    %2514 = vmatmul.mubr.f32.gmra.mrb[0].mxu0 %v2444
    %v2515 = vpop.f32.mrb[0].mxu0
    %v2516 = vadd.f32 %v2441, %v2515
    %v2517 = vpop.f32.mrb[0].mxu0
    %2518 = vmatprep.mubr.f32.mxu0 0.0
    %2519 = vmatmul.mubr.f32.gmra.mrb[0].mxu0 %v2447
    %v2520 = vpop.f32.mrb[0].mxu0
    %v2521 = vadd.f32 %v2441, %v2520
    %v2522 = vpop.f32.mrb[0].mxu0
    %2523 = vdwg.mxu0
    %v2524 = vld [vmem:[#allocation16] sm:$0xff]
    %v2525 = vld [vmem:[#allocation16 + $0x8] sm:$0xff]
    %v2526 = vld [vmem:[#allocation16 + $0x10] sm:$0xff]
    %v2527 = vld [vmem:[#allocation16 + $0x18] sm:$0xff]
    %v2528 = vld [vmem:[#allocation17] sm:$0x1]
    %2530 = vrot.lane.b32.xlu0 %v2424, 120
    %v2531 = vpop.permute.xlu0 %2530
    %2532 = vrot.lane.b32.xlu0 %v2424, 112
    %v2533 = vpop.permute.xlu0 %2532
    %2534 = vrot.lane.b32.xlu0 %v2424, 104
    %v2535 = vpop.permute.xlu0 %2534
    %2537 = vrot.lane.b32.xlu0 %v2516, 120
    %v2538 = vpop.permute.xlu0 %2537
    %2539 = vrot.lane.b32.xlu0 %v2516, 112
    %v2540 = vpop.permute.xlu0 %2539
    %2541 = vrot.lane.b32.xlu0 %v2516, 104
    %v2542 = vpop.permute.xlu0 %2541
    %v2543 = vsel %vm353, %v2424, 0
    %v2545 = vsel %vm353, %v2516, 0
    %2547 = vmatprep.subr.mxu0 0.0
    %2548 = vmatpush1.xpose.msra.mxu0 %v2545
    %2549 = vmatprep.subr.mxu0 0.0
    %2550 = vmatpush1.xpose.msra.mxu0 0.0
    %2551 = vmatprep.subr.mxu0 0.0
    %2552 = vmatpush1.xpose.msra.mxu0 0.0
    %2553 = vmatprep.subr.mxu0 0.0
    %2554 = vmatpush1.xpose.msra.mxu0 0.0
    %2555 = vmatprep.subr.mxu0 0.0
    %2556 = vmatpush1.xpose.msra.mxu0 0.0
    %2557 = vmatprep.subr.mxu0 0.0
    %2558 = vmatpush1.xpose.msra.mxu0 0.0
    %2559 = vmatprep.subr.mxu0 0.0
    %2560 = vmatpush1.xpose.msra.mxu0 0.0
    %2561 = vmatprep.subr.mxu0 0.0
    %2562 = vmatpush1.xpose.msra.mxu0 0.0
    %2563 = vmatprep.subr.mxu0 0.0
    %2564 = vmatpush1.xpose.msra.mxu0 0.0
    %2565 = vmatprep.subr.mxu0 0.0
    %2566 = vmatpush1.xpose.msra.mxu0 0.0
    %2567 = vmatprep.subr.mxu0 0.0
    %2568 = vmatpush1.xpose.msra.mxu0 0.0
    %2569 = vmatprep.subr.mxu0 0.0
    %2570 = vmatpush1.xpose.msra.mxu0 0.0
    %2571 = vmatprep.subr.mxu0 0.0
    %2572 = vmatpush1.xpose.msra.mxu0 0.0
    %2573 = vmatprep.subr.mxu0 0.0
    %2574 = vmatpush1.xpose.msra.mxu0 0.0
    %2575 = vmatprep.subr.mxu0 0.0
    %2576 = vmatpush1.xpose.msra.mxu0 0.0
    %2577 = vmatprep.subr.mxu0 0.0
    %2578 = vmatpush1.xpose.msra.mxu0 0.0
    %2579 = vmatprep.subr.mxu0 0.0
    %2580 = vmatpush1.xpose.msra.mxu0 0.0
    %2581 = vmatprep.subr.mxu0 0.0
    %2582 = vmatpush1.xpose.msra.mxu0 0.0
    %2583 = vmatprep.subr.mxu0 0.0
    %2584 = vmatpush1.xpose.msra.mxu0 0.0
    %2585 = vmatprep.subr.mxu0 0.0
    %2586 = vmatpush1.xpose.msra.mxu0 0.0
    %2587 = vmatprep.subr.mxu0 0.0
    %2588 = vmatpush1.xpose.msra.mxu0 0.0
    %2589 = vmatprep.subr.mxu0 0.0
    %2590 = vmatpush1.xpose.msra.mxu0 0.0
    %2591 = vmatprep.subr.mxu0 0.0
    %2592 = vmatpush1.xpose.msra.mxu0 0.0
    %2593 = vmatprep.subr.mxu0 0.0
    %2594 = vmatpush1.xpose.msra.mxu0 0.0
    %2595 = vmatprep.subr.mxu0 0.0
    %2596 = vmatpush1.xpose.msra.mxu0 0.0
    %2597 = vmatprep.subr.mxu0 0.0
    %2598 = vmatpush1.xpose.msra.mxu0 0.0
    %2599 = vmatprep.subr.mxu0 0.0
    %2600 = vmatpush1.xpose.msra.mxu0 0.0
    %2601 = vmatprep.subr.mxu0 0.0
    %2602 = vmatpush1.xpose.msra.mxu0 0.0
    %2603 = vmatprep.subr.mxu0 0.0
    %2604 = vmatpush1.xpose.msra.mxu0 0.0
    %2605 = vmatprep.subr.mxu0 0.0
    %2606 = vmatpush1.xpose.msra.mxu0 0.0
    %2607 = vmatprep.subr.mxu0 0.0
    %2608 = vmatpush1.xpose.msra.mxu0 0.0
    %2609 = vmatprep.subr.mxu0 0.0
    %2610 = vmatpush1.xpose.msra.mxu0 0.0
    %2611 = vmatprep.mubr.f32.mxu0 0.0
    %2612 = vmatmul.mubr.f32.gmra.mrb[0].mxu0 %v2543
    %v2613 = vpop.f32.mrb[0].mxu0
    %v2614 = vadd.f32 0.0, %v2613
    %v2615 = vpop.f32.mrb[0].mxu0
    %2616 = vdwg.mxu0
    %v2617 = vsel %vm353, %v2531, 0
    %v2619 = vsel %vm353, %v2538, 0
    %2621 = vmatprep.subr.mxu0 0.0
    %2622 = vmatpush1.xpose.msra.mxu0 %v2619
    %2623 = vmatprep.subr.mxu0 0.0
    %2624 = vmatpush1.xpose.msra.mxu0 0.0
    %2625 = vmatprep.subr.mxu0 0.0
    %2626 = vmatpush1.xpose.msra.mxu0 0.0
    %2627 = vmatprep.subr.mxu0 0.0
    %2628 = vmatpush1.xpose.msra.mxu0 0.0
    %2629 = vmatprep.subr.mxu0 0.0
    %2630 = vmatpush1.xpose.msra.mxu0 0.0
    %2631 = vmatprep.subr.mxu0 0.0
    %2632 = vmatpush1.xpose.msra.mxu0 0.0
    %2633 = vmatprep.subr.mxu0 0.0
    %2634 = vmatpush1.xpose.msra.mxu0 0.0
    %2635 = vmatprep.subr.mxu0 0.0
    %2636 = vmatpush1.xpose.msra.mxu0 0.0
    %2637 = vmatprep.subr.mxu0 0.0
    %2638 = vmatpush1.xpose.msra.mxu0 0.0
    %2639 = vmatprep.subr.mxu0 0.0
    %2640 = vmatpush1.xpose.msra.mxu0 0.0
    %2641 = vmatprep.subr.mxu0 0.0
    %2642 = vmatpush1.xpose.msra.mxu0 0.0
    %2643 = vmatprep.subr.mxu0 0.0
    %2644 = vmatpush1.xpose.msra.mxu0 0.0
    %2645 = vmatprep.subr.mxu0 0.0
    %2646 = vmatpush1.xpose.msra.mxu0 0.0
    %2647 = vmatprep.subr.mxu0 0.0
    %2648 = vmatpush1.xpose.msra.mxu0 0.0
    %2649 = vmatprep.subr.mxu0 0.0
    %2650 = vmatpush1.xpose.msra.mxu0 0.0
    %2651 = vmatprep.subr.mxu0 0.0
    %2652 = vmatpush1.xpose.msra.mxu0 0.0
    %2653 = vmatprep.subr.mxu0 0.0
    %2654 = vmatpush1.xpose.msra.mxu0 0.0
    %2655 = vmatprep.subr.mxu0 0.0
    %2656 = vmatpush1.xpose.msra.mxu0 0.0
    %2657 = vmatprep.subr.mxu0 0.0
    %2658 = vmatpush1.xpose.msra.mxu0 0.0
    %2659 = vmatprep.subr.mxu0 0.0
    %2660 = vmatpush1.xpose.msra.mxu0 0.0
    %2661 = vmatprep.subr.mxu0 0.0
    %2662 = vmatpush1.xpose.msra.mxu0 0.0
    %2663 = vmatprep.subr.mxu0 0.0
    %2664 = vmatpush1.xpose.msra.mxu0 0.0
    %2665 = vmatprep.subr.mxu0 0.0
    %2666 = vmatpush1.xpose.msra.mxu0 0.0
    %2667 = vmatprep.subr.mxu0 0.0
    %2668 = vmatpush1.xpose.msra.mxu0 0.0
    %2669 = vmatprep.subr.mxu0 0.0
    %2670 = vmatpush1.xpose.msra.mxu0 0.0
    %2671 = vmatprep.subr.mxu0 0.0
    %2672 = vmatpush1.xpose.msra.mxu0 0.0
    %2673 = vmatprep.subr.mxu0 0.0
    %2674 = vmatpush1.xpose.msra.mxu0 0.0
    %2675 = vmatprep.subr.mxu0 0.0
    %2676 = vmatpush1.xpose.msra.mxu0 0.0
    %2677 = vmatprep.subr.mxu0 0.0
    %2678 = vmatpush1.xpose.msra.mxu0 0.0
    %2679 = vmatprep.subr.mxu0 0.0
    %2680 = vmatpush1.xpose.msra.mxu0 0.0
    %2681 = vmatprep.subr.mxu0 0.0
    %2682 = vmatpush1.xpose.msra.mxu0 0.0
    %2683 = vmatprep.subr.mxu0 0.0
    %2684 = vmatpush1.xpose.msra.mxu0 0.0
    %2685 = vmatprep.mubr.f32.mxu0 0.0
    %2686 = vmatmul.mubr.f32.gmra.mrb[0].mxu0 %v2617
    %v2687 = vpop.f32.mrb[0].mxu0
    %v2688 = vadd.f32 0.0, %v2687
    %v2689 = vpop.f32.mrb[0].mxu0
    %2690 = vdwg.mxu0
    %v2691 = vsel %vm353, %v2533, 0
    %v2693 = vsel %vm353, %v2540, 0
    %2695 = vmatprep.subr.mxu0 0.0
    %2696 = vmatpush1.xpose.msra.mxu0 %v2693
    %2697 = vmatprep.subr.mxu0 0.0
    %2698 = vmatpush1.xpose.msra.mxu0 0.0
    %2699 = vmatprep.subr.mxu0 0.0
    %2700 = vmatpush1.xpose.msra.mxu0 0.0
    %2701 = vmatprep.subr.mxu0 0.0
    %2702 = vmatpush1.xpose.msra.mxu0 0.0
    %2703 = vmatprep.subr.mxu0 0.0
    %2704 = vmatpush1.xpose.msra.mxu0 0.0
    %2705 = vmatprep.subr.mxu0 0.0
    %2706 = vmatpush1.xpose.msra.mxu0 0.0
    %2707 = vmatprep.subr.mxu0 0.0
    %2708 = vmatpush1.xpose.msra.mxu0 0.0
    %2709 = vmatprep.subr.mxu0 0.0
    %2710 = vmatpush1.xpose.msra.mxu0 0.0
    %2711 = vmatprep.subr.mxu0 0.0
    %2712 = vmatpush1.xpose.msra.mxu0 0.0
    %2713 = vmatprep.subr.mxu0 0.0
    %2714 = vmatpush1.xpose.msra.mxu0 0.0
    %2715 = vmatprep.subr.mxu0 0.0
    %2716 = vmatpush1.xpose.msra.mxu0 0.0
    %2717 = vmatprep.subr.mxu0 0.0
    %2718 = vmatpush1.xpose.msra.mxu0 0.0
    %2719 = vmatprep.subr.mxu0 0.0
    %2720 = vmatpush1.xpose.msra.mxu0 0.0
    %2721 = vmatprep.subr.mxu0 0.0
    %2722 = vmatpush1.xpose.msra.mxu0 0.0
    %2723 = vmatprep.subr.mxu0 0.0
    %2724 = vmatpush1.xpose.msra.mxu0 0.0
    %2725 = vmatprep.subr.mxu0 0.0
    %2726 = vmatpush1.xpose.msra.mxu0 0.0
    %2727 = vmatprep.subr.mxu0 0.0
    %2728 = vmatpush1.xpose.msra.mxu0 0.0
    %2729 = vmatprep.subr.mxu0 0.0
    %2730 = vmatpush1.xpose.msra.mxu0 0.0
    %2731 = vmatprep.subr.mxu0 0.0
    %2732 = vmatpush1.xpose.msra.mxu0 0.0
    %2733 = vmatprep.subr.mxu0 0.0
    %2734 = vmatpush1.xpose.msra.mxu0 0.0
    %2735 = vmatprep.subr.mxu0 0.0
    %2736 = vmatpush1.xpose.msra.mxu0 0.0
    %2737 = vmatprep.subr.mxu0 0.0
    %2738 = vmatpush1.xpose.msra.mxu0 0.0
    %2739 = vmatprep.subr.mxu0 0.0
    %2740 = vmatpush1.xpose.msra.mxu0 0.0
    %2741 = vmatprep.subr.mxu0 0.0
    %2742 = vmatpush1.xpose.msra.mxu0 0.0
    %2743 = vmatprep.subr.mxu0 0.0
    %2744 = vmatpush1.xpose.msra.mxu0 0.0
    %2745 = vmatprep.subr.mxu0 0.0
    %2746 = vmatpush1.xpose.msra.mxu0 0.0
    %2747 = vmatprep.subr.mxu0 0.0
    %2748 = vmatpush1.xpose.msra.mxu0 0.0
    %2749 = vmatprep.subr.mxu0 0.0
    %2750 = vmatpush1.xpose.msra.mxu0 0.0
    %2751 = vmatprep.subr.mxu0 0.0
    %2752 = vmatpush1.xpose.msra.mxu0 0.0
    %2753 = vmatprep.subr.mxu0 0.0
    %2754 = vmatpush1.xpose.msra.mxu0 0.0
    %2755 = vmatprep.subr.mxu0 0.0
    %2756 = vmatpush1.xpose.msra.mxu0 0.0
    %2757 = vmatprep.subr.mxu0 0.0
    %2758 = vmatpush1.xpose.msra.mxu0 0.0
    %2759 = vmatprep.mubr.f32.mxu0 0.0
    %2760 = vmatmul.mubr.f32.gmra.mrb[0].mxu0 %v2691
    %v2761 = vpop.f32.mrb[0].mxu0
    %v2762 = vadd.f32 0.0, %v2761
    %v2763 = vpop.f32.mrb[0].mxu0
    %2764 = vdwg.mxu0
    %v2765 = vsel %vm353, %v2535, 0
    %v2767 = vsel %vm353, %v2542, 0
    %2769 = vmatprep.subr.mxu0 0.0
    %2770 = vmatpush1.xpose.msra.mxu0 %v2767
    %2771 = vmatprep.subr.mxu0 0.0
    %2772 = vmatpush1.xpose.msra.mxu0 0.0
    %2773 = vmatprep.subr.mxu0 0.0
    %2774 = vmatpush1.xpose.msra.mxu0 0.0
    %2775 = vmatprep.subr.mxu0 0.0
    %2776 = vmatpush1.xpose.msra.mxu0 0.0
    %2777 = vmatprep.subr.mxu0 0.0
    %2778 = vmatpush1.xpose.msra.mxu0 0.0
    %2779 = vmatprep.subr.mxu0 0.0
    %2780 = vmatpush1.xpose.msra.mxu0 0.0
    %2781 = vmatprep.subr.mxu0 0.0
    %2782 = vmatpush1.xpose.msra.mxu0 0.0
    %2783 = vmatprep.subr.mxu0 0.0
    %2784 = vmatpush1.xpose.msra.mxu0 0.0
    %2785 = vmatprep.subr.mxu0 0.0
    %2786 = vmatpush1.xpose.msra.mxu0 0.0
    %2787 = vmatprep.subr.mxu0 0.0
    %2788 = vmatpush1.xpose.msra.mxu0 0.0
    %2789 = vmatprep.subr.mxu0 0.0
    %2790 = vmatpush1.xpose.msra.mxu0 0.0
    %2791 = vmatprep.subr.mxu0 0.0
    %2792 = vmatpush1.xpose.msra.mxu0 0.0
    %2793 = vmatprep.subr.mxu0 0.0
    %2794 = vmatpush1.xpose.msra.mxu0 0.0
    %2795 = vmatprep.subr.mxu0 0.0
    %2796 = vmatpush1.xpose.msra.mxu0 0.0
    %2797 = vmatprep.subr.mxu0 0.0
    %2798 = vmatpush1.xpose.msra.mxu0 0.0
    %2799 = vmatprep.subr.mxu0 0.0
    %2800 = vmatpush1.xpose.msra.mxu0 0.0
    %2801 = vmatprep.subr.mxu0 0.0
    %2802 = vmatpush1.xpose.msra.mxu0 0.0
    %2803 = vmatprep.subr.mxu0 0.0
    %2804 = vmatpush1.xpose.msra.mxu0 0.0
    %2805 = vmatprep.subr.mxu0 0.0
    %2806 = vmatpush1.xpose.msra.mxu0 0.0
    %2807 = vmatprep.subr.mxu0 0.0
    %2808 = vmatpush1.xpose.msra.mxu0 0.0
    %2809 = vmatprep.subr.mxu0 0.0
    %2810 = vmatpush1.xpose.msra.mxu0 0.0
    %2811 = vmatprep.subr.mxu0 0.0
    %2812 = vmatpush1.xpose.msra.mxu0 0.0
    %2813 = vmatprep.subr.mxu0 0.0
    %2814 = vmatpush1.xpose.msra.mxu0 0.0
    %2815 = vmatprep.subr.mxu0 0.0
    %2816 = vmatpush1.xpose.msra.mxu0 0.0
    %2817 = vmatprep.subr.mxu0 0.0
    %2818 = vmatpush1.xpose.msra.mxu0 0.0
    %2819 = vmatprep.subr.mxu0 0.0
    %2820 = vmatpush1.xpose.msra.mxu0 0.0
    %2821 = vmatprep.subr.mxu0 0.0
    %2822 = vmatpush1.xpose.msra.mxu0 0.0
    %2823 = vmatprep.subr.mxu0 0.0
    %2824 = vmatpush1.xpose.msra.mxu0 0.0
    %2825 = vmatprep.subr.mxu0 0.0
    %2826 = vmatpush1.xpose.msra.mxu0 0.0
    %2827 = vmatprep.subr.mxu0 0.0
    %2828 = vmatpush1.xpose.msra.mxu0 0.0
    %2829 = vmatprep.subr.mxu0 0.0
    %2830 = vmatpush1.xpose.msra.mxu0 0.0
    %2831 = vmatprep.subr.mxu0 0.0
    %2832 = vmatpush1.xpose.msra.mxu0 0.0
    %2833 = vmatprep.mubr.f32.mxu0 0.0
    %2834 = vmatmul.mubr.f32.gmra.mrb[0].mxu0 %v2765
    %v2835 = vpop.f32.mrb[0].mxu0
    %v2836 = vadd.f32 0.0, %v2835
    %v2837 = vpop.f32.mrb[0].mxu0
    %2838 = vdwg.mxu0
    %v2839 = vsel %vm353, %v2614, -inf
    %2840 = vmax.xlane.f32.xlu0 %v2839
    %v2841 = vpop.xlane.xlu0 %2840
    %v2842 = vsel %vm353, %v2688, -inf
    %2843 = vmax.xlane.f32.xlu0 %v2842
    %v2844 = vpop.xlane.xlu0 %2843
    %v2845 = vsel %vm353, %v2762, -inf
    %2846 = vmax.xlane.f32.xlu0 %v2845
    %v2847 = vpop.xlane.xlu0 %2846
    %v2848 = vsel %vm353, %v2836, -inf
    %2849 = vmax.xlane.f32.xlu0 %v2848
    %v2850 = vpop.xlane.xlu0 %2849
    %v2851 = vsub.f32 %v2614, %v2841
    %v2852 = vsub.f32 %v2688, %v2844
    %v2853 = vsub.f32 %v2762, %v2847
    %v2854 = vsub.f32 %v2836, %v2850
    %v2855 = vmul.f32 %v2851, 1.442695
    %v2856 = vpow.pop %v2855
    %v2857 = vmul.f32 %v2852, 1.442695
    %v2858 = vpow.pop %v2857
    %v2859 = vmul.f32 %v2853, 1.442695
    %v2860 = vpow.pop %v2859
    %v2861 = vmul.f32 %v2854, 1.442695
    %v2862 = vpow.pop %v2861
    %v2863 = vsel %vm353, %v2856, 0.0
    %2864 = vadd.xlane.f32.xlu0 %v2863
    %v2865 = vpop.xlane.xlu0 %2864
    %v2866 = vsel %vm353, %v2858, 0.0
    %2867 = vadd.xlane.f32.xlu0 %v2866
    %v2868 = vpop.xlane.xlu0 %2867
    %v2869 = vsel %vm353, %v2860, 0.0
    %2870 = vadd.xlane.f32.xlu0 %v2869
    %v2871 = vpop.xlane.xlu0 %2870
    %v2872 = vsel %vm353, %v2862, 0.0
    %2873 = vadd.xlane.f32.xlu0 %v2872
    %v2874 = vpop.xlane.xlu0 %2873
    %v2875 = vrcp.pop %v2865
    %v2876 = vmul.f32 1.0, %v2875
    %v2877 = vrcp.pop %v2868
    %v2878 = vmul.f32 1.0, %v2877
    %v2879 = vrcp.pop %v2871
    %v2880 = vmul.f32 1.0, %v2879
    %v2881 = vrcp.pop %v2874
    %v2882 = vmul.f32 1.0, %v2881
    %v2883 = vmul.f32 %v2856, %v2876
    %v2884 = vmul.f32 %v2858, %v2878
    %v2885 = vmul.f32 %v2860, %v2880
    %v2886 = vmul.f32 %v2862, %v2882
    %2887 = vrot.lane.b32.xlu0 %v2516, 96
    %v2888 = vpop.permute.xlu0 %2887
    %v2891 = vsel %vm353, %v2883, 0
    %2893 = vmatprep.subr.mxu0 0.0
    %2894 = vmatpush1.msra.mxu0 %v2888
    %2895 = vmatprep.subr.mxu0 0.0
    %2896 = vmatpush1.msra.mxu0 0.0
    %2897 = vmatprep.subr.mxu0 0.0
    %2898 = vmatpush1.msra.mxu0 0.0
    %2899 = vmatprep.subr.mxu0 0.0
    %2900 = vmatpush1.msra.mxu0 0.0
    %2901 = vmatprep.subr.mxu0 0.0
    %2902 = vmatpush1.msra.mxu0 0.0
    %2903 = vmatprep.subr.mxu0 0.0
    %2904 = vmatpush1.msra.mxu0 0.0
    %2905 = vmatprep.subr.mxu0 0.0
    %2906 = vmatpush1.msra.mxu0 0.0
    %2907 = vmatprep.subr.mxu0 0.0
    %2908 = vmatpush1.msra.mxu0 0.0
    %2909 = vmatprep.subr.mxu0 0.0
    %2910 = vmatpush1.msra.mxu0 0.0
    %2911 = vmatprep.subr.mxu0 0.0
    %2912 = vmatpush1.msra.mxu0 0.0
    %2913 = vmatprep.subr.mxu0 0.0
    %2914 = vmatpush1.msra.mxu0 0.0
    %2915 = vmatprep.subr.mxu0 0.0
    %2916 = vmatpush1.msra.mxu0 0.0
    %2917 = vmatprep.subr.mxu0 0.0
    %2918 = vmatpush1.msra.mxu0 0.0
    %2919 = vmatprep.subr.mxu0 0.0
    %2920 = vmatpush1.msra.mxu0 0.0
    %2921 = vmatprep.subr.mxu0 0.0
    %2922 = vmatpush1.msra.mxu0 0.0
    %2923 = vmatprep.subr.mxu0 0.0
    %2924 = vmatpush1.msra.mxu0 0.0
    %2925 = vmatprep.subr.mxu0 0.0
    %2926 = vmatpush1.msra.mxu0 0.0
    %2927 = vmatprep.subr.mxu0 0.0
    %2928 = vmatpush1.msra.mxu0 0.0
    %2929 = vmatprep.subr.mxu0 0.0
    %2930 = vmatpush1.msra.mxu0 0.0
    %2931 = vmatprep.subr.mxu0 0.0
    %2932 = vmatpush1.msra.mxu0 0.0
    %2933 = vmatprep.subr.mxu0 0.0
    %2934 = vmatpush1.msra.mxu0 0.0
    %2935 = vmatprep.subr.mxu0 0.0
    %2936 = vmatpush1.msra.mxu0 0.0
    %2937 = vmatprep.subr.mxu0 0.0
    %2938 = vmatpush1.msra.mxu0 0.0
    %2939 = vmatprep.subr.mxu0 0.0
    %2940 = vmatpush1.msra.mxu0 0.0
    %2941 = vmatprep.subr.mxu0 0.0
    %2942 = vmatpush1.msra.mxu0 0.0
    %2943 = vmatprep.subr.mxu0 0.0
    %2944 = vmatpush1.msra.mxu0 0.0
    %2945 = vmatprep.subr.mxu0 0.0
    %2946 = vmatpush1.msra.mxu0 0.0
    %2947 = vmatprep.subr.mxu0 0.0
    %2948 = vmatpush1.msra.mxu0 0.0
    %2949 = vmatprep.subr.mxu0 0.0
    %2950 = vmatpush1.msra.mxu0 0.0
    %2951 = vmatprep.subr.mxu0 0.0
    %2952 = vmatpush1.msra.mxu0 0.0
    %2953 = vmatprep.subr.mxu0 0.0
    %2954 = vmatpush1.msra.mxu0 0.0
    %2955 = vmatprep.subr.mxu0 0.0
    %2956 = vmatpush1.msra.mxu0 0.0
    %2957 = vmatprep.mubr.f32.mxu0 0.0
    %2958 = vmatmul.mubr.f32.gmra.mrb[0].mxu0 %v2891
    %v2959 = vpop.f32.mrb[0].mxu0
    %v2960 = vadd.f32 0.0, %v2959
    %v2961 = vpop.f32.mrb[0].mxu0
    %2962 = vdwg.mxu0
    %2963 = vrot.lane.b32.xlu0 %v2538, 96
    %v2964 = vpop.permute.xlu0 %2963
    %v2967 = vsel %vm353, %v2884, 0
    %2969 = vmatprep.subr.mxu0 0.0
    %2970 = vmatpush1.msra.mxu0 %v2964
    %2971 = vmatprep.subr.mxu0 0.0
    %2972 = vmatpush1.msra.mxu0 0.0
    %2973 = vmatprep.subr.mxu0 0.0
    %2974 = vmatpush1.msra.mxu0 0.0
    %2975 = vmatprep.subr.mxu0 0.0
    %2976 = vmatpush1.msra.mxu0 0.0
    %2977 = vmatprep.subr.mxu0 0.0
    %2978 = vmatpush1.msra.mxu0 0.0
    %2979 = vmatprep.subr.mxu0 0.0
    %2980 = vmatpush1.msra.mxu0 0.0
    %2981 = vmatprep.subr.mxu0 0.0
    %2982 = vmatpush1.msra.mxu0 0.0
    %2983 = vmatprep.subr.mxu0 0.0
    %2984 = vmatpush1.msra.mxu0 0.0
    %2985 = vmatprep.subr.mxu0 0.0
    %2986 = vmatpush1.msra.mxu0 0.0
    %2987 = vmatprep.subr.mxu0 0.0
    %2988 = vmatpush1.msra.mxu0 0.0
    %2989 = vmatprep.subr.mxu0 0.0
    %2990 = vmatpush1.msra.mxu0 0.0
    %2991 = vmatprep.subr.mxu0 0.0
    %2992 = vmatpush1.msra.mxu0 0.0
    %2993 = vmatprep.subr.mxu0 0.0
    %2994 = vmatpush1.msra.mxu0 0.0
    %2995 = vmatprep.subr.mxu0 0.0
    %2996 = vmatpush1.msra.mxu0 0.0
    %2997 = vmatprep.subr.mxu0 0.0
    %2998 = vmatpush1.msra.mxu0 0.0
    %2999 = vmatprep.subr.mxu0 0.0
    %3000 = vmatpush1.msra.mxu0 0.0
    %3001 = vmatprep.subr.mxu0 0.0
    %3002 = vmatpush1.msra.mxu0 0.0
    %3003 = vmatprep.subr.mxu0 0.0
    %3004 = vmatpush1.msra.mxu0 0.0
    %3005 = vmatprep.subr.mxu0 0.0
    %3006 = vmatpush1.msra.mxu0 0.0
    %3007 = vmatprep.subr.mxu0 0.0
    %3008 = vmatpush1.msra.mxu0 0.0
    %3009 = vmatprep.subr.mxu0 0.0
    %3010 = vmatpush1.msra.mxu0 0.0
    %3011 = vmatprep.subr.mxu0 0.0
    %3012 = vmatpush1.msra.mxu0 0.0
    %3013 = vmatprep.subr.mxu0 0.0
    %3014 = vmatpush1.msra.mxu0 0.0
    %3015 = vmatprep.subr.mxu0 0.0
    %3016 = vmatpush1.msra.mxu0 0.0
    %3017 = vmatprep.subr.mxu0 0.0
    %3018 = vmatpush1.msra.mxu0 0.0
    %3019 = vmatprep.subr.mxu0 0.0
    %3020 = vmatpush1.msra.mxu0 0.0
    %3021 = vmatprep.subr.mxu0 0.0
    %3022 = vmatpush1.msra.mxu0 0.0
    %3023 = vmatprep.subr.mxu0 0.0
    %3024 = vmatpush1.msra.mxu0 0.0
    %3025 = vmatprep.subr.mxu0 0.0
    %3026 = vmatpush1.msra.mxu0 0.0
    %3027 = vmatprep.subr.mxu0 0.0
    %3028 = vmatpush1.msra.mxu0 0.0
    %3029 = vmatprep.subr.mxu0 0.0
    %3030 = vmatpush1.msra.mxu0 0.0
    %3031 = vmatprep.subr.mxu0 0.0
    %3032 = vmatpush1.msra.mxu0 0.0
    %3033 = vmatprep.mubr.f32.mxu0 0.0
    %3034 = vmatmul.mubr.f32.gmra.mrb[0].mxu0 %v2967
    %v3035 = vpop.f32.mrb[0].mxu0
    %v3036 = vadd.f32 0.0, %v3035
    %v3037 = vpop.f32.mrb[0].mxu0
    %3038 = vdwg.mxu0
    %3039 = vrot.lane.b32.xlu0 %v2540, 96
    %v3040 = vpop.permute.xlu0 %3039
    %v3043 = vsel %vm353, %v2885, 0
    %3045 = vmatprep.subr.mxu0 0.0
    %3046 = vmatpush1.msra.mxu0 %v3040
    %3047 = vmatprep.subr.mxu0 0.0
    %3048 = vmatpush1.msra.mxu0 0.0
    %3049 = vmatprep.subr.mxu0 0.0
    %3050 = vmatpush1.msra.mxu0 0.0
    %3051 = vmatprep.subr.mxu0 0.0
    %3052 = vmatpush1.msra.mxu0 0.0
    %3053 = vmatprep.subr.mxu0 0.0
    %3054 = vmatpush1.msra.mxu0 0.0
    %3055 = vmatprep.subr.mxu0 0.0
    %3056 = vmatpush1.msra.mxu0 0.0
    %3057 = vmatprep.subr.mxu0 0.0
    %3058 = vmatpush1.msra.mxu0 0.0
    %3059 = vmatprep.subr.mxu0 0.0
    %3060 = vmatpush1.msra.mxu0 0.0
    %3061 = vmatprep.subr.mxu0 0.0
    %3062 = vmatpush1.msra.mxu0 0.0
    %3063 = vmatprep.subr.mxu0 0.0
    %3064 = vmatpush1.msra.mxu0 0.0
    %3065 = vmatprep.subr.mxu0 0.0
    %3066 = vmatpush1.msra.mxu0 0.0
    %3067 = vmatprep.subr.mxu0 0.0
    %3068 = vmatpush1.msra.mxu0 0.0
    %3069 = vmatprep.subr.mxu0 0.0
    %3070 = vmatpush1.msra.mxu0 0.0
    %3071 = vmatprep.subr.mxu0 0.0
    %3072 = vmatpush1.msra.mxu0 0.0
    %3073 = vmatprep.subr.mxu0 0.0
    %3074 = vmatpush1.msra.mxu0 0.0
    %3075 = vmatprep.subr.mxu0 0.0
    %3076 = vmatpush1.msra.mxu0 0.0
    %3077 = vmatprep.subr.mxu0 0.0
    %3078 = vmatpush1.msra.mxu0 0.0
    %3079 = vmatprep.subr.mxu0 0.0
    %3080 = vmatpush1.msra.mxu0 0.0
    %3081 = vmatprep.subr.mxu0 0.0
    %3082 = vmatpush1.msra.mxu0 0.0
    %3083 = vmatprep.subr.mxu0 0.0
    %3084 = vmatpush1.msra.mxu0 0.0
    %3085 = vmatprep.subr.mxu0 0.0
    %3086 = vmatpush1.msra.mxu0 0.0
    %3087 = vmatprep.subr.mxu0 0.0
    %3088 = vmatpush1.msra.mxu0 0.0
    %3089 = vmatprep.subr.mxu0 0.0
    %3090 = vmatpush1.msra.mxu0 0.0
    %3091 = vmatprep.subr.mxu0 0.0
    %3092 = vmatpush1.msra.mxu0 0.0
    %3093 = vmatprep.subr.mxu0 0.0
    %3094 = vmatpush1.msra.mxu0 0.0
    %3095 = vmatprep.subr.mxu0 0.0
    %3096 = vmatpush1.msra.mxu0 0.0
    %3097 = vmatprep.subr.mxu0 0.0
    %3098 = vmatpush1.msra.mxu0 0.0
    %3099 = vmatprep.subr.mxu0 0.0
    %3100 = vmatpush1.msra.mxu0 0.0
    %3101 = vmatprep.subr.mxu0 0.0
    %3102 = vmatpush1.msra.mxu0 0.0
    %3103 = vmatprep.subr.mxu0 0.0
    %3104 = vmatpush1.msra.mxu0 0.0
    %3105 = vmatprep.subr.mxu0 0.0
    %3106 = vmatpush1.msra.mxu0 0.0
    %3107 = vmatprep.subr.mxu0 0.0
    %3108 = vmatpush1.msra.mxu0 0.0
    %3109 = vmatprep.mubr.f32.mxu0 0.0
    %3110 = vmatmul.mubr.f32.gmra.mrb[0].mxu0 %v3043
    %v3111 = vpop.f32.mrb[0].mxu0
    %v3112 = vadd.f32 0.0, %v3111
    %v3113 = vpop.f32.mrb[0].mxu0
    %3114 = vdwg.mxu0
    %3115 = vrot.lane.b32.xlu0 %v2542, 96
    %v3116 = vpop.permute.xlu0 %3115
    %v3119 = vsel %vm353, %v2886, 0
    %3121 = vmatprep.subr.mxu0 0.0
    %3122 = vmatpush1.msra.mxu0 %v3116
    %3123 = vmatprep.subr.mxu0 0.0
    %3124 = vmatpush1.msra.mxu0 0.0
    %3125 = vmatprep.subr.mxu0 0.0
    %3126 = vmatpush1.msra.mxu0 0.0
    %3127 = vmatprep.subr.mxu0 0.0
    %3128 = vmatpush1.msra.mxu0 0.0
    %3129 = vmatprep.subr.mxu0 0.0
    %3130 = vmatpush1.msra.mxu0 0.0
    %3131 = vmatprep.subr.mxu0 0.0
    %3132 = vmatpush1.msra.mxu0 0.0
    %3133 = vmatprep.subr.mxu0 0.0
    %3134 = vmatpush1.msra.mxu0 0.0
    %3135 = vmatprep.subr.mxu0 0.0
    %3136 = vmatpush1.msra.mxu0 0.0
    %3137 = vmatprep.subr.mxu0 0.0
    %3138 = vmatpush1.msra.mxu0 0.0
    %3139 = vmatprep.subr.mxu0 0.0
    %3140 = vmatpush1.msra.mxu0 0.0
    %3141 = vmatprep.subr.mxu0 0.0
    %3142 = vmatpush1.msra.mxu0 0.0
    %3143 = vmatprep.subr.mxu0 0.0
    %3144 = vmatpush1.msra.mxu0 0.0
    %3145 = vmatprep.subr.mxu0 0.0
    %3146 = vmatpush1.msra.mxu0 0.0
    %3147 = vmatprep.subr.mxu0 0.0
    %3148 = vmatpush1.msra.mxu0 0.0
    %3149 = vmatprep.subr.mxu0 0.0
    %3150 = vmatpush1.msra.mxu0 0.0
    %3151 = vmatprep.subr.mxu0 0.0
    %3152 = vmatpush1.msra.mxu0 0.0
    %3153 = vmatprep.subr.mxu0 0.0
    %3154 = vmatpush1.msra.mxu0 0.0
    %3155 = vmatprep.subr.mxu0 0.0
    %3156 = vmatpush1.msra.mxu0 0.0
    %3157 = vmatprep.subr.mxu0 0.0
    %3158 = vmatpush1.msra.mxu0 0.0
    %3159 = vmatprep.subr.mxu0 0.0
    %3160 = vmatpush1.msra.mxu0 0.0
    %3161 = vmatprep.subr.mxu0 0.0
    %3162 = vmatpush1.msra.mxu0 0.0
    %3163 = vmatprep.subr.mxu0 0.0
    %3164 = vmatpush1.msra.mxu0 0.0
    %3165 = vmatprep.subr.mxu0 0.0
    %3166 = vmatpush1.msra.mxu0 0.0
    %3167 = vmatprep.subr.mxu0 0.0
    %3168 = vmatpush1.msra.mxu0 0.0
    %3169 = vmatprep.subr.mxu0 0.0
    %3170 = vmatpush1.msra.mxu0 0.0
    %3171 = vmatprep.subr.mxu0 0.0
    %3172 = vmatpush1.msra.mxu0 0.0
    %3173 = vmatprep.subr.mxu0 0.0
    %3174 = vmatpush1.msra.mxu0 0.0
    %3175 = vmatprep.subr.mxu0 0.0
    %3176 = vmatpush1.msra.mxu0 0.0
    %3177 = vmatprep.subr.mxu0 0.0
    %3178 = vmatpush1.msra.mxu0 0.0
    %3179 = vmatprep.subr.mxu0 0.0
    %3180 = vmatpush1.msra.mxu0 0.0
    %3181 = vmatprep.subr.mxu0 0.0
    %3182 = vmatpush1.msra.mxu0 0.0
    %3183 = vmatprep.subr.mxu0 0.0
    %3184 = vmatpush1.msra.mxu0 0.0
    %3185 = vmatprep.mubr.f32.mxu0 0.0
    %3186 = vmatmul.mubr.f32.gmra.mrb[0].mxu0 %v3119
    %v3187 = vpop.f32.mrb[0].mxu0
    %v3188 = vadd.f32 0.0, %v3187
    %v3189 = vpop.f32.mrb[0].mxu0
    %3190 = vdwg.mxu0
    %v3192 = vsel %vm353, %v2960, 0
    %3194 = vmatprep.subr.mxu0 0.0
    %3195 = vmatpush1.msra.mxu0 %v2524
    %3196 = vmatprep.subr.mxu0 0.0
    %3197 = vmatpush1.msra.mxu0 0.0
    %3198 = vmatprep.subr.mxu0 0.0
    %3199 = vmatpush1.msra.mxu0 0.0
    %3200 = vmatprep.subr.mxu0 0.0
    %3201 = vmatpush1.msra.mxu0 0.0
    %3202 = vmatprep.subr.mxu0 0.0
    %3203 = vmatpush1.msra.mxu0 0.0
    %3204 = vmatprep.subr.mxu0 0.0
    %3205 = vmatpush1.msra.mxu0 0.0
    %3206 = vmatprep.subr.mxu0 0.0
    %3207 = vmatpush1.msra.mxu0 0.0
    %3208 = vmatprep.subr.mxu0 0.0
    %3209 = vmatpush1.msra.mxu0 0.0
    %3210 = vmatprep.subr.mxu0 0.0
    %3211 = vmatpush1.msra.mxu0 0.0
    %3212 = vmatprep.subr.mxu0 0.0
    %3213 = vmatpush1.msra.mxu0 0.0
    %3214 = vmatprep.subr.mxu0 0.0
    %3215 = vmatpush1.msra.mxu0 0.0
    %3216 = vmatprep.subr.mxu0 0.0
    %3217 = vmatpush1.msra.mxu0 0.0
    %3218 = vmatprep.subr.mxu0 0.0
    %3219 = vmatpush1.msra.mxu0 0.0
    %3220 = vmatprep.subr.mxu0 0.0
    %3221 = vmatpush1.msra.mxu0 0.0
    %3222 = vmatprep.subr.mxu0 0.0
    %3223 = vmatpush1.msra.mxu0 0.0
    %3224 = vmatprep.subr.mxu0 0.0
    %3225 = vmatpush1.msra.mxu0 0.0
    %3226 = vmatprep.subr.mxu0 0.0
    %3227 = vmatpush1.msra.mxu0 0.0
    %3228 = vmatprep.subr.mxu0 0.0
    %3229 = vmatpush1.msra.mxu0 0.0
    %3230 = vmatprep.subr.mxu0 0.0
    %3231 = vmatpush1.msra.mxu0 0.0
    %3232 = vmatprep.subr.mxu0 0.0
    %3233 = vmatpush1.msra.mxu0 0.0
    %3234 = vmatprep.subr.mxu0 0.0
    %3235 = vmatpush1.msra.mxu0 0.0
    %3236 = vmatprep.subr.mxu0 0.0
    %3237 = vmatpush1.msra.mxu0 0.0
    %3238 = vmatprep.subr.mxu0 0.0
    %3239 = vmatpush1.msra.mxu0 0.0
    %3240 = vmatprep.subr.mxu0 0.0
    %3241 = vmatpush1.msra.mxu0 0.0
    %3242 = vmatprep.subr.mxu0 0.0
    %3243 = vmatpush1.msra.mxu0 0.0
    %3244 = vmatprep.subr.mxu0 0.0
    %3245 = vmatpush1.msra.mxu0 0.0
    %3246 = vmatprep.subr.mxu0 0.0
    %3247 = vmatpush1.msra.mxu0 0.0
    %3248 = vmatprep.subr.mxu0 0.0
    %3249 = vmatpush1.msra.mxu0 0.0
    %3250 = vmatprep.subr.mxu0 0.0
    %3251 = vmatpush1.msra.mxu0 0.0
    %3252 = vmatprep.subr.mxu0 0.0
    %3253 = vmatpush1.msra.mxu0 0.0
    %3254 = vmatprep.subr.mxu0 0.0
    %3255 = vmatpush1.msra.mxu0 0.0
    %3256 = vmatprep.subr.mxu0 0.0
    %3257 = vmatpush1.msra.mxu0 0.0
    %3258 = vmatprep.mubr.f32.mxu0 0.0
    %3259 = vmatmul.mubr.f32.gmra.mrb[0].mxu0 %v3192
    %v3260 = vpop.f32.mrb[0].mxu0
    %v3261 = vadd.f32 0.0, %v3260
    %v3262 = vpop.f32.mrb[0].mxu0
    %3263 = vdwg.mxu0
    %v3265 = vsel %vm353, %v3036, 0
    %3267 = vmatprep.subr.mxu0 0.0
    %3268 = vmatpush1.msra.mxu0 %v2525
    %3269 = vmatprep.subr.mxu0 0.0
    %3270 = vmatpush1.msra.mxu0 0.0
    %3271 = vmatprep.subr.mxu0 0.0
    %3272 = vmatpush1.msra.mxu0 0.0
    %3273 = vmatprep.subr.mxu0 0.0
    %3274 = vmatpush1.msra.mxu0 0.0
    %3275 = vmatprep.subr.mxu0 0.0
    %3276 = vmatpush1.msra.mxu0 0.0
    %3277 = vmatprep.subr.mxu0 0.0
    %3278 = vmatpush1.msra.mxu0 0.0
    %3279 = vmatprep.subr.mxu0 0.0
    %3280 = vmatpush1.msra.mxu0 0.0
    %3281 = vmatprep.subr.mxu0 0.0
    %3282 = vmatpush1.msra.mxu0 0.0
    %3283 = vmatprep.subr.mxu0 0.0
    %3284 = vmatpush1.msra.mxu0 0.0
    %3285 = vmatprep.subr.mxu0 0.0
    %3286 = vmatpush1.msra.mxu0 0.0
    %3287 = vmatprep.subr.mxu0 0.0
    %3288 = vmatpush1.msra.mxu0 0.0
    %3289 = vmatprep.subr.mxu0 0.0
    %3290 = vmatpush1.msra.mxu0 0.0
    %3291 = vmatprep.subr.mxu0 0.0
    %3292 = vmatpush1.msra.mxu0 0.0
    %3293 = vmatprep.subr.mxu0 0.0
    %3294 = vmatpush1.msra.mxu0 0.0
    %3295 = vmatprep.subr.mxu0 0.0
    %3296 = vmatpush1.msra.mxu0 0.0
    %3297 = vmatprep.subr.mxu0 0.0
    %3298 = vmatpush1.msra.mxu0 0.0
    %3299 = vmatprep.subr.mxu0 0.0
    %3300 = vmatpush1.msra.mxu0 0.0
    %3301 = vmatprep.subr.mxu0 0.0
    %3302 = vmatpush1.msra.mxu0 0.0
    %3303 = vmatprep.subr.mxu0 0.0
    %3304 = vmatpush1.msra.mxu0 0.0
    %3305 = vmatprep.subr.mxu0 0.0
    %3306 = vmatpush1.msra.mxu0 0.0
    %3307 = vmatprep.subr.mxu0 0.0
    %3308 = vmatpush1.msra.mxu0 0.0
    %3309 = vmatprep.subr.mxu0 0.0
    %3310 = vmatpush1.msra.mxu0 0.0
    %3311 = vmatprep.subr.mxu0 0.0
    %3312 = vmatpush1.msra.mxu0 0.0
    %3313 = vmatprep.subr.mxu0 0.0
    %3314 = vmatpush1.msra.mxu0 0.0
    %3315 = vmatprep.subr.mxu0 0.0
    %3316 = vmatpush1.msra.mxu0 0.0
    %3317 = vmatprep.subr.mxu0 0.0
    %3318 = vmatpush1.msra.mxu0 0.0
    %3319 = vmatprep.subr.mxu0 0.0
    %3320 = vmatpush1.msra.mxu0 0.0
    %3321 = vmatprep.subr.mxu0 0.0
    %3322 = vmatpush1.msra.mxu0 0.0
    %3323 = vmatprep.subr.mxu0 0.0
    %3324 = vmatpush1.msra.mxu0 0.0
    %3325 = vmatprep.subr.mxu0 0.0
    %3326 = vmatpush1.msra.mxu0 0.0
    %3327 = vmatprep.subr.mxu0 0.0
    %3328 = vmatpush1.msra.mxu0 0.0
    %3329 = vmatprep.subr.mxu0 0.0
    %3330 = vmatpush1.msra.mxu0 0.0
    %3331 = vmatprep.mubr.f32.mxu0 0.0
    %3332 = vmatmul.mubr.f32.gmra.mrb[0].mxu0 %v3265
    %v3333 = vpop.f32.mrb[0].mxu0
    %v3334 = vadd.f32 0.0, %v3333
    %v3335 = vpop.f32.mrb[0].mxu0
    %3336 = vdwg.mxu0
    %v3338 = vsel %vm353, %v3112, 0
    %3340 = vmatprep.subr.mxu0 0.0
    %3341 = vmatpush1.msra.mxu0 %v2526
    %3342 = vmatprep.subr.mxu0 0.0
    %3343 = vmatpush1.msra.mxu0 0.0
    %3344 = vmatprep.subr.mxu0 0.0
    %3345 = vmatpush1.msra.mxu0 0.0
    %3346 = vmatprep.subr.mxu0 0.0
    %3347 = vmatpush1.msra.mxu0 0.0
    %3348 = vmatprep.subr.mxu0 0.0
    %3349 = vmatpush1.msra.mxu0 0.0
    %3350 = vmatprep.subr.mxu0 0.0
    %3351 = vmatpush1.msra.mxu0 0.0
    %3352 = vmatprep.subr.mxu0 0.0
    %3353 = vmatpush1.msra.mxu0 0.0
    %3354 = vmatprep.subr.mxu0 0.0
    %3355 = vmatpush1.msra.mxu0 0.0
    %3356 = vmatprep.subr.mxu0 0.0
    %3357 = vmatpush1.msra.mxu0 0.0
    %3358 = vmatprep.subr.mxu0 0.0
    %3359 = vmatpush1.msra.mxu0 0.0
    %3360 = vmatprep.subr.mxu0 0.0
    %3361 = vmatpush1.msra.mxu0 0.0
    %3362 = vmatprep.subr.mxu0 0.0
    %3363 = vmatpush1.msra.mxu0 0.0
    %3364 = vmatprep.subr.mxu0 0.0
    %3365 = vmatpush1.msra.mxu0 0.0
    %3366 = vmatprep.subr.mxu0 0.0
    %3367 = vmatpush1.msra.mxu0 0.0
    %3368 = vmatprep.subr.mxu0 0.0
    %3369 = vmatpush1.msra.mxu0 0.0
    %3370 = vmatprep.subr.mxu0 0.0
    %3371 = vmatpush1.msra.mxu0 0.0
    %3372 = vmatprep.subr.mxu0 0.0
    %3373 = vmatpush1.msra.mxu0 0.0
    %3374 = vmatprep.subr.mxu0 0.0
    %3375 = vmatpush1.msra.mxu0 0.0
    %3376 = vmatprep.subr.mxu0 0.0
    %3377 = vmatpush1.msra.mxu0 0.0
    %3378 = vmatprep.subr.mxu0 0.0
    %3379 = vmatpush1.msra.mxu0 0.0
    %3380 = vmatprep.subr.mxu0 0.0
    %3381 = vmatpush1.msra.mxu0 0.0
    %3382 = vmatprep.subr.mxu0 0.0
    %3383 = vmatpush1.msra.mxu0 0.0
    %3384 = vmatprep.subr.mxu0 0.0
    %3385 = vmatpush1.msra.mxu0 0.0
    %3386 = vmatprep.subr.mxu0 0.0
    %3387 = vmatpush1.msra.mxu0 0.0
    %3388 = vmatprep.subr.mxu0 0.0
    %3389 = vmatpush1.msra.mxu0 0.0
    %3390 = vmatprep.subr.mxu0 0.0
    %3391 = vmatpush1.msra.mxu0 0.0
    %3392 = vmatprep.subr.mxu0 0.0
    %3393 = vmatpush1.msra.mxu0 0.0
    %3394 = vmatprep.subr.mxu0 0.0
    %3395 = vmatpush1.msra.mxu0 0.0
    %3396 = vmatprep.subr.mxu0 0.0
    %3397 = vmatpush1.msra.mxu0 0.0
    %3398 = vmatprep.subr.mxu0 0.0
    %3399 = vmatpush1.msra.mxu0 0.0
    %3400 = vmatprep.subr.mxu0 0.0
    %3401 = vmatpush1.msra.mxu0 0.0
    %3402 = vmatprep.subr.mxu0 0.0
    %3403 = vmatpush1.msra.mxu0 0.0
    %3404 = vmatprep.mubr.f32.mxu0 0.0
    %3405 = vmatmul.mubr.f32.gmra.mrb[0].mxu0 %v3338
    %v3406 = vpop.f32.mrb[0].mxu0
    %v3407 = vadd.f32 0.0, %v3406
    %v3408 = vpop.f32.mrb[0].mxu0
    %3409 = vdwg.mxu0
    %v3411 = vsel %vm353, %v3188, 0
    %3413 = vmatprep.subr.mxu0 0.0
    %3414 = vmatpush1.msra.mxu0 %v2527
    %3415 = vmatprep.subr.mxu0 0.0
    %3416 = vmatpush1.msra.mxu0 0.0
    %3417 = vmatprep.subr.mxu0 0.0
    %3418 = vmatpush1.msra.mxu0 0.0
    %3419 = vmatprep.subr.mxu0 0.0
    %3420 = vmatpush1.msra.mxu0 0.0
    %3421 = vmatprep.subr.mxu0 0.0
    %3422 = vmatpush1.msra.mxu0 0.0
    %3423 = vmatprep.subr.mxu0 0.0
    %3424 = vmatpush1.msra.mxu0 0.0
    %3425 = vmatprep.subr.mxu0 0.0
    %3426 = vmatpush1.msra.mxu0 0.0
    %3427 = vmatprep.subr.mxu0 0.0
    %3428 = vmatpush1.msra.mxu0 0.0
    %3429 = vmatprep.subr.mxu0 0.0
    %3430 = vmatpush1.msra.mxu0 0.0
    %3431 = vmatprep.subr.mxu0 0.0
    %3432 = vmatpush1.msra.mxu0 0.0
    %3433 = vmatprep.subr.mxu0 0.0
    %3434 = vmatpush1.msra.mxu0 0.0
    %3435 = vmatprep.subr.mxu0 0.0
    %3436 = vmatpush1.msra.mxu0 0.0
    %3437 = vmatprep.subr.mxu0 0.0
    %3438 = vmatpush1.msra.mxu0 0.0
    %3439 = vmatprep.subr.mxu0 0.0
    %3440 = vmatpush1.msra.mxu0 0.0
    %3441 = vmatprep.subr.mxu0 0.0
    %3442 = vmatpush1.msra.mxu0 0.0
    %3443 = vmatprep.subr.mxu0 0.0
    %3444 = vmatpush1.msra.mxu0 0.0
    %3445 = vmatprep.subr.mxu0 0.0
    %3446 = vmatpush1.msra.mxu0 0.0
    %3447 = vmatprep.subr.mxu0 0.0
    %3448 = vmatpush1.msra.mxu0 0.0
    %3449 = vmatprep.subr.mxu0 0.0
    %3450 = vmatpush1.msra.mxu0 0.0
    %3451 = vmatprep.subr.mxu0 0.0
    %3452 = vmatpush1.msra.mxu0 0.0
    %3453 = vmatprep.subr.mxu0 0.0
    %3454 = vmatpush1.msra.mxu0 0.0
    %3455 = vmatprep.subr.mxu0 0.0
    %3456 = vmatpush1.msra.mxu0 0.0
    %3457 = vmatprep.subr.mxu0 0.0
    %3458 = vmatpush1.msra.mxu0 0.0
    %3459 = vmatprep.subr.mxu0 0.0
    %3460 = vmatpush1.msra.mxu0 0.0
    %3461 = vmatprep.subr.mxu0 0.0
    %3462 = vmatpush1.msra.mxu0 0.0
    %3463 = vmatprep.subr.mxu0 0.0
    %3464 = vmatpush1.msra.mxu0 0.0
    %3465 = vmatprep.subr.mxu0 0.0
    %3466 = vmatpush1.msra.mxu0 0.0
    %3467 = vmatprep.subr.mxu0 0.0
    %3468 = vmatpush1.msra.mxu0 0.0
    %3469 = vmatprep.subr.mxu0 0.0
    %3470 = vmatpush1.msra.mxu0 0.0
    %3471 = vmatprep.subr.mxu0 0.0
    %3472 = vmatpush1.msra.mxu0 0.0
    %3473 = vmatprep.subr.mxu0 0.0
    %3474 = vmatpush1.msra.mxu0 0.0
    %3475 = vmatprep.subr.mxu0 0.0
    %3476 = vmatpush1.msra.mxu0 0.0
    %3477 = vmatprep.mubr.f32.mxu0 0.0
    %3478 = vmatmul.mubr.f32.gmra.mrb[0].mxu0 %v3411
    %v3479 = vpop.f32.mrb[0].mxu0
    %v3480 = vadd.f32 0.0, %v3479
    %v3481 = vpop.f32.mrb[0].mxu0
    %3482 = vdwg.mxu0
    %v3483 = vsel %vm257, %v3261, 0.0
    %v3484 = vsel %vm257, %v3334, 0.0
    %v3485 = vadd.f32 %v3483, %v3484
    %v3486 = vsel %vm257, %v3407, 0.0
    %v3487 = vadd.f32 %v3485, %v3486
    %v3488 = vsel %vm257, %v3480, 0.0
    %v3489 = vadd.f32 %v3487, %v3488
    %3491 = vrot.lane.b32.xlu0 %v2429, 120
    %v3492 = vpop.permute.xlu0 %3491
    %3493 = vrot.lane.b32.xlu0 %v2429, 112
    %v3494 = vpop.permute.xlu0 %3493
    %3495 = vrot.lane.b32.xlu0 %v2429, 104
    %v3496 = vpop.permute.xlu0 %3495
    %3498 = vrot.lane.b32.xlu0 %v2521, 120
    %v3499 = vpop.permute.xlu0 %3498
    %3500 = vrot.lane.b32.xlu0 %v2521, 112
    %v3501 = vpop.permute.xlu0 %3500
    %3502 = vrot.lane.b32.xlu0 %v2521, 104
    %v3503 = vpop.permute.xlu0 %3502
    %v3504 = vsel %vm353, %v2429, 0
    %v3506 = vsel %vm353, %v2521, 0
    %3508 = vmatprep.subr.mxu0 0.0
    %3509 = vmatpush1.xpose.msra.mxu0 %v3506
    %3510 = vmatprep.subr.mxu0 0.0
    %3511 = vmatpush1.xpose.msra.mxu0 0.0
    %3512 = vmatprep.subr.mxu0 0.0
    %3513 = vmatpush1.xpose.msra.mxu0 0.0
    %3514 = vmatprep.subr.mxu0 0.0
    %3515 = vmatpush1.xpose.msra.mxu0 0.0
    %3516 = vmatprep.subr.mxu0 0.0
    %3517 = vmatpush1.xpose.msra.mxu0 0.0
    %3518 = vmatprep.subr.mxu0 0.0
    %3519 = vmatpush1.xpose.msra.mxu0 0.0
    %3520 = vmatprep.subr.mxu0 0.0
    %3521 = vmatpush1.xpose.msra.mxu0 0.0
    %3522 = vmatprep.subr.mxu0 0.0
    %3523 = vmatpush1.xpose.msra.mxu0 0.0
    %3524 = vmatprep.subr.mxu0 0.0
    %3525 = vmatpush1.xpose.msra.mxu0 0.0
    %3526 = vmatprep.subr.mxu0 0.0
    %3527 = vmatpush1.xpose.msra.mxu0 0.0
    %3528 = vmatprep.subr.mxu0 0.0
    %3529 = vmatpush1.xpose.msra.mxu0 0.0
    %3530 = vmatprep.subr.mxu0 0.0
    %3531 = vmatpush1.xpose.msra.mxu0 0.0
    %3532 = vmatprep.subr.mxu0 0.0
    %3533 = vmatpush1.xpose.msra.mxu0 0.0
    %3534 = vmatprep.subr.mxu0 0.0
    %3535 = vmatpush1.xpose.msra.mxu0 0.0
    %3536 = vmatprep.subr.mxu0 0.0
    %3537 = vmatpush1.xpose.msra.mxu0 0.0
    %3538 = vmatprep.subr.mxu0 0.0
    %3539 = vmatpush1.xpose.msra.mxu0 0.0
    %3540 = vmatprep.subr.mxu0 0.0
    %3541 = vmatpush1.xpose.msra.mxu0 0.0
    %3542 = vmatprep.subr.mxu0 0.0
    %3543 = vmatpush1.xpose.msra.mxu0 0.0
    %3544 = vmatprep.subr.mxu0 0.0
    %3545 = vmatpush1.xpose.msra.mxu0 0.0
    %3546 = vmatprep.subr.mxu0 0.0
    %3547 = vmatpush1.xpose.msra.mxu0 0.0
    %3548 = vmatprep.subr.mxu0 0.0
    %3549 = vmatpush1.xpose.msra.mxu0 0.0
    %3550 = vmatprep.subr.mxu0 0.0
    %3551 = vmatpush1.xpose.msra.mxu0 0.0
    %3552 = vmatprep.subr.mxu0 0.0
    %3553 = vmatpush1.xpose.msra.mxu0 0.0
    %3554 = vmatprep.subr.mxu0 0.0
    %3555 = vmatpush1.xpose.msra.mxu0 0.0
    %3556 = vmatprep.subr.mxu0 0.0
    %3557 = vmatpush1.xpose.msra.mxu0 0.0
    %3558 = vmatprep.subr.mxu0 0.0
    %3559 = vmatpush1.xpose.msra.mxu0 0.0
    %3560 = vmatprep.subr.mxu0 0.0
    %3561 = vmatpush1.xpose.msra.mxu0 0.0
    %3562 = vmatprep.subr.mxu0 0.0
    %3563 = vmatpush1.xpose.msra.mxu0 0.0
    %3564 = vmatprep.subr.mxu0 0.0
    %3565 = vmatpush1.xpose.msra.mxu0 0.0
    %3566 = vmatprep.subr.mxu0 0.0
    %3567 = vmatpush1.xpose.msra.mxu0 0.0
    %3568 = vmatprep.subr.mxu0 0.0
    %3569 = vmatpush1.xpose.msra.mxu0 0.0
    %3570 = vmatprep.subr.mxu0 0.0
    %3571 = vmatpush1.xpose.msra.mxu0 0.0
    %3572 = vmatprep.mubr.f32.mxu0 0.0
    %3573 = vmatmul.mubr.f32.gmra.mrb[0].mxu0 %v3504
    %v3574 = vpop.f32.mrb[0].mxu0
    %v3575 = vadd.f32 0.0, %v3574
    %v3576 = vpop.f32.mrb[0].mxu0
    %3577 = vdwg.mxu0
    %v3578 = vsel %vm353, %v3492, 0
    %v3580 = vsel %vm353, %v3499, 0
    %3582 = vmatprep.subr.mxu0 0.0
    %3583 = vmatpush1.xpose.msra.mxu0 %v3580
    %3584 = vmatprep.subr.mxu0 0.0
    %3585 = vmatpush1.xpose.msra.mxu0 0.0
    %3586 = vmatprep.subr.mxu0 0.0
    %3587 = vmatpush1.xpose.msra.mxu0 0.0
    %3588 = vmatprep.subr.mxu0 0.0
    %3589 = vmatpush1.xpose.msra.mxu0 0.0
    %3590 = vmatprep.subr.mxu0 0.0
    %3591 = vmatpush1.xpose.msra.mxu0 0.0
    %3592 = vmatprep.subr.mxu0 0.0
    %3593 = vmatpush1.xpose.msra.mxu0 0.0
    %3594 = vmatprep.subr.mxu0 0.0
    %3595 = vmatpush1.xpose.msra.mxu0 0.0
    %3596 = vmatprep.subr.mxu0 0.0
    %3597 = vmatpush1.xpose.msra.mxu0 0.0
    %3598 = vmatprep.subr.mxu0 0.0
    %3599 = vmatpush1.xpose.msra.mxu0 0.0
    %3600 = vmatprep.subr.mxu0 0.0
    %3601 = vmatpush1.xpose.msra.mxu0 0.0
    %3602 = vmatprep.subr.mxu0 0.0
    %3603 = vmatpush1.xpose.msra.mxu0 0.0
    %3604 = vmatprep.subr.mxu0 0.0
    %3605 = vmatpush1.xpose.msra.mxu0 0.0
    %3606 = vmatprep.subr.mxu0 0.0
    %3607 = vmatpush1.xpose.msra.mxu0 0.0
    %3608 = vmatprep.subr.mxu0 0.0
    %3609 = vmatpush1.xpose.msra.mxu0 0.0
    %3610 = vmatprep.subr.mxu0 0.0
    %3611 = vmatpush1.xpose.msra.mxu0 0.0
    %3612 = vmatprep.subr.mxu0 0.0
    %3613 = vmatpush1.xpose.msra.mxu0 0.0
    %3614 = vmatprep.subr.mxu0 0.0
    %3615 = vmatpush1.xpose.msra.mxu0 0.0
    %3616 = vmatprep.subr.mxu0 0.0
    %3617 = vmatpush1.xpose.msra.mxu0 0.0
    %3618 = vmatprep.subr.mxu0 0.0
    %3619 = vmatpush1.xpose.msra.mxu0 0.0
    %3620 = vmatprep.subr.mxu0 0.0
    %3621 = vmatpush1.xpose.msra.mxu0 0.0
    %3622 = vmatprep.subr.mxu0 0.0
    %3623 = vmatpush1.xpose.msra.mxu0 0.0
    %3624 = vmatprep.subr.mxu0 0.0
    %3625 = vmatpush1.xpose.msra.mxu0 0.0
    %3626 = vmatprep.subr.mxu0 0.0
    %3627 = vmatpush1.xpose.msra.mxu0 0.0
    %3628 = vmatprep.subr.mxu0 0.0
    %3629 = vmatpush1.xpose.msra.mxu0 0.0
    %3630 = vmatprep.subr.mxu0 0.0
    %3631 = vmatpush1.xpose.msra.mxu0 0.0
    %3632 = vmatprep.subr.mxu0 0.0
    %3633 = vmatpush1.xpose.msra.mxu0 0.0
    %3634 = vmatprep.subr.mxu0 0.0
    %3635 = vmatpush1.xpose.msra.mxu0 0.0
    %3636 = vmatprep.subr.mxu0 0.0
    %3637 = vmatpush1.xpose.msra.mxu0 0.0
    %3638 = vmatprep.subr.mxu0 0.0
    %3639 = vmatpush1.xpose.msra.mxu0 0.0
    %3640 = vmatprep.subr.mxu0 0.0
    %3641 = vmatpush1.xpose.msra.mxu0 0.0
    %3642 = vmatprep.subr.mxu0 0.0
    %3643 = vmatpush1.xpose.msra.mxu0 0.0
    %3644 = vmatprep.subr.mxu0 0.0
    %3645 = vmatpush1.xpose.msra.mxu0 0.0
    %3646 = vmatprep.mubr.f32.mxu0 0.0
    %3647 = vmatmul.mubr.f32.gmra.mrb[0].mxu0 %v3578
    %v3648 = vpop.f32.mrb[0].mxu0
    %v3649 = vadd.f32 0.0, %v3648
    %v3650 = vpop.f32.mrb[0].mxu0
    %3651 = vdwg.mxu0
    %v3652 = vsel %vm353, %v3494, 0
    %v3654 = vsel %vm353, %v3501, 0
    %3656 = vmatprep.subr.mxu0 0.0
    %3657 = vmatpush1.xpose.msra.mxu0 %v3654
    %3658 = vmatprep.subr.mxu0 0.0
    %3659 = vmatpush1.xpose.msra.mxu0 0.0
    %3660 = vmatprep.subr.mxu0 0.0
    %3661 = vmatpush1.xpose.msra.mxu0 0.0
    %3662 = vmatprep.subr.mxu0 0.0
    %3663 = vmatpush1.xpose.msra.mxu0 0.0
    %3664 = vmatprep.subr.mxu0 0.0
    %3665 = vmatpush1.xpose.msra.mxu0 0.0
    %3666 = vmatprep.subr.mxu0 0.0
    %3667 = vmatpush1.xpose.msra.mxu0 0.0
    %3668 = vmatprep.subr.mxu0 0.0
    %3669 = vmatpush1.xpose.msra.mxu0 0.0
    %3670 = vmatprep.subr.mxu0 0.0
    %3671 = vmatpush1.xpose.msra.mxu0 0.0
    %3672 = vmatprep.subr.mxu0 0.0
    %3673 = vmatpush1.xpose.msra.mxu0 0.0
    %3674 = vmatprep.subr.mxu0 0.0
    %3675 = vmatpush1.xpose.msra.mxu0 0.0
    %3676 = vmatprep.subr.mxu0 0.0
    %3677 = vmatpush1.xpose.msra.mxu0 0.0
    %3678 = vmatprep.subr.mxu0 0.0
    %3679 = vmatpush1.xpose.msra.mxu0 0.0
    %3680 = vmatprep.subr.mxu0 0.0
    %3681 = vmatpush1.xpose.msra.mxu0 0.0
    %3682 = vmatprep.subr.mxu0 0.0
    %3683 = vmatpush1.xpose.msra.mxu0 0.0
    %3684 = vmatprep.subr.mxu0 0.0
    %3685 = vmatpush1.xpose.msra.mxu0 0.0
    %3686 = vmatprep.subr.mxu0 0.0
    %3687 = vmatpush1.xpose.msra.mxu0 0.0
    %3688 = vmatprep.subr.mxu0 0.0
    %3689 = vmatpush1.xpose.msra.mxu0 0.0
    %3690 = vmatprep.subr.mxu0 0.0
    %3691 = vmatpush1.xpose.msra.mxu0 0.0
    %3692 = vmatprep.subr.mxu0 0.0
    %3693 = vmatpush1.xpose.msra.mxu0 0.0
    %3694 = vmatprep.subr.mxu0 0.0
    %3695 = vmatpush1.xpose.msra.mxu0 0.0
    %3696 = vmatprep.subr.mxu0 0.0
    %3697 = vmatpush1.xpose.msra.mxu0 0.0
    %3698 = vmatprep.subr.mxu0 0.0
    %3699 = vmatpush1.xpose.msra.mxu0 0.0
    %3700 = vmatprep.subr.mxu0 0.0
    %3701 = vmatpush1.xpose.msra.mxu0 0.0
    %3702 = vmatprep.subr.mxu0 0.0
    %3703 = vmatpush1.xpose.msra.mxu0 0.0
    %3704 = vmatprep.subr.mxu0 0.0
    %3705 = vmatpush1.xpose.msra.mxu0 0.0
    %3706 = vmatprep.subr.mxu0 0.0
    %3707 = vmatpush1.xpose.msra.mxu0 0.0
    %3708 = vmatprep.subr.mxu0 0.0
    %3709 = vmatpush1.xpose.msra.mxu0 0.0
    %3710 = vmatprep.subr.mxu0 0.0
    %3711 = vmatpush1.xpose.msra.mxu0 0.0
    %3712 = vmatprep.subr.mxu0 0.0
    %3713 = vmatpush1.xpose.msra.mxu0 0.0
    %3714 = vmatprep.subr.mxu0 0.0
    %3715 = vmatpush1.xpose.msra.mxu0 0.0
    %3716 = vmatprep.subr.mxu0 0.0
    %3717 = vmatpush1.xpose.msra.mxu0 0.0
    %3718 = vmatprep.subr.mxu0 0.0
    %3719 = vmatpush1.xpose.msra.mxu0 0.0
    %3720 = vmatprep.mubr.f32.mxu0 0.0
    %3721 = vmatmul.mubr.f32.gmra.mrb[0].mxu0 %v3652
    %v3722 = vpop.f32.mrb[0].mxu0
    %v3723 = vadd.f32 0.0, %v3722
    %v3724 = vpop.f32.mrb[0].mxu0
    %3725 = vdwg.mxu0
    %v3726 = vsel %vm353, %v3496, 0
    %v3728 = vsel %vm353, %v3503, 0
    %3730 = vmatprep.subr.mxu0 0.0
    %3731 = vmatpush1.xpose.msra.mxu0 %v3728
    %3732 = vmatprep.subr.mxu0 0.0
    %3733 = vmatpush1.xpose.msra.mxu0 0.0
    %3734 = vmatprep.subr.mxu0 0.0
    %3735 = vmatpush1.xpose.msra.mxu0 0.0
    %3736 = vmatprep.subr.mxu0 0.0
    %3737 = vmatpush1.xpose.msra.mxu0 0.0
    %3738 = vmatprep.subr.mxu0 0.0
    %3739 = vmatpush1.xpose.msra.mxu0 0.0
    %3740 = vmatprep.subr.mxu0 0.0
    %3741 = vmatpush1.xpose.msra.mxu0 0.0
    %3742 = vmatprep.subr.mxu0 0.0
    %3743 = vmatpush1.xpose.msra.mxu0 0.0
    %3744 = vmatprep.subr.mxu0 0.0
    %3745 = vmatpush1.xpose.msra.mxu0 0.0
    %3746 = vmatprep.subr.mxu0 0.0
    %3747 = vmatpush1.xpose.msra.mxu0 0.0
    %3748 = vmatprep.subr.mxu0 0.0
    %3749 = vmatpush1.xpose.msra.mxu0 0.0
    %3750 = vmatprep.subr.mxu0 0.0
    %3751 = vmatpush1.xpose.msra.mxu0 0.0
    %3752 = vmatprep.subr.mxu0 0.0
    %3753 = vmatpush1.xpose.msra.mxu0 0.0
    %3754 = vmatprep.subr.mxu0 0.0
    %3755 = vmatpush1.xpose.msra.mxu0 0.0
    %3756 = vmatprep.subr.mxu0 0.0
    %3757 = vmatpush1.xpose.msra.mxu0 0.0
    %3758 = vmatprep.subr.mxu0 0.0
    %3759 = vmatpush1.xpose.msra.mxu0 0.0
    %3760 = vmatprep.subr.mxu0 0.0
    %3761 = vmatpush1.xpose.msra.mxu0 0.0
    %3762 = vmatprep.subr.mxu0 0.0
    %3763 = vmatpush1.xpose.msra.mxu0 0.0
    %3764 = vmatprep.subr.mxu0 0.0
    %3765 = vmatpush1.xpose.msra.mxu0 0.0
    %3766 = vmatprep.subr.mxu0 0.0
    %3767 = vmatpush1.xpose.msra.mxu0 0.0
    %3768 = vmatprep.subr.mxu0 0.0
    %3769 = vmatpush1.xpose.msra.mxu0 0.0
    %3770 = vmatprep.subr.mxu0 0.0
    %3771 = vmatpush1.xpose.msra.mxu0 0.0
    %3772 = vmatprep.subr.mxu0 0.0
    %3773 = vmatpush1.xpose.msra.mxu0 0.0
    %3774 = vmatprep.subr.mxu0 0.0
    %3775 = vmatpush1.xpose.msra.mxu0 0.0
    %3776 = vmatprep.subr.mxu0 0.0
    %3777 = vmatpush1.xpose.msra.mxu0 0.0
    %3778 = vmatprep.subr.mxu0 0.0
    %3779 = vmatpush1.xpose.msra.mxu0 0.0
    %3780 = vmatprep.subr.mxu0 0.0
    %3781 = vmatpush1.xpose.msra.mxu0 0.0
    %3782 = vmatprep.subr.mxu0 0.0
    %3783 = vmatpush1.xpose.msra.mxu0 0.0
    %3784 = vmatprep.subr.mxu0 0.0
    %3785 = vmatpush1.xpose.msra.mxu0 0.0
    %3786 = vmatprep.subr.mxu0 0.0
    %3787 = vmatpush1.xpose.msra.mxu0 0.0
    %3788 = vmatprep.subr.mxu0 0.0
    %3789 = vmatpush1.xpose.msra.mxu0 0.0
    %3790 = vmatprep.subr.mxu0 0.0
    %3791 = vmatpush1.xpose.msra.mxu0 0.0
    %3792 = vmatprep.subr.mxu0 0.0
    %3793 = vmatpush1.xpose.msra.mxu0 0.0
    %3794 = vmatprep.mubr.f32.mxu0 0.0
    %3795 = vmatmul.mubr.f32.gmra.mrb[0].mxu0 %v3726
    %v3796 = vpop.f32.mrb[0].mxu0
    %v3797 = vadd.f32 0.0, %v3796
    %v3798 = vpop.f32.mrb[0].mxu0
    %3799 = vdwg.mxu0
    %v3800 = vsel %vm353, %v3575, -inf
    %3801 = vmax.xlane.f32.xlu0 %v3800
    %v3802 = vpop.xlane.xlu0 %3801
    %v3803 = vsel %vm353, %v3649, -inf
    %3804 = vmax.xlane.f32.xlu0 %v3803
    %v3805 = vpop.xlane.xlu0 %3804
    %v3806 = vsel %vm353, %v3723, -inf
    %3807 = vmax.xlane.f32.xlu0 %v3806
    %v3808 = vpop.xlane.xlu0 %3807
    %v3809 = vsel %vm353, %v3797, -inf
    %3810 = vmax.xlane.f32.xlu0 %v3809
    %v3811 = vpop.xlane.xlu0 %3810
    %v3812 = vsub.f32 %v3575, %v3802
    %v3813 = vsub.f32 %v3649, %v3805
    %v3814 = vsub.f32 %v3723, %v3808
    %v3815 = vsub.f32 %v3797, %v3811
    %v3816 = vmul.f32 %v3812, 1.442695
    %v3817 = vpow.pop %v3816
    %v3818 = vmul.f32 %v3813, 1.442695
    %v3819 = vpow.pop %v3818
    %v3820 = vmul.f32 %v3814, 1.442695
    %v3821 = vpow.pop %v3820
    %v3822 = vmul.f32 %v3815, 1.442695
    %v3823 = vpow.pop %v3822
    %v3824 = vsel %vm353, %v3817, 0.0
    %3825 = vadd.xlane.f32.xlu0 %v3824
    %v3826 = vpop.xlane.xlu0 %3825
    %v3827 = vsel %vm353, %v3819, 0.0
    %3828 = vadd.xlane.f32.xlu0 %v3827
    %v3829 = vpop.xlane.xlu0 %3828
    %v3830 = vsel %vm353, %v3821, 0.0
    %3831 = vadd.xlane.f32.xlu0 %v3830
    %v3832 = vpop.xlane.xlu0 %3831
    %v3833 = vsel %vm353, %v3823, 0.0
    %3834 = vadd.xlane.f32.xlu0 %v3833
    %v3835 = vpop.xlane.xlu0 %3834
    %v3836 = vrcp.pop %v3826
    %v3837 = vmul.f32 1.0, %v3836
    %v3838 = vrcp.pop %v3829
    %v3839 = vmul.f32 1.0, %v3838
    %v3840 = vrcp.pop %v3832
    %v3841 = vmul.f32 1.0, %v3840
    %v3842 = vrcp.pop %v3835
    %v3843 = vmul.f32 1.0, %v3842
    %v3844 = vmul.f32 %v3817, %v3837
    %v3845 = vmul.f32 %v3819, %v3839
    %v3846 = vmul.f32 %v3821, %v3841
    %v3847 = vmul.f32 %v3823, %v3843
    %3848 = vrot.lane.b32.xlu0 %v2521, 96
    %v3849 = vpop.permute.xlu0 %3848
    %v3852 = vsel %vm353, %v3844, 0
    %3854 = vmatprep.subr.mxu0 0.0
    %3855 = vmatpush1.msra.mxu0 %v3849
    %3856 = vmatprep.subr.mxu0 0.0
    %3857 = vmatpush1.msra.mxu0 0.0
    %3858 = vmatprep.subr.mxu0 0.0
    %3859 = vmatpush1.msra.mxu0 0.0
    %3860 = vmatprep.subr.mxu0 0.0
    %3861 = vmatpush1.msra.mxu0 0.0
    %3862 = vmatprep.subr.mxu0 0.0
    %3863 = vmatpush1.msra.mxu0 0.0
    %3864 = vmatprep.subr.mxu0 0.0
    %3865 = vmatpush1.msra.mxu0 0.0
    %3866 = vmatprep.subr.mxu0 0.0
    %3867 = vmatpush1.msra.mxu0 0.0
    %3868 = vmatprep.subr.mxu0 0.0
    %3869 = vmatpush1.msra.mxu0 0.0
    %3870 = vmatprep.subr.mxu0 0.0
    %3871 = vmatpush1.msra.mxu0 0.0
    %3872 = vmatprep.subr.mxu0 0.0
    %3873 = vmatpush1.msra.mxu0 0.0
    %3874 = vmatprep.subr.mxu0 0.0
    %3875 = vmatpush1.msra.mxu0 0.0
    %3876 = vmatprep.subr.mxu0 0.0
    %3877 = vmatpush1.msra.mxu0 0.0
    %3878 = vmatprep.subr.mxu0 0.0
    %3879 = vmatpush1.msra.mxu0 0.0
    %3880 = vmatprep.subr.mxu0 0.0
    %3881 = vmatpush1.msra.mxu0 0.0
    %3882 = vmatprep.subr.mxu0 0.0
    %3883 = vmatpush1.msra.mxu0 0.0
    %3884 = vmatprep.subr.mxu0 0.0
    %3885 = vmatpush1.msra.mxu0 0.0
    %3886 = vmatprep.subr.mxu0 0.0
    %3887 = vmatpush1.msra.mxu0 0.0
    %3888 = vmatprep.subr.mxu0 0.0
    %3889 = vmatpush1.msra.mxu0 0.0
    %3890 = vmatprep.subr.mxu0 0.0
    %3891 = vmatpush1.msra.mxu0 0.0
    %3892 = vmatprep.subr.mxu0 0.0
    %3893 = vmatpush1.msra.mxu0 0.0
    %3894 = vmatprep.subr.mxu0 0.0
    %3895 = vmatpush1.msra.mxu0 0.0
    %3896 = vmatprep.subr.mxu0 0.0
    %3897 = vmatpush1.msra.mxu0 0.0
    %3898 = vmatprep.subr.mxu0 0.0
    %3899 = vmatpush1.msra.mxu0 0.0
    %3900 = vmatprep.subr.mxu0 0.0
    %3901 = vmatpush1.msra.mxu0 0.0
    %3902 = vmatprep.subr.mxu0 0.0
    %3903 = vmatpush1.msra.mxu0 0.0
    %3904 = vmatprep.subr.mxu0 0.0
    %3905 = vmatpush1.msra.mxu0 0.0
    %3906 = vmatprep.subr.mxu0 0.0
    %3907 = vmatpush1.msra.mxu0 0.0
    %3908 = vmatprep.subr.mxu0 0.0
    %3909 = vmatpush1.msra.mxu0 0.0
    %3910 = vmatprep.subr.mxu0 0.0
    %3911 = vmatpush1.msra.mxu0 0.0
    %3912 = vmatprep.subr.mxu0 0.0
    %3913 = vmatpush1.msra.mxu0 0.0
    %3914 = vmatprep.subr.mxu0 0.0
    %3915 = vmatpush1.msra.mxu0 0.0
    %3916 = vmatprep.subr.mxu0 0.0
    %3917 = vmatpush1.msra.mxu0 0.0
    %3918 = vmatprep.mubr.f32.mxu0 0.0
    %3919 = vmatmul.mubr.f32.gmra.mrb[0].mxu0 %v3852
    %v3920 = vpop.f32.mrb[0].mxu0
    %v3921 = vadd.f32 0.0, %v3920
    %v3922 = vpop.f32.mrb[0].mxu0
    %3923 = vdwg.mxu0
    %3924 = vrot.lane.b32.xlu0 %v3499, 96
    %v3925 = vpop.permute.xlu0 %3924
    %v3928 = vsel %vm353, %v3845, 0
    %3930 = vmatprep.subr.mxu0 0.0
    %3931 = vmatpush1.msra.mxu0 %v3925
    %3932 = vmatprep.subr.mxu0 0.0
    %3933 = vmatpush1.msra.mxu0 0.0
    %3934 = vmatprep.subr.mxu0 0.0
    %3935 = vmatpush1.msra.mxu0 0.0
    %3936 = vmatprep.subr.mxu0 0.0
    %3937 = vmatpush1.msra.mxu0 0.0
    %3938 = vmatprep.subr.mxu0 0.0
    %3939 = vmatpush1.msra.mxu0 0.0
    %3940 = vmatprep.subr.mxu0 0.0
    %3941 = vmatpush1.msra.mxu0 0.0
    %3942 = vmatprep.subr.mxu0 0.0
    %3943 = vmatpush1.msra.mxu0 0.0
    %3944 = vmatprep.subr.mxu0 0.0
    %3945 = vmatpush1.msra.mxu0 0.0
    %3946 = vmatprep.subr.mxu0 0.0
    %3947 = vmatpush1.msra.mxu0 0.0
    %3948 = vmatprep.subr.mxu0 0.0
    %3949 = vmatpush1.msra.mxu0 0.0
    %3950 = vmatprep.subr.mxu0 0.0
    %3951 = vmatpush1.msra.mxu0 0.0
    %3952 = vmatprep.subr.mxu0 0.0
    %3953 = vmatpush1.msra.mxu0 0.0
    %3954 = vmatprep.subr.mxu0 0.0
    %3955 = vmatpush1.msra.mxu0 0.0
    %3956 = vmatprep.subr.mxu0 0.0
    %3957 = vmatpush1.msra.mxu0 0.0
    %3958 = vmatprep.subr.mxu0 0.0
    %3959 = vmatpush1.msra.mxu0 0.0
    %3960 = vmatprep.subr.mxu0 0.0
    %3961 = vmatpush1.msra.mxu0 0.0
    %3962 = vmatprep.subr.mxu0 0.0
    %3963 = vmatpush1.msra.mxu0 0.0
    %3964 = vmatprep.subr.mxu0 0.0
    %3965 = vmatpush1.msra.mxu0 0.0
    %3966 = vmatprep.subr.mxu0 0.0
    %3967 = vmatpush1.msra.mxu0 0.0
    %3968 = vmatprep.subr.mxu0 0.0
    %3969 = vmatpush1.msra.mxu0 0.0
    %3970 = vmatprep.subr.mxu0 0.0
    %3971 = vmatpush1.msra.mxu0 0.0
    %3972 = vmatprep.subr.mxu0 0.0
    %3973 = vmatpush1.msra.mxu0 0.0
    %3974 = vmatprep.subr.mxu0 0.0
    %3975 = vmatpush1.msra.mxu0 0.0
    %3976 = vmatprep.subr.mxu0 0.0
    %3977 = vmatpush1.msra.mxu0 0.0
    %3978 = vmatprep.subr.mxu0 0.0
    %3979 = vmatpush1.msra.mxu0 0.0
    %3980 = vmatprep.subr.mxu0 0.0
    %3981 = vmatpush1.msra.mxu0 0.0
    %3982 = vmatprep.subr.mxu0 0.0
    %3983 = vmatpush1.msra.mxu0 0.0
    %3984 = vmatprep.subr.mxu0 0.0
    %3985 = vmatpush1.msra.mxu0 0.0
    %3986 = vmatprep.subr.mxu0 0.0
    %3987 = vmatpush1.msra.mxu0 0.0
    %3988 = vmatprep.subr.mxu0 0.0
    %3989 = vmatpush1.msra.mxu0 0.0
    %3990 = vmatprep.subr.mxu0 0.0
    %3991 = vmatpush1.msra.mxu0 0.0
    %3992 = vmatprep.subr.mxu0 0.0
    %3993 = vmatpush1.msra.mxu0 0.0
    %3994 = vmatprep.mubr.f32.mxu0 0.0
    %3995 = vmatmul.mubr.f32.gmra.mrb[0].mxu0 %v3928
    %v3996 = vpop.f32.mrb[0].mxu0
    %v3997 = vadd.f32 0.0, %v3996
    %v3998 = vpop.f32.mrb[0].mxu0
    %3999 = vdwg.mxu0
    %4000 = vrot.lane.b32.xlu0 %v3501, 96
    %v4001 = vpop.permute.xlu0 %4000
    %v4004 = vsel %vm353, %v3846, 0
    %4006 = vmatprep.subr.mxu0 0.0
    %4007 = vmatpush1.msra.mxu0 %v4001
    %4008 = vmatprep.subr.mxu0 0.0
    %4009 = vmatpush1.msra.mxu0 0.0
    %4010 = vmatprep.subr.mxu0 0.0
    %4011 = vmatpush1.msra.mxu0 0.0
    %4012 = vmatprep.subr.mxu0 0.0
    %4013 = vmatpush1.msra.mxu0 0.0
    %4014 = vmatprep.subr.mxu0 0.0
    %4015 = vmatpush1.msra.mxu0 0.0
    %4016 = vmatprep.subr.mxu0 0.0
    %4017 = vmatpush1.msra.mxu0 0.0
    %4018 = vmatprep.subr.mxu0 0.0
    %4019 = vmatpush1.msra.mxu0 0.0
    %4020 = vmatprep.subr.mxu0 0.0
    %4021 = vmatpush1.msra.mxu0 0.0
    %4022 = vmatprep.subr.mxu0 0.0
    %4023 = vmatpush1.msra.mxu0 0.0
    %4024 = vmatprep.subr.mxu0 0.0
    %4025 = vmatpush1.msra.mxu0 0.0
    %4026 = vmatprep.subr.mxu0 0.0
    %4027 = vmatpush1.msra.mxu0 0.0
    %4028 = vmatprep.subr.mxu0 0.0
    %4029 = vmatpush1.msra.mxu0 0.0
    %4030 = vmatprep.subr.mxu0 0.0
    %4031 = vmatpush1.msra.mxu0 0.0
    %4032 = vmatprep.subr.mxu0 0.0
    %4033 = vmatpush1.msra.mxu0 0.0
    %4034 = vmatprep.subr.mxu0 0.0
    %4035 = vmatpush1.msra.mxu0 0.0
    %4036 = vmatprep.subr.mxu0 0.0
    %4037 = vmatpush1.msra.mxu0 0.0
    %4038 = vmatprep.subr.mxu0 0.0
    %4039 = vmatpush1.msra.mxu0 0.0
    %4040 = vmatprep.subr.mxu0 0.0
    %4041 = vmatpush1.msra.mxu0 0.0
    %4042 = vmatprep.subr.mxu0 0.0
    %4043 = vmatpush1.msra.mxu0 0.0
    %4044 = vmatprep.subr.mxu0 0.0
    %4045 = vmatpush1.msra.mxu0 0.0
    %4046 = vmatprep.subr.mxu0 0.0
    %4047 = vmatpush1.msra.mxu0 0.0
    %4048 = vmatprep.subr.mxu0 0.0
    %4049 = vmatpush1.msra.mxu0 0.0
    %4050 = vmatprep.subr.mxu0 0.0
    %4051 = vmatpush1.msra.mxu0 0.0
    %4052 = vmatprep.subr.mxu0 0.0
    %4053 = vmatpush1.msra.mxu0 0.0
    %4054 = vmatprep.subr.mxu0 0.0
    %4055 = vmatpush1.msra.mxu0 0.0
    %4056 = vmatprep.subr.mxu0 0.0
    %4057 = vmatpush1.msra.mxu0 0.0
    %4058 = vmatprep.subr.mxu0 0.0
    %4059 = vmatpush1.msra.mxu0 0.0
    %4060 = vmatprep.subr.mxu0 0.0
    %4061 = vmatpush1.msra.mxu0 0.0
    %4062 = vmatprep.subr.mxu0 0.0
    %4063 = vmatpush1.msra.mxu0 0.0
    %4064 = vmatprep.subr.mxu0 0.0
    %4065 = vmatpush1.msra.mxu0 0.0
    %4066 = vmatprep.subr.mxu0 0.0
    %4067 = vmatpush1.msra.mxu0 0.0
    %4068 = vmatprep.subr.mxu0 0.0
    %4069 = vmatpush1.msra.mxu0 0.0
    %4070 = vmatprep.mubr.f32.mxu0 0.0
    %4071 = vmatmul.mubr.f32.gmra.mrb[0].mxu0 %v4004
    %v4072 = vpop.f32.mrb[0].mxu0
    %v4073 = vadd.f32 0.0, %v4072
    %v4074 = vpop.f32.mrb[0].mxu0
    %4075 = vdwg.mxu0
    %4076 = vrot.lane.b32.xlu0 %v3503, 96
    %v4077 = vpop.permute.xlu0 %4076
    %v4080 = vsel %vm353, %v3847, 0
    %4082 = vmatprep.subr.mxu0 0.0
    %4083 = vmatpush1.msra.mxu0 %v4077
    %4084 = vmatprep.subr.mxu0 0.0
    %4085 = vmatpush1.msra.mxu0 0.0
    %4086 = vmatprep.subr.mxu0 0.0
    %4087 = vmatpush1.msra.mxu0 0.0
    %4088 = vmatprep.subr.mxu0 0.0
    %4089 = vmatpush1.msra.mxu0 0.0
    %4090 = vmatprep.subr.mxu0 0.0
    %4091 = vmatpush1.msra.mxu0 0.0
    %4092 = vmatprep.subr.mxu0 0.0
    %4093 = vmatpush1.msra.mxu0 0.0
    %4094 = vmatprep.subr.mxu0 0.0
    %4095 = vmatpush1.msra.mxu0 0.0
    %4096 = vmatprep.subr.mxu0 0.0
    %4097 = vmatpush1.msra.mxu0 0.0
    %4098 = vmatprep.subr.mxu0 0.0
    %4099 = vmatpush1.msra.mxu0 0.0
    %4100 = vmatprep.subr.mxu0 0.0
    %4101 = vmatpush1.msra.mxu0 0.0
    %4102 = vmatprep.subr.mxu0 0.0
    %4103 = vmatpush1.msra.mxu0 0.0
    %4104 = vmatprep.subr.mxu0 0.0
    %4105 = vmatpush1.msra.mxu0 0.0
    %4106 = vmatprep.subr.mxu0 0.0
    %4107 = vmatpush1.msra.mxu0 0.0
    %4108 = vmatprep.subr.mxu0 0.0
    %4109 = vmatpush1.msra.mxu0 0.0
    %4110 = vmatprep.subr.mxu0 0.0
    %4111 = vmatpush1.msra.mxu0 0.0
    %4112 = vmatprep.subr.mxu0 0.0
    %4113 = vmatpush1.msra.mxu0 0.0
    %4114 = vmatprep.subr.mxu0 0.0
    %4115 = vmatpush1.msra.mxu0 0.0
    %4116 = vmatprep.subr.mxu0 0.0
    %4117 = vmatpush1.msra.mxu0 0.0
    %4118 = vmatprep.subr.mxu0 0.0
    %4119 = vmatpush1.msra.mxu0 0.0
    %4120 = vmatprep.subr.mxu0 0.0
    %4121 = vmatpush1.msra.mxu0 0.0
    %4122 = vmatprep.subr.mxu0 0.0
    %4123 = vmatpush1.msra.mxu0 0.0
    %4124 = vmatprep.subr.mxu0 0.0
    %4125 = vmatpush1.msra.mxu0 0.0
    %4126 = vmatprep.subr.mxu0 0.0
    %4127 = vmatpush1.msra.mxu0 0.0
    %4128 = vmatprep.subr.mxu0 0.0
    %4129 = vmatpush1.msra.mxu0 0.0
    %4130 = vmatprep.subr.mxu0 0.0
    %4131 = vmatpush1.msra.mxu0 0.0
    %4132 = vmatprep.subr.mxu0 0.0
    %4133 = vmatpush1.msra.mxu0 0.0
    %4134 = vmatprep.subr.mxu0 0.0
    %4135 = vmatpush1.msra.mxu0 0.0
    %4136 = vmatprep.subr.mxu0 0.0
    %4137 = vmatpush1.msra.mxu0 0.0
    %4138 = vmatprep.subr.mxu0 0.0
    %4139 = vmatpush1.msra.mxu0 0.0
    %4140 = vmatprep.subr.mxu0 0.0
    %4141 = vmatpush1.msra.mxu0 0.0
    %4142 = vmatprep.subr.mxu0 0.0
    %4143 = vmatpush1.msra.mxu0 0.0
    %4144 = vmatprep.subr.mxu0 0.0
    %4145 = vmatpush1.msra.mxu0 0.0
    %4146 = vmatprep.mubr.f32.mxu0 0.0
    %4147 = vmatmul.mubr.f32.gmra.mrb[0].mxu0 %v4080
    %v4148 = vpop.f32.mrb[0].mxu0
    %v4149 = vadd.f32 0.0, %v4148
    %v4150 = vpop.f32.mrb[0].mxu0
    %4151 = vdwg.mxu0
    %v4153 = vsel %vm353, %v3921, 0
    %4155 = vmatprep.subr.mxu0 0.0
    %4156 = vmatpush1.msra.mxu0 %v2524
    %4157 = vmatprep.subr.mxu0 0.0
    %4158 = vmatpush1.msra.mxu0 0.0
    %4159 = vmatprep.subr.mxu0 0.0
    %4160 = vmatpush1.msra.mxu0 0.0
    %4161 = vmatprep.subr.mxu0 0.0
    %4162 = vmatpush1.msra.mxu0 0.0
    %4163 = vmatprep.subr.mxu0 0.0
    %4164 = vmatpush1.msra.mxu0 0.0
    %4165 = vmatprep.subr.mxu0 0.0
    %4166 = vmatpush1.msra.mxu0 0.0
    %4167 = vmatprep.subr.mxu0 0.0
    %4168 = vmatpush1.msra.mxu0 0.0
    %4169 = vmatprep.subr.mxu0 0.0
    %4170 = vmatpush1.msra.mxu0 0.0
    %4171 = vmatprep.subr.mxu0 0.0
    %4172 = vmatpush1.msra.mxu0 0.0
    %4173 = vmatprep.subr.mxu0 0.0
    %4174 = vmatpush1.msra.mxu0 0.0
    %4175 = vmatprep.subr.mxu0 0.0
    %4176 = vmatpush1.msra.mxu0 0.0
    %4177 = vmatprep.subr.mxu0 0.0
    %4178 = vmatpush1.msra.mxu0 0.0
    %4179 = vmatprep.subr.mxu0 0.0
    %4180 = vmatpush1.msra.mxu0 0.0
    %4181 = vmatprep.subr.mxu0 0.0
    %4182 = vmatpush1.msra.mxu0 0.0
    %4183 = vmatprep.subr.mxu0 0.0
    %4184 = vmatpush1.msra.mxu0 0.0
    %4185 = vmatprep.subr.mxu0 0.0
    %4186 = vmatpush1.msra.mxu0 0.0
    %4187 = vmatprep.subr.mxu0 0.0
    %4188 = vmatpush1.msra.mxu0 0.0
    %4189 = vmatprep.subr.mxu0 0.0
    %4190 = vmatpush1.msra.mxu0 0.0
    %4191 = vmatprep.subr.mxu0 0.0
    %4192 = vmatpush1.msra.mxu0 0.0
    %4193 = vmatprep.subr.mxu0 0.0
    %4194 = vmatpush1.msra.mxu0 0.0
    %4195 = vmatprep.subr.mxu0 0.0
    %4196 = vmatpush1.msra.mxu0 0.0
    %4197 = vmatprep.subr.mxu0 0.0
    %4198 = vmatpush1.msra.mxu0 0.0
    %4199 = vmatprep.subr.mxu0 0.0
    %4200 = vmatpush1.msra.mxu0 0.0
    %4201 = vmatprep.subr.mxu0 0.0
    %4202 = vmatpush1.msra.mxu0 0.0
    %4203 = vmatprep.subr.mxu0 0.0
    %4204 = vmatpush1.msra.mxu0 0.0
    %4205 = vmatprep.subr.mxu0 0.0
    %4206 = vmatpush1.msra.mxu0 0.0
    %4207 = vmatprep.subr.mxu0 0.0
    %4208 = vmatpush1.msra.mxu0 0.0
    %4209 = vmatprep.subr.mxu0 0.0
    %4210 = vmatpush1.msra.mxu0 0.0
    %4211 = vmatprep.subr.mxu0 0.0
    %4212 = vmatpush1.msra.mxu0 0.0
    %4213 = vmatprep.subr.mxu0 0.0
    %4214 = vmatpush1.msra.mxu0 0.0
    %4215 = vmatprep.subr.mxu0 0.0
    %4216 = vmatpush1.msra.mxu0 0.0
    %4217 = vmatprep.subr.mxu0 0.0
    %4218 = vmatpush1.msra.mxu0 0.0
    %4219 = vmatprep.mubr.f32.mxu0 0.0
    %4220 = vmatmul.mubr.f32.gmra.mrb[0].mxu0 %v4153
    %v4221 = vpop.f32.mrb[0].mxu0
    %v4222 = vadd.f32 0.0, %v4221
    %v4223 = vpop.f32.mrb[0].mxu0
    %4224 = vdwg.mxu0
    %v4226 = vsel %vm353, %v3997, 0
    %4228 = vmatprep.subr.mxu0 0.0
    %4229 = vmatpush1.msra.mxu0 %v2525
    %4230 = vmatprep.subr.mxu0 0.0
    %4231 = vmatpush1.msra.mxu0 0.0
    %4232 = vmatprep.subr.mxu0 0.0
    %4233 = vmatpush1.msra.mxu0 0.0
    %4234 = vmatprep.subr.mxu0 0.0
    %4235 = vmatpush1.msra.mxu0 0.0
    %4236 = vmatprep.subr.mxu0 0.0
    %4237 = vmatpush1.msra.mxu0 0.0
    %4238 = vmatprep.subr.mxu0 0.0
    %4239 = vmatpush1.msra.mxu0 0.0
    %4240 = vmatprep.subr.mxu0 0.0
    %4241 = vmatpush1.msra.mxu0 0.0
    %4242 = vmatprep.subr.mxu0 0.0
    %4243 = vmatpush1.msra.mxu0 0.0
    %4244 = vmatprep.subr.mxu0 0.0
    %4245 = vmatpush1.msra.mxu0 0.0
    %4246 = vmatprep.subr.mxu0 0.0
    %4247 = vmatpush1.msra.mxu0 0.0
    %4248 = vmatprep.subr.mxu0 0.0
    %4249 = vmatpush1.msra.mxu0 0.0
    %4250 = vmatprep.subr.mxu0 0.0
    %4251 = vmatpush1.msra.mxu0 0.0
    %4252 = vmatprep.subr.mxu0 0.0
    %4253 = vmatpush1.msra.mxu0 0.0
    %4254 = vmatprep.subr.mxu0 0.0
    %4255 = vmatpush1.msra.mxu0 0.0
    %4256 = vmatprep.subr.mxu0 0.0
    %4257 = vmatpush1.msra.mxu0 0.0
    %4258 = vmatprep.subr.mxu0 0.0
    %4259 = vmatpush1.msra.mxu0 0.0
    %4260 = vmatprep.subr.mxu0 0.0
    %4261 = vmatpush1.msra.mxu0 0.0
    %4262 = vmatprep.subr.mxu0 0.0
    %4263 = vmatpush1.msra.mxu0 0.0
    %4264 = vmatprep.subr.mxu0 0.0
    %4265 = vmatpush1.msra.mxu0 0.0
    %4266 = vmatprep.subr.mxu0 0.0
    %4267 = vmatpush1.msra.mxu0 0.0
    %4268 = vmatprep.subr.mxu0 0.0
    %4269 = vmatpush1.msra.mxu0 0.0
    %4270 = vmatprep.subr.mxu0 0.0
    %4271 = vmatpush1.msra.mxu0 0.0
    %4272 = vmatprep.subr.mxu0 0.0
    %4273 = vmatpush1.msra.mxu0 0.0
    %4274 = vmatprep.subr.mxu0 0.0
    %4275 = vmatpush1.msra.mxu0 0.0
    %4276 = vmatprep.subr.mxu0 0.0
    %4277 = vmatpush1.msra.mxu0 0.0
    %4278 = vmatprep.subr.mxu0 0.0
    %4279 = vmatpush1.msra.mxu0 0.0
    %4280 = vmatprep.subr.mxu0 0.0
    %4281 = vmatpush1.msra.mxu0 0.0
    %4282 = vmatprep.subr.mxu0 0.0
    %4283 = vmatpush1.msra.mxu0 0.0
    %4284 = vmatprep.subr.mxu0 0.0
    %4285 = vmatpush1.msra.mxu0 0.0
    %4286 = vmatprep.subr.mxu0 0.0
    %4287 = vmatpush1.msra.mxu0 0.0
    %4288 = vmatprep.subr.mxu0 0.0
    %4289 = vmatpush1.msra.mxu0 0.0
    %4290 = vmatprep.subr.mxu0 0.0
    %4291 = vmatpush1.msra.mxu0 0.0
    %4292 = vmatprep.mubr.f32.mxu0 0.0
    %4293 = vmatmul.mubr.f32.gmra.mrb[0].mxu0 %v4226
    %v4294 = vpop.f32.mrb[0].mxu0
    %v4295 = vadd.f32 0.0, %v4294
    %v4296 = vpop.f32.mrb[0].mxu0
    %4297 = vdwg.mxu0
    %v4299 = vsel %vm353, %v4073, 0
    %4301 = vmatprep.subr.mxu0 0.0
    %4302 = vmatpush1.msra.mxu0 %v2526
    %4303 = vmatprep.subr.mxu0 0.0
    %4304 = vmatpush1.msra.mxu0 0.0
    %4305 = vmatprep.subr.mxu0 0.0
    %4306 = vmatpush1.msra.mxu0 0.0
    %4307 = vmatprep.subr.mxu0 0.0
    %4308 = vmatpush1.msra.mxu0 0.0
    %4309 = vmatprep.subr.mxu0 0.0
    %4310 = vmatpush1.msra.mxu0 0.0
    %4311 = vmatprep.subr.mxu0 0.0
    %4312 = vmatpush1.msra.mxu0 0.0
    %4313 = vmatprep.subr.mxu0 0.0
    %4314 = vmatpush1.msra.mxu0 0.0
    %4315 = vmatprep.subr.mxu0 0.0
    %4316 = vmatpush1.msra.mxu0 0.0
    %4317 = vmatprep.subr.mxu0 0.0
    %4318 = vmatpush1.msra.mxu0 0.0
    %4319 = vmatprep.subr.mxu0 0.0
    %4320 = vmatpush1.msra.mxu0 0.0
    %4321 = vmatprep.subr.mxu0 0.0
    %4322 = vmatpush1.msra.mxu0 0.0
    %4323 = vmatprep.subr.mxu0 0.0
    %4324 = vmatpush1.msra.mxu0 0.0
    %4325 = vmatprep.subr.mxu0 0.0
    %4326 = vmatpush1.msra.mxu0 0.0
    %4327 = vmatprep.subr.mxu0 0.0
    %4328 = vmatpush1.msra.mxu0 0.0
    %4329 = vmatprep.subr.mxu0 0.0
    %4330 = vmatpush1.msra.mxu0 0.0
    %4331 = vmatprep.subr.mxu0 0.0
    %4332 = vmatpush1.msra.mxu0 0.0
    %4333 = vmatprep.subr.mxu0 0.0
    %4334 = vmatpush1.msra.mxu0 0.0
    %4335 = vmatprep.subr.mxu0 0.0
    %4336 = vmatpush1.msra.mxu0 0.0
    %4337 = vmatprep.subr.mxu0 0.0
    %4338 = vmatpush1.msra.mxu0 0.0
    %4339 = vmatprep.subr.mxu0 0.0
    %4340 = vmatpush1.msra.mxu0 0.0
    %4341 = vmatprep.subr.mxu0 0.0
    %4342 = vmatpush1.msra.mxu0 0.0
    %4343 = vmatprep.subr.mxu0 0.0
    %4344 = vmatpush1.msra.mxu0 0.0
    %4345 = vmatprep.subr.mxu0 0.0
    %4346 = vmatpush1.msra.mxu0 0.0
    %4347 = vmatprep.subr.mxu0 0.0
    %4348 = vmatpush1.msra.mxu0 0.0
    %4349 = vmatprep.subr.mxu0 0.0
    %4350 = vmatpush1.msra.mxu0 0.0
    %4351 = vmatprep.subr.mxu0 0.0
    %4352 = vmatpush1.msra.mxu0 0.0
    %4353 = vmatprep.subr.mxu0 0.0
    %4354 = vmatpush1.msra.mxu0 0.0
    %4355 = vmatprep.subr.mxu0 0.0
    %4356 = vmatpush1.msra.mxu0 0.0
    %4357 = vmatprep.subr.mxu0 0.0
    %4358 = vmatpush1.msra.mxu0 0.0
    %4359 = vmatprep.subr.mxu0 0.0
    %4360 = vmatpush1.msra.mxu0 0.0
    %4361 = vmatprep.subr.mxu0 0.0
    %4362 = vmatpush1.msra.mxu0 0.0
    %4363 = vmatprep.subr.mxu0 0.0
    %4364 = vmatpush1.msra.mxu0 0.0
    %4365 = vmatprep.mubr.f32.mxu0 0.0
    %4366 = vmatmul.mubr.f32.gmra.mrb[0].mxu0 %v4299
    %v4367 = vpop.f32.mrb[0].mxu0
    %v4368 = vadd.f32 0.0, %v4367
    %v4369 = vpop.f32.mrb[0].mxu0
    %4370 = vdwg.mxu0
    %v4372 = vsel %vm353, %v4149, 0
    %4374 = vmatprep.subr.mxu0 0.0
    %4375 = vmatpush1.msra.mxu0 %v2527
    %4376 = vmatprep.subr.mxu0 0.0
    %4377 = vmatpush1.msra.mxu0 0.0
    %4378 = vmatprep.subr.mxu0 0.0
    %4379 = vmatpush1.msra.mxu0 0.0
    %4380 = vmatprep.subr.mxu0 0.0
    %4381 = vmatpush1.msra.mxu0 0.0
    %4382 = vmatprep.subr.mxu0 0.0
    %4383 = vmatpush1.msra.mxu0 0.0
    %4384 = vmatprep.subr.mxu0 0.0
    %4385 = vmatpush1.msra.mxu0 0.0
    %4386 = vmatprep.subr.mxu0 0.0
    %4387 = vmatpush1.msra.mxu0 0.0
    %4388 = vmatprep.subr.mxu0 0.0
    %4389 = vmatpush1.msra.mxu0 0.0
    %4390 = vmatprep.subr.mxu0 0.0
    %4391 = vmatpush1.msra.mxu0 0.0
    %4392 = vmatprep.subr.mxu0 0.0
    %4393 = vmatpush1.msra.mxu0 0.0
    %4394 = vmatprep.subr.mxu0 0.0
    %4395 = vmatpush1.msra.mxu0 0.0
    %4396 = vmatprep.subr.mxu0 0.0
    %4397 = vmatpush1.msra.mxu0 0.0
    %4398 = vmatprep.subr.mxu0 0.0
    %4399 = vmatpush1.msra.mxu0 0.0
    %4400 = vmatprep.subr.mxu0 0.0
    %4401 = vmatpush1.msra.mxu0 0.0
    %4402 = vmatprep.subr.mxu0 0.0
    %4403 = vmatpush1.msra.mxu0 0.0
    %4404 = vmatprep.subr.mxu0 0.0
    %4405 = vmatpush1.msra.mxu0 0.0
    %4406 = vmatprep.subr.mxu0 0.0
    %4407 = vmatpush1.msra.mxu0 0.0
    %4408 = vmatprep.subr.mxu0 0.0
    %4409 = vmatpush1.msra.mxu0 0.0
    %4410 = vmatprep.subr.mxu0 0.0
    %4411 = vmatpush1.msra.mxu0 0.0
    %4412 = vmatprep.subr.mxu0 0.0
    %4413 = vmatpush1.msra.mxu0 0.0
    %4414 = vmatprep.subr.mxu0 0.0
    %4415 = vmatpush1.msra.mxu0 0.0
    %4416 = vmatprep.subr.mxu0 0.0
    %4417 = vmatpush1.msra.mxu0 0.0
    %4418 = vmatprep.subr.mxu0 0.0
    %4419 = vmatpush1.msra.mxu0 0.0
    %4420 = vmatprep.subr.mxu0 0.0
    %4421 = vmatpush1.msra.mxu0 0.0
    %4422 = vmatprep.subr.mxu0 0.0
    %4423 = vmatpush1.msra.mxu0 0.0
    %4424 = vmatprep.subr.mxu0 0.0
    %4425 = vmatpush1.msra.mxu0 0.0
    %4426 = vmatprep.subr.mxu0 0.0
    %4427 = vmatpush1.msra.mxu0 0.0
    %4428 = vmatprep.subr.mxu0 0.0
    %4429 = vmatpush1.msra.mxu0 0.0
    %4430 = vmatprep.subr.mxu0 0.0
    %4431 = vmatpush1.msra.mxu0 0.0
    %4432 = vmatprep.subr.mxu0 0.0
    %4433 = vmatpush1.msra.mxu0 0.0
    %4434 = vmatprep.subr.mxu0 0.0
    %4435 = vmatpush1.msra.mxu0 0.0
    %4436 = vmatprep.subr.mxu0 0.0
    %4437 = vmatpush1.msra.mxu0 0.0
    %4438 = vmatprep.mubr.f32.mxu0 0.0
    %4439 = vmatmul.mubr.f32.gmra.mrb[0].mxu0 %v4372
    %v4440 = vpop.f32.mrb[0].mxu0
    %v4441 = vadd.f32 0.0, %v4440
    %v4442 = vpop.f32.mrb[0].mxu0
    %4443 = vdwg.mxu0
    %v4444 = vsel %vm257, %v4222, 0.0
    %v4445 = vsel %vm257, %v4295, 0.0
    %v4446 = vadd.f32 %v4444, %v4445
    %v4447 = vsel %vm257, %v4368, 0.0
    %v4448 = vadd.f32 %v4446, %v4447
    %v4449 = vsel %vm257, %v4441, 0.0
    %v4450 = vadd.f32 %v4448, %v4449
    %v4452 = vlaneseq
    %v4453 = vshrl.u32 %v4452, 7
    %v4454 = vsub.s32 0, %v4453
    %v4455 = vrot.slane %v2528, %v4454
    %v4457 = vadd.f32 %v3489, %v4455
    %v4458 = vadd.f32 %v4450, %v4455
    %v4459 = vadd.f32 %v2338, %v4457
    %v4460 = vadd.f32 %v2339, %v4458
    %v4461 = vld [vmem:[#allocation19] sm:$0x1]
    %v4462 = vld [vmem:[#allocation20] sm:$0x1]
    %v4463 = vsel %vm257, %v4459, 0.0
    %4464 = vadd.xlane.f32.xlu0 %v4463
    %v4465 = vpop.xlane.xlu0 %4464
    %v4466 = vsel %vm257, %v4460, 0.0
    %4467 = vadd.xlane.f32.xlu0 %v4466
    %v4468 = vpop.xlane.xlu0 %4467
    %v4469 = vmul.f32 %v4465, %v2287
    %v4470 = vmul.f32 %v4468, %v2287
    %v4471 = vsub.f32 %v4459, %v4469
    %v4472 = vsub.f32 %v4460, %v4470
    %v4473 = vmul.f32 %v4471, %v4471
    %v4474 = vmul.f32 %v4472, %v4472
    %v4475 = vsel %vm257, %v4473, 0.0
    %4476 = vadd.xlane.f32.xlu0 %v4475
    %v4477 = vpop.xlane.xlu0 %4476
    %v4478 = vsel %vm257, %v4474, 0.0
    %4479 = vadd.xlane.f32.xlu0 %v4478
    %v4480 = vpop.xlane.xlu0 %4479
    %v4481 = vmul.f32 %v4477, 0.032258064
    %v4482 = vmul.f32 %v4480, 0.032258064
    %v4483 = vrsqrt.pop %v4481
    %v4484 = vmul.f32 %v4481, %v4483
    %vm4485 = vcmp.eq.f32.partialorder %v4481, inf
    %v4486 = vsel %vm4485, %v4481, %v4484
    %vm4487 = vcmp.eq.f32.partialorder %v4481, 0.0
    %v4488 = vand.u32 %v4481, 2147483648
    %v4489 = vsel %vm4487, %v4488, %v4486
    %v4490 = vrsqrt.pop %v4482
    %v4491 = vmul.f32 %v4482, %v4490
    %vm4492 = vcmp.eq.f32.partialorder %v4482, inf
    %v4493 = vsel %vm4492, %v4482, %v4491
    %vm4494 = vcmp.eq.f32.partialorder %v4482, 0.0
    %v4495 = vand.u32 %v4482, 2147483648
    %v4496 = vsel %vm4494, %v4495, %v4493
    %v4497 = vadd.f32 %v4489, 1e-12
    %v4498 = vadd.f32 %v4496, 1e-12
    %v4499 = vrcp.pop %v4497
    %v4500 = vmul.f32 1.0, %v4499
    %v4501 = vrcp.pop %v4498
    %v4502 = vmul.f32 1.0, %v4501
    %v4503 = vmul.f32 %v4471, %v4500
    %v4504 = vmul.f32 %v4472, %v4502
    %v4506 = vlaneseq
    %v4507 = vshrl.u32 %v4506, 7
    %v4508 = vsub.s32 0, %v4507
    %v4509 = vrot.slane %v4461, %v4508
    %v4511 = vmul.f32 %v4509, %v4503
    %v4512 = vmul.f32 %v4509, %v4504
    %v4514 = vlaneseq
    %v4515 = vshrl.u32 %v4514, 7
    %v4516 = vsub.s32 0, %v4515
    %v4517 = vrot.slane %v4462, %v4516
    %v4519 = vadd.f32 %v4511, %v4517
    %v4520 = vadd.f32 %v4512, %v4517
    %v4521 = vld [vmem:[#allocation22] sm:$0xff]
    %v4522 = vld [vmem:[#allocation22 + $0x8] sm:$0xff]
    %v4523 = vld [vmem:[#allocation22 + $0x10] sm:$0xff]
    %v4524 = vld [vmem:[#allocation22 + $0x18] sm:$0xff]
    %v4525 = vld [vmem:[#allocation23] sm:$0x1]
    %v4527 = vlaneseq
    %v4528 = vshrl.u32 %v4527, 7
    %v4529 = vsub.s32 0, %v4528
    %v4530 = vrot.slane %v4525, %v4529
    %v4533 = vsel %vm257, %v4519, 0
    %v4536 = vsel %vm257, %v4520, 0
    %4538 = vmatprep.subr.mxu0 0.0
    %4539 = vmatpush1.msra.mxu0 %v4521
    %4540 = vmatprep.subr.mxu0 0.0
    %4541 = vmatpush1.msra.mxu0 %v4522
    %4542 = vmatprep.subr.mxu0 0.0
    %4543 = vmatpush1.msra.mxu0 %v4523
    %4544 = vmatprep.subr.mxu0 0.0
    %4545 = vmatpush1.msra.mxu0 %v4524
    %4546 = vmatprep.subr.mxu0 0.0
    %4547 = vmatpush1.msra.mxu0 0.0
    %4548 = vmatprep.subr.mxu0 0.0
    %4549 = vmatpush1.msra.mxu0 0.0
    %4550 = vmatprep.subr.mxu0 0.0
    %4551 = vmatpush1.msra.mxu0 0.0
    %4552 = vmatprep.subr.mxu0 0.0
    %4553 = vmatpush1.msra.mxu0 0.0
    %4554 = vmatprep.subr.mxu0 0.0
    %4555 = vmatpush1.msra.mxu0 0.0
    %4556 = vmatprep.subr.mxu0 0.0
    %4557 = vmatpush1.msra.mxu0 0.0
    %4558 = vmatprep.subr.mxu0 0.0
    %4559 = vmatpush1.msra.mxu0 0.0
    %4560 = vmatprep.subr.mxu0 0.0
    %4561 = vmatpush1.msra.mxu0 0.0
    %4562 = vmatprep.subr.mxu0 0.0
    %4563 = vmatpush1.msra.mxu0 0.0
    %4564 = vmatprep.subr.mxu0 0.0
    %4565 = vmatpush1.msra.mxu0 0.0
    %4566 = vmatprep.subr.mxu0 0.0
    %4567 = vmatpush1.msra.mxu0 0.0
    %4568 = vmatprep.subr.mxu0 0.0
    %4569 = vmatpush1.msra.mxu0 0.0
    %4570 = vmatprep.subr.mxu0 0.0
    %4571 = vmatpush1.msra.mxu0 0.0
    %4572 = vmatprep.subr.mxu0 0.0
    %4573 = vmatpush1.msra.mxu0 0.0
    %4574 = vmatprep.subr.mxu0 0.0
    %4575 = vmatpush1.msra.mxu0 0.0
    %4576 = vmatprep.subr.mxu0 0.0
    %4577 = vmatpush1.msra.mxu0 0.0
    %4578 = vmatprep.subr.mxu0 0.0
    %4579 = vmatpush1.msra.mxu0 0.0
    %4580 = vmatprep.subr.mxu0 0.0
    %4581 = vmatpush1.msra.mxu0 0.0
    %4582 = vmatprep.subr.mxu0 0.0
    %4583 = vmatpush1.msra.mxu0 0.0
    %4584 = vmatprep.subr.mxu0 0.0
    %4585 = vmatpush1.msra.mxu0 0.0
    %4586 = vmatprep.subr.mxu0 0.0
    %4587 = vmatpush1.msra.mxu0 0.0
    %4588 = vmatprep.subr.mxu0 0.0
    %4589 = vmatpush1.msra.mxu0 0.0
    %4590 = vmatprep.subr.mxu0 0.0
    %4591 = vmatpush1.msra.mxu0 0.0
    %4592 = vmatprep.subr.mxu0 0.0
    %4593 = vmatpush1.msra.mxu0 0.0
    %4594 = vmatprep.subr.mxu0 0.0
    %4595 = vmatpush1.msra.mxu0 0.0
    %4596 = vmatprep.subr.mxu0 0.0
    %4597 = vmatpush1.msra.mxu0 0.0
    %4598 = vmatprep.subr.mxu0 0.0
    %4599 = vmatpush1.msra.mxu0 0.0
    %4600 = vmatprep.subr.mxu0 0.0
    %4601 = vmatpush1.msra.mxu0 0.0
    %4602 = vmatprep.mubr.f32.mxu0 0.0
    %4603 = vmatmul.mubr.f32.gmra.mrb[0].mxu0 %v4533
    %v4604 = vpop.f32.mrb[0].mxu0
    %v4605 = vadd.f32 %v4530, %v4604
    %v4606 = vpop.f32.mrb[0].mxu0
    %4607 = vmatprep.mubr.f32.mxu0 0.0
    %4608 = vmatmul.mubr.f32.gmra.mrb[0].mxu0 %v4536
    %v4609 = vpop.f32.mrb[0].mxu0
    %v4610 = vadd.f32 %v4530, %v4609
    %v4611 = vpop.f32.mrb[0].mxu0
    %4612 = vdwg.mxu0
    %v4613 = vmax.f32 %v4605, 0.0
    %v4614 = vmax.f32 %v4610, 0.0
    %v4615 = vld [vmem:[%s18] sm:$0xff]
    %v4616 = vld [vmem:[%s18 + $0x8] sm:$0xff]
    %v4617 = vld [vmem:[%s18 + $0x10] sm:$0xff]
    %v4618 = vld [vmem:[%s18 + $0x18] sm:$0xff]
    %v4619 = vld [vmem:[%s18 + $0x20] sm:$0xff]
    %v4620 = vld [vmem:[%s18 + $0x28] sm:$0xff]
    %v4621 = vld [vmem:[%s18 + $0x30] sm:$0xff]
    %v4622 = vld [vmem:[%s18 + $0x38] sm:$0xff]
    %v4623 = vld [vmem:[%s19] sm:$0x1]
    %v4625 = vlaneseq
    %v4626 = vshrl.u32 %v4625, 7
    %v4627 = vsub.s32 0, %v4626
    %v4628 = vrot.slane %v4623, %v4627
    %vm4630 = vcmask 523264
    %v4632 = vsel %vm4630, %v4613, 0
    %v4635 = vsel %vm4630, %v4614, 0
    %4637 = vmatprep.subr.mxu0 0.0
    %4638 = vmatpush1.msra.mxu0 %v4615
    %4639 = vmatprep.subr.mxu0 0.0
    %4640 = vmatpush1.msra.mxu0 %v4616
    %4641 = vmatprep.subr.mxu0 0.0
    %4642 = vmatpush1.msra.mxu0 %v4617
    %4643 = vmatprep.subr.mxu0 0.0
    %4644 = vmatpush1.msra.mxu0 %v4618
    %4645 = vmatprep.subr.mxu0 0.0
    %4646 = vmatpush1.msra.mxu0 %v4619
    %4647 = vmatprep.subr.mxu0 0.0
    %4648 = vmatpush1.msra.mxu0 %v4620
    %4649 = vmatprep.subr.mxu0 0.0
    %4650 = vmatpush1.msra.mxu0 %v4621
    %4651 = vmatprep.subr.mxu0 0.0
    %4652 = vmatpush1.msra.mxu0 %v4622
    %4653 = vmatprep.subr.mxu0 0.0
    %4654 = vmatpush1.msra.mxu0 0.0
    %4655 = vmatprep.subr.mxu0 0.0
    %4656 = vmatpush1.msra.mxu0 0.0
    %4657 = vmatprep.subr.mxu0 0.0
    %4658 = vmatpush1.msra.mxu0 0.0
    %4659 = vmatprep.subr.mxu0 0.0
    %4660 = vmatpush1.msra.mxu0 0.0
    %4661 = vmatprep.subr.mxu0 0.0
    %4662 = vmatpush1.msra.mxu0 0.0
    %4663 = vmatprep.subr.mxu0 0.0
    %4664 = vmatpush1.msra.mxu0 0.0
    %4665 = vmatprep.subr.mxu0 0.0
    %4666 = vmatpush1.msra.mxu0 0.0
    %4667 = vmatprep.subr.mxu0 0.0
    %4668 = vmatpush1.msra.mxu0 0.0
    %4669 = vmatprep.subr.mxu0 0.0
    %4670 = vmatpush1.msra.mxu0 0.0
    %4671 = vmatprep.subr.mxu0 0.0
    %4672 = vmatpush1.msra.mxu0 0.0
    %4673 = vmatprep.subr.mxu0 0.0
    %4674 = vmatpush1.msra.mxu0 0.0
    %4675 = vmatprep.subr.mxu0 0.0
    %4676 = vmatpush1.msra.mxu0 0.0
    %4677 = vmatprep.subr.mxu0 0.0
    %4678 = vmatpush1.msra.mxu0 0.0
    %4679 = vmatprep.subr.mxu0 0.0
    %4680 = vmatpush1.msra.mxu0 0.0
    %4681 = vmatprep.subr.mxu0 0.0
    %4682 = vmatpush1.msra.mxu0 0.0
    %4683 = vmatprep.subr.mxu0 0.0
    %4684 = vmatpush1.msra.mxu0 0.0
    %4685 = vmatprep.subr.mxu0 0.0
    %4686 = vmatpush1.msra.mxu0 0.0
    %4687 = vmatprep.subr.mxu0 0.0
    %4688 = vmatpush1.msra.mxu0 0.0
    %4689 = vmatprep.subr.mxu0 0.0
    %4690 = vmatpush1.msra.mxu0 0.0
    %4691 = vmatprep.subr.mxu0 0.0
    %4692 = vmatpush1.msra.mxu0 0.0
    %4693 = vmatprep.subr.mxu0 0.0
    %4694 = vmatpush1.msra.mxu0 0.0
    %4695 = vmatprep.subr.mxu0 0.0
    %4696 = vmatpush1.msra.mxu0 0.0
    %4697 = vmatprep.subr.mxu0 0.0
    %4698 = vmatpush1.msra.mxu0 0.0
    %4699 = vmatprep.subr.mxu0 0.0
    %4700 = vmatpush1.msra.mxu0 0.0
    %4701 = vmatprep.mubr.f32.mxu0 0.0
    %4702 = vmatmul.mubr.f32.gmra.mrb[0].mxu0 %v4632
    %v4703 = vpop.f32.mrb[0].mxu0
    %v4704 = vadd.f32 %v4628, %v4703
    %v4705 = vpop.f32.mrb[0].mxu0
    %4706 = vmatprep.mubr.f32.mxu0 0.0
    %4707 = vmatmul.mubr.f32.gmra.mrb[0].mxu0 %v4635
    %v4708 = vpop.f32.mrb[0].mxu0
    %v4709 = vadd.f32 %v4628, %v4708
    %v4710 = vpop.f32.mrb[0].mxu0
    %4711 = vdwg.mxu0
    %v4712 = vadd.f32 %v4519, %v4704
    %v4713 = vadd.f32 %v4520, %v4709
    %v4714 = vld [vmem:[%s20] sm:$0x1]
    %v4715 = vld [vmem:[%s21] sm:$0x1]
    %v4716 = vsel %vm257, %v4712, 0.0
    %4717 = vadd.xlane.f32.xlu0 %v4716
    %v4718 = vpop.xlane.xlu0 %4717
    %v4719 = vsel %vm257, %v4713, 0.0
    %4720 = vadd.xlane.f32.xlu0 %v4719
    %v4721 = vpop.xlane.xlu0 %4720
    %v4722 = vmul.f32 %v4718, %v2287
    %v4723 = vmul.f32 %v4721, %v2287
    %v4724 = vsub.f32 %v4712, %v4722
    %v4725 = vsub.f32 %v4713, %v4723
    %v4726 = vmul.f32 %v4724, %v4724
    %v4727 = vmul.f32 %v4725, %v4725
    %v4728 = vsel %vm257, %v4726, 0.0
    %4729 = vadd.xlane.f32.xlu0 %v4728
    %v4730 = vpop.xlane.xlu0 %4729
    %v4731 = vsel %vm257, %v4727, 0.0
    %4732 = vadd.xlane.f32.xlu0 %v4731
    %v4733 = vpop.xlane.xlu0 %4732
    %v4734 = vmul.f32 %v4730, 0.032258064
    %v4735 = vmul.f32 %v4733, 0.032258064
    %v4736 = vrsqrt.pop %v4734
    %v4737 = vmul.f32 %v4734, %v4736
    %vm4738 = vcmp.eq.f32.partialorder %v4734, inf
    %v4739 = vsel %vm4738, %v4734, %v4737
    %vm4740 = vcmp.eq.f32.partialorder %v4734, 0.0
    %v4741 = vand.u32 %v4734, 2147483648
    %v4742 = vsel %vm4740, %v4741, %v4739
    %v4743 = vrsqrt.pop %v4735
    %v4744 = vmul.f32 %v4735, %v4743
    %vm4745 = vcmp.eq.f32.partialorder %v4735, inf
    %v4746 = vsel %vm4745, %v4735, %v4744
    %vm4747 = vcmp.eq.f32.partialorder %v4735, 0.0
    %v4748 = vand.u32 %v4735, 2147483648
    %v4749 = vsel %vm4747, %v4748, %v4746
    %v4750 = vadd.f32 %v4742, 1e-12
    %v4751 = vadd.f32 %v4749, 1e-12
    %v4752 = vrcp.pop %v4750
    %v4753 = vmul.f32 1.0, %v4752
    %v4754 = vrcp.pop %v4751
    %v4755 = vmul.f32 1.0, %v4754
    %v4756 = vmul.f32 %v4724, %v4753
    %v4757 = vmul.f32 %v4725, %v4755
    %v4759 = vlaneseq
    %v4760 = vshrl.u32 %v4759, 7
    %v4761 = vsub.s32 0, %v4760
    %v4762 = vrot.slane %v4714, %v4761
    %v4764 = vmul.f32 %v4762, %v4756
    %v4765 = vmul.f32 %v4762, %v4757
    %v4767 = vlaneseq
    %v4768 = vshrl.u32 %v4767, 7
    %v4769 = vsub.s32 0, %v4768
    %v4770 = vrot.slane %v4715, %v4769
    %v4772 = vadd.f32 %v4764, %v4770
    %v4773 = vadd.f32 %v4765, %v4770
    %4774 = vst.msk [vmem:[#allocation25] sm:$0xff] %vm257, %v4772
    %4775 = vst.msk [vmem:[#allocation25 + $0x8] sm:$0xff] %vm257, %v4773
    // Predicated region
    $region146: #{tpu_custom_call.1} parent=1 // pred_check
      _
    $region147: #{tpu_custom_call.1} parent=1 // pred_check_branch
      %4777 = sbr.rel (0) target = $region149
    $region148: #{tpu_custom_call.1} parent=1 // pred_region
      %s4779 = ssub.s32 256, 256
      %4780 = vsyncadd [#allocation4], %s4779
      %s4781 = sshll.u32 [#allocation25], 4
      %s4782 = int_to_ptr.vmem [resolvable:$true] %s4781
      %4787 = dma.vmem_to_hbm [thread:$0]  %s4782, 256, %s22, [#allocation4], 128, 128, 8
    $region149: #{tpu_custom_call.1} parent=1 // pred_fallthru
      _
    // Predicated region
    $region150: #{tpu_custom_call.1} parent=1 // pred_check
      _
    $region151: #{tpu_custom_call.1} parent=1 // pred_check_branch
      %4789 = sbr.rel (0) target = $region153
    $region152: #{tpu_custom_call.1} parent=1 // pred_region
      %4790 = dma.done [#allocation4], 256
    $region153: #{tpu_custom_call.1} parent=1 // pred_fallthru
      _
    %4791 = vsyncpa [#allocation3], 1
    %4792 = vsyncpa [#allocation6], 1
    %4793 = vsyncpa [#allocation9], 1
    %4794 = vsyncpa [#allocation12], 1
    %4795 = vsyncpa [#allocation15], 1
    %4796 = vsyncpa [#allocation18], 1
    %4797 = vsyncpa [#allocation21], 1
    %4798 = vsyncpa [#allocation24], 1
    %4799 = vsyncpa [#allocation4], 1

</llo_original>
